<compile_context>
chip_gen: v5e
topology: v5e:2x2
jax: 0.10.0
libtpu: 0.0.40
codegen_flags: <defaults>
</compile_context>

<pallas_src>
import jax
import jax.numpy as jnp
from jax import lax
from jax.experimental import pallas as pl
from jax.experimental.pallas import tpu as pltpu


# ---------------------------------------------------------------------------
# Kernel
# ---------------------------------------------------------------------------
def basic_block_kernel(xs_ref, w1_ref, s1_ref, b1_ref, w2_ref, s2_ref, b2_ref,
                       o_ref, mid_ref):
    """One grid step = one (image, row-strip).

    xs_ref : (SH+4, W+2, Cp)  bf16  zero-padded input strip (2-row/1-col halo)
    w1_ref : (9*Cp, Cp)       bf16  conv1 weights, rows ordered (ky, kx, cin)
    s1_ref : (1, Cp)          f32   folded BN1 scale
    b1_ref : (1, Cp)          f32   folded BN1 bias
    w2_ref : (9*Cp, Cp)       bf16  conv2 weights
    s2_ref : (1, Cp)          f32   folded BN2 scale
    b2_ref : (1, Cp)          f32   folded BN2 bias
    o_ref  : (SH, W, Cp)      bf16  output strip
    mid_ref: (SH+2, W+32, Cp) bf16  scratch: conv1 activation + 16-col halos
    """
    SH, W, C = o_ref.shape
    s = pl.program_id(1)

    def conv3x3(get_tap, w_ref, rows):
        # im2col: 9 taps, each (rows, W, C) -> (rows*W, C); the lane-axis
        # concat is 128-lane aligned; single K = 9*C MXU matmul, f32 accum.
        taps = [get_tap(dy, dx).reshape(rows * W, C)
                for dy in range(3) for dx in range(3)]
        patch = jnp.concatenate(taps, axis=-1)                 # (rows*W, 9*C)
        return jnp.dot(patch, w_ref[...], preferred_element_type=jnp.float32)

    # ---- conv1 + BN1 + ReLU over SH+2 rows (1 extra row above/below is the
    #      recomputed halo conv2 needs) ----
    acc1 = conv3x3(lambda dy, dx: xs_ref[dy:dy + SH + 2, dx:dx + W, :],
                   w1_ref, SH + 2)
    out1 = jnp.maximum(acc1 * s1_ref[...] + b1_ref[...], 0.0)  # (.,C) f32

    # Stage intermediate in bf16 scratch at a sublane-aligned column offset
    # (16 = bf16 sublane tile) -> unmasked stores; zero 16-wide column halos.
    mid_ref[:, 16:16 + W, :] = out1.astype(jnp.bfloat16).reshape(SH + 2, W, C)
    zcol = jnp.zeros((SH + 2, 16, C), jnp.bfloat16)
    mid_ref[:, 0:16, :] = zcol                      # left  column halo
    mid_ref[:, 16 + W:32 + W, :] = zcol             # right column halo

    # conv2 'same' padding at the image top/bottom: the halo row of the first
    # / last strip was recomputed from padded x and must instead be zero.
    zrow = jnp.zeros((1, W, C), jnp.bfloat16)

    @pl.when(s == 0)
    def _():
        mid_ref[0:1, 16:16 + W, :] = zrow

    @pl.when(s == pl.num_programs(1) - 1)
    def _():
        mid_ref[SH + 1:SH + 2, 16:16 + W, :] = zrow

    # ---- conv2 + BN2 + residual add (from the centered bf16 input slice) +
    #      final ReLU; cast to bf16 only at the store ----
    acc2 = conv3x3(lambda dy, dx: mid_ref[dy:dy + SH, 15 + dx:15 + dx + W, :],
                   w2_ref, SH)
    out2 = (acc2 * s2_ref[...] + b2_ref[...]).reshape(SH, W, C)
    resid = xs_ref[2:SH + 2, 1:W + 1, :].astype(jnp.float32)
    o_ref[...] = jnp.maximum(out2 + resid, 0.0).astype(o_ref.dtype)


# ---------------------------------------------------------------------------
# Wrapper helpers
# ---------------------------------------------------------------------------
def _round_up(x, m):
    return ((x + m - 1) // m) * m


def _physical_vmem_bytes():
    try:
        return int(pltpu.get_tpu_info().vmem_capacity_bytes)
    except Exception:
        return 64 << 20               # conservative (v7x per-TensorCore VMEM)


def _strip_vmem_bytes(sh, W, Cp):
    """Rough per-strip VMEM working set (pipeline operands double-buffered)."""
    bf16, f32 = 2, 4
    xp = (sh + 4) * (W + 2) * Cp * bf16            # input strip
    out = sh * W * Cp * bf16                       # output strip
    wts = 2 * 9 * Cp * Cp * bf16                   # conv1 + conv2 weights
    mid = (sh + 2) * (W + 32) * Cp * bf16          # activation scratch
    patch = (sh + 2) * W * 9 * Cp * bf16           # largest im2col patch
    acc = (sh + 2) * W * Cp * f32                  # f32 accumulator / BN temp
    return 2 * xp + 2 * out + 2 * wts + mid + patch + 2 * acc


def _pick_strip_height(H, W, Cp, budget):
    for sh in sorted((d for d in range(1, H + 1) if H % d == 0), reverse=True):
        if _strip_vmem_bytes(sh, W, Cp) <= budget:
            return sh
    return 1


# ---------------------------------------------------------------------------
# Wrapper
# ---------------------------------------------------------------------------
@jax.jit
def basic_block_forward(x_nchw, w1, g1, be1, m1, v1, w2, g2, be2, m2, v2,
                        eps=1e-5):
    """Fused BasicBlock forward (inference). NCHW f32 in, NCHW bf16 out."""
    N, Cin, H, W = x_nchw.shape
    Cout = w1.shape[0]
    assert Cin == Cout, "downsample=None requires in_channels == out_channels"
    C = Cin
    Cp = _round_up(C, 128)            # lane-dense channel padding
    cpad = Cp - C

    phys_vmem = _physical_vmem_bytes()
    SH = _pick_strip_height(H, W, Cp, budget=phys_vmem // 2)
    NS = H // SH

    # NCHW -> NHWC bf16, lane-pad channels, 2-row / 1-col zero spatial halo.
    x_nhwc = jnp.transpose(x_nchw, (0, 2, 3, 1)).astype(jnp.bfloat16)
    x_pad = jnp.pad(x_nhwc, ((0, 0), (2, 2), (1, 1), (0, cpad)))

    # Materialise overlapping row strips: (N, NS, SH+4, W+2, Cp). The 4-row
    # overlap is the recomputed conv1 halo (layout plumbing, fused by XLA into
    # the transpose/pad/cast pass above).
    x_strips = jnp.stack(
        [x_pad[:, s * SH:s * SH + SH + 4] for s in range(NS)], axis=1)

    # (Cout, Cin, 3, 3) -> (9*Cp, Cp) bf16, rows ordered (ky, kx, cin).
    def prep_w(w):
        wt = jnp.transpose(w, (2, 3, 1, 0)).astype(jnp.float32)
        wt = jnp.pad(wt, ((0, 0), (0, 0), (0, cpad), (0, cpad)))
        return wt.reshape(9 * Cp, Cp).astype(jnp.bfloat16)

    w1_r, w2_r = prep_w(w1), prep_w(w2)

    # Fold BatchNorm (inference) into per-channel scale/bias, zero-padded.
    def fold_bn(g, b, m, v):
        sc = (g / jnp.sqrt(v + eps)).astype(jnp.float32)
        bias = (b - m * sc).astype(jnp.float32)
        return (jnp.pad(sc, (0, cpad)).reshape(1, Cp),
                jnp.pad(bias, (0, cpad)).reshape(1, Cp))

    s1, b1 = fold_bn(g1, be1, m1, v1)
    s2, b2 = fold_bn(g2, be2, m2, v2)

    vmem_limit = int(min(int(phys_vmem * 0.85),
                         max(2 * _strip_vmem_bytes(SH, W, Cp), 32 << 20)))

    out_nhwc = pl.pallas_call(
        basic_block_kernel,
        out_shape=jax.ShapeDtypeStruct((N, H, W, Cp), jnp.bfloat16),
        grid_spec=pltpu.PrefetchScalarGridSpec(
            num_scalar_prefetch=0,
            grid=(N, NS),
            in_specs=[
                pl.BlockSpec((None, None, SH + 4, W + 2, Cp),
                             lambda n, s: (n, s, 0, 0, 0)),
                pl.BlockSpec((9 * Cp, Cp), lambda n, s: (0, 0)),
                pl.BlockSpec((1, Cp), lambda n, s: (0, 0)),
                pl.BlockSpec((1, Cp), lambda n, s: (0, 0)),
                pl.BlockSpec((9 * Cp, Cp), lambda n, s: (0, 0)),
                pl.BlockSpec((1, Cp), lambda n, s: (0, 0)),
                pl.BlockSpec((1, Cp), lambda n, s: (0, 0)),
            ],
            out_specs=pl.BlockSpec((None, SH, W, Cp),
                                   lambda n, s: (n, s, 0, 0)),
            scratch_shapes=[pltpu.VMEM((SH + 2, W + 32, Cp), jnp.bfloat16)],
        ),
        compiler_params=pltpu.CompilerParams(
            dimension_semantics=("parallel", "parallel"),
            vmem_limit_bytes=vmem_limit),
    )(x_strips, w1_r, s1, b1, w2_r, s2, b2)

    # Drop padded channels, NHWC -> NCHW.  Output stays bf16 (inference).
    return jnp.transpose(out_nhwc[..., :C], (0, 3, 1, 2))


# ---------------------------------------------------------------------------
# Pure-JAX reference (f32, lax.conv) for correctness checking
# ---------------------------------------------------------------------------
def reference_basic_block(x_nchw, w1, g1, be1, m1, v1, w2, g2, be2, m2, v2,
                          eps=1e-5):
    def conv(x, w):
        return lax.conv_general_dilated(
            x, w, window_strides=(1, 1), padding=((1, 1), (1, 1)),
            dimension_numbers=("NCHW", "OIHW", "NCHW"))

    def bn(x, g, b, m, v):
        g = g.reshape(1, -1, 1, 1); b = b.reshape(1, -1, 1, 1)
        m = m.reshape(1, -1, 1, 1); v = v.reshape(1, -1, 1, 1)
        return (x - m) / jnp.sqrt(v + eps) * g + b

    out = jnp.maximum(bn(conv(x_nchw, w1), g1, be1, m1, v1), 0.0)
    out = bn(conv(out, w2), g2, be2, m2, v2)
    return jnp.maximum(out + x_nchw, 0.0)


if __name__ == "__main__":
    key = jax.random.PRNGKey(0)
    N, C, H, W = 2, 4, 16, 16  # in_channels == out_channels == 4, stride=1

    keys = jax.random.split(key, 3)
    x = jax.random.normal(keys[0], (N, C, H, W), jnp.float32)

    # conv weights (PyTorch layout: Cout, Cin, 3, 3), deterministic init
    w1 = jax.random.normal(keys[1], (C, C, 3, 3), jnp.float32) * 0.1
    w2 = jax.random.normal(keys[2], (C, C, 3, 3), jnp.float32) * 0.1

    # BatchNorm parameters / running stats, deterministic non-trivial values
    g1 = jnp.linspace(0.8, 1.2, C, dtype=jnp.float32)
    be1 = jnp.linspace(-0.1, 0.1, C, dtype=jnp.float32)
    m1 = jnp.linspace(-0.2, 0.2, C, dtype=jnp.float32)
    v1 = jnp.linspace(0.5, 1.5, C, dtype=jnp.float32)
    g2 = jnp.linspace(1.1, 0.9, C, dtype=jnp.float32)
    be2 = jnp.linspace(0.05, -0.05, C, dtype=jnp.float32)
    m2 = jnp.linspace(0.1, -0.1, C, dtype=jnp.float32)
    v2 = jnp.linspace(0.9, 1.1, C, dtype=jnp.float32)

    out = basic_block_forward(x, w1, g1, be1, m1, v1, w2, g2, be2, m2, v2)
    out = jax.block_until_ready(out)

    ref = reference_basic_block(x, w1, g1, be1, m1, v1, w2, g2, be2, m2, v2)
    ref = jax.block_until_ready(ref)

    assert out.shape == (N, C, H, W)
    out_f32 = out.astype(jnp.float32)
    # bf16 conv operands / intermediate / residual / output (f32 accumulation)
    # -> loosened tolerance vs the pure-f32 reference (inference contract).
    max_err = float(jnp.max(jnp.abs(out_f32 - ref)))
    assert jnp.allclose(out_f32, ref, atol=4e-2, rtol=4e-2), max_err

    print("KERNEL_OK")
</pallas_src>

<mosaic_0001>
module attributes {stable_mosaic.version = 11 : i64} {
  func.func @basic_block_kernel(%arg0: i32, %arg1: i32, %arg2: memref<1x1x20x18x128xbf16, #tpu.memory_space<vmem>>, %arg3: memref<1152x128xbf16, #tpu.memory_space<vmem>>, %arg4: memref<1x128xf32, #tpu.memory_space<vmem>>, %arg5: memref<1x128xf32, #tpu.memory_space<vmem>>, %arg6: memref<1152x128xbf16, #tpu.memory_space<vmem>>, %arg7: memref<1x128xf32, #tpu.memory_space<vmem>>, %arg8: memref<1x128xf32, #tpu.memory_space<vmem>>, %arg9: memref<1x16x16x128xbf16, #tpu.memory_space<vmem>>, %arg10: memref<18x48x128xbf16, #tpu.memory_space<vmem>>) attributes {dimension_semantics = [#tpu.dimension_semantics<parallel>, #tpu.dimension_semantics<parallel>], iteration_bounds = array<i64: 2, 1>, scalar_prefetch = 0 : i64, scratch_operands = 1 : i64, tpu.core_type = #tpu.core_type<tc>, window_params = [{transform_indices = @transform_0, window_bounds = array<i64: 1, 1, 20, 18, 128>}, {pipeline_mode = #tpu.pipeline_mode<synchronous>, transform_indices = @transform_1, window_bounds = array<i64: 1152, 128>}, {pipeline_mode = #tpu.pipeline_mode<synchronous>, transform_indices = @transform_2, window_bounds = array<i64: 1, 128>}, {pipeline_mode = #tpu.pipeline_mode<synchronous>, transform_indices = @transform_3, window_bounds = array<i64: 1, 128>}, {pipeline_mode = #tpu.pipeline_mode<synchronous>, transform_indices = @transform_4, window_bounds = array<i64: 1152, 128>}, {pipeline_mode = #tpu.pipeline_mode<synchronous>, transform_indices = @transform_5, window_bounds = array<i64: 1, 128>}, {pipeline_mode = #tpu.pipeline_mode<synchronous>, transform_indices = @transform_6, window_bounds = array<i64: 1, 128>}, {transform_indices = @transform_7, window_bounds = array<i64: 1, 16, 16, 128>}]} {
    %c0 = arith.constant 0 : index
    %c0_0 = arith.constant 0 : index
    %c0_1 = arith.constant 0 : index
    %c0_2 = arith.constant 0 : index
    %c0_3 = arith.constant 0 : index
    %0 = vector.load %arg2[%c0, %c0_0, %c0_1, %c0_2, %c0_3] : memref<1x1x20x18x128xbf16, #tpu.memory_space<vmem>>, vector<1x1x18x16x128xbf16>
    %1 = vector.shape_cast %0 : vector<1x1x18x16x128xbf16> to vector<18x16x128xbf16>
    %2 = vector.shape_cast %1 : vector<18x16x128xbf16> to vector<288x128xbf16>
    %c0_4 = arith.constant 0 : index
    %c0_5 = arith.constant 0 : index
    %c0_6 = arith.constant 0 : index
    %c1 = arith.constant 1 : index
    %c0_7 = arith.constant 0 : index
    %3 = vector.load %arg2[%c0_4, %c0_5, %c0_6, %c1, %c0_7] : memref<1x1x20x18x128xbf16, #tpu.memory_space<vmem>>, vector<1x1x18x16x128xbf16>
    %4 = vector.shape_cast %3 : vector<1x1x18x16x128xbf16> to vector<18x16x128xbf16>
    %5 = vector.shape_cast %4 : vector<18x16x128xbf16> to vector<288x128xbf16>
    %c0_8 = arith.constant 0 : index
    %c0_9 = arith.constant 0 : index
    %c0_10 = arith.constant 0 : index
    %c2 = arith.constant 2 : index
    %c0_11 = arith.constant 0 : index
    %6 = vector.load %arg2[%c0_8, %c0_9, %c0_10, %c2, %c0_11] : memref<1x1x20x18x128xbf16, #tpu.memory_space<vmem>>, vector<1x1x18x16x128xbf16>
    %7 = vector.shape_cast %6 : vector<1x1x18x16x128xbf16> to vector<18x16x128xbf16>
    %8 = vector.shape_cast %7 : vector<18x16x128xbf16> to vector<288x128xbf16>
    %c0_12 = arith.constant 0 : index
    %c0_13 = arith.constant 0 : index
    %c1_14 = arith.constant 1 : index
    %c0_15 = arith.constant 0 : index
    %c0_16 = arith.constant 0 : index
    %9 = vector.load %arg2[%c0_12, %c0_13, %c1_14, %c0_15, %c0_16] : memref<1x1x20x18x128xbf16, #tpu.memory_space<vmem>>, vector<1x1x18x16x128xbf16>
    %10 = vector.shape_cast %9 : vector<1x1x18x16x128xbf16> to vector<18x16x128xbf16>
    %11 = vector.shape_cast %10 : vector<18x16x128xbf16> to vector<288x128xbf16>
    %c0_17 = arith.constant 0 : index
    %c0_18 = arith.constant 0 : index
    %c1_19 = arith.constant 1 : index
    %c1_20 = arith.constant 1 : index
    %c0_21 = arith.constant 0 : index
    %12 = vector.load %arg2[%c0_17, %c0_18, %c1_19, %c1_20, %c0_21] : memref<1x1x20x18x128xbf16, #tpu.memory_space<vmem>>, vector<1x1x18x16x128xbf16>
    %13 = vector.shape_cast %12 : vector<1x1x18x16x128xbf16> to vector<18x16x128xbf16>
    %14 = vector.shape_cast %13 : vector<18x16x128xbf16> to vector<288x128xbf16>
    %c0_22 = arith.constant 0 : index
    %c0_23 = arith.constant 0 : index
    %c1_24 = arith.constant 1 : index
    %c2_25 = arith.constant 2 : index
    %c0_26 = arith.constant 0 : index
    %15 = vector.load %arg2[%c0_22, %c0_23, %c1_24, %c2_25, %c0_26] : memref<1x1x20x18x128xbf16, #tpu.memory_space<vmem>>, vector<1x1x18x16x128xbf16>
    %16 = vector.shape_cast %15 : vector<1x1x18x16x128xbf16> to vector<18x16x128xbf16>
    %17 = vector.shape_cast %16 : vector<18x16x128xbf16> to vector<288x128xbf16>
    %c0_27 = arith.constant 0 : index
    %c0_28 = arith.constant 0 : index
    %c2_29 = arith.constant 2 : index
    %c0_30 = arith.constant 0 : index
    %c0_31 = arith.constant 0 : index
    %18 = vector.load %arg2[%c0_27, %c0_28, %c2_29, %c0_30, %c0_31] : memref<1x1x20x18x128xbf16, #tpu.memory_space<vmem>>, vector<1x1x18x16x128xbf16>
    %19 = vector.shape_cast %18 : vector<1x1x18x16x128xbf16> to vector<18x16x128xbf16>
    %20 = vector.shape_cast %19 : vector<18x16x128xbf16> to vector<288x128xbf16>
    %c0_32 = arith.constant 0 : index
    %c0_33 = arith.constant 0 : index
    %c2_34 = arith.constant 2 : index
    %c1_35 = arith.constant 1 : index
    %c0_36 = arith.constant 0 : index
    %21 = vector.load %arg2[%c0_32, %c0_33, %c2_34, %c1_35, %c0_36] : memref<1x1x20x18x128xbf16, #tpu.memory_space<vmem>>, vector<1x1x18x16x128xbf16>
    %22 = vector.shape_cast %21 : vector<1x1x18x16x128xbf16> to vector<18x16x128xbf16>
    %23 = vector.shape_cast %22 : vector<18x16x128xbf16> to vector<288x128xbf16>
    %c0_37 = arith.constant 0 : index
    %c0_38 = arith.constant 0 : index
    %c2_39 = arith.constant 2 : index
    %c2_40 = arith.constant 2 : index
    %c0_41 = arith.constant 0 : index
    %24 = vector.load %arg2[%c0_37, %c0_38, %c2_39, %c2_40, %c0_41] : memref<1x1x20x18x128xbf16, #tpu.memory_space<vmem>>, vector<1x1x18x16x128xbf16>
    %25 = vector.shape_cast %24 : vector<1x1x18x16x128xbf16> to vector<18x16x128xbf16>
    %26 = vector.shape_cast %25 : vector<18x16x128xbf16> to vector<288x128xbf16>
    %27 = tpu.concatenate %2, %5, %8, %11, %14, %17, %20, %23, %26 in 1 : vector<288x128xbf16>, vector<288x128xbf16>, vector<288x128xbf16>, vector<288x128xbf16>, vector<288x128xbf16>, vector<288x128xbf16>, vector<288x128xbf16>, vector<288x128xbf16>, vector<288x128xbf16> -> vector<288x1152xbf16>
    %c0_42 = arith.constant 0 : index
    %c0_43 = arith.constant 0 : index
    %28 = vector.load %arg3[%c0_42, %c0_43] : memref<1152x128xbf16, #tpu.memory_space<vmem>>, vector<1152x128xbf16>
    %cst = arith.constant dense<0.000000e+00> : vector<288x128xf32>
    %29 = tpu.matmul %27, %28, %cst {dimension_numbers = #tpu.dot_dimension_numbers<[1], [0], [0], [1], [0, 0, 1, 1], [], []>} : vector<288x1152xbf16>, vector<1152x128xbf16>, vector<288x128xf32> -> vector<288x128xf32>
    %c0_44 = arith.constant 0 : index
    %c0_45 = arith.constant 0 : index
    %30 = vector.load %arg4[%c0_44, %c0_45] : memref<1x128xf32, #tpu.memory_space<vmem>>, vector<1x128xf32>
    %31 = vector.broadcast %30 : vector<1x128xf32> to vector<288x128xf32>
    %32 = arith.mulf %29, %31 : vector<288x128xf32>
    %c0_46 = arith.constant 0 : index
    %c0_47 = arith.constant 0 : index
    %33 = vector.load %arg5[%c0_46, %c0_47] : memref<1x128xf32, #tpu.memory_space<vmem>>, vector<1x128xf32>
    %34 = vector.broadcast %33 : vector<1x128xf32> to vector<288x128xf32>
    %35 = arith.addf %32, %34 : vector<288x128xf32>
    %cst_48 = arith.constant 0.000000e+00 : f32
    %36 = vector.broadcast %cst_48 : f32 to vector<288x128xf32>
    %37 = arith.maximumf %35, %36 : vector<288x128xf32>
    %38 = arith.truncf %37 : vector<288x128xf32> to vector<288x128xbf16>
    %39 = vector.shape_cast %38 : vector<288x128xbf16> to vector<18x16x128xbf16>
    %c0_49 = arith.constant 0 : index
    %c16 = arith.constant 16 : index
    %c0_50 = arith.constant 0 : index
    %40 = vector.load %arg10[%c0_49, %c16, %c0_50] : memref<18x48x128xbf16, #tpu.memory_space<vmem>>, vector<18x16x128xbf16>
    tpu.vector_store %arg10[%c0_49, %c16, %c0_50], %39 {strides = array<i32>} : memref<18x48x128xbf16, #tpu.memory_space<vmem>>, vector<18x16x128xbf16>,
    %cst_51 = arith.constant 0.000000e+00 : bf16
    %41 = vector.broadcast %cst_51 : bf16 to vector<18x16x128xbf16>
    %c0_52 = arith.constant 0 : index
    %c0_53 = arith.constant 0 : index
    %c0_54 = arith.constant 0 : index
    %42 = vector.load %arg10[%c0_52, %c0_53, %c0_54] : memref<18x48x128xbf16, #tpu.memory_space<vmem>>, vector<18x16x128xbf16>
    tpu.vector_store %arg10[%c0_52, %c0_53, %c0_54], %41 {strides = array<i32>} : memref<18x48x128xbf16, #tpu.memory_space<vmem>>, vector<18x16x128xbf16>,
    %c0_55 = arith.constant 0 : index
    %c32 = arith.constant 32 : index
    %c0_56 = arith.constant 0 : index
    %43 = vector.load %arg10[%c0_55, %c32, %c0_56] : memref<18x48x128xbf16, #tpu.memory_space<vmem>>, vector<18x16x128xbf16>
    tpu.vector_store %arg10[%c0_55, %c32, %c0_56], %41 {strides = array<i32>} : memref<18x48x128xbf16, #tpu.memory_space<vmem>>, vector<18x16x128xbf16>,
    %cst_57 = arith.constant 0.000000e+00 : bf16
    %44 = vector.broadcast %cst_57 : bf16 to vector<1x16x128xbf16>
    %c0_i32 = arith.constant 0 : i32
    %45 = arith.cmpi eq, %arg1, %c0_i32 : i32
    %46 = arith.extui %45 : i1 to i32
    %c0_i32_58 = arith.constant 0 : i32
    %47 = arith.cmpi ne, %46, %c0_i32_58 : i32
    scf.if %47 {
      %c0_103 = arith.constant 0 : index
      %c16_104 = arith.constant 16 : index
      %c0_105 = arith.constant 0 : index
      %89 = vector.load %arg10[%c0_103, %c16_104, %c0_105] : memref<18x48x128xbf16, #tpu.memory_space<vmem>>, vector<1x16x128xbf16>
      tpu.vector_store %arg10[%c0_103, %c16_104, %c0_105], %44 {strides = array<i32>} : memref<18x48x128xbf16, #tpu.memory_space<vmem>>, vector<1x16x128xbf16>,
    } else {
    }
    %c0_i32_59 = arith.constant 0 : i32
    %48 = arith.cmpi eq, %arg1, %c0_i32_59 : i32
    %49 = arith.extui %48 : i1 to i32
    %c0_i32_60 = arith.constant 0 : i32
    %50 = arith.cmpi ne, %49, %c0_i32_60 : i32
    scf.if %50 {
      %c17_103 = arith.constant 17 : index
      %c16_104 = arith.constant 16 : index
      %c0_105 = arith.constant 0 : index
      %89 = vector.load %arg10[%c17_103, %c16_104, %c0_105] : memref<18x48x128xbf16, #tpu.memory_space<vmem>>, vector<1x16x128xbf16>
      tpu.vector_store %arg10[%c17_103, %c16_104, %c0_105], %44 {strides = array<i32>} : memref<18x48x128xbf16, #tpu.memory_space<vmem>>, vector<1x16x128xbf16>,
    } else {
    }
    %c0_61 = arith.constant 0 : index
    %c15 = arith.constant 15 : index
    %c0_62 = arith.constant 0 : index
    %51 = vector.load %arg10[%c0_61, %c15, %c0_62] : memref<18x48x128xbf16, #tpu.memory_space<vmem>>, vector<16x16x128xbf16>
    %52 = vector.shape_cast %51 : vector<16x16x128xbf16> to vector<256x128xbf16>
    %c0_63 = arith.constant 0 : index
    %c16_64 = arith.constant 16 : index
    %c0_65 = arith.constant 0 : index
    %53 = vector.load %arg10[%c0_63, %c16_64, %c0_65] : memref<18x48x128xbf16, #tpu.memory_space<vmem>>, vector<16x16x128xbf16>
    %54 = vector.shape_cast %53 : vector<16x16x128xbf16> to vector<256x128xbf16>
    %c0_66 = arith.constant 0 : index
    %c17 = arith.constant 17 : index
    %c0_67 = arith.constant 0 : index
    %55 = vector.load %arg10[%c0_66, %c17, %c0_67] : memref<18x48x128xbf16, #tpu.memory_space<vmem>>, vector<16x16x128xbf16>
    %56 = vector.shape_cast %55 : vector<16x16x128xbf16> to vector<256x128xbf16>
    %c1_68 = arith.constant 1 : index
    %c15_69 = arith.constant 15 : index
    %c0_70 = arith.constant 0 : index
    %57 = vector.load %arg10[%c1_68, %c15_69, %c0_70] : memref<18x48x128xbf16, #tpu.memory_space<vmem>>, vector<16x16x128xbf16>
    %58 = vector.shape_cast %57 : vector<16x16x128xbf16> to vector<256x128xbf16>
    %c1_71 = arith.constant 1 : index
    %c16_72 = arith.constant 16 : index
    %c0_73 = arith.constant 0 : index
    %59 = vector.load %arg10[%c1_71, %c16_72, %c0_73] : memref<18x48x128xbf16, #tpu.memory_space<vmem>>, vector<16x16x128xbf16>
    %60 = vector.shape_cast %59 : vector<16x16x128xbf16> to vector<256x128xbf16>
    %c1_74 = arith.constant 1 : index
    %c17_75 = arith.constant 17 : index
    %c0_76 = arith.constant 0 : index
    %61 = vector.load %arg10[%c1_74, %c17_75, %c0_76] : memref<18x48x128xbf16, #tpu.memory_space<vmem>>, vector<16x16x128xbf16>
    %62 = vector.shape_cast %61 : vector<16x16x128xbf16> to vector<256x128xbf16>
    %c2_77 = arith.constant 2 : index
    %c15_78 = arith.constant 15 : index
    %c0_79 = arith.constant 0 : index
    %63 = vector.load %arg10[%c2_77, %c15_78, %c0_79] : memref<18x48x128xbf16, #tpu.memory_space<vmem>>, vector<16x16x128xbf16>
    %64 = vector.shape_cast %63 : vector<16x16x128xbf16> to vector<256x128xbf16>
    %c2_80 = arith.constant 2 : index
    %c16_81 = arith.constant 16 : index
    %c0_82 = arith.constant 0 : index
    %65 = vector.load %arg10[%c2_80, %c16_81, %c0_82] : memref<18x48x128xbf16, #tpu.memory_space<vmem>>, vector<16x16x128xbf16>
    %66 = vector.shape_cast %65 : vector<16x16x128xbf16> to vector<256x128xbf16>
    %c2_83 = arith.constant 2 : index
    %c17_84 = arith.constant 17 : index
    %c0_85 = arith.constant 0 : index
    %67 = vector.load %arg10[%c2_83, %c17_84, %c0_85] : memref<18x48x128xbf16, #tpu.memory_space<vmem>>, vector<16x16x128xbf16>
    %68 = vector.shape_cast %67 : vector<16x16x128xbf16> to vector<256x128xbf16>
    %69 = tpu.concatenate %52, %54, %56, %58, %60, %62, %64, %66, %68 in 1 : vector<256x128xbf16>, vector<256x128xbf16>, vector<256x128xbf16>, vector<256x128xbf16>, vector<256x128xbf16>, vector<256x128xbf16>, vector<256x128xbf16>, vector<256x128xbf16>, vector<256x128xbf16> -> vector<256x1152xbf16>
    %c0_86 = arith.constant 0 : index
    %c0_87 = arith.constant 0 : index
    %70 = vector.load %arg6[%c0_86, %c0_87] : memref<1152x128xbf16, #tpu.memory_space<vmem>>, vector<1152x128xbf16>
    %cst_88 = arith.constant dense<0.000000e+00> : vector<256x128xf32>
    %71 = tpu.matmul %69, %70, %cst_88 {dimension_numbers = #tpu.dot_dimension_numbers<[1], [0], [0], [1], [0, 0, 1, 1], [], []>} : vector<256x1152xbf16>, vector<1152x128xbf16>, vector<256x128xf32> -> vector<256x128xf32>
    %c0_89 = arith.constant 0 : index
    %c0_90 = arith.constant 0 : index
    %72 = vector.load %arg7[%c0_89, %c0_90] : memref<1x128xf32, #tpu.memory_space<vmem>>, vector<1x128xf32>
    %73 = vector.broadcast %72 : vector<1x128xf32> to vector<256x128xf32>
    %74 = arith.mulf %71, %73 : vector<256x128xf32>
    %c0_91 = arith.constant 0 : index
    %c0_92 = arith.constant 0 : index
    %75 = vector.load %arg8[%c0_91, %c0_92] : memref<1x128xf32, #tpu.memory_space<vmem>>, vector<1x128xf32>
    %76 = vector.broadcast %75 : vector<1x128xf32> to vector<256x128xf32>
    %77 = arith.addf %74, %76 : vector<256x128xf32>
    %78 = vector.shape_cast %77 : vector<256x128xf32> to vector<16x16x128xf32>
    %c0_93 = arith.constant 0 : index
    %c0_94 = arith.constant 0 : index
    %c2_95 = arith.constant 2 : index
    %c1_96 = arith.constant 1 : index
    %c0_97 = arith.constant 0 : index
    %79 = vector.load %arg2[%c0_93, %c0_94, %c2_95, %c1_96, %c0_97] : memref<1x1x20x18x128xbf16, #tpu.memory_space<vmem>>, vector<1x1x16x16x128xbf16>
    %80 = vector.shape_cast %79 : vector<1x1x16x16x128xbf16> to vector<16x16x128xbf16>
    %81 = arith.extf %80 : vector<16x16x128xbf16> to vector<16x16x128xf32>
    %82 = arith.addf %78, %81 : vector<16x16x128xf32>
    %cst_98 = arith.constant 0.000000e+00 : f32
    %83 = vector.broadcast %cst_98 : f32 to vector<16x16x128xf32>
    %84 = arith.maximumf %82, %83 : vector<16x16x128xf32>
    %85 = arith.truncf %84 : vector<16x16x128xf32> to vector<16x16x128xbf16>
    %c0_99 = arith.constant 0 : index
    %c0_100 = arith.constant 0 : index
    %c0_101 = arith.constant 0 : index
    %c0_102 = arith.constant 0 : index
    %86 = vector.load %arg9[%c0_99, %c0_100, %c0_101, %c0_102] : memref<1x16x16x128xbf16, #tpu.memory_space<vmem>>, vector<1x16x16x128xbf16>
    %87 = vector.shape_cast %86 : vector<1x16x16x128xbf16> to vector<16x16x128xbf16>
    %88 = vector.shape_cast %85 : vector<16x16x128xbf16> to vector<1x16x16x128xbf16>
    tpu.vector_store %arg9[%c0_99, %c0_100, %c0_101, %c0_102], %88 {strides = array<i32>} : memref<1x16x16x128xbf16, #tpu.memory_space<vmem>>, vector<1x16x16x128xbf16>,
    return
  }
  func.func @transform_0(%arg0: i32, %arg1: i32) -> (i32, i32, i32, i32, i32) {
    %c0_i32 = arith.constant 0 : i32
    %c0_i32_0 = arith.constant 0 : i32
    %c0_i32_1 = arith.constant 0 : i32
    %c0_i32_2 = arith.constant 0 : i32
    return %arg0, %arg1, %c0_i32, %c0_i32_0, %c0_i32_1 : i32, i32, i32, i32, i32
  }
  func.func @transform_1(%arg0: i32, %arg1: i32) -> (i32, i32) {
    %c0_i32 = arith.constant 0 : i32
    %c0_i32_0 = arith.constant 0 : i32
    %c0_i32_1 = arith.constant 0 : i32
    return %c0_i32, %c0_i32_0 : i32, i32
  }
  func.func @transform_2(%arg0: i32, %arg1: i32) -> (i32, i32) {
    %c0_i32 = arith.constant 0 : i32
    %c0_i32_0 = arith.constant 0 : i32
    %c0_i32_1 = arith.constant 0 : i32
    return %c0_i32, %c0_i32_0 : i32, i32
  }
  func.func @transform_3(%arg0: i32, %arg1: i32) -> (i32, i32) {
    %c0_i32 = arith.constant 0 : i32
    %c0_i32_0 = arith.constant 0 : i32
    %c0_i32_1 = arith.constant 0 : i32
    return %c0_i32, %c0_i32_0 : i32, i32
  }
  func.func @transform_4(%arg0: i32, %arg1: i32) -> (i32, i32) {
    %c0_i32 = arith.constant 0 : i32
    %c0_i32_0 = arith.constant 0 : i32
    %c0_i32_1 = arith.constant 0 : i32
    return %c0_i32, %c0_i32_0 : i32, i32
  }
  func.func @transform_5(%arg0: i32, %arg1: i32) -> (i32, i32) {
    %c0_i32 = arith.constant 0 : i32
    %c0_i32_0 = arith.constant 0 : i32
    %c0_i32_1 = arith.constant 0 : i32
    return %c0_i32, %c0_i32_0 : i32, i32
  }
  func.func @transform_6(%arg0: i32, %arg1: i32) -> (i32, i32) {
    %c0_i32 = arith.constant 0 : i32
    %c0_i32_0 = arith.constant 0 : i32
    %c0_i32_1 = arith.constant 0 : i32
    return %c0_i32, %c0_i32_0 : i32, i32
  }
  func.func @transform_7(%arg0: i32, %arg1: i32) -> (i32, i32, i32, i32) {
    %c0_i32 = arith.constant 0 : i32
    %c0_i32_0 = arith.constant 0 : i32
    %c0_i32_1 = arith.constant 0 : i32
    return %arg0, %arg1, %c0_i32, %c0_i32_0 : i32, i32, i32, i32
  }
}

</mosaic_0001>

<llo_original>
// kernel: basic_block_forward.1
$region0: #{basic_block_forward.1}
  #allocation0 [shape = 'u32[]', space=smem, size = 0x4, offset = 0x4, fixed_abs, tag = 'smem constant byte address 0x4 - core index']
  #allocation1 [shape = 'u32[72,128]{1,0:T(1,128)}', space=vmem, size = 0x9000, scoped, tag = 'internal scratch']
  #allocation2 [shape = 'bf16[18,48,128]{2,1,0:T(8,128)(2,1)}', space=vmem, size = 0x36000, scoped, tag = 'scratch operand']
  %s0 = inlined_call_operand.vmem [shape: bf16[2,1,20,18,128], index: 0, kind: input, shape index: {}]
  %s1 = inlined_call_operand.vmem [shape: bf16[1152,128], index: 1, kind: input, shape index: {}]
  %s2 = inlined_call_operand.vmem [shape: f32[1,128], index: 2, kind: input, shape index: {}]
  %s3 = inlined_call_operand.vmem [shape: f32[1,128], index: 3, kind: input, shape index: {}]
  %s4 = inlined_call_operand.vmem [shape: bf16[1152,128], index: 4, kind: input, shape index: {}]
  %s5 = inlined_call_operand.vmem [shape: f32[1,128], index: 5, kind: input, shape index: {}]
  %s6 = inlined_call_operand.vmem [shape: f32[1,128], index: 6, kind: input, shape index: {}]
  %s7 = inlined_call_operand.vmem [shape: bf16[2,16,16,128], index: 7, kind: output, shape index: {}]
  %s8 = sld [smem:[#allocation0]]
  $region65: #{basic_block_forward.1} parent=0
    _
  %s10 = ssub.s32 1, %s8
  %s11 = scalar_select 0, %s10, %s8
  loop: start=0, step=1, limit=4
  $region2: #{basic_block_forward.1} parent=0 // loop_pre_header
    _
  $region3: #{basic_block_forward.1} parent=0 // loop_header
    %s13 = sphi 0, %s17
    %p14 = scmp.ge.s32.totalorder %s13, 4
    %s20 = sphi 0, %s32
    %s21 = sphi 0, %s28
    %s22 = sphi 0, %s20
    %s23 = sphi 0, %s21
    %s24 = sphi 0, %s22
    %s25 = sphi 0, %s23
    %s37 = sphi 0, %s39
    %s40 = sphi 0, %s37
    %s41 = sphi 0, %s40
    %s57 = sphi 0, %s41
    %s61 = sphi 0, %s61
    %s63 = sphi 0, %s61
    %s64 = sphi 0, %s63
    %s78 = sphi 0, %s64
    %s82 = sphi 0, %s82
    %s84 = sphi 0, %s82
    %s85 = sphi 0, %s84
    %s99 = sphi 0, %s85
    %s103 = sphi 0, %s103
    %s105 = sphi 0, %s103
    %s106 = sphi 0, %s105
    %s120 = sphi 0, %s106
    %s124 = sphi 0, %s124
    %s126 = sphi 0, %s124
    %s127 = sphi 0, %s126
    %s141 = sphi 0, %s127
    %s145 = sphi 0, %s145
    %s147 = sphi 0, %s145
    %s148 = sphi 0, %s147
    %s162 = sphi 0, %s148
    %s166 = sphi 0, %s166
    %s168 = sphi 0, %s166
    %s169 = sphi 0, %s168
    %s183 = sphi 0, %s169
    %s191 = sphi 0, %s193
    %s194 = sphi 0, %s191
    %s195 = sphi 0, %s194
    %s211 = sphi 0, %s195
  $region4: #{basic_block_forward.1} parent=0 // loop_header_branch
    %16 = sbr.rel (%p14) target = $region8
  $region5: #{basic_block_forward.1} parent=0 // loop_body
    %s18 = ssub.s32 %s13, 1
    %s19 = ssub.s32 %s13, 2
    %s26 = sadd.s32 1, %s21
    %p27 = scmp.ge.s32.totalorder %s26, 1
    %s28 = scalar_select %p27, 0, %s26
    %s29 = sadd.s32 1, %s20
    %s30 = scalar_select %p27, %s29, %s20
    %p31 = scmp.ge.s32.totalorder %s30, 2
    %s32 = scalar_select %p31, 0, %s30
    %s33 = ssub.s32 %s20, %s32
    %s34 = ssub.s32 %s21, %s28
    %s35 = sor.u32 %s33, %s34
    %p36 = scmp.eq.s32.totalorder %s35, 0
    %s38 = sadd.s32 %s37, 1
    %s39 = scalar_select %p36, %s37, %s38
    %p42 = pneg %p36
    %p43 = scmp.eq.s32.totalorder %s13, 1
    %p44 = por %p42, %p43
    %p45 = scmp.ne.s32.totalorder %s37, %s40
    %p46 = scmp.eq.s32.totalorder %s13, 0
    %p47 = por %p45, %p46
    %p48 = scmp.ne.s32.totalorder %s37, %s40
    %p49 = scmp.eq.s32.totalorder %s18, 1
    %p50 = por %p48, %p49
    %p51 = scmp.ne.s32.totalorder %s40, %s41
    %p52 = scmp.eq.s32.totalorder %s18, 0
    %p53 = por %p51, %p52
    %p54 = scmp.ne.s32.totalorder %s40, %s41
    %p55 = scmp.eq.s32.totalorder %s19, 1
    %p56 = por %p54, %p55
    %p58 = scmp.ne.s32.totalorder %s41, %s57
    %p59 = scmp.eq.s32.totalorder %s19, 0
    %p60 = por %p58, %p59
    %s62 = sadd.s32 %s61, 1
    %p65 = scmp.eq.s32.totalorder %s13, 1
    %p66 = scmp.ne.s32.totalorder %s61, %s63
    %p67 = scmp.eq.s32.totalorder %s13, 0
    %p68 = por %p66, %p67
    %p69 = scmp.ne.s32.totalorder %s61, %s63
    %p70 = scmp.eq.s32.totalorder %s18, 1
    %p71 = por %p69, %p70
    %p72 = scmp.ne.s32.totalorder %s63, %s64
    %p73 = scmp.eq.s32.totalorder %s18, 0
    %p74 = por %p72, %p73
    %p75 = scmp.ne.s32.totalorder %s63, %s64
    %p76 = scmp.eq.s32.totalorder %s19, 1
    %p77 = por %p75, %p76
    %p79 = scmp.ne.s32.totalorder %s64, %s78
    %p80 = scmp.eq.s32.totalorder %s19, 0
    %p81 = por %p79, %p80
    %s83 = sadd.s32 %s82, 1
    %p86 = scmp.eq.s32.totalorder %s13, 1
    %p87 = scmp.ne.s32.totalorder %s82, %s84
    %p88 = scmp.eq.s32.totalorder %s13, 0
    %p89 = por %p87, %p88
    %p90 = scmp.ne.s32.totalorder %s82, %s84
    %p91 = scmp.eq.s32.totalorder %s18, 1
    %p92 = por %p90, %p91
    %p93 = scmp.ne.s32.totalorder %s84, %s85
    %p94 = scmp.eq.s32.totalorder %s18, 0
    %p95 = por %p93, %p94
    %p96 = scmp.ne.s32.totalorder %s84, %s85
    %p97 = scmp.eq.s32.totalorder %s19, 1
    %p98 = por %p96, %p97
    %p100 = scmp.ne.s32.totalorder %s85, %s99
    %p101 = scmp.eq.s32.totalorder %s19, 0
    %p102 = por %p100, %p101
    %s104 = sadd.s32 %s103, 1
    %p107 = scmp.eq.s32.totalorder %s13, 1
    %p108 = scmp.ne.s32.totalorder %s103, %s105
    %p109 = scmp.eq.s32.totalorder %s13, 0
    %p110 = por %p108, %p109
    %p111 = scmp.ne.s32.totalorder %s103, %s105
    %p112 = scmp.eq.s32.totalorder %s18, 1
    %p113 = por %p111, %p112
    %p114 = scmp.ne.s32.totalorder %s105, %s106
    %p115 = scmp.eq.s32.totalorder %s18, 0
    %p116 = por %p114, %p115
    %p117 = scmp.ne.s32.totalorder %s105, %s106
    %p118 = scmp.eq.s32.totalorder %s19, 1
    %p119 = por %p117, %p118
    %p121 = scmp.ne.s32.totalorder %s106, %s120
    %p122 = scmp.eq.s32.totalorder %s19, 0
    %p123 = por %p121, %p122
    %s125 = sadd.s32 %s124, 1
    %p128 = scmp.eq.s32.totalorder %s13, 1
    %p129 = scmp.ne.s32.totalorder %s124, %s126
    %p130 = scmp.eq.s32.totalorder %s13, 0
    %p131 = por %p129, %p130
    %p132 = scmp.ne.s32.totalorder %s124, %s126
    %p133 = scmp.eq.s32.totalorder %s18, 1
    %p134 = por %p132, %p133
    %p135 = scmp.ne.s32.totalorder %s126, %s127
    %p136 = scmp.eq.s32.totalorder %s18, 0
    %p137 = por %p135, %p136
    %p138 = scmp.ne.s32.totalorder %s126, %s127
    %p139 = scmp.eq.s32.totalorder %s19, 1
    %p140 = por %p138, %p139
    %p142 = scmp.ne.s32.totalorder %s127, %s141
    %p143 = scmp.eq.s32.totalorder %s19, 0
    %p144 = por %p142, %p143
    %s146 = sadd.s32 %s145, 1
    %p149 = scmp.eq.s32.totalorder %s13, 1
    %p150 = scmp.ne.s32.totalorder %s145, %s147
    %p151 = scmp.eq.s32.totalorder %s13, 0
    %p152 = por %p150, %p151
    %p153 = scmp.ne.s32.totalorder %s145, %s147
    %p154 = scmp.eq.s32.totalorder %s18, 1
    %p155 = por %p153, %p154
    %p156 = scmp.ne.s32.totalorder %s147, %s148
    %p157 = scmp.eq.s32.totalorder %s18, 0
    %p158 = por %p156, %p157
    %p159 = scmp.ne.s32.totalorder %s147, %s148
    %p160 = scmp.eq.s32.totalorder %s19, 1
    %p161 = por %p159, %p160
    %p163 = scmp.ne.s32.totalorder %s148, %s162
    %p164 = scmp.eq.s32.totalorder %s19, 0
    %p165 = por %p163, %p164
    %s167 = sadd.s32 %s166, 1
    %p170 = scmp.eq.s32.totalorder %s13, 1
    %p171 = scmp.ne.s32.totalorder %s166, %s168
    %p172 = scmp.eq.s32.totalorder %s13, 0
    %p173 = por %p171, %p172
    %p174 = scmp.ne.s32.totalorder %s166, %s168
    %p175 = scmp.eq.s32.totalorder %s18, 1
    %p176 = por %p174, %p175
    %p177 = scmp.ne.s32.totalorder %s168, %s169
    %p178 = scmp.eq.s32.totalorder %s18, 0
    %p179 = por %p177, %p178
    %p180 = scmp.ne.s32.totalorder %s168, %s169
    %p181 = scmp.eq.s32.totalorder %s19, 1
    %p182 = por %p180, %p181
    %p184 = scmp.ne.s32.totalorder %s169, %s183
    %p185 = scmp.eq.s32.totalorder %s19, 0
    %p186 = por %p184, %p185
    %s187 = ssub.s32 %s20, %s32
    %s188 = ssub.s32 %s21, %s28
    %s189 = sor.u32 %s187, %s188
    %p190 = scmp.eq.s32.totalorder %s189, 0
    %s192 = sadd.s32 %s191, 1
    %s193 = scalar_select %p190, %s191, %s192
    %p196 = pneg %p190
    %p197 = scmp.eq.s32.totalorder %s13, 1
    %p198 = por %p196, %p197
    %p199 = scmp.ne.s32.totalorder %s191, %s194
    %p200 = scmp.eq.s32.totalorder %s13, 0
    %p201 = por %p199, %p200
    %p202 = scmp.ne.s32.totalorder %s191, %s194
    %p203 = scmp.eq.s32.totalorder %s18, 1
    %p204 = por %p202, %p203
    %p205 = scmp.ne.s32.totalorder %s194, %s195
    %p206 = scmp.eq.s32.totalorder %s18, 0
    %p207 = por %p205, %p206
    %p208 = scmp.ne.s32.totalorder %s194, %s195
    %p209 = scmp.eq.s32.totalorder %s19, 1
    %p210 = por %p208, %p209
    %p212 = scmp.ne.s32.totalorder %s195, %s211
    %p213 = scmp.eq.s32.totalorder %s19, 0
    %p214 = por %p212, %p213
    %p215 = scmp.le.s32.totalorder 1, %s13
    %p216 = scmp.lt.s32.totalorder %s13, 3
    %p217 = pnand %p215, %p216
    %p218 = pneg %p217
    // Predicated region
    $region9: #{basic_block_forward.1} parent=5 // pred_check
      _
    $region10: #{basic_block_forward.1} parent=5 // pred_check_branch
      %220 = sbr.rel (%p217) target = $region12
    $region11: #{basic_block_forward.1} parent=5 // pred_region
      %s221 = ssub.s32 %s13, 1
      // Predicated region
      $region13: #{basic_block_forward.1} parent=11 // pred_check
        %p222 = pneg %p74
      $region14: #{basic_block_forward.1} parent=11 // pred_check_branch
        %224 = sbr.rel (%p222) target = $region16
      $region15: #{basic_block_forward.1} parent=11 // pred_region
        _
      $region16: #{basic_block_forward.1} parent=11 // pred_fallthru
        _
      // Predicated region
      $region17: #{basic_block_forward.1} parent=11 // pred_check
        %p225 = pneg %p95
      $region18: #{basic_block_forward.1} parent=11 // pred_check_branch
        %227 = sbr.rel (%p225) target = $region20
      $region19: #{basic_block_forward.1} parent=11 // pred_region
        _
      $region20: #{basic_block_forward.1} parent=11 // pred_fallthru
        _
      // Predicated region
      $region21: #{basic_block_forward.1} parent=11 // pred_check
        %p228 = pneg %p116
      $region22: #{basic_block_forward.1} parent=11 // pred_check_branch
        %230 = sbr.rel (%p228) target = $region24
      $region23: #{basic_block_forward.1} parent=11 // pred_region
        _
      $region24: #{basic_block_forward.1} parent=11 // pred_fallthru
        _
      // Predicated region
      $region25: #{basic_block_forward.1} parent=11 // pred_check
        %p231 = pneg %p137
      $region26: #{basic_block_forward.1} parent=11 // pred_check_branch
        %233 = sbr.rel (%p231) target = $region28
      $region27: #{basic_block_forward.1} parent=11 // pred_region
        _
      $region28: #{basic_block_forward.1} parent=11 // pred_fallthru
        _
      // Predicated region
      $region29: #{basic_block_forward.1} parent=11 // pred_check
        %p234 = pneg %p158
      $region30: #{basic_block_forward.1} parent=11 // pred_check_branch
        %236 = sbr.rel (%p234) target = $region32
      $region31: #{basic_block_forward.1} parent=11 // pred_region
        _
      $region32: #{basic_block_forward.1} parent=11 // pred_fallthru
        _
      // Predicated region
      $region33: #{basic_block_forward.1} parent=11 // pred_check
        %p237 = pneg %p179
      $region34: #{basic_block_forward.1} parent=11 // pred_check_branch
        %239 = sbr.rel (%p237) target = $region36
      $region35: #{basic_block_forward.1} parent=11 // pred_region
        _
      $region36: #{basic_block_forward.1} parent=11 // pred_fallthru
        _
    $region12: #{basic_block_forward.1} parent=5 // pred_fallthru
      _
    %p240 = scmp.lt.s32.totalorder %s13, 2
    // Predicated region
    $region37: #{basic_block_forward.1} parent=5 // pred_check
      %p241 = pneg %p240
    $region38: #{basic_block_forward.1} parent=5 // pred_check_branch
      %243 = sbr.rel (%p241) target = $region40
    $region39: #{basic_block_forward.1} parent=5 // pred_region
      // Predicated region
      $region41: #{basic_block_forward.1} parent=39 // pred_check
        %p244 = pneg %p47
      $region42: #{basic_block_forward.1} parent=39 // pred_check_branch
        %246 = sbr.rel (%p244) target = $region44
      $region43: #{basic_block_forward.1} parent=39 // pred_region
        %p247 = scmp.lt.s32.totalorder %s20, 1
        %s248 = scalar_select %p247, %s20, 1
        %p249 = scmp.lt.s32.totalorder %s21, 0
        %s250 = scalar_select %p249, %s21, 0
        %s251 = smul.addr %s250, 60
        %s252 = smul.addr %s248, 60
        %s253 = sadd.s32 %s251, %s252
        %s254 = smul.addr %s253, 4
        %s255 = scalar_lea.vmem %s0, %s254
      $region44: #{basic_block_forward.1} parent=39 // pred_fallthru
        _
    $region40: #{basic_block_forward.1} parent=5 // pred_fallthru
      _
    %p256 = scmp.le.s32.totalorder 1, %s13
    %p257 = scmp.lt.s32.totalorder %s13, 3
    %p258 = pnand %p256, %p257
    %p259 = pneg %p258
    // Predicated region
    $region45: #{basic_block_forward.1} parent=5 // pred_check
      _
    $region46: #{basic_block_forward.1} parent=5 // pred_check_branch
      %261 = sbr.rel (%p258) target = $region48
    $region47: #{basic_block_forward.1} parent=5 // pred_region
      %s262 = ssub.s32 %s13, 1
      %p263 = scmp.lt.s32.totalorder %s22, 1
      %s264 = scalar_select %p263, %s22, 1
      %p265 = scmp.lt.s32.totalorder %s23, 0
      %s266 = scalar_select %p265, %s23, 0
      %s267 = smul.addr %s266, 60
      %s268 = smul.addr %s264, 60
      %s269 = sadd.s32 %s267, %s268
      %s270 = smul.addr %s269, 4
      %s271 = scalar_lea.vmem %s0, %s270
      %p272 = pneg %p53
      %p273 = pneg %p50
      %p274 = pneg %p74
      %p275 = pneg %p71
      %p276 = pneg %p95
      %p277 = pneg %p92
      %p278 = pneg %p116
      %p279 = pneg %p113
      %p280 = pneg %p137
      %p281 = pneg %p134
      %p282 = pneg %p158
      %p283 = pneg %p155
      %p284 = pneg %p179
      %p285 = pneg %p176
      %p286 = pneg %p207
      %p287 = pneg %p204
      %s288 = smul.u32 16, %s23
      %p289 = scmp.lt.s32.totalorder %s22, 1
      %s290 = scalar_select %p289, %s22, 1
      %p291 = scmp.lt.s32.totalorder %s288, 15
      %s292 = scalar_select %p291, %s288, 15
      %s293 = smul.addr %s292, 2
      %s294 = smul.addr %s290, 32
      %s295 = sadd.s32 %s293, %s294
      %s296 = smul.addr %s295, 4
      %s297 = scalar_lea.vmem %s7, %s296
      %p298 = scmp.lt.s32.totalorder %s22, 1
      %s299 = scalar_select %p298, %s22, 1
      %p300 = scmp.lt.s32.totalorder %s23, 0
      %s301 = scalar_select %p300, %s23, 0
      %s302 = smul.addr %s301, 60
      %s303 = smul.addr %s299, 60
      %s304 = sadd.s32 %s302, %s303
      %s305 = smul.addr %s304, 4
      %s306 = scalar_lea.vmem %s0, %s305
      %s307 = smul.u32 16, %s23
      %p308 = scmp.lt.s32.totalorder %s22, 1
      %s309 = scalar_select %p308, %s22, 1
      %p310 = scmp.lt.s32.totalorder %s307, 15
      %s311 = scalar_select %p310, %s307, 15
      %s312 = smul.addr %s311, 2
      %s313 = smul.addr %s309, 32
      %s314 = sadd.s32 %s312, %s313
      %s315 = smul.addr %s314, 4
      %s316 = scalar_lea.vmem %s7, %s315
      %s317 = smul.u32 16, %s23
      %v319 = vld [vmem:[%s306] sm:$0xf]
      %v320 = vld [vmem:[%s306 + $0x4] sm:$0xf]
      %v321 = vld [vmem:[%s306 + $0xc] sm:$0xf]
      %v322 = vld [vmem:[%s306 + $0x10] sm:$0xf]
      %v323 = vld [vmem:[%s306 + $0x18] sm:$0xf]
      %v324 = vld [vmem:[%s306 + $0x1c] sm:$0xf]
      %v325 = vld [vmem:[%s306 + $0x24] sm:$0xf]
      %v326 = vld [vmem:[%s306 + $0x28] sm:$0xf]
      %v327 = vld [vmem:[%s306 + $0x30] sm:$0xf]
      %v328 = vld [vmem:[%s306 + $0x34] sm:$0xf]
      %v329 = vld [vmem:[%s306 + $0x3c] sm:$0xf]
      %v330 = vld [vmem:[%s306 + $0x40] sm:$0xf]
      %v331 = vld [vmem:[%s306 + $0x48] sm:$0xf]
      %v332 = vld [vmem:[%s306 + $0x4c] sm:$0xf]
      %v333 = vld [vmem:[%s306 + $0x54] sm:$0xf]
      %v334 = vld [vmem:[%s306 + $0x58] sm:$0xf]
      %v335 = vld [vmem:[%s306 + $0x60] sm:$0xf]
      %v336 = vld [vmem:[%s306 + $0x64] sm:$0xf]
      %v337 = vld [vmem:[%s306 + $0x6c] sm:$0xf]
      %v338 = vld [vmem:[%s306 + $0x70] sm:$0xf]
      %v339 = vld [vmem:[%s306 + $0x78] sm:$0xf]
      %v340 = vld [vmem:[%s306 + $0x7c] sm:$0xf]
      %v341 = vld [vmem:[%s306 + $0x84] sm:$0xf]
      %v342 = vld [vmem:[%s306 + $0x88] sm:$0xf]
      %v343 = vld [vmem:[%s306 + $0x90] sm:$0xf]
      %v344 = vld [vmem:[%s306 + $0x94] sm:$0xf]
      %v345 = vld [vmem:[%s306 + $0x9c] sm:$0xf]
      %v346 = vld [vmem:[%s306 + $0xa0] sm:$0xf]
      %v347 = vld [vmem:[%s306 + $0xa8] sm:$0xf]
      %v348 = vld [vmem:[%s306 + $0xac] sm:$0xf]
      %v349 = vld [vmem:[%s306 + $0xb4] sm:$0xf]
      %v350 = vld [vmem:[%s306 + $0xb8] sm:$0xf]
      %v351 = vld [vmem:[%s306 + $0xc0] sm:$0xf]
      %v352 = vld [vmem:[%s306 + $0xc4] sm:$0xf]
      %v353 = vld [vmem:[%s306 + $0xcc] sm:$0xf]
      %v354 = vld [vmem:[%s306 + $0xd0] sm:$0xf]
      %v355 = vld [vmem:[%s306 + $0x8] sm:$0x1]
      %v356 = vld [vmem:[%s306 + $0x14] sm:$0x1]
      %v357 = vld [vmem:[%s306 + $0x20] sm:$0x1]
      %v358 = vld [vmem:[%s306 + $0x2c] sm:$0x1]
      %v359 = vld [vmem:[%s306 + $0x38] sm:$0x1]
      %v360 = vld [vmem:[%s306 + $0x44] sm:$0x1]
      %v361 = vld [vmem:[%s306 + $0x50] sm:$0x1]
      %v362 = vld [vmem:[%s306 + $0x5c] sm:$0x1]
      %v363 = vld [vmem:[%s306 + $0x68] sm:$0x1]
      %v364 = vld [vmem:[%s306 + $0x74] sm:$0x1]
      %v365 = vld [vmem:[%s306 + $0x80] sm:$0x1]
      %v366 = vld [vmem:[%s306 + $0x8c] sm:$0x1]
      %v367 = vld [vmem:[%s306 + $0x98] sm:$0x1]
      %v368 = vld [vmem:[%s306 + $0xa4] sm:$0x1]
      %v369 = vld [vmem:[%s306 + $0xb0] sm:$0x1]
      %v370 = vld [vmem:[%s306 + $0xbc] sm:$0x1]
      %v371 = vld [vmem:[%s306 + $0xc8] sm:$0x1]
      %v372 = vld [vmem:[%s306 + $0xd4] sm:$0x1]
      %vm373 = vsmask.f32 3328
      %vm374 = vsmask.f32 7440
      %vm375 = vmor %vm373, %vm374
      %v377 = vshrl.u32 %v319, 16
      %v379 = vrot.slane %v377, 4
      %v380 = vshll.u32 %v319, 16
      %v382 = vrot.slane %v380, 5
      %v383 = vor.u32 %v379, %v382
      %v384 = vrot.slane %v383, 4
      %v386 = vshll.u32 %v320, 16
      %v388 = vrot.slane %v386, 5
      %v389 = vsel %vm375, %v384, %v388
      %v390 = vshrl.u32 %v320, 16
      %v392 = vrot.slane %v390, 4
      %v393 = vor.u32 %v392, %v388
      %v394 = vrot.slane %v393, 4
      %v396 = vshll.u32 %v355, 16
      %v398 = vrot.slane %v396, 5
      %v399 = vsel %vm375, %v394, %v398
      %v401 = vshrl.u32 %v321, 16
      %v403 = vrot.slane %v401, 4
      %v404 = vshll.u32 %v321, 16
      %v406 = vrot.slane %v404, 5
      %v407 = vor.u32 %v403, %v406
      %v408 = vrot.slane %v407, 4
      %v410 = vshll.u32 %v322, 16
      %v412 = vrot.slane %v410, 5
      %v413 = vsel %vm375, %v408, %v412
      %v414 = vshrl.u32 %v322, 16
      %v416 = vrot.slane %v414, 4
      %v417 = vor.u32 %v416, %v412
      %v418 = vrot.slane %v417, 4
      %v420 = vshll.u32 %v356, 16
      %v422 = vrot.slane %v420, 5
      %v423 = vsel %vm375, %v418, %v422
      %v425 = vshrl.u32 %v323, 16
      %v427 = vrot.slane %v425, 4
      %v428 = vshll.u32 %v323, 16
      %v430 = vrot.slane %v428, 5
      %v431 = vor.u32 %v427, %v430
      %v432 = vrot.slane %v431, 4
      %v434 = vshll.u32 %v324, 16
      %v436 = vrot.slane %v434, 5
      %v437 = vsel %vm375, %v432, %v436
      %v438 = vshrl.u32 %v324, 16
      %v440 = vrot.slane %v438, 4
      %v441 = vor.u32 %v440, %v436
      %v442 = vrot.slane %v441, 4
      %v444 = vshll.u32 %v357, 16
      %v446 = vrot.slane %v444, 5
      %v447 = vsel %vm375, %v442, %v446
      %v449 = vshrl.u32 %v325, 16
      %v451 = vrot.slane %v449, 4
      %v452 = vshll.u32 %v325, 16
      %v454 = vrot.slane %v452, 5
      %v455 = vor.u32 %v451, %v454
      %v456 = vrot.slane %v455, 4
      %v458 = vshll.u32 %v326, 16
      %v460 = vrot.slane %v458, 5
      %v461 = vsel %vm375, %v456, %v460
      %v462 = vshrl.u32 %v326, 16
      %v464 = vrot.slane %v462, 4
      %v465 = vor.u32 %v464, %v460
      %v466 = vrot.slane %v465, 4
      %v468 = vshll.u32 %v358, 16
      %v470 = vrot.slane %v468, 5
      %v471 = vsel %vm375, %v466, %v470
      %v473 = vshrl.u32 %v327, 16
      %v475 = vrot.slane %v473, 4
      %v476 = vshll.u32 %v327, 16
      %v478 = vrot.slane %v476, 5
      %v479 = vor.u32 %v475, %v478
      %v480 = vrot.slane %v479, 4
      %v482 = vshll.u32 %v328, 16
      %v484 = vrot.slane %v482, 5
      %v485 = vsel %vm375, %v480, %v484
      %v486 = vshrl.u32 %v328, 16
      %v488 = vrot.slane %v486, 4
      %v489 = vor.u32 %v488, %v484
      %v490 = vrot.slane %v489, 4
      %v492 = vshll.u32 %v359, 16
      %v494 = vrot.slane %v492, 5
      %v495 = vsel %vm375, %v490, %v494
      %v497 = vshrl.u32 %v329, 16
      %v499 = vrot.slane %v497, 4
      %v500 = vshll.u32 %v329, 16
      %v502 = vrot.slane %v500, 5
      %v503 = vor.u32 %v499, %v502
      %v504 = vrot.slane %v503, 4
      %v506 = vshll.u32 %v330, 16
      %v508 = vrot.slane %v506, 5
      %v509 = vsel %vm375, %v504, %v508
      %v510 = vshrl.u32 %v330, 16
      %v512 = vrot.slane %v510, 4
      %v513 = vor.u32 %v512, %v508
      %v514 = vrot.slane %v513, 4
      %v516 = vshll.u32 %v360, 16
      %v518 = vrot.slane %v516, 5
      %v519 = vsel %vm375, %v514, %v518
      %v521 = vshrl.u32 %v331, 16
      %v523 = vrot.slane %v521, 4
      %v524 = vshll.u32 %v331, 16
      %v526 = vrot.slane %v524, 5
      %v527 = vor.u32 %v523, %v526
      %v528 = vrot.slane %v527, 4
      %v530 = vshll.u32 %v332, 16
      %v532 = vrot.slane %v530, 5
      %v533 = vsel %vm375, %v528, %v532
      %v534 = vshrl.u32 %v332, 16
      %v536 = vrot.slane %v534, 4
      %v537 = vor.u32 %v536, %v532
      %v538 = vrot.slane %v537, 4
      %v540 = vshll.u32 %v361, 16
      %v542 = vrot.slane %v540, 5
      %v543 = vsel %vm375, %v538, %v542
      %v545 = vshrl.u32 %v333, 16
      %v547 = vrot.slane %v545, 4
      %v548 = vshll.u32 %v333, 16
      %v550 = vrot.slane %v548, 5
      %v551 = vor.u32 %v547, %v550
      %v552 = vrot.slane %v551, 4
      %v554 = vshll.u32 %v334, 16
      %v556 = vrot.slane %v554, 5
      %v557 = vsel %vm375, %v552, %v556
      %v558 = vshrl.u32 %v334, 16
      %v560 = vrot.slane %v558, 4
      %v561 = vor.u32 %v560, %v556
      %v562 = vrot.slane %v561, 4
      %v564 = vshll.u32 %v362, 16
      %v566 = vrot.slane %v564, 5
      %v567 = vsel %vm375, %v562, %v566
      %v569 = vshrl.u32 %v335, 16
      %v571 = vrot.slane %v569, 4
      %v572 = vshll.u32 %v335, 16
      %v574 = vrot.slane %v572, 5
      %v575 = vor.u32 %v571, %v574
      %v576 = vrot.slane %v575, 4
      %v578 = vshll.u32 %v336, 16
      %v580 = vrot.slane %v578, 5
      %v581 = vsel %vm375, %v576, %v580
      %v582 = vshrl.u32 %v336, 16
      %v584 = vrot.slane %v582, 4
      %v585 = vor.u32 %v584, %v580
      %v586 = vrot.slane %v585, 4
      %v588 = vshll.u32 %v363, 16
      %v590 = vrot.slane %v588, 5
      %v591 = vsel %vm375, %v586, %v590
      %v593 = vshrl.u32 %v337, 16
      %v595 = vrot.slane %v593, 4
      %v596 = vshll.u32 %v337, 16
      %v598 = vrot.slane %v596, 5
      %v599 = vor.u32 %v595, %v598
      %v600 = vrot.slane %v599, 4
      %v602 = vshll.u32 %v338, 16
      %v604 = vrot.slane %v602, 5
      %v605 = vsel %vm375, %v600, %v604
      %v606 = vshrl.u32 %v338, 16
      %v608 = vrot.slane %v606, 4
      %v609 = vor.u32 %v608, %v604
      %v610 = vrot.slane %v609, 4
      %v612 = vshll.u32 %v364, 16
      %v614 = vrot.slane %v612, 5
      %v615 = vsel %vm375, %v610, %v614
      %v617 = vshrl.u32 %v339, 16
      %v619 = vrot.slane %v617, 4
      %v620 = vshll.u32 %v339, 16
      %v622 = vrot.slane %v620, 5
      %v623 = vor.u32 %v619, %v622
      %v624 = vrot.slane %v623, 4
      %v626 = vshll.u32 %v340, 16
      %v628 = vrot.slane %v626, 5
      %v629 = vsel %vm375, %v624, %v628
      %v630 = vshrl.u32 %v340, 16
      %v632 = vrot.slane %v630, 4
      %v633 = vor.u32 %v632, %v628
      %v634 = vrot.slane %v633, 4
      %v636 = vshll.u32 %v365, 16
      %v638 = vrot.slane %v636, 5
      %v639 = vsel %vm375, %v634, %v638
      %v641 = vshrl.u32 %v341, 16
      %v643 = vrot.slane %v641, 4
      %v644 = vshll.u32 %v341, 16
      %v646 = vrot.slane %v644, 5
      %v647 = vor.u32 %v643, %v646
      %v648 = vrot.slane %v647, 4
      %v650 = vshll.u32 %v342, 16
      %v652 = vrot.slane %v650, 5
      %v653 = vsel %vm375, %v648, %v652
      %v654 = vshrl.u32 %v342, 16
      %v656 = vrot.slane %v654, 4
      %v657 = vor.u32 %v656, %v652
      %v658 = vrot.slane %v657, 4
      %v660 = vshll.u32 %v366, 16
      %v662 = vrot.slane %v660, 5
      %v663 = vsel %vm375, %v658, %v662
      %v665 = vshrl.u32 %v343, 16
      %v667 = vrot.slane %v665, 4
      %v668 = vshll.u32 %v343, 16
      %v670 = vrot.slane %v668, 5
      %v671 = vor.u32 %v667, %v670
      %v672 = vrot.slane %v671, 4
      %v674 = vshll.u32 %v344, 16
      %v676 = vrot.slane %v674, 5
      %v677 = vsel %vm375, %v672, %v676
      %v678 = vshrl.u32 %v344, 16
      %v680 = vrot.slane %v678, 4
      %v681 = vor.u32 %v680, %v676
      %v682 = vrot.slane %v681, 4
      %v684 = vshll.u32 %v367, 16
      %v686 = vrot.slane %v684, 5
      %v687 = vsel %vm375, %v682, %v686
      %v689 = vshrl.u32 %v345, 16
      %v691 = vrot.slane %v689, 4
      %v692 = vshll.u32 %v345, 16
      %v694 = vrot.slane %v692, 5
      %v695 = vor.u32 %v691, %v694
      %v696 = vrot.slane %v695, 4
      %v698 = vshll.u32 %v346, 16
      %v700 = vrot.slane %v698, 5
      %v701 = vsel %vm375, %v696, %v700
      %v702 = vshrl.u32 %v346, 16
      %v704 = vrot.slane %v702, 4
      %v705 = vor.u32 %v704, %v700
      %v706 = vrot.slane %v705, 4
      %v708 = vshll.u32 %v368, 16
      %v710 = vrot.slane %v708, 5
      %v711 = vsel %vm375, %v706, %v710
      %v713 = vshrl.u32 %v347, 16
      %v715 = vrot.slane %v713, 4
      %v716 = vshll.u32 %v347, 16
      %v718 = vrot.slane %v716, 5
      %v719 = vor.u32 %v715, %v718
      %v720 = vrot.slane %v719, 4
      %v722 = vshll.u32 %v348, 16
      %v724 = vrot.slane %v722, 5
      %v725 = vsel %vm375, %v720, %v724
      %v726 = vshrl.u32 %v348, 16
      %v728 = vrot.slane %v726, 4
      %v729 = vor.u32 %v728, %v724
      %v730 = vrot.slane %v729, 4
      %v732 = vshll.u32 %v369, 16
      %v734 = vrot.slane %v732, 5
      %v735 = vsel %vm375, %v730, %v734
      %v737 = vshrl.u32 %v349, 16
      %v739 = vrot.slane %v737, 4
      %v740 = vshll.u32 %v349, 16
      %v742 = vrot.slane %v740, 5
      %v743 = vor.u32 %v739, %v742
      %v744 = vrot.slane %v743, 4
      %v746 = vshll.u32 %v350, 16
      %v748 = vrot.slane %v746, 5
      %v749 = vsel %vm375, %v744, %v748
      %v750 = vshrl.u32 %v350, 16
      %v752 = vrot.slane %v750, 4
      %v753 = vor.u32 %v752, %v748
      %v754 = vrot.slane %v753, 4
      %v756 = vshll.u32 %v370, 16
      %v758 = vrot.slane %v756, 5
      %v759 = vsel %vm375, %v754, %v758
      %v761 = vshrl.u32 %v351, 16
      %v763 = vrot.slane %v761, 4
      %v764 = vshll.u32 %v351, 16
      %v766 = vrot.slane %v764, 5
      %v767 = vor.u32 %v763, %v766
      %v768 = vrot.slane %v767, 4
      %v770 = vshll.u32 %v352, 16
      %v772 = vrot.slane %v770, 5
      %v773 = vsel %vm375, %v768, %v772
      %v774 = vshrl.u32 %v352, 16
      %v776 = vrot.slane %v774, 4
      %v777 = vor.u32 %v776, %v772
      %v778 = vrot.slane %v777, 4
      %v780 = vshll.u32 %v371, 16
      %v782 = vrot.slane %v780, 5
      %v783 = vsel %vm375, %v778, %v782
      %v785 = vshrl.u32 %v353, 16
      %v787 = vrot.slane %v785, 4
      %v788 = vshll.u32 %v353, 16
      %v790 = vrot.slane %v788, 5
      %v791 = vor.u32 %v787, %v790
      %v792 = vrot.slane %v791, 4
      %v794 = vshll.u32 %v354, 16
      %v796 = vrot.slane %v794, 5
      %v797 = vsel %vm375, %v792, %v796
      %v798 = vshrl.u32 %v354, 16
      %v800 = vrot.slane %v798, 4
      %v801 = vor.u32 %v800, %v796
      %v802 = vrot.slane %v801, 4
      %v804 = vshll.u32 %v372, 16
      %v806 = vrot.slane %v804, 5
      %v807 = vsel %vm375, %v802, %v806
      %v808 = vld [vmem:[%s306] sm:$0xe]
      %v809 = vld [vmem:[%s306 + $0xc] sm:$0xe]
      %v810 = vld [vmem:[%s306 + $0x18] sm:$0xe]
      %v811 = vld [vmem:[%s306 + $0x24] sm:$0xe]
      %v812 = vld [vmem:[%s306 + $0x30] sm:$0xe]
      %v813 = vld [vmem:[%s306 + $0x3c] sm:$0xe]
      %v814 = vld [vmem:[%s306 + $0x48] sm:$0xe]
      %v815 = vld [vmem:[%s306 + $0x54] sm:$0xe]
      %v816 = vld [vmem:[%s306 + $0x60] sm:$0xe]
      %v817 = vld [vmem:[%s306 + $0x6c] sm:$0xe]
      %v818 = vld [vmem:[%s306 + $0x78] sm:$0xe]
      %v819 = vld [vmem:[%s306 + $0x84] sm:$0xe]
      %v820 = vld [vmem:[%s306 + $0x90] sm:$0xe]
      %v821 = vld [vmem:[%s306 + $0x9c] sm:$0xe]
      %v822 = vld [vmem:[%s306 + $0xa8] sm:$0xe]
      %v823 = vld [vmem:[%s306 + $0xb4] sm:$0xe]
      %v824 = vld [vmem:[%s306 + $0xc0] sm:$0xe]
      %v825 = vld [vmem:[%s306 + $0xcc] sm:$0xe]
      %vm880 = vcmask 1042432
      %vm881 = vcmask 1046532
      %vm882 = vmor %vm880, %vm881
      %v883 = vrot.slane %v808, 5
      %v884 = vrot.slane %v883, 4
      %v885 = vrot.slane %v320, 5
      %v886 = vsel %vm882, %v884, %v885
      %v887 = vrot.slane %v885, 4
      %v888 = vrot.slane %v355, 5
      %v889 = vsel %vm882, %v887, %v888
      %v890 = vrot.slane %v809, 5
      %v891 = vrot.slane %v890, 4
      %v892 = vrot.slane %v322, 5
      %v893 = vsel %vm882, %v891, %v892
      %v894 = vrot.slane %v892, 4
      %v895 = vrot.slane %v356, 5
      %v896 = vsel %vm882, %v894, %v895
      %v897 = vrot.slane %v810, 5
      %v898 = vrot.slane %v897, 4
      %v899 = vrot.slane %v324, 5
      %v900 = vsel %vm882, %v898, %v899
      %v901 = vrot.slane %v899, 4
      %v902 = vrot.slane %v357, 5
      %v903 = vsel %vm882, %v901, %v902
      %v904 = vrot.slane %v811, 5
      %v905 = vrot.slane %v904, 4
      %v906 = vrot.slane %v326, 5
      %v907 = vsel %vm882, %v905, %v906
      %v908 = vrot.slane %v906, 4
      %v909 = vrot.slane %v358, 5
      %v910 = vsel %vm882, %v908, %v909
      %v911 = vrot.slane %v812, 5
      %v912 = vrot.slane %v911, 4
      %v913 = vrot.slane %v328, 5
      %v914 = vsel %vm882, %v912, %v913
      %v915 = vrot.slane %v913, 4
      %v916 = vrot.slane %v359, 5
      %v917 = vsel %vm882, %v915, %v916
      %v918 = vrot.slane %v813, 5
      %v919 = vrot.slane %v918, 4
      %v920 = vrot.slane %v330, 5
      %v921 = vsel %vm882, %v919, %v920
      %v922 = vrot.slane %v920, 4
      %v923 = vrot.slane %v360, 5
      %v924 = vsel %vm882, %v922, %v923
      %v925 = vrot.slane %v814, 5
      %v926 = vrot.slane %v925, 4
      %v927 = vrot.slane %v332, 5
      %v928 = vsel %vm882, %v926, %v927
      %v929 = vrot.slane %v927, 4
      %v930 = vrot.slane %v361, 5
      %v931 = vsel %vm882, %v929, %v930
      %v932 = vrot.slane %v815, 5
      %v933 = vrot.slane %v932, 4
      %v934 = vrot.slane %v334, 5
      %v935 = vsel %vm882, %v933, %v934
      %v936 = vrot.slane %v934, 4
      %v937 = vrot.slane %v362, 5
      %v938 = vsel %vm882, %v936, %v937
      %v939 = vrot.slane %v816, 5
      %v940 = vrot.slane %v939, 4
      %v941 = vrot.slane %v336, 5
      %v942 = vsel %vm882, %v940, %v941
      %v943 = vrot.slane %v941, 4
      %v944 = vrot.slane %v363, 5
      %v945 = vsel %vm882, %v943, %v944
      %v946 = vrot.slane %v817, 5
      %v947 = vrot.slane %v946, 4
      %v948 = vrot.slane %v338, 5
      %v949 = vsel %vm882, %v947, %v948
      %v950 = vrot.slane %v948, 4
      %v951 = vrot.slane %v364, 5
      %v952 = vsel %vm882, %v950, %v951
      %v953 = vrot.slane %v818, 5
      %v954 = vrot.slane %v953, 4
      %v955 = vrot.slane %v340, 5
      %v956 = vsel %vm882, %v954, %v955
      %v957 = vrot.slane %v955, 4
      %v958 = vrot.slane %v365, 5
      %v959 = vsel %vm882, %v957, %v958
      %v960 = vrot.slane %v819, 5
      %v961 = vrot.slane %v960, 4
      %v962 = vrot.slane %v342, 5
      %v963 = vsel %vm882, %v961, %v962
      %v964 = vrot.slane %v962, 4
      %v965 = vrot.slane %v366, 5
      %v966 = vsel %vm882, %v964, %v965
      %v967 = vrot.slane %v820, 5
      %v968 = vrot.slane %v967, 4
      %v969 = vrot.slane %v344, 5
      %v970 = vsel %vm882, %v968, %v969
      %v971 = vrot.slane %v969, 4
      %v972 = vrot.slane %v367, 5
      %v973 = vsel %vm882, %v971, %v972
      %v974 = vrot.slane %v821, 5
      %v975 = vrot.slane %v974, 4
      %v976 = vrot.slane %v346, 5
      %v977 = vsel %vm882, %v975, %v976
      %v978 = vrot.slane %v976, 4
      %v979 = vrot.slane %v368, 5
      %v980 = vsel %vm882, %v978, %v979
      %v981 = vrot.slane %v822, 5
      %v982 = vrot.slane %v981, 4
      %v983 = vrot.slane %v348, 5
      %v984 = vsel %vm882, %v982, %v983
      %v985 = vrot.slane %v983, 4
      %v986 = vrot.slane %v369, 5
      %v987 = vsel %vm882, %v985, %v986
      %v988 = vrot.slane %v823, 5
      %v989 = vrot.slane %v988, 4
      %v990 = vrot.slane %v350, 5
      %v991 = vsel %vm882, %v989, %v990
      %v992 = vrot.slane %v990, 4
      %v993 = vrot.slane %v370, 5
      %v994 = vsel %vm882, %v992, %v993
      %v995 = vrot.slane %v824, 5
      %v996 = vrot.slane %v995, 4
      %v997 = vrot.slane %v352, 5
      %v998 = vsel %vm882, %v996, %v997
      %v999 = vrot.slane %v997, 4
      %v1000 = vrot.slane %v371, 5
      %v1001 = vsel %vm882, %v999, %v1000
      %v1002 = vrot.slane %v825, 5
      %v1003 = vrot.slane %v1002, 4
      %v1004 = vrot.slane %v354, 5
      %v1005 = vsel %vm882, %v1003, %v1004
      %v1006 = vrot.slane %v1004, 4
      %v1007 = vrot.slane %v372, 5
      %v1008 = vsel %vm882, %v1006, %v1007
      %s1009 = scalar_lea.vmem %s306, 12
      %v1010 = vld [vmem:[%s1009] sm:$0xf]
      %v1011 = vld [vmem:[%s1009 + $0x4] sm:$0xf]
      %v1012 = vld [vmem:[%s1009 + $0xc] sm:$0xf]
      %v1013 = vld [vmem:[%s1009 + $0x10] sm:$0xf]
      %v1014 = vld [vmem:[%s1009 + $0x18] sm:$0xf]
      %v1015 = vld [vmem:[%s1009 + $0x1c] sm:$0xf]
      %v1016 = vld [vmem:[%s1009 + $0x24] sm:$0xf]
      %v1017 = vld [vmem:[%s1009 + $0x28] sm:$0xf]
      %v1018 = vld [vmem:[%s1009 + $0x30] sm:$0xf]
      %v1019 = vld [vmem:[%s1009 + $0x34] sm:$0xf]
      %v1020 = vld [vmem:[%s1009 + $0x3c] sm:$0xf]
      %v1021 = vld [vmem:[%s1009 + $0x40] sm:$0xf]
      %v1022 = vld [vmem:[%s1009 + $0x48] sm:$0xf]
      %v1023 = vld [vmem:[%s1009 + $0x4c] sm:$0xf]
      %v1024 = vld [vmem:[%s1009 + $0x54] sm:$0xf]
      %v1025 = vld [vmem:[%s1009 + $0x58] sm:$0xf]
      %v1026 = vld [vmem:[%s1009 + $0x60] sm:$0xf]
      %v1027 = vld [vmem:[%s1009 + $0x64] sm:$0xf]
      %v1028 = vld [vmem:[%s1009 + $0x6c] sm:$0xf]
      %v1029 = vld [vmem:[%s1009 + $0x70] sm:$0xf]
      %v1030 = vld [vmem:[%s1009 + $0x78] sm:$0xf]
      %v1031 = vld [vmem:[%s1009 + $0x7c] sm:$0xf]
      %v1032 = vld [vmem:[%s1009 + $0x84] sm:$0xf]
      %v1033 = vld [vmem:[%s1009 + $0x88] sm:$0xf]
      %v1034 = vld [vmem:[%s1009 + $0x90] sm:$0xf]
      %v1035 = vld [vmem:[%s1009 + $0x94] sm:$0xf]
      %v1036 = vld [vmem:[%s1009 + $0x9c] sm:$0xf]
      %v1037 = vld [vmem:[%s1009 + $0xa0] sm:$0xf]
      %v1038 = vld [vmem:[%s1009 + $0xa8] sm:$0xf]
      %v1039 = vld [vmem:[%s1009 + $0xac] sm:$0xf]
      %v1040 = vld [vmem:[%s1009 + $0xb4] sm:$0xf]
      %v1041 = vld [vmem:[%s1009 + $0xb8] sm:$0xf]
      %v1042 = vld [vmem:[%s1009 + $0xc0] sm:$0xf]
      %v1043 = vld [vmem:[%s1009 + $0xc4] sm:$0xf]
      %v1044 = vld [vmem:[%s1009 + $0xcc] sm:$0xf]
      %v1045 = vld [vmem:[%s1009 + $0xd0] sm:$0xf]
      %v1046 = vld [vmem:[%s1009 + $0x8] sm:$0x1]
      %v1047 = vld [vmem:[%s1009 + $0x14] sm:$0x1]
      %v1048 = vld [vmem:[%s1009 + $0x20] sm:$0x1]
      %v1049 = vld [vmem:[%s1009 + $0x2c] sm:$0x1]
      %v1050 = vld [vmem:[%s1009 + $0x38] sm:$0x1]
      %v1051 = vld [vmem:[%s1009 + $0x44] sm:$0x1]
      %v1052 = vld [vmem:[%s1009 + $0x50] sm:$0x1]
      %v1053 = vld [vmem:[%s1009 + $0x5c] sm:$0x1]
      %v1054 = vld [vmem:[%s1009 + $0x68] sm:$0x1]
      %v1055 = vld [vmem:[%s1009 + $0x74] sm:$0x1]
      %v1056 = vld [vmem:[%s1009 + $0x80] sm:$0x1]
      %v1057 = vld [vmem:[%s1009 + $0x8c] sm:$0x1]
      %v1058 = vld [vmem:[%s1009 + $0x98] sm:$0x1]
      %v1059 = vld [vmem:[%s1009 + $0xa4] sm:$0x1]
      %v1060 = vld [vmem:[%s1009 + $0xb0] sm:$0x1]
      %v1061 = vld [vmem:[%s1009 + $0xbc] sm:$0x1]
      %v1062 = vld [vmem:[%s1009 + $0xc8] sm:$0x1]
      %v1063 = vld [vmem:[%s1009 + $0xd4] sm:$0x1]
      %v1065 = vshrl.u32 %v1010, 16
      %v1067 = vrot.slane %v1065, 4
      %v1068 = vshll.u32 %v1010, 16
      %v1070 = vrot.slane %v1068, 5
      %v1071 = vor.u32 %v1067, %v1070
      %v1072 = vrot.slane %v1071, 4
      %v1074 = vshll.u32 %v1011, 16
      %v1076 = vrot.slane %v1074, 5
      %v1077 = vsel %vm375, %v1072, %v1076
      %v1078 = vshrl.u32 %v1011, 16
      %v1080 = vrot.slane %v1078, 4
      %v1081 = vor.u32 %v1080, %v1076
      %v1082 = vrot.slane %v1081, 4
      %v1084 = vshll.u32 %v1046, 16
      %v1086 = vrot.slane %v1084, 5
      %v1087 = vsel %vm375, %v1082, %v1086
      %v1089 = vshrl.u32 %v1012, 16
      %v1091 = vrot.slane %v1089, 4
      %v1092 = vshll.u32 %v1012, 16
      %v1094 = vrot.slane %v1092, 5
      %v1095 = vor.u32 %v1091, %v1094
      %v1096 = vrot.slane %v1095, 4
      %v1098 = vshll.u32 %v1013, 16
      %v1100 = vrot.slane %v1098, 5
      %v1101 = vsel %vm375, %v1096, %v1100
      %v1102 = vshrl.u32 %v1013, 16
      %v1104 = vrot.slane %v1102, 4
      %v1105 = vor.u32 %v1104, %v1100
      %v1106 = vrot.slane %v1105, 4
      %v1108 = vshll.u32 %v1047, 16
      %v1110 = vrot.slane %v1108, 5
      %v1111 = vsel %vm375, %v1106, %v1110
      %v1113 = vshrl.u32 %v1014, 16
      %v1115 = vrot.slane %v1113, 4
      %v1116 = vshll.u32 %v1014, 16
      %v1118 = vrot.slane %v1116, 5
      %v1119 = vor.u32 %v1115, %v1118
      %v1120 = vrot.slane %v1119, 4
      %v1122 = vshll.u32 %v1015, 16
      %v1124 = vrot.slane %v1122, 5
      %v1125 = vsel %vm375, %v1120, %v1124
      %v1126 = vshrl.u32 %v1015, 16
      %v1128 = vrot.slane %v1126, 4
      %v1129 = vor.u32 %v1128, %v1124
      %v1130 = vrot.slane %v1129, 4
      %v1132 = vshll.u32 %v1048, 16
      %v1134 = vrot.slane %v1132, 5
      %v1135 = vsel %vm375, %v1130, %v1134
      %v1137 = vshrl.u32 %v1016, 16
      %v1139 = vrot.slane %v1137, 4
      %v1140 = vshll.u32 %v1016, 16
      %v1142 = vrot.slane %v1140, 5
      %v1143 = vor.u32 %v1139, %v1142
      %v1144 = vrot.slane %v1143, 4
      %v1146 = vshll.u32 %v1017, 16
      %v1148 = vrot.slane %v1146, 5
      %v1149 = vsel %vm375, %v1144, %v1148
      %v1150 = vshrl.u32 %v1017, 16
      %v1152 = vrot.slane %v1150, 4
      %v1153 = vor.u32 %v1152, %v1148
      %v1154 = vrot.slane %v1153, 4
      %v1156 = vshll.u32 %v1049, 16
      %v1158 = vrot.slane %v1156, 5
      %v1159 = vsel %vm375, %v1154, %v1158
      %v1161 = vshrl.u32 %v1018, 16
      %v1163 = vrot.slane %v1161, 4
      %v1164 = vshll.u32 %v1018, 16
      %v1166 = vrot.slane %v1164, 5
      %v1167 = vor.u32 %v1163, %v1166
      %v1168 = vrot.slane %v1167, 4
      %v1170 = vshll.u32 %v1019, 16
      %v1172 = vrot.slane %v1170, 5
      %v1173 = vsel %vm375, %v1168, %v1172
      %v1174 = vshrl.u32 %v1019, 16
      %v1176 = vrot.slane %v1174, 4
      %v1177 = vor.u32 %v1176, %v1172
      %v1178 = vrot.slane %v1177, 4
      %v1180 = vshll.u32 %v1050, 16
      %v1182 = vrot.slane %v1180, 5
      %v1183 = vsel %vm375, %v1178, %v1182
      %v1185 = vshrl.u32 %v1020, 16
      %v1187 = vrot.slane %v1185, 4
      %v1188 = vshll.u32 %v1020, 16
      %v1190 = vrot.slane %v1188, 5
      %v1191 = vor.u32 %v1187, %v1190
      %v1192 = vrot.slane %v1191, 4
      %v1194 = vshll.u32 %v1021, 16
      %v1196 = vrot.slane %v1194, 5
      %v1197 = vsel %vm375, %v1192, %v1196
      %v1198 = vshrl.u32 %v1021, 16
      %v1200 = vrot.slane %v1198, 4
      %v1201 = vor.u32 %v1200, %v1196
      %v1202 = vrot.slane %v1201, 4
      %v1204 = vshll.u32 %v1051, 16
      %v1206 = vrot.slane %v1204, 5
      %v1207 = vsel %vm375, %v1202, %v1206
      %v1209 = vshrl.u32 %v1022, 16
      %v1211 = vrot.slane %v1209, 4
      %v1212 = vshll.u32 %v1022, 16
      %v1214 = vrot.slane %v1212, 5
      %v1215 = vor.u32 %v1211, %v1214
      %v1216 = vrot.slane %v1215, 4
      %v1218 = vshll.u32 %v1023, 16
      %v1220 = vrot.slane %v1218, 5
      %v1221 = vsel %vm375, %v1216, %v1220
      %v1222 = vshrl.u32 %v1023, 16
      %v1224 = vrot.slane %v1222, 4
      %v1225 = vor.u32 %v1224, %v1220
      %v1226 = vrot.slane %v1225, 4
      %v1228 = vshll.u32 %v1052, 16
      %v1230 = vrot.slane %v1228, 5
      %v1231 = vsel %vm375, %v1226, %v1230
      %v1233 = vshrl.u32 %v1024, 16
      %v1235 = vrot.slane %v1233, 4
      %v1236 = vshll.u32 %v1024, 16
      %v1238 = vrot.slane %v1236, 5
      %v1239 = vor.u32 %v1235, %v1238
      %v1240 = vrot.slane %v1239, 4
      %v1242 = vshll.u32 %v1025, 16
      %v1244 = vrot.slane %v1242, 5
      %v1245 = vsel %vm375, %v1240, %v1244
      %v1246 = vshrl.u32 %v1025, 16
      %v1248 = vrot.slane %v1246, 4
      %v1249 = vor.u32 %v1248, %v1244
      %v1250 = vrot.slane %v1249, 4
      %v1252 = vshll.u32 %v1053, 16
      %v1254 = vrot.slane %v1252, 5
      %v1255 = vsel %vm375, %v1250, %v1254
      %v1257 = vshrl.u32 %v1026, 16
      %v1259 = vrot.slane %v1257, 4
      %v1260 = vshll.u32 %v1026, 16
      %v1262 = vrot.slane %v1260, 5
      %v1263 = vor.u32 %v1259, %v1262
      %v1264 = vrot.slane %v1263, 4
      %v1266 = vshll.u32 %v1027, 16
      %v1268 = vrot.slane %v1266, 5
      %v1269 = vsel %vm375, %v1264, %v1268
      %v1270 = vshrl.u32 %v1027, 16
      %v1272 = vrot.slane %v1270, 4
      %v1273 = vor.u32 %v1272, %v1268
      %v1274 = vrot.slane %v1273, 4
      %v1276 = vshll.u32 %v1054, 16
      %v1278 = vrot.slane %v1276, 5
      %v1279 = vsel %vm375, %v1274, %v1278
      %v1281 = vshrl.u32 %v1028, 16
      %v1283 = vrot.slane %v1281, 4
      %v1284 = vshll.u32 %v1028, 16
      %v1286 = vrot.slane %v1284, 5
      %v1287 = vor.u32 %v1283, %v1286
      %v1288 = vrot.slane %v1287, 4
      %v1290 = vshll.u32 %v1029, 16
      %v1292 = vrot.slane %v1290, 5
      %v1293 = vsel %vm375, %v1288, %v1292
      %v1294 = vshrl.u32 %v1029, 16
      %v1296 = vrot.slane %v1294, 4
      %v1297 = vor.u32 %v1296, %v1292
      %v1298 = vrot.slane %v1297, 4
      %v1300 = vshll.u32 %v1055, 16
      %v1302 = vrot.slane %v1300, 5
      %v1303 = vsel %vm375, %v1298, %v1302
      %v1305 = vshrl.u32 %v1030, 16
      %v1307 = vrot.slane %v1305, 4
      %v1308 = vshll.u32 %v1030, 16
      %v1310 = vrot.slane %v1308, 5
      %v1311 = vor.u32 %v1307, %v1310
      %v1312 = vrot.slane %v1311, 4
      %v1314 = vshll.u32 %v1031, 16
      %v1316 = vrot.slane %v1314, 5
      %v1317 = vsel %vm375, %v1312, %v1316
      %v1318 = vshrl.u32 %v1031, 16
      %v1320 = vrot.slane %v1318, 4
      %v1321 = vor.u32 %v1320, %v1316
      %v1322 = vrot.slane %v1321, 4
      %v1324 = vshll.u32 %v1056, 16
      %v1326 = vrot.slane %v1324, 5
      %v1327 = vsel %vm375, %v1322, %v1326
      %v1329 = vshrl.u32 %v1032, 16
      %v1331 = vrot.slane %v1329, 4
      %v1332 = vshll.u32 %v1032, 16
      %v1334 = vrot.slane %v1332, 5
      %v1335 = vor.u32 %v1331, %v1334
      %v1336 = vrot.slane %v1335, 4
      %v1338 = vshll.u32 %v1033, 16
      %v1340 = vrot.slane %v1338, 5
      %v1341 = vsel %vm375, %v1336, %v1340
      %v1342 = vshrl.u32 %v1033, 16
      %v1344 = vrot.slane %v1342, 4
      %v1345 = vor.u32 %v1344, %v1340
      %v1346 = vrot.slane %v1345, 4
      %v1348 = vshll.u32 %v1057, 16
      %v1350 = vrot.slane %v1348, 5
      %v1351 = vsel %vm375, %v1346, %v1350
      %v1353 = vshrl.u32 %v1034, 16
      %v1355 = vrot.slane %v1353, 4
      %v1356 = vshll.u32 %v1034, 16
      %v1358 = vrot.slane %v1356, 5
      %v1359 = vor.u32 %v1355, %v1358
      %v1360 = vrot.slane %v1359, 4
      %v1362 = vshll.u32 %v1035, 16
      %v1364 = vrot.slane %v1362, 5
      %v1365 = vsel %vm375, %v1360, %v1364
      %v1366 = vshrl.u32 %v1035, 16
      %v1368 = vrot.slane %v1366, 4
      %v1369 = vor.u32 %v1368, %v1364
      %v1370 = vrot.slane %v1369, 4
      %v1372 = vshll.u32 %v1058, 16
      %v1374 = vrot.slane %v1372, 5
      %v1375 = vsel %vm375, %v1370, %v1374
      %v1377 = vshrl.u32 %v1036, 16
      %v1379 = vrot.slane %v1377, 4
      %v1380 = vshll.u32 %v1036, 16
      %v1382 = vrot.slane %v1380, 5
      %v1383 = vor.u32 %v1379, %v1382
      %v1384 = vrot.slane %v1383, 4
      %v1386 = vshll.u32 %v1037, 16
      %v1388 = vrot.slane %v1386, 5
      %v1389 = vsel %vm375, %v1384, %v1388
      %v1390 = vshrl.u32 %v1037, 16
      %v1392 = vrot.slane %v1390, 4
      %v1393 = vor.u32 %v1392, %v1388
      %v1394 = vrot.slane %v1393, 4
      %v1396 = vshll.u32 %v1059, 16
      %v1398 = vrot.slane %v1396, 5
      %v1399 = vsel %vm375, %v1394, %v1398
      %v1401 = vshrl.u32 %v1038, 16
      %v1403 = vrot.slane %v1401, 4
      %v1404 = vshll.u32 %v1038, 16
      %v1406 = vrot.slane %v1404, 5
      %v1407 = vor.u32 %v1403, %v1406
      %v1408 = vrot.slane %v1407, 4
      %v1410 = vshll.u32 %v1039, 16
      %v1412 = vrot.slane %v1410, 5
      %v1413 = vsel %vm375, %v1408, %v1412
      %v1414 = vshrl.u32 %v1039, 16
      %v1416 = vrot.slane %v1414, 4
      %v1417 = vor.u32 %v1416, %v1412
      %v1418 = vrot.slane %v1417, 4
      %v1420 = vshll.u32 %v1060, 16
      %v1422 = vrot.slane %v1420, 5
      %v1423 = vsel %vm375, %v1418, %v1422
      %v1425 = vshrl.u32 %v1040, 16
      %v1427 = vrot.slane %v1425, 4
      %v1428 = vshll.u32 %v1040, 16
      %v1430 = vrot.slane %v1428, 5
      %v1431 = vor.u32 %v1427, %v1430
      %v1432 = vrot.slane %v1431, 4
      %v1434 = vshll.u32 %v1041, 16
      %v1436 = vrot.slane %v1434, 5
      %v1437 = vsel %vm375, %v1432, %v1436
      %v1438 = vshrl.u32 %v1041, 16
      %v1440 = vrot.slane %v1438, 4
      %v1441 = vor.u32 %v1440, %v1436
      %v1442 = vrot.slane %v1441, 4
      %v1444 = vshll.u32 %v1061, 16
      %v1446 = vrot.slane %v1444, 5
      %v1447 = vsel %vm375, %v1442, %v1446
      %v1449 = vshrl.u32 %v1042, 16
      %v1451 = vrot.slane %v1449, 4
      %v1452 = vshll.u32 %v1042, 16
      %v1454 = vrot.slane %v1452, 5
      %v1455 = vor.u32 %v1451, %v1454
      %v1456 = vrot.slane %v1455, 4
      %v1458 = vshll.u32 %v1043, 16
      %v1460 = vrot.slane %v1458, 5
      %v1461 = vsel %vm375, %v1456, %v1460
      %v1462 = vshrl.u32 %v1043, 16
      %v1464 = vrot.slane %v1462, 4
      %v1465 = vor.u32 %v1464, %v1460
      %v1466 = vrot.slane %v1465, 4
      %v1468 = vshll.u32 %v1062, 16
      %v1470 = vrot.slane %v1468, 5
      %v1471 = vsel %vm375, %v1466, %v1470
      %v1473 = vshrl.u32 %v1044, 16
      %v1475 = vrot.slane %v1473, 4
      %v1476 = vshll.u32 %v1044, 16
      %v1478 = vrot.slane %v1476, 5
      %v1479 = vor.u32 %v1475, %v1478
      %v1480 = vrot.slane %v1479, 4
      %v1482 = vshll.u32 %v1045, 16
      %v1484 = vrot.slane %v1482, 5
      %v1485 = vsel %vm375, %v1480, %v1484
      %v1486 = vshrl.u32 %v1045, 16
      %v1488 = vrot.slane %v1486, 4
      %v1489 = vor.u32 %v1488, %v1484
      %v1490 = vrot.slane %v1489, 4
      %v1492 = vshll.u32 %v1063, 16
      %v1494 = vrot.slane %v1492, 5
      %v1495 = vsel %vm375, %v1490, %v1494
      %v1496 = vld [vmem:[%s1009] sm:$0xe]
      %v1497 = vld [vmem:[%s1009 + $0xc] sm:$0xe]
      %v1498 = vld [vmem:[%s1009 + $0x18] sm:$0xe]
      %v1499 = vld [vmem:[%s1009 + $0x24] sm:$0xe]
      %v1500 = vld [vmem:[%s1009 + $0x30] sm:$0xe]
      %v1501 = vld [vmem:[%s1009 + $0x3c] sm:$0xe]
      %v1502 = vld [vmem:[%s1009 + $0x48] sm:$0xe]
      %v1503 = vld [vmem:[%s1009 + $0x54] sm:$0xe]
      %v1504 = vld [vmem:[%s1009 + $0x60] sm:$0xe]
      %v1505 = vld [vmem:[%s1009 + $0x6c] sm:$0xe]
      %v1506 = vld [vmem:[%s1009 + $0x78] sm:$0xe]
      %v1507 = vld [vmem:[%s1009 + $0x84] sm:$0xe]
      %v1508 = vld [vmem:[%s1009 + $0x90] sm:$0xe]
      %v1509 = vld [vmem:[%s1009 + $0x9c] sm:$0xe]
      %v1510 = vld [vmem:[%s1009 + $0xa8] sm:$0xe]
      %v1511 = vld [vmem:[%s1009 + $0xb4] sm:$0xe]
      %v1512 = vld [vmem:[%s1009 + $0xc0] sm:$0xe]
      %v1513 = vld [vmem:[%s1009 + $0xcc] sm:$0xe]
      %v1568 = vrot.slane %v1496, 5
      %v1569 = vrot.slane %v1568, 4
      %v1570 = vrot.slane %v1011, 5
      %v1571 = vsel %vm882, %v1569, %v1570
      %v1572 = vrot.slane %v1570, 4
      %v1573 = vrot.slane %v1046, 5
      %v1574 = vsel %vm882, %v1572, %v1573
      %v1575 = vrot.slane %v1497, 5
      %v1576 = vrot.slane %v1575, 4
      %v1577 = vrot.slane %v1013, 5
      %v1578 = vsel %vm882, %v1576, %v1577
      %v1579 = vrot.slane %v1577, 4
      %v1580 = vrot.slane %v1047, 5
      %v1581 = vsel %vm882, %v1579, %v1580
      %v1582 = vrot.slane %v1498, 5
      %v1583 = vrot.slane %v1582, 4
      %v1584 = vrot.slane %v1015, 5
      %v1585 = vsel %vm882, %v1583, %v1584
      %v1586 = vrot.slane %v1584, 4
      %v1587 = vrot.slane %v1048, 5
      %v1588 = vsel %vm882, %v1586, %v1587
      %v1589 = vrot.slane %v1499, 5
      %v1590 = vrot.slane %v1589, 4
      %v1591 = vrot.slane %v1017, 5
      %v1592 = vsel %vm882, %v1590, %v1591
      %v1593 = vrot.slane %v1591, 4
      %v1594 = vrot.slane %v1049, 5
      %v1595 = vsel %vm882, %v1593, %v1594
      %v1596 = vrot.slane %v1500, 5
      %v1597 = vrot.slane %v1596, 4
      %v1598 = vrot.slane %v1019, 5
      %v1599 = vsel %vm882, %v1597, %v1598
      %v1600 = vrot.slane %v1598, 4
      %v1601 = vrot.slane %v1050, 5
      %v1602 = vsel %vm882, %v1600, %v1601
      %v1603 = vrot.slane %v1501, 5
      %v1604 = vrot.slane %v1603, 4
      %v1605 = vrot.slane %v1021, 5
      %v1606 = vsel %vm882, %v1604, %v1605
      %v1607 = vrot.slane %v1605, 4
      %v1608 = vrot.slane %v1051, 5
      %v1609 = vsel %vm882, %v1607, %v1608
      %v1610 = vrot.slane %v1502, 5
      %v1611 = vrot.slane %v1610, 4
      %v1612 = vrot.slane %v1023, 5
      %v1613 = vsel %vm882, %v1611, %v1612
      %v1614 = vrot.slane %v1612, 4
      %v1615 = vrot.slane %v1052, 5
      %v1616 = vsel %vm882, %v1614, %v1615
      %v1617 = vrot.slane %v1503, 5
      %v1618 = vrot.slane %v1617, 4
      %v1619 = vrot.slane %v1025, 5
      %v1620 = vsel %vm882, %v1618, %v1619
      %v1621 = vrot.slane %v1619, 4
      %v1622 = vrot.slane %v1053, 5
      %v1623 = vsel %vm882, %v1621, %v1622
      %v1624 = vrot.slane %v1504, 5
      %v1625 = vrot.slane %v1624, 4
      %v1626 = vrot.slane %v1027, 5
      %v1627 = vsel %vm882, %v1625, %v1626
      %v1628 = vrot.slane %v1626, 4
      %v1629 = vrot.slane %v1054, 5
      %v1630 = vsel %vm882, %v1628, %v1629
      %v1631 = vrot.slane %v1505, 5
      %v1632 = vrot.slane %v1631, 4
      %v1633 = vrot.slane %v1029, 5
      %v1634 = vsel %vm882, %v1632, %v1633
      %v1635 = vrot.slane %v1633, 4
      %v1636 = vrot.slane %v1055, 5
      %v1637 = vsel %vm882, %v1635, %v1636
      %v1638 = vrot.slane %v1506, 5
      %v1639 = vrot.slane %v1638, 4
      %v1640 = vrot.slane %v1031, 5
      %v1641 = vsel %vm882, %v1639, %v1640
      %v1642 = vrot.slane %v1640, 4
      %v1643 = vrot.slane %v1056, 5
      %v1644 = vsel %vm882, %v1642, %v1643
      %v1645 = vrot.slane %v1507, 5
      %v1646 = vrot.slane %v1645, 4
      %v1647 = vrot.slane %v1033, 5
      %v1648 = vsel %vm882, %v1646, %v1647
      %v1649 = vrot.slane %v1647, 4
      %v1650 = vrot.slane %v1057, 5
      %v1651 = vsel %vm882, %v1649, %v1650
      %v1652 = vrot.slane %v1508, 5
      %v1653 = vrot.slane %v1652, 4
      %v1654 = vrot.slane %v1035, 5
      %v1655 = vsel %vm882, %v1653, %v1654
      %v1656 = vrot.slane %v1654, 4
      %v1657 = vrot.slane %v1058, 5
      %v1658 = vsel %vm882, %v1656, %v1657
      %v1659 = vrot.slane %v1509, 5
      %v1660 = vrot.slane %v1659, 4
      %v1661 = vrot.slane %v1037, 5
      %v1662 = vsel %vm882, %v1660, %v1661
      %v1663 = vrot.slane %v1661, 4
      %v1664 = vrot.slane %v1059, 5
      %v1665 = vsel %vm882, %v1663, %v1664
      %v1666 = vrot.slane %v1510, 5
      %v1667 = vrot.slane %v1666, 4
      %v1668 = vrot.slane %v1039, 5
      %v1669 = vsel %vm882, %v1667, %v1668
      %v1670 = vrot.slane %v1668, 4
      %v1671 = vrot.slane %v1060, 5
      %v1672 = vsel %vm882, %v1670, %v1671
      %v1673 = vrot.slane %v1511, 5
      %v1674 = vrot.slane %v1673, 4
      %v1675 = vrot.slane %v1041, 5
      %v1676 = vsel %vm882, %v1674, %v1675
      %v1677 = vrot.slane %v1675, 4
      %v1678 = vrot.slane %v1061, 5
      %v1679 = vsel %vm882, %v1677, %v1678
      %v1680 = vrot.slane %v1512, 5
      %v1681 = vrot.slane %v1680, 4
      %v1682 = vrot.slane %v1043, 5
      %v1683 = vsel %vm882, %v1681, %v1682
      %v1684 = vrot.slane %v1682, 4
      %v1685 = vrot.slane %v1062, 5
      %v1686 = vsel %vm882, %v1684, %v1685
      %v1687 = vrot.slane %v1513, 5
      %v1688 = vrot.slane %v1687, 4
      %v1689 = vrot.slane %v1045, 5
      %v1690 = vsel %vm882, %v1688, %v1689
      %v1691 = vrot.slane %v1689, 4
      %v1692 = vrot.slane %v1063, 5
      %v1693 = vsel %vm882, %v1691, %v1692
      %s1694 = scalar_lea.vmem %s306, 24
      %v1695 = vld [vmem:[%s1694] sm:$0xf]
      %v1696 = vld [vmem:[%s1694 + $0x4] sm:$0xf]
      %v1697 = vld [vmem:[%s1694 + $0xc] sm:$0xf]
      %v1698 = vld [vmem:[%s1694 + $0x10] sm:$0xf]
      %v1699 = vld [vmem:[%s1694 + $0x18] sm:$0xf]
      %v1700 = vld [vmem:[%s1694 + $0x1c] sm:$0xf]
      %v1701 = vld [vmem:[%s1694 + $0x24] sm:$0xf]
      %v1702 = vld [vmem:[%s1694 + $0x28] sm:$0xf]
      %v1703 = vld [vmem:[%s1694 + $0x30] sm:$0xf]
      %v1704 = vld [vmem:[%s1694 + $0x34] sm:$0xf]
      %v1705 = vld [vmem:[%s1694 + $0x3c] sm:$0xf]
      %v1706 = vld [vmem:[%s1694 + $0x40] sm:$0xf]
      %v1707 = vld [vmem:[%s1694 + $0x48] sm:$0xf]
      %v1708 = vld [vmem:[%s1694 + $0x4c] sm:$0xf]
      %v1709 = vld [vmem:[%s1694 + $0x54] sm:$0xf]
      %v1710 = vld [vmem:[%s1694 + $0x58] sm:$0xf]
      %v1711 = vld [vmem:[%s1694 + $0x60] sm:$0xf]
      %v1712 = vld [vmem:[%s1694 + $0x64] sm:$0xf]
      %v1713 = vld [vmem:[%s1694 + $0x6c] sm:$0xf]
      %v1714 = vld [vmem:[%s1694 + $0x70] sm:$0xf]
      %v1715 = vld [vmem:[%s1694 + $0x78] sm:$0xf]
      %v1716 = vld [vmem:[%s1694 + $0x7c] sm:$0xf]
      %v1717 = vld [vmem:[%s1694 + $0x84] sm:$0xf]
      %v1718 = vld [vmem:[%s1694 + $0x88] sm:$0xf]
      %v1719 = vld [vmem:[%s1694 + $0x90] sm:$0xf]
      %v1720 = vld [vmem:[%s1694 + $0x94] sm:$0xf]
      %v1721 = vld [vmem:[%s1694 + $0x9c] sm:$0xf]
      %v1722 = vld [vmem:[%s1694 + $0xa0] sm:$0xf]
      %v1723 = vld [vmem:[%s1694 + $0xa8] sm:$0xf]
      %v1724 = vld [vmem:[%s1694 + $0xac] sm:$0xf]
      %v1725 = vld [vmem:[%s1694 + $0xb4] sm:$0xf]
      %v1726 = vld [vmem:[%s1694 + $0xb8] sm:$0xf]
      %v1727 = vld [vmem:[%s1694 + $0xc0] sm:$0xf]
      %v1728 = vld [vmem:[%s1694 + $0xc4] sm:$0xf]
      %v1729 = vld [vmem:[%s1694 + $0xcc] sm:$0xf]
      %v1730 = vld [vmem:[%s1694 + $0xd0] sm:$0xf]
      %v1731 = vld [vmem:[%s1694 + $0x8] sm:$0x1]
      %v1732 = vld [vmem:[%s1694 + $0x14] sm:$0x1]
      %v1733 = vld [vmem:[%s1694 + $0x20] sm:$0x1]
      %v1734 = vld [vmem:[%s1694 + $0x2c] sm:$0x1]
      %v1735 = vld [vmem:[%s1694 + $0x38] sm:$0x1]
      %v1736 = vld [vmem:[%s1694 + $0x44] sm:$0x1]
      %v1737 = vld [vmem:[%s1694 + $0x50] sm:$0x1]
      %v1738 = vld [vmem:[%s1694 + $0x5c] sm:$0x1]
      %v1739 = vld [vmem:[%s1694 + $0x68] sm:$0x1]
      %v1740 = vld [vmem:[%s1694 + $0x74] sm:$0x1]
      %v1741 = vld [vmem:[%s1694 + $0x80] sm:$0x1]
      %v1742 = vld [vmem:[%s1694 + $0x8c] sm:$0x1]
      %v1743 = vld [vmem:[%s1694 + $0x98] sm:$0x1]
      %v1744 = vld [vmem:[%s1694 + $0xa4] sm:$0x1]
      %v1745 = vld [vmem:[%s1694 + $0xb0] sm:$0x1]
      %v1746 = vld [vmem:[%s1694 + $0xbc] sm:$0x1]
      %v1747 = vld [vmem:[%s1694 + $0xc8] sm:$0x1]
      %v1748 = vld [vmem:[%s1694 + $0xd4] sm:$0x1]
      %v1750 = vshrl.u32 %v1695, 16
      %v1752 = vrot.slane %v1750, 4
      %v1753 = vshll.u32 %v1695, 16
      %v1755 = vrot.slane %v1753, 5
      %v1756 = vor.u32 %v1752, %v1755
      %v1757 = vrot.slane %v1756, 4
      %v1759 = vshll.u32 %v1696, 16
      %v1761 = vrot.slane %v1759, 5
      %v1762 = vsel %vm375, %v1757, %v1761
      %v1763 = vshrl.u32 %v1696, 16
      %v1765 = vrot.slane %v1763, 4
      %v1766 = vor.u32 %v1765, %v1761
      %v1767 = vrot.slane %v1766, 4
      %v1769 = vshll.u32 %v1731, 16
      %v1771 = vrot.slane %v1769, 5
      %v1772 = vsel %vm375, %v1767, %v1771
      %v1774 = vshrl.u32 %v1697, 16
      %v1776 = vrot.slane %v1774, 4
      %v1777 = vshll.u32 %v1697, 16
      %v1779 = vrot.slane %v1777, 5
      %v1780 = vor.u32 %v1776, %v1779
      %v1781 = vrot.slane %v1780, 4
      %v1783 = vshll.u32 %v1698, 16
      %v1785 = vrot.slane %v1783, 5
      %v1786 = vsel %vm375, %v1781, %v1785
      %v1787 = vshrl.u32 %v1698, 16
      %v1789 = vrot.slane %v1787, 4
      %v1790 = vor.u32 %v1789, %v1785
      %v1791 = vrot.slane %v1790, 4
      %v1793 = vshll.u32 %v1732, 16
      %v1795 = vrot.slane %v1793, 5
      %v1796 = vsel %vm375, %v1791, %v1795
      %v1798 = vshrl.u32 %v1699, 16
      %v1800 = vrot.slane %v1798, 4
      %v1801 = vshll.u32 %v1699, 16
      %v1803 = vrot.slane %v1801, 5
      %v1804 = vor.u32 %v1800, %v1803
      %v1805 = vrot.slane %v1804, 4
      %v1807 = vshll.u32 %v1700, 16
      %v1809 = vrot.slane %v1807, 5
      %v1810 = vsel %vm375, %v1805, %v1809
      %v1811 = vshrl.u32 %v1700, 16
      %v1813 = vrot.slane %v1811, 4
      %v1814 = vor.u32 %v1813, %v1809
      %v1815 = vrot.slane %v1814, 4
      %v1817 = vshll.u32 %v1733, 16
      %v1819 = vrot.slane %v1817, 5
      %v1820 = vsel %vm375, %v1815, %v1819
      %v1822 = vshrl.u32 %v1701, 16
      %v1824 = vrot.slane %v1822, 4
      %v1825 = vshll.u32 %v1701, 16
      %v1827 = vrot.slane %v1825, 5
      %v1828 = vor.u32 %v1824, %v1827
      %v1829 = vrot.slane %v1828, 4
      %v1831 = vshll.u32 %v1702, 16
      %v1833 = vrot.slane %v1831, 5
      %v1834 = vsel %vm375, %v1829, %v1833
      %v1835 = vshrl.u32 %v1702, 16
      %v1837 = vrot.slane %v1835, 4
      %v1838 = vor.u32 %v1837, %v1833
      %v1839 = vrot.slane %v1838, 4
      %v1841 = vshll.u32 %v1734, 16
      %v1843 = vrot.slane %v1841, 5
      %v1844 = vsel %vm375, %v1839, %v1843
      %v1846 = vshrl.u32 %v1703, 16
      %v1848 = vrot.slane %v1846, 4
      %v1849 = vshll.u32 %v1703, 16
      %v1851 = vrot.slane %v1849, 5
      %v1852 = vor.u32 %v1848, %v1851
      %v1853 = vrot.slane %v1852, 4
      %v1855 = vshll.u32 %v1704, 16
      %v1857 = vrot.slane %v1855, 5
      %v1858 = vsel %vm375, %v1853, %v1857
      %v1859 = vshrl.u32 %v1704, 16
      %v1861 = vrot.slane %v1859, 4
      %v1862 = vor.u32 %v1861, %v1857
      %v1863 = vrot.slane %v1862, 4
      %v1865 = vshll.u32 %v1735, 16
      %v1867 = vrot.slane %v1865, 5
      %v1868 = vsel %vm375, %v1863, %v1867
      %v1870 = vshrl.u32 %v1705, 16
      %v1872 = vrot.slane %v1870, 4
      %v1873 = vshll.u32 %v1705, 16
      %v1875 = vrot.slane %v1873, 5
      %v1876 = vor.u32 %v1872, %v1875
      %v1877 = vrot.slane %v1876, 4
      %v1879 = vshll.u32 %v1706, 16
      %v1881 = vrot.slane %v1879, 5
      %v1882 = vsel %vm375, %v1877, %v1881
      %v1883 = vshrl.u32 %v1706, 16
      %v1885 = vrot.slane %v1883, 4
      %v1886 = vor.u32 %v1885, %v1881
      %v1887 = vrot.slane %v1886, 4
      %v1889 = vshll.u32 %v1736, 16
      %v1891 = vrot.slane %v1889, 5
      %v1892 = vsel %vm375, %v1887, %v1891
      %v1894 = vshrl.u32 %v1707, 16
      %v1896 = vrot.slane %v1894, 4
      %v1897 = vshll.u32 %v1707, 16
      %v1899 = vrot.slane %v1897, 5
      %v1900 = vor.u32 %v1896, %v1899
      %v1901 = vrot.slane %v1900, 4
      %v1903 = vshll.u32 %v1708, 16
      %v1905 = vrot.slane %v1903, 5
      %v1906 = vsel %vm375, %v1901, %v1905
      %v1907 = vshrl.u32 %v1708, 16
      %v1909 = vrot.slane %v1907, 4
      %v1910 = vor.u32 %v1909, %v1905
      %v1911 = vrot.slane %v1910, 4
      %v1913 = vshll.u32 %v1737, 16
      %v1915 = vrot.slane %v1913, 5
      %v1916 = vsel %vm375, %v1911, %v1915
      %v1918 = vshrl.u32 %v1709, 16
      %v1920 = vrot.slane %v1918, 4
      %v1921 = vshll.u32 %v1709, 16
      %v1923 = vrot.slane %v1921, 5
      %v1924 = vor.u32 %v1920, %v1923
      %v1925 = vrot.slane %v1924, 4
      %v1927 = vshll.u32 %v1710, 16
      %v1929 = vrot.slane %v1927, 5
      %v1930 = vsel %vm375, %v1925, %v1929
      %v1931 = vshrl.u32 %v1710, 16
      %v1933 = vrot.slane %v1931, 4
      %v1934 = vor.u32 %v1933, %v1929
      %v1935 = vrot.slane %v1934, 4
      %v1937 = vshll.u32 %v1738, 16
      %v1939 = vrot.slane %v1937, 5
      %v1940 = vsel %vm375, %v1935, %v1939
      %v1942 = vshrl.u32 %v1711, 16
      %v1944 = vrot.slane %v1942, 4
      %v1945 = vshll.u32 %v1711, 16
      %v1947 = vrot.slane %v1945, 5
      %v1948 = vor.u32 %v1944, %v1947
      %v1949 = vrot.slane %v1948, 4
      %v1951 = vshll.u32 %v1712, 16
      %v1953 = vrot.slane %v1951, 5
      %v1954 = vsel %vm375, %v1949, %v1953
      %v1955 = vshrl.u32 %v1712, 16
      %v1957 = vrot.slane %v1955, 4
      %v1958 = vor.u32 %v1957, %v1953
      %v1959 = vrot.slane %v1958, 4
      %v1961 = vshll.u32 %v1739, 16
      %v1963 = vrot.slane %v1961, 5
      %v1964 = vsel %vm375, %v1959, %v1963
      %v1966 = vshrl.u32 %v1713, 16
      %v1968 = vrot.slane %v1966, 4
      %v1969 = vshll.u32 %v1713, 16
      %v1971 = vrot.slane %v1969, 5
      %v1972 = vor.u32 %v1968, %v1971
      %v1973 = vrot.slane %v1972, 4
      %v1975 = vshll.u32 %v1714, 16
      %v1977 = vrot.slane %v1975, 5
      %v1978 = vsel %vm375, %v1973, %v1977
      %v1979 = vshrl.u32 %v1714, 16
      %v1981 = vrot.slane %v1979, 4
      %v1982 = vor.u32 %v1981, %v1977
      %v1983 = vrot.slane %v1982, 4
      %v1985 = vshll.u32 %v1740, 16
      %v1987 = vrot.slane %v1985, 5
      %v1988 = vsel %vm375, %v1983, %v1987
      %v1990 = vshrl.u32 %v1715, 16
      %v1992 = vrot.slane %v1990, 4
      %v1993 = vshll.u32 %v1715, 16
      %v1995 = vrot.slane %v1993, 5
      %v1996 = vor.u32 %v1992, %v1995
      %v1997 = vrot.slane %v1996, 4
      %v1999 = vshll.u32 %v1716, 16
      %v2001 = vrot.slane %v1999, 5
      %v2002 = vsel %vm375, %v1997, %v2001
      %v2003 = vshrl.u32 %v1716, 16
      %v2005 = vrot.slane %v2003, 4
      %v2006 = vor.u32 %v2005, %v2001
      %v2007 = vrot.slane %v2006, 4
      %v2009 = vshll.u32 %v1741, 16
      %v2011 = vrot.slane %v2009, 5
      %v2012 = vsel %vm375, %v2007, %v2011
      %v2014 = vshrl.u32 %v1717, 16
      %v2016 = vrot.slane %v2014, 4
      %v2017 = vshll.u32 %v1717, 16
      %v2019 = vrot.slane %v2017, 5
      %v2020 = vor.u32 %v2016, %v2019
      %v2021 = vrot.slane %v2020, 4
      %v2023 = vshll.u32 %v1718, 16
      %v2025 = vrot.slane %v2023, 5
      %v2026 = vsel %vm375, %v2021, %v2025
      %v2027 = vshrl.u32 %v1718, 16
      %v2029 = vrot.slane %v2027, 4
      %v2030 = vor.u32 %v2029, %v2025
      %v2031 = vrot.slane %v2030, 4
      %v2033 = vshll.u32 %v1742, 16
      %v2035 = vrot.slane %v2033, 5
      %v2036 = vsel %vm375, %v2031, %v2035
      %v2038 = vshrl.u32 %v1719, 16
      %v2040 = vrot.slane %v2038, 4
      %v2041 = vshll.u32 %v1719, 16
      %v2043 = vrot.slane %v2041, 5
      %v2044 = vor.u32 %v2040, %v2043
      %v2045 = vrot.slane %v2044, 4
      %v2047 = vshll.u32 %v1720, 16
      %v2049 = vrot.slane %v2047, 5
      %v2050 = vsel %vm375, %v2045, %v2049
      %v2051 = vshrl.u32 %v1720, 16
      %v2053 = vrot.slane %v2051, 4
      %v2054 = vor.u32 %v2053, %v2049
      %v2055 = vrot.slane %v2054, 4
      %v2057 = vshll.u32 %v1743, 16
      %v2059 = vrot.slane %v2057, 5
      %v2060 = vsel %vm375, %v2055, %v2059
      %v2062 = vshrl.u32 %v1721, 16
      %v2064 = vrot.slane %v2062, 4
      %v2065 = vshll.u32 %v1721, 16
      %v2067 = vrot.slane %v2065, 5
      %v2068 = vor.u32 %v2064, %v2067
      %v2069 = vrot.slane %v2068, 4
      %v2071 = vshll.u32 %v1722, 16
      %v2073 = vrot.slane %v2071, 5
      %v2074 = vsel %vm375, %v2069, %v2073
      %v2075 = vshrl.u32 %v1722, 16
      %v2077 = vrot.slane %v2075, 4
      %v2078 = vor.u32 %v2077, %v2073
      %v2079 = vrot.slane %v2078, 4
      %v2081 = vshll.u32 %v1744, 16
      %v2083 = vrot.slane %v2081, 5
      %v2084 = vsel %vm375, %v2079, %v2083
      %v2086 = vshrl.u32 %v1723, 16
      %v2088 = vrot.slane %v2086, 4
      %v2089 = vshll.u32 %v1723, 16
      %v2091 = vrot.slane %v2089, 5
      %v2092 = vor.u32 %v2088, %v2091
      %v2093 = vrot.slane %v2092, 4
      %v2095 = vshll.u32 %v1724, 16
      %v2097 = vrot.slane %v2095, 5
      %v2098 = vsel %vm375, %v2093, %v2097
      %v2099 = vshrl.u32 %v1724, 16
      %v2101 = vrot.slane %v2099, 4
      %v2102 = vor.u32 %v2101, %v2097
      %v2103 = vrot.slane %v2102, 4
      %v2105 = vshll.u32 %v1745, 16
      %v2107 = vrot.slane %v2105, 5
      %v2108 = vsel %vm375, %v2103, %v2107
      %v2110 = vshrl.u32 %v1725, 16
      %v2112 = vrot.slane %v2110, 4
      %v2113 = vshll.u32 %v1725, 16
      %v2115 = vrot.slane %v2113, 5
      %v2116 = vor.u32 %v2112, %v2115
      %v2117 = vrot.slane %v2116, 4
      %v2119 = vshll.u32 %v1726, 16
      %v2121 = vrot.slane %v2119, 5
      %v2122 = vsel %vm375, %v2117, %v2121
      %v2123 = vshrl.u32 %v1726, 16
      %v2125 = vrot.slane %v2123, 4
      %v2126 = vor.u32 %v2125, %v2121
      %v2127 = vrot.slane %v2126, 4
      %v2129 = vshll.u32 %v1746, 16
      %v2131 = vrot.slane %v2129, 5
      %v2132 = vsel %vm375, %v2127, %v2131
      %v2134 = vshrl.u32 %v1727, 16
      %v2136 = vrot.slane %v2134, 4
      %v2137 = vshll.u32 %v1727, 16
      %v2139 = vrot.slane %v2137, 5
      %v2140 = vor.u32 %v2136, %v2139
      %v2141 = vrot.slane %v2140, 4
      %v2143 = vshll.u32 %v1728, 16
      %v2145 = vrot.slane %v2143, 5
      %v2146 = vsel %vm375, %v2141, %v2145
      %v2147 = vshrl.u32 %v1728, 16
      %v2149 = vrot.slane %v2147, 4
      %v2150 = vor.u32 %v2149, %v2145
      %v2151 = vrot.slane %v2150, 4
      %v2153 = vshll.u32 %v1747, 16
      %v2155 = vrot.slane %v2153, 5
      %v2156 = vsel %vm375, %v2151, %v2155
      %v2158 = vshrl.u32 %v1729, 16
      %v2160 = vrot.slane %v2158, 4
      %v2161 = vshll.u32 %v1729, 16
      %v2163 = vrot.slane %v2161, 5
      %v2164 = vor.u32 %v2160, %v2163
      %v2165 = vrot.slane %v2164, 4
      %v2167 = vshll.u32 %v1730, 16
      %v2169 = vrot.slane %v2167, 5
      %v2170 = vsel %vm375, %v2165, %v2169
      %v2171 = vshrl.u32 %v1730, 16
      %v2173 = vrot.slane %v2171, 4
      %v2174 = vor.u32 %v2173, %v2169
      %v2175 = vrot.slane %v2174, 4
      %v2177 = vshll.u32 %v1748, 16
      %v2179 = vrot.slane %v2177, 5
      %v2180 = vsel %vm375, %v2175, %v2179
      %v2181 = vld [vmem:[%s1694] sm:$0xe]
      %v2182 = vld [vmem:[%s1694 + $0xc] sm:$0xe]
      %v2183 = vld [vmem:[%s1694 + $0x18] sm:$0xe]
      %v2184 = vld [vmem:[%s1694 + $0x24] sm:$0xe]
      %v2185 = vld [vmem:[%s1694 + $0x30] sm:$0xe]
      %v2186 = vld [vmem:[%s1694 + $0x3c] sm:$0xe]
      %v2187 = vld [vmem:[%s1694 + $0x48] sm:$0xe]
      %v2188 = vld [vmem:[%s1694 + $0x54] sm:$0xe]
      %v2189 = vld [vmem:[%s1694 + $0x60] sm:$0xe]
      %v2190 = vld [vmem:[%s1694 + $0x6c] sm:$0xe]
      %v2191 = vld [vmem:[%s1694 + $0x78] sm:$0xe]
      %v2192 = vld [vmem:[%s1694 + $0x84] sm:$0xe]
      %v2193 = vld [vmem:[%s1694 + $0x90] sm:$0xe]
      %v2194 = vld [vmem:[%s1694 + $0x9c] sm:$0xe]
      %v2195 = vld [vmem:[%s1694 + $0xa8] sm:$0xe]
      %v2196 = vld [vmem:[%s1694 + $0xb4] sm:$0xe]
      %v2197 = vld [vmem:[%s1694 + $0xc0] sm:$0xe]
      %v2198 = vld [vmem:[%s1694 + $0xcc] sm:$0xe]
      %v2253 = vrot.slane %v2181, 5
      %v2254 = vrot.slane %v2253, 4
      %v2255 = vrot.slane %v1696, 5
      %v2256 = vsel %vm882, %v2254, %v2255
      %v2257 = vrot.slane %v2255, 4
      %v2258 = vrot.slane %v1731, 5
      %v2259 = vsel %vm882, %v2257, %v2258
      %v2260 = vrot.slane %v2182, 5
      %v2261 = vrot.slane %v2260, 4
      %v2262 = vrot.slane %v1698, 5
      %v2263 = vsel %vm882, %v2261, %v2262
      %v2264 = vrot.slane %v2262, 4
      %v2265 = vrot.slane %v1732, 5
      %v2266 = vsel %vm882, %v2264, %v2265
      %v2267 = vrot.slane %v2183, 5
      %v2268 = vrot.slane %v2267, 4
      %v2269 = vrot.slane %v1700, 5
      %v2270 = vsel %vm882, %v2268, %v2269
      %v2271 = vrot.slane %v2269, 4
      %v2272 = vrot.slane %v1733, 5
      %v2273 = vsel %vm882, %v2271, %v2272
      %v2274 = vrot.slane %v2184, 5
      %v2275 = vrot.slane %v2274, 4
      %v2276 = vrot.slane %v1702, 5
      %v2277 = vsel %vm882, %v2275, %v2276
      %v2278 = vrot.slane %v2276, 4
      %v2279 = vrot.slane %v1734, 5
      %v2280 = vsel %vm882, %v2278, %v2279
      %v2281 = vrot.slane %v2185, 5
      %v2282 = vrot.slane %v2281, 4
      %v2283 = vrot.slane %v1704, 5
      %v2284 = vsel %vm882, %v2282, %v2283
      %v2285 = vrot.slane %v2283, 4
      %v2286 = vrot.slane %v1735, 5
      %v2287 = vsel %vm882, %v2285, %v2286
      %v2288 = vrot.slane %v2186, 5
      %v2289 = vrot.slane %v2288, 4
      %v2290 = vrot.slane %v1706, 5
      %v2291 = vsel %vm882, %v2289, %v2290
      %v2292 = vrot.slane %v2290, 4
      %v2293 = vrot.slane %v1736, 5
      %v2294 = vsel %vm882, %v2292, %v2293
      %v2295 = vrot.slane %v2187, 5
      %v2296 = vrot.slane %v2295, 4
      %v2297 = vrot.slane %v1708, 5
      %v2298 = vsel %vm882, %v2296, %v2297
      %v2299 = vrot.slane %v2297, 4
      %v2300 = vrot.slane %v1737, 5
      %v2301 = vsel %vm882, %v2299, %v2300
      %v2302 = vrot.slane %v2188, 5
      %v2303 = vrot.slane %v2302, 4
      %v2304 = vrot.slane %v1710, 5
      %v2305 = vsel %vm882, %v2303, %v2304
      %v2306 = vrot.slane %v2304, 4
      %v2307 = vrot.slane %v1738, 5
      %v2308 = vsel %vm882, %v2306, %v2307
      %v2309 = vrot.slane %v2189, 5
      %v2310 = vrot.slane %v2309, 4
      %v2311 = vrot.slane %v1712, 5
      %v2312 = vsel %vm882, %v2310, %v2311
      %v2313 = vrot.slane %v2311, 4
      %v2314 = vrot.slane %v1739, 5
      %v2315 = vsel %vm882, %v2313, %v2314
      %v2316 = vrot.slane %v2190, 5
      %v2317 = vrot.slane %v2316, 4
      %v2318 = vrot.slane %v1714, 5
      %v2319 = vsel %vm882, %v2317, %v2318
      %v2320 = vrot.slane %v2318, 4
      %v2321 = vrot.slane %v1740, 5
      %v2322 = vsel %vm882, %v2320, %v2321
      %v2323 = vrot.slane %v2191, 5
      %v2324 = vrot.slane %v2323, 4
      %v2325 = vrot.slane %v1716, 5
      %v2326 = vsel %vm882, %v2324, %v2325
      %v2327 = vrot.slane %v2325, 4
      %v2328 = vrot.slane %v1741, 5
      %v2329 = vsel %vm882, %v2327, %v2328
      %v2330 = vrot.slane %v2192, 5
      %v2331 = vrot.slane %v2330, 4
      %v2332 = vrot.slane %v1718, 5
      %v2333 = vsel %vm882, %v2331, %v2332
      %v2334 = vrot.slane %v2332, 4
      %v2335 = vrot.slane %v1742, 5
      %v2336 = vsel %vm882, %v2334, %v2335
      %v2337 = vrot.slane %v2193, 5
      %v2338 = vrot.slane %v2337, 4
      %v2339 = vrot.slane %v1720, 5
      %v2340 = vsel %vm882, %v2338, %v2339
      %v2341 = vrot.slane %v2339, 4
      %v2342 = vrot.slane %v1743, 5
      %v2343 = vsel %vm882, %v2341, %v2342
      %v2344 = vrot.slane %v2194, 5
      %v2345 = vrot.slane %v2344, 4
      %v2346 = vrot.slane %v1722, 5
      %v2347 = vsel %vm882, %v2345, %v2346
      %v2348 = vrot.slane %v2346, 4
      %v2349 = vrot.slane %v1744, 5
      %v2350 = vsel %vm882, %v2348, %v2349
      %v2351 = vrot.slane %v2195, 5
      %v2352 = vrot.slane %v2351, 4
      %v2353 = vrot.slane %v1724, 5
      %v2354 = vsel %vm882, %v2352, %v2353
      %v2355 = vrot.slane %v2353, 4
      %v2356 = vrot.slane %v1745, 5
      %v2357 = vsel %vm882, %v2355, %v2356
      %v2358 = vrot.slane %v2196, 5
      %v2359 = vrot.slane %v2358, 4
      %v2360 = vrot.slane %v1726, 5
      %v2361 = vsel %vm882, %v2359, %v2360
      %v2362 = vrot.slane %v2360, 4
      %v2363 = vrot.slane %v1746, 5
      %v2364 = vsel %vm882, %v2362, %v2363
      %v2365 = vrot.slane %v2197, 5
      %v2366 = vrot.slane %v2365, 4
      %v2367 = vrot.slane %v1728, 5
      %v2368 = vsel %vm882, %v2366, %v2367
      %v2369 = vrot.slane %v2367, 4
      %v2370 = vrot.slane %v1747, 5
      %v2371 = vsel %vm882, %v2369, %v2370
      %v2372 = vrot.slane %v2198, 5
      %v2373 = vrot.slane %v2372, 4
      %v2374 = vrot.slane %v1730, 5
      %v2375 = vsel %vm882, %v2373, %v2374
      %v2376 = vrot.slane %v2374, 4
      %v2377 = vrot.slane %v1748, 5
      %v2378 = vsel %vm882, %v2376, %v2377
      %v2397 = vunpack.c.l.b16 %v319
      %v2398 = vunpack.c.l.b16 %v320
      %v2399 = vunpack.c.l.b16 %v321
      %v2400 = vunpack.c.l.b16 %v322
      %v2401 = vunpack.c.l.b16 %v323
      %v2402 = vunpack.c.l.b16 %v324
      %v2403 = vunpack.c.l.b16 %v325
      %v2404 = vunpack.c.l.b16 %v326
      %v2405 = vunpack.c.l.b16 %v327
      %v2406 = vunpack.c.l.b16 %v328
      %v2407 = vunpack.c.l.b16 %v329
      %v2408 = vunpack.c.l.b16 %v330
      %v2409 = vunpack.c.l.b16 %v331
      %v2410 = vunpack.c.l.b16 %v332
      %v2411 = vunpack.c.l.b16 %v333
      %v2412 = vunpack.c.l.b16 %v334
      %v2413 = vunpack.c.l.b16 %v335
      %v2414 = vunpack.c.l.b16 %v336
      %v2415 = vunpack.c.l.b16 %v337
      %v2416 = vunpack.c.l.b16 %v338
      %v2417 = vunpack.c.l.b16 %v339
      %v2418 = vunpack.c.l.b16 %v340
      %v2419 = vunpack.c.l.b16 %v341
      %v2420 = vunpack.c.l.b16 %v342
      %v2421 = vunpack.c.l.b16 %v343
      %v2422 = vunpack.c.l.b16 %v344
      %v2423 = vunpack.c.l.b16 %v345
      %v2424 = vunpack.c.l.b16 %v346
      %v2425 = vunpack.c.l.b16 %v347
      %v2426 = vunpack.c.l.b16 %v348
      %v2427 = vunpack.c.l.b16 %v349
      %v2428 = vunpack.c.l.b16 %v350
      %v2429 = vunpack.c.l.b16 %v351
      %v2430 = vunpack.c.l.b16 %v352
      %v2431 = vunpack.c.l.b16 %v353
      %v2432 = vunpack.c.l.b16 %v354
      %v2433 = vpack.c.b16 %v2398, %v2397
      %v2434 = vpack.c.b16 %v2400, %v2399
      %v2435 = vpack.c.b16 %v2402, %v2401
      %v2436 = vpack.c.b16 %v2404, %v2403
      %v2437 = vpack.c.b16 %v2406, %v2405
      %v2438 = vpack.c.b16 %v2408, %v2407
      %v2439 = vpack.c.b16 %v2410, %v2409
      %v2440 = vpack.c.b16 %v2412, %v2411
      %v2441 = vpack.c.b16 %v2414, %v2413
      %v2442 = vpack.c.b16 %v2416, %v2415
      %v2443 = vpack.c.b16 %v2418, %v2417
      %v2444 = vpack.c.b16 %v2420, %v2419
      %v2445 = vpack.c.b16 %v2422, %v2421
      %v2446 = vpack.c.b16 %v2424, %v2423
      %v2447 = vpack.c.b16 %v2426, %v2425
      %v2448 = vpack.c.b16 %v2428, %v2427
      %v2449 = vpack.c.b16 %v2430, %v2429
      %v2450 = vpack.c.b16 %v2432, %v2431
      %v2469 = vunpack.c.l.b16 %v389
      %v2470 = vunpack.c.l.b16 %v399
      %v2471 = vunpack.c.l.b16 %v413
      %v2472 = vunpack.c.l.b16 %v423
      %v2473 = vunpack.c.l.b16 %v437
      %v2474 = vunpack.c.l.b16 %v447
      %v2475 = vunpack.c.l.b16 %v461
      %v2476 = vunpack.c.l.b16 %v471
      %v2477 = vunpack.c.l.b16 %v485
      %v2478 = vunpack.c.l.b16 %v495
      %v2479 = vunpack.c.l.b16 %v509
      %v2480 = vunpack.c.l.b16 %v519
      %v2481 = vunpack.c.l.b16 %v533
      %v2482 = vunpack.c.l.b16 %v543
      %v2483 = vunpack.c.l.b16 %v557
      %v2484 = vunpack.c.l.b16 %v567
      %v2485 = vunpack.c.l.b16 %v581
      %v2486 = vunpack.c.l.b16 %v591
      %v2487 = vunpack.c.l.b16 %v605
      %v2488 = vunpack.c.l.b16 %v615
      %v2489 = vunpack.c.l.b16 %v629
      %v2490 = vunpack.c.l.b16 %v639
      %v2491 = vunpack.c.l.b16 %v653
      %v2492 = vunpack.c.l.b16 %v663
      %v2493 = vunpack.c.l.b16 %v677
      %v2494 = vunpack.c.l.b16 %v687
      %v2495 = vunpack.c.l.b16 %v701
      %v2496 = vunpack.c.l.b16 %v711
      %v2497 = vunpack.c.l.b16 %v725
      %v2498 = vunpack.c.l.b16 %v735
      %v2499 = vunpack.c.l.b16 %v749
      %v2500 = vunpack.c.l.b16 %v759
      %v2501 = vunpack.c.l.b16 %v773
      %v2502 = vunpack.c.l.b16 %v783
      %v2503 = vunpack.c.l.b16 %v797
      %v2504 = vunpack.c.l.b16 %v807
      %v2505 = vpack.c.b16 %v2470, %v2469
      %v2506 = vpack.c.b16 %v2472, %v2471
      %v2507 = vpack.c.b16 %v2474, %v2473
      %v2508 = vpack.c.b16 %v2476, %v2475
      %v2509 = vpack.c.b16 %v2478, %v2477
      %v2510 = vpack.c.b16 %v2480, %v2479
      %v2511 = vpack.c.b16 %v2482, %v2481
      %v2512 = vpack.c.b16 %v2484, %v2483
      %v2513 = vpack.c.b16 %v2486, %v2485
      %v2514 = vpack.c.b16 %v2488, %v2487
      %v2515 = vpack.c.b16 %v2490, %v2489
      %v2516 = vpack.c.b16 %v2492, %v2491
      %v2517 = vpack.c.b16 %v2494, %v2493
      %v2518 = vpack.c.b16 %v2496, %v2495
      %v2519 = vpack.c.b16 %v2498, %v2497
      %v2520 = vpack.c.b16 %v2500, %v2499
      %v2521 = vpack.c.b16 %v2502, %v2501
      %v2522 = vpack.c.b16 %v2504, %v2503
      %v2541 = vunpack.c.l.b16 %v886
      %v2542 = vunpack.c.l.b16 %v889
      %v2543 = vunpack.c.l.b16 %v893
      %v2544 = vunpack.c.l.b16 %v896
      %v2545 = vunpack.c.l.b16 %v900
      %v2546 = vunpack.c.l.b16 %v903
      %v2547 = vunpack.c.l.b16 %v907
      %v2548 = vunpack.c.l.b16 %v910
      %v2549 = vunpack.c.l.b16 %v914
      %v2550 = vunpack.c.l.b16 %v917
      %v2551 = vunpack.c.l.b16 %v921
      %v2552 = vunpack.c.l.b16 %v924
      %v2553 = vunpack.c.l.b16 %v928
      %v2554 = vunpack.c.l.b16 %v931
      %v2555 = vunpack.c.l.b16 %v935
      %v2556 = vunpack.c.l.b16 %v938
      %v2557 = vunpack.c.l.b16 %v942
      %v2558 = vunpack.c.l.b16 %v945
      %v2559 = vunpack.c.l.b16 %v949
      %v2560 = vunpack.c.l.b16 %v952
      %v2561 = vunpack.c.l.b16 %v956
      %v2562 = vunpack.c.l.b16 %v959
      %v2563 = vunpack.c.l.b16 %v963
      %v2564 = vunpack.c.l.b16 %v966
      %v2565 = vunpack.c.l.b16 %v970
      %v2566 = vunpack.c.l.b16 %v973
      %v2567 = vunpack.c.l.b16 %v977
      %v2568 = vunpack.c.l.b16 %v980
      %v2569 = vunpack.c.l.b16 %v984
      %v2570 = vunpack.c.l.b16 %v987
      %v2571 = vunpack.c.l.b16 %v991
      %v2572 = vunpack.c.l.b16 %v994
      %v2573 = vunpack.c.l.b16 %v998
      %v2574 = vunpack.c.l.b16 %v1001
      %v2575 = vunpack.c.l.b16 %v1005
      %v2576 = vunpack.c.l.b16 %v1008
      %v2577 = vpack.c.b16 %v2542, %v2541
      %v2578 = vpack.c.b16 %v2544, %v2543
      %v2579 = vpack.c.b16 %v2546, %v2545
      %v2580 = vpack.c.b16 %v2548, %v2547
      %v2581 = vpack.c.b16 %v2550, %v2549
      %v2582 = vpack.c.b16 %v2552, %v2551
      %v2583 = vpack.c.b16 %v2554, %v2553
      %v2584 = vpack.c.b16 %v2556, %v2555
      %v2585 = vpack.c.b16 %v2558, %v2557
      %v2586 = vpack.c.b16 %v2560, %v2559
      %v2587 = vpack.c.b16 %v2562, %v2561
      %v2588 = vpack.c.b16 %v2564, %v2563
      %v2589 = vpack.c.b16 %v2566, %v2565
      %v2590 = vpack.c.b16 %v2568, %v2567
      %v2591 = vpack.c.b16 %v2570, %v2569
      %v2592 = vpack.c.b16 %v2572, %v2571
      %v2593 = vpack.c.b16 %v2574, %v2573
      %v2594 = vpack.c.b16 %v2576, %v2575
      %v2631 = vunpack.c.l.b16 %v1010
      %v2632 = vunpack.c.l.b16 %v1011
      %v2633 = vunpack.c.l.b16 %v1012
      %v2634 = vunpack.c.l.b16 %v1013
      %v2635 = vunpack.c.l.b16 %v1014
      %v2636 = vunpack.c.l.b16 %v1015
      %v2637 = vunpack.c.l.b16 %v1016
      %v2638 = vunpack.c.l.b16 %v1017
      %v2639 = vunpack.c.l.b16 %v1018
      %v2640 = vunpack.c.l.b16 %v1019
      %v2641 = vunpack.c.l.b16 %v1020
      %v2642 = vunpack.c.l.b16 %v1021
      %v2643 = vunpack.c.l.b16 %v1022
      %v2644 = vunpack.c.l.b16 %v1023
      %v2645 = vunpack.c.l.b16 %v1024
      %v2646 = vunpack.c.l.b16 %v1025
      %v2647 = vunpack.c.l.b16 %v1026
      %v2648 = vunpack.c.l.b16 %v1027
      %v2649 = vunpack.c.l.b16 %v1028
      %v2650 = vunpack.c.l.b16 %v1029
      %v2651 = vunpack.c.l.b16 %v1030
      %v2652 = vunpack.c.l.b16 %v1031
      %v2653 = vunpack.c.l.b16 %v1032
      %v2654 = vunpack.c.l.b16 %v1033
      %v2655 = vunpack.c.l.b16 %v1034
      %v2656 = vunpack.c.l.b16 %v1035
      %v2657 = vunpack.c.l.b16 %v1036
      %v2658 = vunpack.c.l.b16 %v1037
      %v2659 = vunpack.c.l.b16 %v1038
      %v2660 = vunpack.c.l.b16 %v1039
      %v2661 = vunpack.c.l.b16 %v1040
      %v2662 = vunpack.c.l.b16 %v1041
      %v2663 = vunpack.c.l.b16 %v1042
      %v2664 = vunpack.c.l.b16 %v1043
      %v2665 = vunpack.c.l.b16 %v1044
      %v2666 = vunpack.c.l.b16 %v1045
      %v2667 = vpack.c.b16 %v2632, %v2631
      %v2668 = vpack.c.b16 %v2634, %v2633
      %v2669 = vpack.c.b16 %v2636, %v2635
      %v2670 = vpack.c.b16 %v2638, %v2637
      %v2671 = vpack.c.b16 %v2640, %v2639
      %v2672 = vpack.c.b16 %v2642, %v2641
      %v2673 = vpack.c.b16 %v2644, %v2643
      %v2674 = vpack.c.b16 %v2646, %v2645
      %v2675 = vpack.c.b16 %v2648, %v2647
      %v2676 = vpack.c.b16 %v2650, %v2649
      %v2677 = vpack.c.b16 %v2652, %v2651
      %v2678 = vpack.c.b16 %v2654, %v2653
      %v2679 = vpack.c.b16 %v2656, %v2655
      %v2680 = vpack.c.b16 %v2658, %v2657
      %v2681 = vpack.c.b16 %v2660, %v2659
      %v2682 = vpack.c.b16 %v2662, %v2661
      %v2683 = vpack.c.b16 %v2664, %v2663
      %v2684 = vpack.c.b16 %v2666, %v2665
      %v2703 = vunpack.c.l.b16 %v1077
      %v2704 = vunpack.c.l.b16 %v1087
      %v2705 = vunpack.c.l.b16 %v1101
      %v2706 = vunpack.c.l.b16 %v1111
      %v2707 = vunpack.c.l.b16 %v1125
      %v2708 = vunpack.c.l.b16 %v1135
      %v2709 = vunpack.c.l.b16 %v1149
      %v2710 = vunpack.c.l.b16 %v1159
      %v2711 = vunpack.c.l.b16 %v1173
      %v2712 = vunpack.c.l.b16 %v1183
      %v2713 = vunpack.c.l.b16 %v1197
      %v2714 = vunpack.c.l.b16 %v1207
      %v2715 = vunpack.c.l.b16 %v1221
      %v2716 = vunpack.c.l.b16 %v1231
      %v2717 = vunpack.c.l.b16 %v1245
      %v2718 = vunpack.c.l.b16 %v1255
      %v2719 = vunpack.c.l.b16 %v1269
      %v2720 = vunpack.c.l.b16 %v1279
      %v2721 = vunpack.c.l.b16 %v1293
      %v2722 = vunpack.c.l.b16 %v1303
      %v2723 = vunpack.c.l.b16 %v1317
      %v2724 = vunpack.c.l.b16 %v1327
      %v2725 = vunpack.c.l.b16 %v1341
      %v2726 = vunpack.c.l.b16 %v1351
      %v2727 = vunpack.c.l.b16 %v1365
      %v2728 = vunpack.c.l.b16 %v1375
      %v2729 = vunpack.c.l.b16 %v1389
      %v2730 = vunpack.c.l.b16 %v1399
      %v2731 = vunpack.c.l.b16 %v1413
      %v2732 = vunpack.c.l.b16 %v1423
      %v2733 = vunpack.c.l.b16 %v1437
      %v2734 = vunpack.c.l.b16 %v1447
      %v2735 = vunpack.c.l.b16 %v1461
      %v2736 = vunpack.c.l.b16 %v1471
      %v2737 = vunpack.c.l.b16 %v1485
      %v2738 = vunpack.c.l.b16 %v1495
      %v2739 = vpack.c.b16 %v2704, %v2703
      %v2740 = vpack.c.b16 %v2706, %v2705
      %v2741 = vpack.c.b16 %v2708, %v2707
      %v2742 = vpack.c.b16 %v2710, %v2709
      %v2743 = vpack.c.b16 %v2712, %v2711
      %v2744 = vpack.c.b16 %v2714, %v2713
      %v2745 = vpack.c.b16 %v2716, %v2715
      %v2746 = vpack.c.b16 %v2718, %v2717
      %v2747 = vpack.c.b16 %v2720, %v2719
      %v2748 = vpack.c.b16 %v2722, %v2721
      %v2749 = vpack.c.b16 %v2724, %v2723
      %v2750 = vpack.c.b16 %v2726, %v2725
      %v2751 = vpack.c.b16 %v2728, %v2727
      %v2752 = vpack.c.b16 %v2730, %v2729
      %v2753 = vpack.c.b16 %v2732, %v2731
      %v2754 = vpack.c.b16 %v2734, %v2733
      %v2755 = vpack.c.b16 %v2736, %v2735
      %v2756 = vpack.c.b16 %v2738, %v2737
      %v2775 = vunpack.c.l.b16 %v1571
      %v2776 = vunpack.c.l.b16 %v1574
      %v2777 = vunpack.c.l.b16 %v1578
      %v2778 = vunpack.c.l.b16 %v1581
      %v2779 = vunpack.c.l.b16 %v1585
      %v2780 = vunpack.c.l.b16 %v1588
      %v2781 = vunpack.c.l.b16 %v1592
      %v2782 = vunpack.c.l.b16 %v1595
      %v2783 = vunpack.c.l.b16 %v1599
      %v2784 = vunpack.c.l.b16 %v1602
      %v2785 = vunpack.c.l.b16 %v1606
      %v2786 = vunpack.c.l.b16 %v1609
      %v2787 = vunpack.c.l.b16 %v1613
      %v2788 = vunpack.c.l.b16 %v1616
      %v2789 = vunpack.c.l.b16 %v1620
      %v2790 = vunpack.c.l.b16 %v1623
      %v2791 = vunpack.c.l.b16 %v1627
      %v2792 = vunpack.c.l.b16 %v1630
      %v2793 = vunpack.c.l.b16 %v1634
      %v2794 = vunpack.c.l.b16 %v1637
      %v2795 = vunpack.c.l.b16 %v1641
      %v2796 = vunpack.c.l.b16 %v1644
      %v2797 = vunpack.c.l.b16 %v1648
      %v2798 = vunpack.c.l.b16 %v1651
      %v2799 = vunpack.c.l.b16 %v1655
      %v2800 = vunpack.c.l.b16 %v1658
      %v2801 = vunpack.c.l.b16 %v1662
      %v2802 = vunpack.c.l.b16 %v1665
      %v2803 = vunpack.c.l.b16 %v1669
      %v2804 = vunpack.c.l.b16 %v1672
      %v2805 = vunpack.c.l.b16 %v1676
      %v2806 = vunpack.c.l.b16 %v1679
      %v2807 = vunpack.c.l.b16 %v1683
      %v2808 = vunpack.c.l.b16 %v1686
      %v2809 = vunpack.c.l.b16 %v1690
      %v2810 = vunpack.c.l.b16 %v1693
      %v2811 = vpack.c.b16 %v2776, %v2775
      %v2812 = vpack.c.b16 %v2778, %v2777
      %v2813 = vpack.c.b16 %v2780, %v2779
      %v2814 = vpack.c.b16 %v2782, %v2781
      %v2815 = vpack.c.b16 %v2784, %v2783
      %v2816 = vpack.c.b16 %v2786, %v2785
      %v2817 = vpack.c.b16 %v2788, %v2787
      %v2818 = vpack.c.b16 %v2790, %v2789
      %v2819 = vpack.c.b16 %v2792, %v2791
      %v2820 = vpack.c.b16 %v2794, %v2793
      %v2821 = vpack.c.b16 %v2796, %v2795
      %v2822 = vpack.c.b16 %v2798, %v2797
      %v2823 = vpack.c.b16 %v2800, %v2799
      %v2824 = vpack.c.b16 %v2802, %v2801
      %v2825 = vpack.c.b16 %v2804, %v2803
      %v2826 = vpack.c.b16 %v2806, %v2805
      %v2827 = vpack.c.b16 %v2808, %v2807
      %v2828 = vpack.c.b16 %v2810, %v2809
      %v2865 = vunpack.c.l.b16 %v1695
      %v2866 = vunpack.c.l.b16 %v1696
      %v2867 = vunpack.c.l.b16 %v1697
      %v2868 = vunpack.c.l.b16 %v1698
      %v2869 = vunpack.c.l.b16 %v1699
      %v2870 = vunpack.c.l.b16 %v1700
      %v2871 = vunpack.c.l.b16 %v1701
      %v2872 = vunpack.c.l.b16 %v1702
      %v2873 = vunpack.c.l.b16 %v1703
      %v2874 = vunpack.c.l.b16 %v1704
      %v2875 = vunpack.c.l.b16 %v1705
      %v2876 = vunpack.c.l.b16 %v1706
      %v2877 = vunpack.c.l.b16 %v1707
      %v2878 = vunpack.c.l.b16 %v1708
      %v2879 = vunpack.c.l.b16 %v1709
      %v2880 = vunpack.c.l.b16 %v1710
      %v2881 = vunpack.c.l.b16 %v1711
      %v2882 = vunpack.c.l.b16 %v1712
      %v2883 = vunpack.c.l.b16 %v1713
      %v2884 = vunpack.c.l.b16 %v1714
      %v2885 = vunpack.c.l.b16 %v1715
      %v2886 = vunpack.c.l.b16 %v1716
      %v2887 = vunpack.c.l.b16 %v1717
      %v2888 = vunpack.c.l.b16 %v1718
      %v2889 = vunpack.c.l.b16 %v1719
      %v2890 = vunpack.c.l.b16 %v1720
      %v2891 = vunpack.c.l.b16 %v1721
      %v2892 = vunpack.c.l.b16 %v1722
      %v2893 = vunpack.c.l.b16 %v1723
      %v2894 = vunpack.c.l.b16 %v1724
      %v2895 = vunpack.c.l.b16 %v1725
      %v2896 = vunpack.c.l.b16 %v1726
      %v2897 = vunpack.c.l.b16 %v1727
      %v2898 = vunpack.c.l.b16 %v1728
      %v2899 = vunpack.c.l.b16 %v1729
      %v2900 = vunpack.c.l.b16 %v1730
      %v2901 = vpack.c.b16 %v2866, %v2865
      %v2902 = vpack.c.b16 %v2868, %v2867
      %v2903 = vpack.c.b16 %v2870, %v2869
      %v2904 = vpack.c.b16 %v2872, %v2871
      %v2905 = vpack.c.b16 %v2874, %v2873
      %v2906 = vpack.c.b16 %v2876, %v2875
      %v2907 = vpack.c.b16 %v2878, %v2877
      %v2908 = vpack.c.b16 %v2880, %v2879
      %v2909 = vpack.c.b16 %v2882, %v2881
      %v2910 = vpack.c.b16 %v2884, %v2883
      %v2911 = vpack.c.b16 %v2886, %v2885
      %v2912 = vpack.c.b16 %v2888, %v2887
      %v2913 = vpack.c.b16 %v2890, %v2889
      %v2914 = vpack.c.b16 %v2892, %v2891
      %v2915 = vpack.c.b16 %v2894, %v2893
      %v2916 = vpack.c.b16 %v2896, %v2895
      %v2917 = vpack.c.b16 %v2898, %v2897
      %v2918 = vpack.c.b16 %v2900, %v2899
      %v2937 = vunpack.c.l.b16 %v1762
      %v2938 = vunpack.c.l.b16 %v1772
      %v2939 = vunpack.c.l.b16 %v1786
      %v2940 = vunpack.c.l.b16 %v1796
      %v2941 = vunpack.c.l.b16 %v1810
      %v2942 = vunpack.c.l.b16 %v1820
      %v2943 = vunpack.c.l.b16 %v1834
      %v2944 = vunpack.c.l.b16 %v1844
      %v2945 = vunpack.c.l.b16 %v1858
      %v2946 = vunpack.c.l.b16 %v1868
      %v2947 = vunpack.c.l.b16 %v1882
      %v2948 = vunpack.c.l.b16 %v1892
      %v2949 = vunpack.c.l.b16 %v1906
      %v2950 = vunpack.c.l.b16 %v1916
      %v2951 = vunpack.c.l.b16 %v1930
      %v2952 = vunpack.c.l.b16 %v1940
      %v2953 = vunpack.c.l.b16 %v1954
      %v2954 = vunpack.c.l.b16 %v1964
      %v2955 = vunpack.c.l.b16 %v1978
      %v2956 = vunpack.c.l.b16 %v1988
      %v2957 = vunpack.c.l.b16 %v2002
      %v2958 = vunpack.c.l.b16 %v2012
      %v2959 = vunpack.c.l.b16 %v2026
      %v2960 = vunpack.c.l.b16 %v2036
      %v2961 = vunpack.c.l.b16 %v2050
      %v2962 = vunpack.c.l.b16 %v2060
      %v2963 = vunpack.c.l.b16 %v2074
      %v2964 = vunpack.c.l.b16 %v2084
      %v2965 = vunpack.c.l.b16 %v2098
      %v2966 = vunpack.c.l.b16 %v2108
      %v2967 = vunpack.c.l.b16 %v2122
      %v2968 = vunpack.c.l.b16 %v2132
      %v2969 = vunpack.c.l.b16 %v2146
      %v2970 = vunpack.c.l.b16 %v2156
      %v2971 = vunpack.c.l.b16 %v2170
      %v2972 = vunpack.c.l.b16 %v2180
      %v2973 = vpack.c.b16 %v2938, %v2937
      %v2974 = vpack.c.b16 %v2940, %v2939
      %v2975 = vpack.c.b16 %v2942, %v2941
      %v2976 = vpack.c.b16 %v2944, %v2943
      %v2977 = vpack.c.b16 %v2946, %v2945
      %v2978 = vpack.c.b16 %v2948, %v2947
      %v2979 = vpack.c.b16 %v2950, %v2949
      %v2980 = vpack.c.b16 %v2952, %v2951
      %v2981 = vpack.c.b16 %v2954, %v2953
      %v2982 = vpack.c.b16 %v2956, %v2955
      %v2983 = vpack.c.b16 %v2958, %v2957
      %v2984 = vpack.c.b16 %v2960, %v2959
      %v2985 = vpack.c.b16 %v2962, %v2961
      %v2986 = vpack.c.b16 %v2964, %v2963
      %v2987 = vpack.c.b16 %v2966, %v2965
      %v2988 = vpack.c.b16 %v2968, %v2967
      %v2989 = vpack.c.b16 %v2970, %v2969
      %v2990 = vpack.c.b16 %v2972, %v2971
      %v3009 = vunpack.c.l.b16 %v2256
      %v3010 = vunpack.c.l.b16 %v2259
      %v3011 = vunpack.c.l.b16 %v2263
      %v3012 = vunpack.c.l.b16 %v2266
      %v3013 = vunpack.c.l.b16 %v2270
      %v3014 = vunpack.c.l.b16 %v2273
      %v3015 = vunpack.c.l.b16 %v2277
      %v3016 = vunpack.c.l.b16 %v2280
      %v3017 = vunpack.c.l.b16 %v2284
      %v3018 = vunpack.c.l.b16 %v2287
      %v3019 = vunpack.c.l.b16 %v2291
      %v3020 = vunpack.c.l.b16 %v2294
      %v3021 = vunpack.c.l.b16 %v2298
      %v3022 = vunpack.c.l.b16 %v2301
      %v3023 = vunpack.c.l.b16 %v2305
      %v3024 = vunpack.c.l.b16 %v2308
      %v3025 = vunpack.c.l.b16 %v2312
      %v3026 = vunpack.c.l.b16 %v2315
      %v3027 = vunpack.c.l.b16 %v2319
      %v3028 = vunpack.c.l.b16 %v2322
      %v3029 = vunpack.c.l.b16 %v2326
      %v3030 = vunpack.c.l.b16 %v2329
      %v3031 = vunpack.c.l.b16 %v2333
      %v3032 = vunpack.c.l.b16 %v2336
      %v3033 = vunpack.c.l.b16 %v2340
      %v3034 = vunpack.c.l.b16 %v2343
      %v3035 = vunpack.c.l.b16 %v2347
      %v3036 = vunpack.c.l.b16 %v2350
      %v3037 = vunpack.c.l.b16 %v2354
      %v3038 = vunpack.c.l.b16 %v2357
      %v3039 = vunpack.c.l.b16 %v2361
      %v3040 = vunpack.c.l.b16 %v2364
      %v3041 = vunpack.c.l.b16 %v2368
      %v3042 = vunpack.c.l.b16 %v2371
      %v3043 = vunpack.c.l.b16 %v2375
      %v3044 = vunpack.c.l.b16 %v2378
      %v3045 = vpack.c.b16 %v3010, %v3009
      %v3046 = vpack.c.b16 %v3012, %v3011
      %v3047 = vpack.c.b16 %v3014, %v3013
      %v3048 = vpack.c.b16 %v3016, %v3015
      %v3049 = vpack.c.b16 %v3018, %v3017
      %v3050 = vpack.c.b16 %v3020, %v3019
      %v3051 = vpack.c.b16 %v3022, %v3021
      %v3052 = vpack.c.b16 %v3024, %v3023
      %v3053 = vpack.c.b16 %v3026, %v3025
      %v3054 = vpack.c.b16 %v3028, %v3027
      %v3055 = vpack.c.b16 %v3030, %v3029
      %v3056 = vpack.c.b16 %v3032, %v3031
      %v3057 = vpack.c.b16 %v3034, %v3033
      %v3058 = vpack.c.b16 %v3036, %v3035
      %v3059 = vpack.c.b16 %v3038, %v3037
      %v3060 = vpack.c.b16 %v3040, %v3039
      %v3061 = vpack.c.b16 %v3042, %v3041
      %v3062 = vpack.c.b16 %v3044, %v3043
      %v3081 = vld [vmem:[%s1] sm:$0xf]
      %v3082 = vld [vmem:[%s1 + $0x4] sm:$0xf]
      %v3083 = vld [vmem:[%s1 + $0x8] sm:$0xf]
      %v3084 = vld [vmem:[%s1 + $0xc] sm:$0xf]
      %v3085 = vld [vmem:[%s1 + $0x10] sm:$0xf]
      %v3086 = vld [vmem:[%s1 + $0x14] sm:$0xf]
      %v3087 = vld [vmem:[%s1 + $0x18] sm:$0xf]
      %v3088 = vld [vmem:[%s1 + $0x1c] sm:$0xf]
      %v3089 = vld [vmem:[%s1 + $0x20] sm:$0xf]
      %v3090 = vld [vmem:[%s1 + $0x24] sm:$0xf]
      %v3091 = vld [vmem:[%s1 + $0x28] sm:$0xf]
      %v3092 = vld [vmem:[%s1 + $0x2c] sm:$0xf]
      %v3093 = vld [vmem:[%s1 + $0x30] sm:$0xf]
      %v3094 = vld [vmem:[%s1 + $0x34] sm:$0xf]
      %v3095 = vld [vmem:[%s1 + $0x38] sm:$0xf]
      %v3096 = vld [vmem:[%s1 + $0x3c] sm:$0xf]
      %v3097 = vld [vmem:[%s1 + $0x40] sm:$0xf]
      %v3098 = vld [vmem:[%s1 + $0x44] sm:$0xf]
      %v3099 = vld [vmem:[%s1 + $0x48] sm:$0xf]
      %v3100 = vld [vmem:[%s1 + $0x4c] sm:$0xf]
      %v3101 = vld [vmem:[%s1 + $0x50] sm:$0xf]
      %v3102 = vld [vmem:[%s1 + $0x54] sm:$0xf]
      %v3103 = vld [vmem:[%s1 + $0x58] sm:$0xf]
      %v3104 = vld [vmem:[%s1 + $0x5c] sm:$0xf]
      %v3105 = vld [vmem:[%s1 + $0x60] sm:$0xf]
      %v3106 = vld [vmem:[%s1 + $0x64] sm:$0xf]
      %v3107 = vld [vmem:[%s1 + $0x68] sm:$0xf]
      %v3108 = vld [vmem:[%s1 + $0x6c] sm:$0xf]
      %v3109 = vld [vmem:[%s1 + $0x70] sm:$0xf]
      %v3110 = vld [vmem:[%s1 + $0x74] sm:$0xf]
      %v3111 = vld [vmem:[%s1 + $0x78] sm:$0xf]
      %v3112 = vld [vmem:[%s1 + $0x7c] sm:$0xf]
      %v3113 = vld [vmem:[%s1 + $0x80] sm:$0xf]
      %v3114 = vld [vmem:[%s1 + $0x84] sm:$0xf]
      %v3115 = vld [vmem:[%s1 + $0x88] sm:$0xf]
      %v3116 = vld [vmem:[%s1 + $0x8c] sm:$0xf]
      %v3117 = vld [vmem:[%s1 + $0x90] sm:$0xf]
      %v3118 = vld [vmem:[%s1 + $0x94] sm:$0xf]
      %v3119 = vld [vmem:[%s1 + $0x98] sm:$0xf]
      %v3120 = vld [vmem:[%s1 + $0x9c] sm:$0xf]
      %v3121 = vld [vmem:[%s1 + $0xa0] sm:$0xf]
      %v3122 = vld [vmem:[%s1 + $0xa4] sm:$0xf]
      %v3123 = vld [vmem:[%s1 + $0xa8] sm:$0xf]
      %v3124 = vld [vmem:[%s1 + $0xac] sm:$0xf]
      %v3125 = vld [vmem:[%s1 + $0xb0] sm:$0xf]
      %v3126 = vld [vmem:[%s1 + $0xb4] sm:$0xf]
      %v3127 = vld [vmem:[%s1 + $0xb8] sm:$0xf]
      %v3128 = vld [vmem:[%s1 + $0xbc] sm:$0xf]
      %v3129 = vld [vmem:[%s1 + $0xc0] sm:$0xf]
      %v3130 = vld [vmem:[%s1 + $0xc4] sm:$0xf]
      %v3131 = vld [vmem:[%s1 + $0xc8] sm:$0xf]
      %v3132 = vld [vmem:[%s1 + $0xcc] sm:$0xf]
      %v3133 = vld [vmem:[%s1 + $0xd0] sm:$0xf]
      %v3134 = vld [vmem:[%s1 + $0xd4] sm:$0xf]
      %v3135 = vld [vmem:[%s1 + $0xd8] sm:$0xf]
      %v3136 = vld [vmem:[%s1 + $0xdc] sm:$0xf]
      %v3137 = vld [vmem:[%s1 + $0xe0] sm:$0xf]
      %v3138 = vld [vmem:[%s1 + $0xe4] sm:$0xf]
      %v3139 = vld [vmem:[%s1 + $0xe8] sm:$0xf]
      %v3140 = vld [vmem:[%s1 + $0xec] sm:$0xf]
      %v3141 = vld [vmem:[%s1 + $0xf0] sm:$0xf]
      %v3142 = vld [vmem:[%s1 + $0xf4] sm:$0xf]
      %v3143 = vld [vmem:[%s1 + $0xf8] sm:$0xf]
      %v3144 = vld [vmem:[%s1 + $0xfc] sm:$0xf]
      %v3145 = vld [vmem:[%s1 + $0x100] sm:$0xf]
      %v3146 = vld [vmem:[%s1 + $0x104] sm:$0xf]
      %v3147 = vld [vmem:[%s1 + $0x108] sm:$0xf]
      %v3148 = vld [vmem:[%s1 + $0x10c] sm:$0xf]
      %v3149 = vld [vmem:[%s1 + $0x110] sm:$0xf]
      %v3150 = vld [vmem:[%s1 + $0x114] sm:$0xf]
      %v3151 = vld [vmem:[%s1 + $0x118] sm:$0xf]
      %v3152 = vld [vmem:[%s1 + $0x11c] sm:$0xf]
      %v3153 = vld [vmem:[%s1 + $0x120] sm:$0xf]
      %v3154 = vld [vmem:[%s1 + $0x124] sm:$0xf]
      %v3155 = vld [vmem:[%s1 + $0x128] sm:$0xf]
      %v3156 = vld [vmem:[%s1 + $0x12c] sm:$0xf]
      %v3157 = vld [vmem:[%s1 + $0x130] sm:$0xf]
      %v3158 = vld [vmem:[%s1 + $0x134] sm:$0xf]
      %v3159 = vld [vmem:[%s1 + $0x138] sm:$0xf]
      %v3160 = vld [vmem:[%s1 + $0x13c] sm:$0xf]
      %v3161 = vld [vmem:[%s1 + $0x140] sm:$0xf]
      %v3162 = vld [vmem:[%s1 + $0x144] sm:$0xf]
      %v3163 = vld [vmem:[%s1 + $0x148] sm:$0xf]
      %v3164 = vld [vmem:[%s1 + $0x14c] sm:$0xf]
      %v3165 = vld [vmem:[%s1 + $0x150] sm:$0xf]
      %v3166 = vld [vmem:[%s1 + $0x154] sm:$0xf]
      %v3167 = vld [vmem:[%s1 + $0x158] sm:$0xf]
      %v3168 = vld [vmem:[%s1 + $0x15c] sm:$0xf]
      %v3169 = vld [vmem:[%s1 + $0x160] sm:$0xf]
      %v3170 = vld [vmem:[%s1 + $0x164] sm:$0xf]
      %v3171 = vld [vmem:[%s1 + $0x168] sm:$0xf]
      %v3172 = vld [vmem:[%s1 + $0x16c] sm:$0xf]
      %v3173 = vld [vmem:[%s1 + $0x170] sm:$0xf]
      %v3174 = vld [vmem:[%s1 + $0x174] sm:$0xf]
      %v3175 = vld [vmem:[%s1 + $0x178] sm:$0xf]
      %v3176 = vld [vmem:[%s1 + $0x17c] sm:$0xf]
      %v3177 = vld [vmem:[%s1 + $0x180] sm:$0xf]
      %v3178 = vld [vmem:[%s1 + $0x184] sm:$0xf]
      %v3179 = vld [vmem:[%s1 + $0x188] sm:$0xf]
      %v3180 = vld [vmem:[%s1 + $0x18c] sm:$0xf]
      %v3181 = vld [vmem:[%s1 + $0x190] sm:$0xf]
      %v3182 = vld [vmem:[%s1 + $0x194] sm:$0xf]
      %v3183 = vld [vmem:[%s1 + $0x198] sm:$0xf]
      %v3184 = vld [vmem:[%s1 + $0x19c] sm:$0xf]
      %v3185 = vld [vmem:[%s1 + $0x1a0] sm:$0xf]
      %v3186 = vld [vmem:[%s1 + $0x1a4] sm:$0xf]
      %v3187 = vld [vmem:[%s1 + $0x1a8] sm:$0xf]
      %v3188 = vld [vmem:[%s1 + $0x1ac] sm:$0xf]
      %v3189 = vld [vmem:[%s1 + $0x1b0] sm:$0xf]
      %v3190 = vld [vmem:[%s1 + $0x1b4] sm:$0xf]
      %v3191 = vld [vmem:[%s1 + $0x1b8] sm:$0xf]
      %v3192 = vld [vmem:[%s1 + $0x1bc] sm:$0xf]
      %v3193 = vld [vmem:[%s1 + $0x1c0] sm:$0xf]
      %v3194 = vld [vmem:[%s1 + $0x1c4] sm:$0xf]
      %v3195 = vld [vmem:[%s1 + $0x1c8] sm:$0xf]
      %v3196 = vld [vmem:[%s1 + $0x1cc] sm:$0xf]
      %v3197 = vld [vmem:[%s1 + $0x1d0] sm:$0xf]
      %v3198 = vld [vmem:[%s1 + $0x1d4] sm:$0xf]
      %v3199 = vld [vmem:[%s1 + $0x1d8] sm:$0xf]
      %v3200 = vld [vmem:[%s1 + $0x1dc] sm:$0xf]
      %v3201 = vld [vmem:[%s1 + $0x1e0] sm:$0xf]
      %v3202 = vld [vmem:[%s1 + $0x1e4] sm:$0xf]
      %v3203 = vld [vmem:[%s1 + $0x1e8] sm:$0xf]
      %v3204 = vld [vmem:[%s1 + $0x1ec] sm:$0xf]
      %v3205 = vld [vmem:[%s1 + $0x1f0] sm:$0xf]
      %v3206 = vld [vmem:[%s1 + $0x1f4] sm:$0xf]
      %v3207 = vld [vmem:[%s1 + $0x1f8] sm:$0xf]
      %v3208 = vld [vmem:[%s1 + $0x1fc] sm:$0xf]
      %v3209 = vld [vmem:[%s1 + $0x200] sm:$0xf]
      %v3210 = vld [vmem:[%s1 + $0x204] sm:$0xf]
      %v3211 = vld [vmem:[%s1 + $0x208] sm:$0xf]
      %v3212 = vld [vmem:[%s1 + $0x20c] sm:$0xf]
      %v3213 = vld [vmem:[%s1 + $0x210] sm:$0xf]
      %v3214 = vld [vmem:[%s1 + $0x214] sm:$0xf]
      %v3215 = vld [vmem:[%s1 + $0x218] sm:$0xf]
      %v3216 = vld [vmem:[%s1 + $0x21c] sm:$0xf]
      %v3217 = vld [vmem:[%s1 + $0x220] sm:$0xf]
      %v3218 = vld [vmem:[%s1 + $0x224] sm:$0xf]
      %v3219 = vld [vmem:[%s1 + $0x228] sm:$0xf]
      %v3220 = vld [vmem:[%s1 + $0x22c] sm:$0xf]
      %v3221 = vld [vmem:[%s1 + $0x230] sm:$0xf]
      %v3222 = vld [vmem:[%s1 + $0x234] sm:$0xf]
      %v3223 = vld [vmem:[%s1 + $0x238] sm:$0xf]
      %v3224 = vld [vmem:[%s1 + $0x23c] sm:$0xf]
      %v3369 = vunpack.c.l.b16 %v3081
      %v3370 = vunpack.c.l.b16 %v3082
      %v3371 = vunpack.c.l.b16 %v3083
      %v3372 = vunpack.c.l.b16 %v3084
      %v3373 = vunpack.c.l.b16 %v3085
      %v3374 = vunpack.c.l.b16 %v3086
      %v3375 = vunpack.c.l.b16 %v3087
      %v3376 = vunpack.c.l.b16 %v3088
      %v3377 = vunpack.c.l.b16 %v3089
      %v3378 = vunpack.c.l.b16 %v3090
      %v3379 = vunpack.c.l.b16 %v3091
      %v3380 = vunpack.c.l.b16 %v3092
      %v3381 = vunpack.c.l.b16 %v3093
      %v3382 = vunpack.c.l.b16 %v3094
      %v3383 = vunpack.c.l.b16 %v3095
      %v3384 = vunpack.c.l.b16 %v3096
      %v3385 = vunpack.c.l.b16 %v3097
      %v3386 = vunpack.c.l.b16 %v3098
      %v3387 = vunpack.c.l.b16 %v3099
      %v3388 = vunpack.c.l.b16 %v3100
      %v3389 = vunpack.c.l.b16 %v3101
      %v3390 = vunpack.c.l.b16 %v3102
      %v3391 = vunpack.c.l.b16 %v3103
      %v3392 = vunpack.c.l.b16 %v3104
      %v3393 = vunpack.c.l.b16 %v3105
      %v3394 = vunpack.c.l.b16 %v3106
      %v3395 = vunpack.c.l.b16 %v3107
      %v3396 = vunpack.c.l.b16 %v3108
      %v3397 = vunpack.c.l.b16 %v3109
      %v3398 = vunpack.c.l.b16 %v3110
      %v3399 = vunpack.c.l.b16 %v3111
      %v3400 = vunpack.c.l.b16 %v3112
      %v3401 = vunpack.c.l.b16 %v3113
      %v3402 = vunpack.c.l.b16 %v3114
      %v3403 = vunpack.c.l.b16 %v3115
      %v3404 = vunpack.c.l.b16 %v3116
      %v3405 = vunpack.c.l.b16 %v3117
      %v3406 = vunpack.c.l.b16 %v3118
      %v3407 = vunpack.c.l.b16 %v3119
      %v3408 = vunpack.c.l.b16 %v3120
      %v3409 = vunpack.c.l.b16 %v3121
      %v3410 = vunpack.c.l.b16 %v3122
      %v3411 = vunpack.c.l.b16 %v3123
      %v3412 = vunpack.c.l.b16 %v3124
      %v3413 = vunpack.c.l.b16 %v3125
      %v3414 = vunpack.c.l.b16 %v3126
      %v3415 = vunpack.c.l.b16 %v3127
      %v3416 = vunpack.c.l.b16 %v3128
      %v3417 = vunpack.c.l.b16 %v3129
      %v3418 = vunpack.c.l.b16 %v3130
      %v3419 = vunpack.c.l.b16 %v3131
      %v3420 = vunpack.c.l.b16 %v3132
      %v3421 = vunpack.c.l.b16 %v3133
      %v3422 = vunpack.c.l.b16 %v3134
      %v3423 = vunpack.c.l.b16 %v3135
      %v3424 = vunpack.c.l.b16 %v3136
      %v3425 = vunpack.c.l.b16 %v3137
      %v3426 = vunpack.c.l.b16 %v3138
      %v3427 = vunpack.c.l.b16 %v3139
      %v3428 = vunpack.c.l.b16 %v3140
      %v3429 = vunpack.c.l.b16 %v3141
      %v3430 = vunpack.c.l.b16 %v3142
      %v3431 = vunpack.c.l.b16 %v3143
      %v3432 = vunpack.c.l.b16 %v3144
      %v3433 = vunpack.c.l.b16 %v3145
      %v3434 = vunpack.c.l.b16 %v3146
      %v3435 = vunpack.c.l.b16 %v3147
      %v3436 = vunpack.c.l.b16 %v3148
      %v3437 = vunpack.c.l.b16 %v3149
      %v3438 = vunpack.c.l.b16 %v3150
      %v3439 = vunpack.c.l.b16 %v3151
      %v3440 = vunpack.c.l.b16 %v3152
      %v3441 = vunpack.c.l.b16 %v3153
      %v3442 = vunpack.c.l.b16 %v3154
      %v3443 = vunpack.c.l.b16 %v3155
      %v3444 = vunpack.c.l.b16 %v3156
      %v3445 = vunpack.c.l.b16 %v3157
      %v3446 = vunpack.c.l.b16 %v3158
      %v3447 = vunpack.c.l.b16 %v3159
      %v3448 = vunpack.c.l.b16 %v3160
      %v3449 = vunpack.c.l.b16 %v3161
      %v3450 = vunpack.c.l.b16 %v3162
      %v3451 = vunpack.c.l.b16 %v3163
      %v3452 = vunpack.c.l.b16 %v3164
      %v3453 = vunpack.c.l.b16 %v3165
      %v3454 = vunpack.c.l.b16 %v3166
      %v3455 = vunpack.c.l.b16 %v3167
      %v3456 = vunpack.c.l.b16 %v3168
      %v3457 = vunpack.c.l.b16 %v3169
      %v3458 = vunpack.c.l.b16 %v3170
      %v3459 = vunpack.c.l.b16 %v3171
      %v3460 = vunpack.c.l.b16 %v3172
      %v3461 = vunpack.c.l.b16 %v3173
      %v3462 = vunpack.c.l.b16 %v3174
      %v3463 = vunpack.c.l.b16 %v3175
      %v3464 = vunpack.c.l.b16 %v3176
      %v3465 = vunpack.c.l.b16 %v3177
      %v3466 = vunpack.c.l.b16 %v3178
      %v3467 = vunpack.c.l.b16 %v3179
      %v3468 = vunpack.c.l.b16 %v3180
      %v3469 = vunpack.c.l.b16 %v3181
      %v3470 = vunpack.c.l.b16 %v3182
      %v3471 = vunpack.c.l.b16 %v3183
      %v3472 = vunpack.c.l.b16 %v3184
      %v3473 = vunpack.c.l.b16 %v3185
      %v3474 = vunpack.c.l.b16 %v3186
      %v3475 = vunpack.c.l.b16 %v3187
      %v3476 = vunpack.c.l.b16 %v3188
      %v3477 = vunpack.c.l.b16 %v3189
      %v3478 = vunpack.c.l.b16 %v3190
      %v3479 = vunpack.c.l.b16 %v3191
      %v3480 = vunpack.c.l.b16 %v3192
      %v3481 = vunpack.c.l.b16 %v3193
      %v3482 = vunpack.c.l.b16 %v3194
      %v3483 = vunpack.c.l.b16 %v3195
      %v3484 = vunpack.c.l.b16 %v3196
      %v3485 = vunpack.c.l.b16 %v3197
      %v3486 = vunpack.c.l.b16 %v3198
      %v3487 = vunpack.c.l.b16 %v3199
      %v3488 = vunpack.c.l.b16 %v3200
      %v3489 = vunpack.c.l.b16 %v3201
      %v3490 = vunpack.c.l.b16 %v3202
      %v3491 = vunpack.c.l.b16 %v3203
      %v3492 = vunpack.c.l.b16 %v3204
      %v3493 = vunpack.c.l.b16 %v3205
      %v3494 = vunpack.c.l.b16 %v3206
      %v3495 = vunpack.c.l.b16 %v3207
      %v3496 = vunpack.c.l.b16 %v3208
      %v3497 = vunpack.c.l.b16 %v3209
      %v3498 = vunpack.c.l.b16 %v3210
      %v3499 = vunpack.c.l.b16 %v3211
      %v3500 = vunpack.c.l.b16 %v3212
      %v3501 = vunpack.c.l.b16 %v3213
      %v3502 = vunpack.c.l.b16 %v3214
      %v3503 = vunpack.c.l.b16 %v3215
      %v3504 = vunpack.c.l.b16 %v3216
      %v3505 = vunpack.c.l.b16 %v3217
      %v3506 = vunpack.c.l.b16 %v3218
      %v3507 = vunpack.c.l.b16 %v3219
      %v3508 = vunpack.c.l.b16 %v3220
      %v3509 = vunpack.c.l.b16 %v3221
      %v3510 = vunpack.c.l.b16 %v3222
      %v3511 = vunpack.c.l.b16 %v3223
      %v3512 = vunpack.c.l.b16 %v3224
      %v3513 = vpack.c.b16 %v3370, %v3369
      %v3514 = vpack.c.b16 %v3372, %v3371
      %v3515 = vpack.c.b16 %v3374, %v3373
      %v3516 = vpack.c.b16 %v3376, %v3375
      %v3517 = vpack.c.b16 %v3378, %v3377
      %v3518 = vpack.c.b16 %v3380, %v3379
      %v3519 = vpack.c.b16 %v3382, %v3381
      %v3520 = vpack.c.b16 %v3384, %v3383
      %v3521 = vpack.c.b16 %v3386, %v3385
      %v3522 = vpack.c.b16 %v3388, %v3387
      %v3523 = vpack.c.b16 %v3390, %v3389
      %v3524 = vpack.c.b16 %v3392, %v3391
      %v3525 = vpack.c.b16 %v3394, %v3393
      %v3526 = vpack.c.b16 %v3396, %v3395
      %v3527 = vpack.c.b16 %v3398, %v3397
      %v3528 = vpack.c.b16 %v3400, %v3399
      %v3529 = vpack.c.b16 %v3402, %v3401
      %v3530 = vpack.c.b16 %v3404, %v3403
      %v3531 = vpack.c.b16 %v3406, %v3405
      %v3532 = vpack.c.b16 %v3408, %v3407
      %v3533 = vpack.c.b16 %v3410, %v3409
      %v3534 = vpack.c.b16 %v3412, %v3411
      %v3535 = vpack.c.b16 %v3414, %v3413
      %v3536 = vpack.c.b16 %v3416, %v3415
      %v3537 = vpack.c.b16 %v3418, %v3417
      %v3538 = vpack.c.b16 %v3420, %v3419
      %v3539 = vpack.c.b16 %v3422, %v3421
      %v3540 = vpack.c.b16 %v3424, %v3423
      %v3541 = vpack.c.b16 %v3426, %v3425
      %v3542 = vpack.c.b16 %v3428, %v3427
      %v3543 = vpack.c.b16 %v3430, %v3429
      %v3544 = vpack.c.b16 %v3432, %v3431
      %v3545 = vpack.c.b16 %v3434, %v3433
      %v3546 = vpack.c.b16 %v3436, %v3435
      %v3547 = vpack.c.b16 %v3438, %v3437
      %v3548 = vpack.c.b16 %v3440, %v3439
      %v3549 = vpack.c.b16 %v3442, %v3441
      %v3550 = vpack.c.b16 %v3444, %v3443
      %v3551 = vpack.c.b16 %v3446, %v3445
      %v3552 = vpack.c.b16 %v3448, %v3447
      %v3553 = vpack.c.b16 %v3450, %v3449
      %v3554 = vpack.c.b16 %v3452, %v3451
      %v3555 = vpack.c.b16 %v3454, %v3453
      %v3556 = vpack.c.b16 %v3456, %v3455
      %v3557 = vpack.c.b16 %v3458, %v3457
      %v3558 = vpack.c.b16 %v3460, %v3459
      %v3559 = vpack.c.b16 %v3462, %v3461
      %v3560 = vpack.c.b16 %v3464, %v3463
      %v3561 = vpack.c.b16 %v3466, %v3465
      %v3562 = vpack.c.b16 %v3468, %v3467
      %v3563 = vpack.c.b16 %v3470, %v3469
      %v3564 = vpack.c.b16 %v3472, %v3471
      %v3565 = vpack.c.b16 %v3474, %v3473
      %v3566 = vpack.c.b16 %v3476, %v3475
      %v3567 = vpack.c.b16 %v3478, %v3477
      %v3568 = vpack.c.b16 %v3480, %v3479
      %v3569 = vpack.c.b16 %v3482, %v3481
      %v3570 = vpack.c.b16 %v3484, %v3483
      %v3571 = vpack.c.b16 %v3486, %v3485
      %v3572 = vpack.c.b16 %v3488, %v3487
      %v3573 = vpack.c.b16 %v3490, %v3489
      %v3574 = vpack.c.b16 %v3492, %v3491
      %v3575 = vpack.c.b16 %v3494, %v3493
      %v3576 = vpack.c.b16 %v3496, %v3495
      %v3577 = vpack.c.b16 %v3498, %v3497
      %v3578 = vpack.c.b16 %v3500, %v3499
      %v3579 = vpack.c.b16 %v3502, %v3501
      %v3580 = vpack.c.b16 %v3504, %v3503
      %v3581 = vpack.c.b16 %v3506, %v3505
      %v3582 = vpack.c.b16 %v3508, %v3507
      %v3583 = vpack.c.b16 %v3510, %v3509
      %v3584 = vpack.c.b16 %v3512, %v3511
      %3657 = vmatpush.bf16.msra.mxu0 %v3520
      %3658 = vmatpush.bf16.msra.mxu0 %v3519
      %3659 = vmatpush.bf16.msra.mxu0 %v3518
      %3660 = vmatpush.bf16.msra.mxu0 %v3517
      %3661 = vmatpush.bf16.msra.mxu0 %v3516
      %3662 = vmatpush.bf16.msra.mxu0 %v3515
      %3663 = vmatpush.bf16.msra.mxu0 %v3514
      %3664 = vmatpush.bf16.msra.mxu0 %v3513
      %3665 = vmatmul.bf16.gmra.mxu0 %v2433
      %v3666 = vpop.f32.mrf.mxu0
      %v3667 = vadd.f32 0.0, %v3666
      %v3668 = vpop.f32.mrf.mxu0
      %v3669 = vadd.f32 0.0, %v3668
      %3670 = vmatmul.bf16.gmra.mxu0 %v2434
      %v3671 = vpop.f32.mrf.mxu0
      %v3672 = vadd.f32 0.0, %v3671
      %v3673 = vpop.f32.mrf.mxu0
      %v3674 = vadd.f32 0.0, %v3673
      %3675 = vmatmul.bf16.gmra.mxu0 %v2435
      %v3676 = vpop.f32.mrf.mxu0
      %v3677 = vadd.f32 0.0, %v3676
      %v3678 = vpop.f32.mrf.mxu0
      %v3679 = vadd.f32 0.0, %v3678
      %3680 = vmatmul.bf16.gmra.mxu0 %v2436
      %v3681 = vpop.f32.mrf.mxu0
      %v3682 = vadd.f32 0.0, %v3681
      %v3683 = vpop.f32.mrf.mxu0
      %v3684 = vadd.f32 0.0, %v3683
      %3685 = vmatmul.bf16.gmra.mxu0 %v2437
      %v3686 = vpop.f32.mrf.mxu0
      %v3687 = vadd.f32 0.0, %v3686
      %v3688 = vpop.f32.mrf.mxu0
      %v3689 = vadd.f32 0.0, %v3688
      %3690 = vmatmul.bf16.gmra.mxu0 %v2438
      %v3691 = vpop.f32.mrf.mxu0
      %v3692 = vadd.f32 0.0, %v3691
      %v3693 = vpop.f32.mrf.mxu0
      %v3694 = vadd.f32 0.0, %v3693
      %3695 = vmatmul.bf16.gmra.mxu0 %v2439
      %v3696 = vpop.f32.mrf.mxu0
      %v3697 = vadd.f32 0.0, %v3696
      %v3698 = vpop.f32.mrf.mxu0
      %v3699 = vadd.f32 0.0, %v3698
      %3700 = vmatmul.bf16.gmra.mxu0 %v2440
      %v3701 = vpop.f32.mrf.mxu0
      %v3702 = vadd.f32 0.0, %v3701
      %v3703 = vpop.f32.mrf.mxu0
      %v3704 = vadd.f32 0.0, %v3703
      %3705 = vmatmul.bf16.gmra.mxu0 %v2441
      %v3706 = vpop.f32.mrf.mxu0
      %v3707 = vadd.f32 0.0, %v3706
      %v3708 = vpop.f32.mrf.mxu0
      %v3709 = vadd.f32 0.0, %v3708
      %3710 = vmatmul.bf16.gmra.mxu0 %v2442
      %v3711 = vpop.f32.mrf.mxu0
      %v3712 = vadd.f32 0.0, %v3711
      %v3713 = vpop.f32.mrf.mxu0
      %v3714 = vadd.f32 0.0, %v3713
      %3715 = vmatmul.bf16.gmra.mxu0 %v2443
      %v3716 = vpop.f32.mrf.mxu0
      %v3717 = vadd.f32 0.0, %v3716
      %v3718 = vpop.f32.mrf.mxu0
      %v3719 = vadd.f32 0.0, %v3718
      %3720 = vmatmul.bf16.gmra.mxu0 %v2444
      %v3721 = vpop.f32.mrf.mxu0
      %v3722 = vadd.f32 0.0, %v3721
      %v3723 = vpop.f32.mrf.mxu0
      %v3724 = vadd.f32 0.0, %v3723
      %3725 = vmatmul.bf16.gmra.mxu0 %v2445
      %v3726 = vpop.f32.mrf.mxu0
      %v3727 = vadd.f32 0.0, %v3726
      %v3728 = vpop.f32.mrf.mxu0
      %v3729 = vadd.f32 0.0, %v3728
      %3730 = vmatmul.bf16.gmra.mxu0 %v2446
      %v3731 = vpop.f32.mrf.mxu0
      %v3732 = vadd.f32 0.0, %v3731
      %v3733 = vpop.f32.mrf.mxu0
      %v3734 = vadd.f32 0.0, %v3733
      %3735 = vmatmul.bf16.gmra.mxu0 %v2447
      %v3736 = vpop.f32.mrf.mxu0
      %v3737 = vadd.f32 0.0, %v3736
      %v3738 = vpop.f32.mrf.mxu0
      %v3739 = vadd.f32 0.0, %v3738
      %3740 = vmatmul.bf16.gmra.mxu0 %v2448
      %v3741 = vpop.f32.mrf.mxu0
      %v3742 = vadd.f32 0.0, %v3741
      %v3743 = vpop.f32.mrf.mxu0
      %v3744 = vadd.f32 0.0, %v3743
      %3745 = vmatmul.bf16.gmra.mxu0 %v2449
      %v3746 = vpop.f32.mrf.mxu0
      %v3747 = vadd.f32 0.0, %v3746
      %v3748 = vpop.f32.mrf.mxu0
      %v3749 = vadd.f32 0.0, %v3748
      %3750 = vmatmul.bf16.gmra.mxu0 %v2450
      %v3751 = vpop.f32.mrf.mxu0
      %v3752 = vadd.f32 0.0, %v3751
      %v3753 = vpop.f32.mrf.mxu0
      %v3754 = vadd.f32 0.0, %v3753
      %3755 = vdwg.mxu0
      %3756 = vmatpush.bf16.msra.mxu0 %v3528
      %3757 = vmatpush.bf16.msra.mxu0 %v3527
      %3758 = vmatpush.bf16.msra.mxu0 %v3526
      %3759 = vmatpush.bf16.msra.mxu0 %v3525
      %3760 = vmatpush.bf16.msra.mxu0 %v3524
      %3761 = vmatpush.bf16.msra.mxu0 %v3523
      %3762 = vmatpush.bf16.msra.mxu0 %v3522
      %3763 = vmatpush.bf16.msra.mxu0 %v3521
      %3764 = vmatmul.bf16.gmra.mxu0 %v2505
      %v3765 = vpop.f32.mrf.mxu0
      %v3766 = vadd.f32 %v3667, %v3765
      %v3767 = vpop.f32.mrf.mxu0
      %v3768 = vadd.f32 %v3669, %v3767
      %3769 = vmatmul.bf16.gmra.mxu0 %v2506
      %v3770 = vpop.f32.mrf.mxu0
      %v3771 = vadd.f32 %v3672, %v3770
      %v3772 = vpop.f32.mrf.mxu0
      %v3773 = vadd.f32 %v3674, %v3772
      %3774 = vmatmul.bf16.gmra.mxu0 %v2507
      %v3775 = vpop.f32.mrf.mxu0
      %v3776 = vadd.f32 %v3677, %v3775
      %v3777 = vpop.f32.mrf.mxu0
      %v3778 = vadd.f32 %v3679, %v3777
      %3779 = vmatmul.bf16.gmra.mxu0 %v2508
      %v3780 = vpop.f32.mrf.mxu0
      %v3781 = vadd.f32 %v3682, %v3780
      %v3782 = vpop.f32.mrf.mxu0
      %v3783 = vadd.f32 %v3684, %v3782
      %3784 = vmatmul.bf16.gmra.mxu0 %v2509
      %v3785 = vpop.f32.mrf.mxu0
      %v3786 = vadd.f32 %v3687, %v3785
      %v3787 = vpop.f32.mrf.mxu0
      %v3788 = vadd.f32 %v3689, %v3787
      %3789 = vmatmul.bf16.gmra.mxu0 %v2510
      %v3790 = vpop.f32.mrf.mxu0
      %v3791 = vadd.f32 %v3692, %v3790
      %v3792 = vpop.f32.mrf.mxu0
      %v3793 = vadd.f32 %v3694, %v3792
      %3794 = vmatmul.bf16.gmra.mxu0 %v2511
      %v3795 = vpop.f32.mrf.mxu0
      %v3796 = vadd.f32 %v3697, %v3795
      %v3797 = vpop.f32.mrf.mxu0
      %v3798 = vadd.f32 %v3699, %v3797
      %3799 = vmatmul.bf16.gmra.mxu0 %v2512
      %v3800 = vpop.f32.mrf.mxu0
      %v3801 = vadd.f32 %v3702, %v3800
      %v3802 = vpop.f32.mrf.mxu0
      %v3803 = vadd.f32 %v3704, %v3802
      %3804 = vmatmul.bf16.gmra.mxu0 %v2513
      %v3805 = vpop.f32.mrf.mxu0
      %v3806 = vadd.f32 %v3707, %v3805
      %v3807 = vpop.f32.mrf.mxu0
      %v3808 = vadd.f32 %v3709, %v3807
      %3809 = vmatmul.bf16.gmra.mxu0 %v2514
      %v3810 = vpop.f32.mrf.mxu0
      %v3811 = vadd.f32 %v3712, %v3810
      %v3812 = vpop.f32.mrf.mxu0
      %v3813 = vadd.f32 %v3714, %v3812
      %3814 = vmatmul.bf16.gmra.mxu0 %v2515
      %v3815 = vpop.f32.mrf.mxu0
      %v3816 = vadd.f32 %v3717, %v3815
      %v3817 = vpop.f32.mrf.mxu0
      %v3818 = vadd.f32 %v3719, %v3817
      %3819 = vmatmul.bf16.gmra.mxu0 %v2516
      %v3820 = vpop.f32.mrf.mxu0
      %v3821 = vadd.f32 %v3722, %v3820
      %v3822 = vpop.f32.mrf.mxu0
      %v3823 = vadd.f32 %v3724, %v3822
      %3824 = vmatmul.bf16.gmra.mxu0 %v2517
      %v3825 = vpop.f32.mrf.mxu0
      %v3826 = vadd.f32 %v3727, %v3825
      %v3827 = vpop.f32.mrf.mxu0
      %v3828 = vadd.f32 %v3729, %v3827
      %3829 = vmatmul.bf16.gmra.mxu0 %v2518
      %v3830 = vpop.f32.mrf.mxu0
      %v3831 = vadd.f32 %v3732, %v3830
      %v3832 = vpop.f32.mrf.mxu0
      %v3833 = vadd.f32 %v3734, %v3832
      %3834 = vmatmul.bf16.gmra.mxu0 %v2519
      %v3835 = vpop.f32.mrf.mxu0
      %v3836 = vadd.f32 %v3737, %v3835
      %v3837 = vpop.f32.mrf.mxu0
      %v3838 = vadd.f32 %v3739, %v3837
      %3839 = vmatmul.bf16.gmra.mxu0 %v2520
      %v3840 = vpop.f32.mrf.mxu0
      %v3841 = vadd.f32 %v3742, %v3840
      %v3842 = vpop.f32.mrf.mxu0
      %v3843 = vadd.f32 %v3744, %v3842
      %3844 = vmatmul.bf16.gmra.mxu0 %v2521
      %v3845 = vpop.f32.mrf.mxu0
      %v3846 = vadd.f32 %v3747, %v3845
      %v3847 = vpop.f32.mrf.mxu0
      %v3848 = vadd.f32 %v3749, %v3847
      %3849 = vmatmul.bf16.gmra.mxu0 %v2522
      %v3850 = vpop.f32.mrf.mxu0
      %v3851 = vadd.f32 %v3752, %v3850
      %v3852 = vpop.f32.mrf.mxu0
      %v3853 = vadd.f32 %v3754, %v3852
      %3854 = vdwg.mxu0
      %3855 = vmatpush.bf16.msra.mxu0 %v3536
      %3856 = vmatpush.bf16.msra.mxu0 %v3535
      %3857 = vmatpush.bf16.msra.mxu0 %v3534
      %3858 = vmatpush.bf16.msra.mxu0 %v3533
      %3859 = vmatpush.bf16.msra.mxu0 %v3532
      %3860 = vmatpush.bf16.msra.mxu0 %v3531
      %3861 = vmatpush.bf16.msra.mxu0 %v3530
      %3862 = vmatpush.bf16.msra.mxu0 %v3529
      %3863 = vmatmul.bf16.gmra.mxu0 %v2577
      %v3864 = vpop.f32.mrf.mxu0
      %v3865 = vadd.f32 %v3766, %v3864
      %v3866 = vpop.f32.mrf.mxu0
      %v3867 = vadd.f32 %v3768, %v3866
      %3868 = vmatmul.bf16.gmra.mxu0 %v2578
      %v3869 = vpop.f32.mrf.mxu0
      %v3870 = vadd.f32 %v3771, %v3869
      %v3871 = vpop.f32.mrf.mxu0
      %v3872 = vadd.f32 %v3773, %v3871
      %3873 = vmatmul.bf16.gmra.mxu0 %v2579
      %v3874 = vpop.f32.mrf.mxu0
      %v3875 = vadd.f32 %v3776, %v3874
      %v3876 = vpop.f32.mrf.mxu0
      %v3877 = vadd.f32 %v3778, %v3876
      %3878 = vmatmul.bf16.gmra.mxu0 %v2580
      %v3879 = vpop.f32.mrf.mxu0
      %v3880 = vadd.f32 %v3781, %v3879
      %v3881 = vpop.f32.mrf.mxu0
      %v3882 = vadd.f32 %v3783, %v3881
      %3883 = vmatmul.bf16.gmra.mxu0 %v2581
      %v3884 = vpop.f32.mrf.mxu0
      %v3885 = vadd.f32 %v3786, %v3884
      %v3886 = vpop.f32.mrf.mxu0
      %v3887 = vadd.f32 %v3788, %v3886
      %3888 = vmatmul.bf16.gmra.mxu0 %v2582
      %v3889 = vpop.f32.mrf.mxu0
      %v3890 = vadd.f32 %v3791, %v3889
      %v3891 = vpop.f32.mrf.mxu0
      %v3892 = vadd.f32 %v3793, %v3891
      %3893 = vmatmul.bf16.gmra.mxu0 %v2583
      %v3894 = vpop.f32.mrf.mxu0
      %v3895 = vadd.f32 %v3796, %v3894
      %v3896 = vpop.f32.mrf.mxu0
      %v3897 = vadd.f32 %v3798, %v3896
      %3898 = vmatmul.bf16.gmra.mxu0 %v2584
      %v3899 = vpop.f32.mrf.mxu0
      %v3900 = vadd.f32 %v3801, %v3899
      %v3901 = vpop.f32.mrf.mxu0
      %v3902 = vadd.f32 %v3803, %v3901
      %3903 = vmatmul.bf16.gmra.mxu0 %v2585
      %v3904 = vpop.f32.mrf.mxu0
      %v3905 = vadd.f32 %v3806, %v3904
      %v3906 = vpop.f32.mrf.mxu0
      %v3907 = vadd.f32 %v3808, %v3906
      %3908 = vmatmul.bf16.gmra.mxu0 %v2586
      %v3909 = vpop.f32.mrf.mxu0
      %v3910 = vadd.f32 %v3811, %v3909
      %v3911 = vpop.f32.mrf.mxu0
      %v3912 = vadd.f32 %v3813, %v3911
      %3913 = vmatmul.bf16.gmra.mxu0 %v2587
      %v3914 = vpop.f32.mrf.mxu0
      %v3915 = vadd.f32 %v3816, %v3914
      %v3916 = vpop.f32.mrf.mxu0
      %v3917 = vadd.f32 %v3818, %v3916
      %3918 = vmatmul.bf16.gmra.mxu0 %v2588
      %v3919 = vpop.f32.mrf.mxu0
      %v3920 = vadd.f32 %v3821, %v3919
      %v3921 = vpop.f32.mrf.mxu0
      %v3922 = vadd.f32 %v3823, %v3921
      %3923 = vmatmul.bf16.gmra.mxu0 %v2589
      %v3924 = vpop.f32.mrf.mxu0
      %v3925 = vadd.f32 %v3826, %v3924
      %v3926 = vpop.f32.mrf.mxu0
      %v3927 = vadd.f32 %v3828, %v3926
      %3928 = vmatmul.bf16.gmra.mxu0 %v2590
      %v3929 = vpop.f32.mrf.mxu0
      %v3930 = vadd.f32 %v3831, %v3929
      %v3931 = vpop.f32.mrf.mxu0
      %v3932 = vadd.f32 %v3833, %v3931
      %3933 = vmatmul.bf16.gmra.mxu0 %v2591
      %v3934 = vpop.f32.mrf.mxu0
      %v3935 = vadd.f32 %v3836, %v3934
      %v3936 = vpop.f32.mrf.mxu0
      %v3937 = vadd.f32 %v3838, %v3936
      %3938 = vmatmul.bf16.gmra.mxu0 %v2592
      %v3939 = vpop.f32.mrf.mxu0
      %v3940 = vadd.f32 %v3841, %v3939
      %v3941 = vpop.f32.mrf.mxu0
      %v3942 = vadd.f32 %v3843, %v3941
      %3943 = vmatmul.bf16.gmra.mxu0 %v2593
      %v3944 = vpop.f32.mrf.mxu0
      %v3945 = vadd.f32 %v3846, %v3944
      %v3946 = vpop.f32.mrf.mxu0
      %v3947 = vadd.f32 %v3848, %v3946
      %3948 = vmatmul.bf16.gmra.mxu0 %v2594
      %v3949 = vpop.f32.mrf.mxu0
      %v3950 = vadd.f32 %v3851, %v3949
      %v3951 = vpop.f32.mrf.mxu0
      %v3952 = vadd.f32 %v3853, %v3951
      %3953 = vdwg.mxu0
      %3954 = vmatpush.bf16.msra.mxu0 %v3544
      %3955 = vmatpush.bf16.msra.mxu0 %v3543
      %3956 = vmatpush.bf16.msra.mxu0 %v3542
      %3957 = vmatpush.bf16.msra.mxu0 %v3541
      %3958 = vmatpush.bf16.msra.mxu0 %v3540
      %3959 = vmatpush.bf16.msra.mxu0 %v3539
      %3960 = vmatpush.bf16.msra.mxu0 %v3538
      %3961 = vmatpush.bf16.msra.mxu0 %v3537
      %3962 = vmatmul.bf16.gmra.mxu0 %v2667
      %v3963 = vpop.f32.mrf.mxu0
      %v3964 = vadd.f32 %v3865, %v3963
      %v3965 = vpop.f32.mrf.mxu0
      %v3966 = vadd.f32 %v3867, %v3965
      %3967 = vmatmul.bf16.gmra.mxu0 %v2668
      %v3968 = vpop.f32.mrf.mxu0
      %v3969 = vadd.f32 %v3870, %v3968
      %v3970 = vpop.f32.mrf.mxu0
      %v3971 = vadd.f32 %v3872, %v3970
      %3972 = vmatmul.bf16.gmra.mxu0 %v2669
      %v3973 = vpop.f32.mrf.mxu0
      %v3974 = vadd.f32 %v3875, %v3973
      %v3975 = vpop.f32.mrf.mxu0
      %v3976 = vadd.f32 %v3877, %v3975
      %3977 = vmatmul.bf16.gmra.mxu0 %v2670
      %v3978 = vpop.f32.mrf.mxu0
      %v3979 = vadd.f32 %v3880, %v3978
      %v3980 = vpop.f32.mrf.mxu0
      %v3981 = vadd.f32 %v3882, %v3980
      %3982 = vmatmul.bf16.gmra.mxu0 %v2671
      %v3983 = vpop.f32.mrf.mxu0
      %v3984 = vadd.f32 %v3885, %v3983
      %v3985 = vpop.f32.mrf.mxu0
      %v3986 = vadd.f32 %v3887, %v3985
      %3987 = vmatmul.bf16.gmra.mxu0 %v2672
      %v3988 = vpop.f32.mrf.mxu0
      %v3989 = vadd.f32 %v3890, %v3988
      %v3990 = vpop.f32.mrf.mxu0
      %v3991 = vadd.f32 %v3892, %v3990
      %3992 = vmatmul.bf16.gmra.mxu0 %v2673
      %v3993 = vpop.f32.mrf.mxu0
      %v3994 = vadd.f32 %v3895, %v3993
      %v3995 = vpop.f32.mrf.mxu0
      %v3996 = vadd.f32 %v3897, %v3995
      %3997 = vmatmul.bf16.gmra.mxu0 %v2674
      %v3998 = vpop.f32.mrf.mxu0
      %v3999 = vadd.f32 %v3900, %v3998
      %v4000 = vpop.f32.mrf.mxu0
      %v4001 = vadd.f32 %v3902, %v4000
      %4002 = vmatmul.bf16.gmra.mxu0 %v2675
      %v4003 = vpop.f32.mrf.mxu0
      %v4004 = vadd.f32 %v3905, %v4003
      %v4005 = vpop.f32.mrf.mxu0
      %v4006 = vadd.f32 %v3907, %v4005
      %4007 = vmatmul.bf16.gmra.mxu0 %v2676
      %v4008 = vpop.f32.mrf.mxu0
      %v4009 = vadd.f32 %v3910, %v4008
      %v4010 = vpop.f32.mrf.mxu0
      %v4011 = vadd.f32 %v3912, %v4010
      %4012 = vmatmul.bf16.gmra.mxu0 %v2677
      %v4013 = vpop.f32.mrf.mxu0
      %v4014 = vadd.f32 %v3915, %v4013
      %v4015 = vpop.f32.mrf.mxu0
      %v4016 = vadd.f32 %v3917, %v4015
      %4017 = vmatmul.bf16.gmra.mxu0 %v2678
      %v4018 = vpop.f32.mrf.mxu0
      %v4019 = vadd.f32 %v3920, %v4018
      %v4020 = vpop.f32.mrf.mxu0
      %v4021 = vadd.f32 %v3922, %v4020
      %4022 = vmatmul.bf16.gmra.mxu0 %v2679
      %v4023 = vpop.f32.mrf.mxu0
      %v4024 = vadd.f32 %v3925, %v4023
      %v4025 = vpop.f32.mrf.mxu0
      %v4026 = vadd.f32 %v3927, %v4025
      %4027 = vmatmul.bf16.gmra.mxu0 %v2680
      %v4028 = vpop.f32.mrf.mxu0
      %v4029 = vadd.f32 %v3930, %v4028
      %v4030 = vpop.f32.mrf.mxu0
      %v4031 = vadd.f32 %v3932, %v4030
      %4032 = vmatmul.bf16.gmra.mxu0 %v2681
      %v4033 = vpop.f32.mrf.mxu0
      %v4034 = vadd.f32 %v3935, %v4033
      %v4035 = vpop.f32.mrf.mxu0
      %v4036 = vadd.f32 %v3937, %v4035
      %4037 = vmatmul.bf16.gmra.mxu0 %v2682
      %v4038 = vpop.f32.mrf.mxu0
      %v4039 = vadd.f32 %v3940, %v4038
      %v4040 = vpop.f32.mrf.mxu0
      %v4041 = vadd.f32 %v3942, %v4040
      %4042 = vmatmul.bf16.gmra.mxu0 %v2683
      %v4043 = vpop.f32.mrf.mxu0
      %v4044 = vadd.f32 %v3945, %v4043
      %v4045 = vpop.f32.mrf.mxu0
      %v4046 = vadd.f32 %v3947, %v4045
      %4047 = vmatmul.bf16.gmra.mxu0 %v2684
      %v4048 = vpop.f32.mrf.mxu0
      %v4049 = vadd.f32 %v3950, %v4048
      %v4050 = vpop.f32.mrf.mxu0
      %v4051 = vadd.f32 %v3952, %v4050
      %4052 = vdwg.mxu0
      %4053 = vmatpush.bf16.msra.mxu0 %v3552
      %4054 = vmatpush.bf16.msra.mxu0 %v3551
      %4055 = vmatpush.bf16.msra.mxu0 %v3550
      %4056 = vmatpush.bf16.msra.mxu0 %v3549
      %4057 = vmatpush.bf16.msra.mxu0 %v3548
      %4058 = vmatpush.bf16.msra.mxu0 %v3547
      %4059 = vmatpush.bf16.msra.mxu0 %v3546
      %4060 = vmatpush.bf16.msra.mxu0 %v3545
      %4061 = vmatmul.bf16.gmra.mxu0 %v2739
      %v4062 = vpop.f32.mrf.mxu0
      %v4063 = vadd.f32 %v3964, %v4062
      %v4064 = vpop.f32.mrf.mxu0
      %v4065 = vadd.f32 %v3966, %v4064
      %4066 = vmatmul.bf16.gmra.mxu0 %v2740
      %v4067 = vpop.f32.mrf.mxu0
      %v4068 = vadd.f32 %v3969, %v4067
      %v4069 = vpop.f32.mrf.mxu0
      %v4070 = vadd.f32 %v3971, %v4069
      %4071 = vmatmul.bf16.gmra.mxu0 %v2741
      %v4072 = vpop.f32.mrf.mxu0
      %v4073 = vadd.f32 %v3974, %v4072
      %v4074 = vpop.f32.mrf.mxu0
      %v4075 = vadd.f32 %v3976, %v4074
      %4076 = vmatmul.bf16.gmra.mxu0 %v2742
      %v4077 = vpop.f32.mrf.mxu0
      %v4078 = vadd.f32 %v3979, %v4077
      %v4079 = vpop.f32.mrf.mxu0
      %v4080 = vadd.f32 %v3981, %v4079
      %4081 = vmatmul.bf16.gmra.mxu0 %v2743
      %v4082 = vpop.f32.mrf.mxu0
      %v4083 = vadd.f32 %v3984, %v4082
      %v4084 = vpop.f32.mrf.mxu0
      %v4085 = vadd.f32 %v3986, %v4084
      %4086 = vmatmul.bf16.gmra.mxu0 %v2744
      %v4087 = vpop.f32.mrf.mxu0
      %v4088 = vadd.f32 %v3989, %v4087
      %v4089 = vpop.f32.mrf.mxu0
      %v4090 = vadd.f32 %v3991, %v4089
      %4091 = vmatmul.bf16.gmra.mxu0 %v2745
      %v4092 = vpop.f32.mrf.mxu0
      %v4093 = vadd.f32 %v3994, %v4092
      %v4094 = vpop.f32.mrf.mxu0
      %v4095 = vadd.f32 %v3996, %v4094
      %4096 = vmatmul.bf16.gmra.mxu0 %v2746
      %v4097 = vpop.f32.mrf.mxu0
      %v4098 = vadd.f32 %v3999, %v4097
      %v4099 = vpop.f32.mrf.mxu0
      %v4100 = vadd.f32 %v4001, %v4099
      %4101 = vmatmul.bf16.gmra.mxu0 %v2747
      %v4102 = vpop.f32.mrf.mxu0
      %v4103 = vadd.f32 %v4004, %v4102
      %v4104 = vpop.f32.mrf.mxu0
      %v4105 = vadd.f32 %v4006, %v4104
      %4106 = vmatmul.bf16.gmra.mxu0 %v2748
      %v4107 = vpop.f32.mrf.mxu0
      %v4108 = vadd.f32 %v4009, %v4107
      %v4109 = vpop.f32.mrf.mxu0
      %v4110 = vadd.f32 %v4011, %v4109
      %4111 = vmatmul.bf16.gmra.mxu0 %v2749
      %v4112 = vpop.f32.mrf.mxu0
      %v4113 = vadd.f32 %v4014, %v4112
      %v4114 = vpop.f32.mrf.mxu0
      %v4115 = vadd.f32 %v4016, %v4114
      %4116 = vmatmul.bf16.gmra.mxu0 %v2750
      %v4117 = vpop.f32.mrf.mxu0
      %v4118 = vadd.f32 %v4019, %v4117
      %v4119 = vpop.f32.mrf.mxu0
      %v4120 = vadd.f32 %v4021, %v4119
      %4121 = vmatmul.bf16.gmra.mxu0 %v2751
      %v4122 = vpop.f32.mrf.mxu0
      %v4123 = vadd.f32 %v4024, %v4122
      %v4124 = vpop.f32.mrf.mxu0
      %v4125 = vadd.f32 %v4026, %v4124
      %4126 = vmatmul.bf16.gmra.mxu0 %v2752
      %v4127 = vpop.f32.mrf.mxu0
      %v4128 = vadd.f32 %v4029, %v4127
      %v4129 = vpop.f32.mrf.mxu0
      %v4130 = vadd.f32 %v4031, %v4129
      %4131 = vmatmul.bf16.gmra.mxu0 %v2753
      %v4132 = vpop.f32.mrf.mxu0
      %v4133 = vadd.f32 %v4034, %v4132
      %v4134 = vpop.f32.mrf.mxu0
      %v4135 = vadd.f32 %v4036, %v4134
      %4136 = vmatmul.bf16.gmra.mxu0 %v2754
      %v4137 = vpop.f32.mrf.mxu0
      %v4138 = vadd.f32 %v4039, %v4137
      %v4139 = vpop.f32.mrf.mxu0
      %v4140 = vadd.f32 %v4041, %v4139
      %4141 = vmatmul.bf16.gmra.mxu0 %v2755
      %v4142 = vpop.f32.mrf.mxu0
      %v4143 = vadd.f32 %v4044, %v4142
      %v4144 = vpop.f32.mrf.mxu0
      %v4145 = vadd.f32 %v4046, %v4144
      %4146 = vmatmul.bf16.gmra.mxu0 %v2756
      %v4147 = vpop.f32.mrf.mxu0
      %v4148 = vadd.f32 %v4049, %v4147
      %v4149 = vpop.f32.mrf.mxu0
      %v4150 = vadd.f32 %v4051, %v4149
      %4151 = vdwg.mxu0
      %4152 = vmatpush.bf16.msra.mxu0 %v3560
      %4153 = vmatpush.bf16.msra.mxu0 %v3559
      %4154 = vmatpush.bf16.msra.mxu0 %v3558
      %4155 = vmatpush.bf16.msra.mxu0 %v3557
      %4156 = vmatpush.bf16.msra.mxu0 %v3556
      %4157 = vmatpush.bf16.msra.mxu0 %v3555
      %4158 = vmatpush.bf16.msra.mxu0 %v3554
      %4159 = vmatpush.bf16.msra.mxu0 %v3553
      %4160 = vmatmul.bf16.gmra.mxu0 %v2811
      %v4161 = vpop.f32.mrf.mxu0
      %v4162 = vadd.f32 %v4063, %v4161
      %v4163 = vpop.f32.mrf.mxu0
      %v4164 = vadd.f32 %v4065, %v4163
      %4165 = vmatmul.bf16.gmra.mxu0 %v2812
      %v4166 = vpop.f32.mrf.mxu0
      %v4167 = vadd.f32 %v4068, %v4166
      %v4168 = vpop.f32.mrf.mxu0
      %v4169 = vadd.f32 %v4070, %v4168
      %4170 = vmatmul.bf16.gmra.mxu0 %v2813
      %v4171 = vpop.f32.mrf.mxu0
      %v4172 = vadd.f32 %v4073, %v4171
      %v4173 = vpop.f32.mrf.mxu0
      %v4174 = vadd.f32 %v4075, %v4173
      %4175 = vmatmul.bf16.gmra.mxu0 %v2814
      %v4176 = vpop.f32.mrf.mxu0
      %v4177 = vadd.f32 %v4078, %v4176
      %v4178 = vpop.f32.mrf.mxu0
      %v4179 = vadd.f32 %v4080, %v4178
      %4180 = vmatmul.bf16.gmra.mxu0 %v2815
      %v4181 = vpop.f32.mrf.mxu0
      %v4182 = vadd.f32 %v4083, %v4181
      %v4183 = vpop.f32.mrf.mxu0
      %v4184 = vadd.f32 %v4085, %v4183
      %4185 = vmatmul.bf16.gmra.mxu0 %v2816
      %v4186 = vpop.f32.mrf.mxu0
      %v4187 = vadd.f32 %v4088, %v4186
      %v4188 = vpop.f32.mrf.mxu0
      %v4189 = vadd.f32 %v4090, %v4188
      %4190 = vmatmul.bf16.gmra.mxu0 %v2817
      %v4191 = vpop.f32.mrf.mxu0
      %v4192 = vadd.f32 %v4093, %v4191
      %v4193 = vpop.f32.mrf.mxu0
      %v4194 = vadd.f32 %v4095, %v4193
      %4195 = vmatmul.bf16.gmra.mxu0 %v2818
      %v4196 = vpop.f32.mrf.mxu0
      %v4197 = vadd.f32 %v4098, %v4196
      %v4198 = vpop.f32.mrf.mxu0
      %v4199 = vadd.f32 %v4100, %v4198
      %4200 = vmatmul.bf16.gmra.mxu0 %v2819
      %v4201 = vpop.f32.mrf.mxu0
      %v4202 = vadd.f32 %v4103, %v4201
      %v4203 = vpop.f32.mrf.mxu0
      %v4204 = vadd.f32 %v4105, %v4203
      %4205 = vmatmul.bf16.gmra.mxu0 %v2820
      %v4206 = vpop.f32.mrf.mxu0
      %v4207 = vadd.f32 %v4108, %v4206
      %v4208 = vpop.f32.mrf.mxu0
      %v4209 = vadd.f32 %v4110, %v4208
      %4210 = vmatmul.bf16.gmra.mxu0 %v2821
      %v4211 = vpop.f32.mrf.mxu0
      %v4212 = vadd.f32 %v4113, %v4211
      %v4213 = vpop.f32.mrf.mxu0
      %v4214 = vadd.f32 %v4115, %v4213
      %4215 = vmatmul.bf16.gmra.mxu0 %v2822
      %v4216 = vpop.f32.mrf.mxu0
      %v4217 = vadd.f32 %v4118, %v4216
      %v4218 = vpop.f32.mrf.mxu0
      %v4219 = vadd.f32 %v4120, %v4218
      %4220 = vmatmul.bf16.gmra.mxu0 %v2823
      %v4221 = vpop.f32.mrf.mxu0
      %v4222 = vadd.f32 %v4123, %v4221
      %v4223 = vpop.f32.mrf.mxu0
      %v4224 = vadd.f32 %v4125, %v4223
      %4225 = vmatmul.bf16.gmra.mxu0 %v2824
      %v4226 = vpop.f32.mrf.mxu0
      %v4227 = vadd.f32 %v4128, %v4226
      %v4228 = vpop.f32.mrf.mxu0
      %v4229 = vadd.f32 %v4130, %v4228
      %4230 = vmatmul.bf16.gmra.mxu0 %v2825
      %v4231 = vpop.f32.mrf.mxu0
      %v4232 = vadd.f32 %v4133, %v4231
      %v4233 = vpop.f32.mrf.mxu0
      %v4234 = vadd.f32 %v4135, %v4233
      %4235 = vmatmul.bf16.gmra.mxu0 %v2826
      %v4236 = vpop.f32.mrf.mxu0
      %v4237 = vadd.f32 %v4138, %v4236
      %v4238 = vpop.f32.mrf.mxu0
      %v4239 = vadd.f32 %v4140, %v4238
      %4240 = vmatmul.bf16.gmra.mxu0 %v2827
      %v4241 = vpop.f32.mrf.mxu0
      %v4242 = vadd.f32 %v4143, %v4241
      %v4243 = vpop.f32.mrf.mxu0
      %v4244 = vadd.f32 %v4145, %v4243
      %4245 = vmatmul.bf16.gmra.mxu0 %v2828
      %v4246 = vpop.f32.mrf.mxu0
      %v4247 = vadd.f32 %v4148, %v4246
      %v4248 = vpop.f32.mrf.mxu0
      %v4249 = vadd.f32 %v4150, %v4248
      %4250 = vdwg.mxu0
      %4251 = vmatpush.bf16.msra.mxu0 %v3568
      %4252 = vmatpush.bf16.msra.mxu0 %v3567
      %4253 = vmatpush.bf16.msra.mxu0 %v3566
      %4254 = vmatpush.bf16.msra.mxu0 %v3565
      %4255 = vmatpush.bf16.msra.mxu0 %v3564
      %4256 = vmatpush.bf16.msra.mxu0 %v3563
      %4257 = vmatpush.bf16.msra.mxu0 %v3562
      %4258 = vmatpush.bf16.msra.mxu0 %v3561
      %4259 = vmatmul.bf16.gmra.mxu0 %v2901
      %v4260 = vpop.f32.mrf.mxu0
      %v4261 = vadd.f32 %v4162, %v4260
      %v4262 = vpop.f32.mrf.mxu0
      %v4263 = vadd.f32 %v4164, %v4262
      %4264 = vmatmul.bf16.gmra.mxu0 %v2902
      %v4265 = vpop.f32.mrf.mxu0
      %v4266 = vadd.f32 %v4167, %v4265
      %v4267 = vpop.f32.mrf.mxu0
      %v4268 = vadd.f32 %v4169, %v4267
      %4269 = vmatmul.bf16.gmra.mxu0 %v2903
      %v4270 = vpop.f32.mrf.mxu0
      %v4271 = vadd.f32 %v4172, %v4270
      %v4272 = vpop.f32.mrf.mxu0
      %v4273 = vadd.f32 %v4174, %v4272
      %4274 = vmatmul.bf16.gmra.mxu0 %v2904
      %v4275 = vpop.f32.mrf.mxu0
      %v4276 = vadd.f32 %v4177, %v4275
      %v4277 = vpop.f32.mrf.mxu0
      %v4278 = vadd.f32 %v4179, %v4277
      %4279 = vmatmul.bf16.gmra.mxu0 %v2905
      %v4280 = vpop.f32.mrf.mxu0
      %v4281 = vadd.f32 %v4182, %v4280
      %v4282 = vpop.f32.mrf.mxu0
      %v4283 = vadd.f32 %v4184, %v4282
      %4284 = vmatmul.bf16.gmra.mxu0 %v2906
      %v4285 = vpop.f32.mrf.mxu0
      %v4286 = vadd.f32 %v4187, %v4285
      %v4287 = vpop.f32.mrf.mxu0
      %v4288 = vadd.f32 %v4189, %v4287
      %4289 = vmatmul.bf16.gmra.mxu0 %v2907
      %v4290 = vpop.f32.mrf.mxu0
      %v4291 = vadd.f32 %v4192, %v4290
      %v4292 = vpop.f32.mrf.mxu0
      %v4293 = vadd.f32 %v4194, %v4292
      %4294 = vmatmul.bf16.gmra.mxu0 %v2908
      %v4295 = vpop.f32.mrf.mxu0
      %v4296 = vadd.f32 %v4197, %v4295
      %v4297 = vpop.f32.mrf.mxu0
      %v4298 = vadd.f32 %v4199, %v4297
      %4299 = vmatmul.bf16.gmra.mxu0 %v2909
      %v4300 = vpop.f32.mrf.mxu0
      %v4301 = vadd.f32 %v4202, %v4300
      %v4302 = vpop.f32.mrf.mxu0
      %v4303 = vadd.f32 %v4204, %v4302
      %4304 = vmatmul.bf16.gmra.mxu0 %v2910
      %v4305 = vpop.f32.mrf.mxu0
      %v4306 = vadd.f32 %v4207, %v4305
      %v4307 = vpop.f32.mrf.mxu0
      %v4308 = vadd.f32 %v4209, %v4307
      %4309 = vmatmul.bf16.gmra.mxu0 %v2911
      %v4310 = vpop.f32.mrf.mxu0
      %v4311 = vadd.f32 %v4212, %v4310
      %v4312 = vpop.f32.mrf.mxu0
      %v4313 = vadd.f32 %v4214, %v4312
      %4314 = vmatmul.bf16.gmra.mxu0 %v2912
      %v4315 = vpop.f32.mrf.mxu0
      %v4316 = vadd.f32 %v4217, %v4315
      %v4317 = vpop.f32.mrf.mxu0
      %v4318 = vadd.f32 %v4219, %v4317
      %4319 = vmatmul.bf16.gmra.mxu0 %v2913
      %v4320 = vpop.f32.mrf.mxu0
      %v4321 = vadd.f32 %v4222, %v4320
      %v4322 = vpop.f32.mrf.mxu0
      %v4323 = vadd.f32 %v4224, %v4322
      %4324 = vmatmul.bf16.gmra.mxu0 %v2914
      %v4325 = vpop.f32.mrf.mxu0
      %v4326 = vadd.f32 %v4227, %v4325
      %v4327 = vpop.f32.mrf.mxu0
      %v4328 = vadd.f32 %v4229, %v4327
      %4329 = vmatmul.bf16.gmra.mxu0 %v2915
      %v4330 = vpop.f32.mrf.mxu0
      %v4331 = vadd.f32 %v4232, %v4330
      %v4332 = vpop.f32.mrf.mxu0
      %v4333 = vadd.f32 %v4234, %v4332
      %4334 = vmatmul.bf16.gmra.mxu0 %v2916
      %v4335 = vpop.f32.mrf.mxu0
      %v4336 = vadd.f32 %v4237, %v4335
      %v4337 = vpop.f32.mrf.mxu0
      %v4338 = vadd.f32 %v4239, %v4337
      %4339 = vmatmul.bf16.gmra.mxu0 %v2917
      %v4340 = vpop.f32.mrf.mxu0
      %v4341 = vadd.f32 %v4242, %v4340
      %v4342 = vpop.f32.mrf.mxu0
      %v4343 = vadd.f32 %v4244, %v4342
      %4344 = vmatmul.bf16.gmra.mxu0 %v2918
      %v4345 = vpop.f32.mrf.mxu0
      %v4346 = vadd.f32 %v4247, %v4345
      %v4347 = vpop.f32.mrf.mxu0
      %v4348 = vadd.f32 %v4249, %v4347
      %4349 = vdwg.mxu0
      %4350 = vmatpush.bf16.msra.mxu0 %v3576
      %4351 = vmatpush.bf16.msra.mxu0 %v3575
      %4352 = vmatpush.bf16.msra.mxu0 %v3574
      %4353 = vmatpush.bf16.msra.mxu0 %v3573
      %4354 = vmatpush.bf16.msra.mxu0 %v3572
      %4355 = vmatpush.bf16.msra.mxu0 %v3571
      %4356 = vmatpush.bf16.msra.mxu0 %v3570
      %4357 = vmatpush.bf16.msra.mxu0 %v3569
      %4358 = vmatmul.bf16.gmra.mxu0 %v2973
      %v4359 = vpop.f32.mrf.mxu0
      %v4360 = vadd.f32 %v4261, %v4359
      %v4361 = vpop.f32.mrf.mxu0
      %v4362 = vadd.f32 %v4263, %v4361
      %4363 = vmatmul.bf16.gmra.mxu0 %v2974
      %v4364 = vpop.f32.mrf.mxu0
      %v4365 = vadd.f32 %v4266, %v4364
      %v4366 = vpop.f32.mrf.mxu0
      %v4367 = vadd.f32 %v4268, %v4366
      %4368 = vmatmul.bf16.gmra.mxu0 %v2975
      %v4369 = vpop.f32.mrf.mxu0
      %v4370 = vadd.f32 %v4271, %v4369
      %v4371 = vpop.f32.mrf.mxu0
      %v4372 = vadd.f32 %v4273, %v4371
      %4373 = vmatmul.bf16.gmra.mxu0 %v2976
      %v4374 = vpop.f32.mrf.mxu0
      %v4375 = vadd.f32 %v4276, %v4374
      %v4376 = vpop.f32.mrf.mxu0
      %v4377 = vadd.f32 %v4278, %v4376
      %4378 = vmatmul.bf16.gmra.mxu0 %v2977
      %v4379 = vpop.f32.mrf.mxu0
      %v4380 = vadd.f32 %v4281, %v4379
      %v4381 = vpop.f32.mrf.mxu0
      %v4382 = vadd.f32 %v4283, %v4381
      %4383 = vmatmul.bf16.gmra.mxu0 %v2978
      %v4384 = vpop.f32.mrf.mxu0
      %v4385 = vadd.f32 %v4286, %v4384
      %v4386 = vpop.f32.mrf.mxu0
      %v4387 = vadd.f32 %v4288, %v4386
      %4388 = vmatmul.bf16.gmra.mxu0 %v2979
      %v4389 = vpop.f32.mrf.mxu0
      %v4390 = vadd.f32 %v4291, %v4389
      %v4391 = vpop.f32.mrf.mxu0
      %v4392 = vadd.f32 %v4293, %v4391
      %4393 = vmatmul.bf16.gmra.mxu0 %v2980
      %v4394 = vpop.f32.mrf.mxu0
      %v4395 = vadd.f32 %v4296, %v4394
      %v4396 = vpop.f32.mrf.mxu0
      %v4397 = vadd.f32 %v4298, %v4396
      %4398 = vmatmul.bf16.gmra.mxu0 %v2981
      %v4399 = vpop.f32.mrf.mxu0
      %v4400 = vadd.f32 %v4301, %v4399
      %v4401 = vpop.f32.mrf.mxu0
      %v4402 = vadd.f32 %v4303, %v4401
      %4403 = vmatmul.bf16.gmra.mxu0 %v2982
      %v4404 = vpop.f32.mrf.mxu0
      %v4405 = vadd.f32 %v4306, %v4404
      %v4406 = vpop.f32.mrf.mxu0
      %v4407 = vadd.f32 %v4308, %v4406
      %4408 = vmatmul.bf16.gmra.mxu0 %v2983
      %v4409 = vpop.f32.mrf.mxu0
      %v4410 = vadd.f32 %v4311, %v4409
      %v4411 = vpop.f32.mrf.mxu0
      %v4412 = vadd.f32 %v4313, %v4411
      %4413 = vmatmul.bf16.gmra.mxu0 %v2984
      %v4414 = vpop.f32.mrf.mxu0
      %v4415 = vadd.f32 %v4316, %v4414
      %v4416 = vpop.f32.mrf.mxu0
      %v4417 = vadd.f32 %v4318, %v4416
      %4418 = vmatmul.bf16.gmra.mxu0 %v2985
      %v4419 = vpop.f32.mrf.mxu0
      %v4420 = vadd.f32 %v4321, %v4419
      %v4421 = vpop.f32.mrf.mxu0
      %v4422 = vadd.f32 %v4323, %v4421
      %4423 = vmatmul.bf16.gmra.mxu0 %v2986
      %v4424 = vpop.f32.mrf.mxu0
      %v4425 = vadd.f32 %v4326, %v4424
      %v4426 = vpop.f32.mrf.mxu0
      %v4427 = vadd.f32 %v4328, %v4426
      %4428 = vmatmul.bf16.gmra.mxu0 %v2987
      %v4429 = vpop.f32.mrf.mxu0
      %v4430 = vadd.f32 %v4331, %v4429
      %v4431 = vpop.f32.mrf.mxu0
      %v4432 = vadd.f32 %v4333, %v4431
      %4433 = vmatmul.bf16.gmra.mxu0 %v2988
      %v4434 = vpop.f32.mrf.mxu0
      %v4435 = vadd.f32 %v4336, %v4434
      %v4436 = vpop.f32.mrf.mxu0
      %v4437 = vadd.f32 %v4338, %v4436
      %4438 = vmatmul.bf16.gmra.mxu0 %v2989
      %v4439 = vpop.f32.mrf.mxu0
      %v4440 = vadd.f32 %v4341, %v4439
      %v4441 = vpop.f32.mrf.mxu0
      %v4442 = vadd.f32 %v4343, %v4441
      %4443 = vmatmul.bf16.gmra.mxu0 %v2990
      %v4444 = vpop.f32.mrf.mxu0
      %v4445 = vadd.f32 %v4346, %v4444
      %v4446 = vpop.f32.mrf.mxu0
      %v4447 = vadd.f32 %v4348, %v4446
      %4448 = vdwg.mxu0
      %4449 = vmatpush.bf16.msra.mxu0 %v3584
      %4450 = vmatpush.bf16.msra.mxu0 %v3583
      %4451 = vmatpush.bf16.msra.mxu0 %v3582
      %4452 = vmatpush.bf16.msra.mxu0 %v3581
      %4453 = vmatpush.bf16.msra.mxu0 %v3580
      %4454 = vmatpush.bf16.msra.mxu0 %v3579
      %4455 = vmatpush.bf16.msra.mxu0 %v3578
      %4456 = vmatpush.bf16.msra.mxu0 %v3577
      %4457 = vmatmul.bf16.gmra.mxu0 %v3045
      %v4458 = vpop.f32.mrf.mxu0
      %v4459 = vadd.f32 %v4360, %v4458
      %v4460 = vpop.f32.mrf.mxu0
      %v4461 = vadd.f32 %v4362, %v4460
      %4462 = vmatmul.bf16.gmra.mxu0 %v3046
      %v4463 = vpop.f32.mrf.mxu0
      %v4464 = vadd.f32 %v4365, %v4463
      %v4465 = vpop.f32.mrf.mxu0
      %v4466 = vadd.f32 %v4367, %v4465
      %4467 = vmatmul.bf16.gmra.mxu0 %v3047
      %v4468 = vpop.f32.mrf.mxu0
      %v4469 = vadd.f32 %v4370, %v4468
      %v4470 = vpop.f32.mrf.mxu0
      %v4471 = vadd.f32 %v4372, %v4470
      %4472 = vmatmul.bf16.gmra.mxu0 %v3048
      %v4473 = vpop.f32.mrf.mxu0
      %v4474 = vadd.f32 %v4375, %v4473
      %v4475 = vpop.f32.mrf.mxu0
      %v4476 = vadd.f32 %v4377, %v4475
      %4477 = vmatmul.bf16.gmra.mxu0 %v3049
      %v4478 = vpop.f32.mrf.mxu0
      %v4479 = vadd.f32 %v4380, %v4478
      %v4480 = vpop.f32.mrf.mxu0
      %v4481 = vadd.f32 %v4382, %v4480
      %4482 = vmatmul.bf16.gmra.mxu0 %v3050
      %v4483 = vpop.f32.mrf.mxu0
      %v4484 = vadd.f32 %v4385, %v4483
      %v4485 = vpop.f32.mrf.mxu0
      %v4486 = vadd.f32 %v4387, %v4485
      %4487 = vmatmul.bf16.gmra.mxu0 %v3051
      %v4488 = vpop.f32.mrf.mxu0
      %v4489 = vadd.f32 %v4390, %v4488
      %v4490 = vpop.f32.mrf.mxu0
      %v4491 = vadd.f32 %v4392, %v4490
      %4492 = vmatmul.bf16.gmra.mxu0 %v3052
      %v4493 = vpop.f32.mrf.mxu0
      %v4494 = vadd.f32 %v4395, %v4493
      %v4495 = vpop.f32.mrf.mxu0
      %v4496 = vadd.f32 %v4397, %v4495
      %4497 = vmatmul.bf16.gmra.mxu0 %v3053
      %v4498 = vpop.f32.mrf.mxu0
      %v4499 = vadd.f32 %v4400, %v4498
      %v4500 = vpop.f32.mrf.mxu0
      %v4501 = vadd.f32 %v4402, %v4500
      %4502 = vmatmul.bf16.gmra.mxu0 %v3054
      %v4503 = vpop.f32.mrf.mxu0
      %v4504 = vadd.f32 %v4405, %v4503
      %v4505 = vpop.f32.mrf.mxu0
      %v4506 = vadd.f32 %v4407, %v4505
      %4507 = vmatmul.bf16.gmra.mxu0 %v3055
      %v4508 = vpop.f32.mrf.mxu0
      %v4509 = vadd.f32 %v4410, %v4508
      %v4510 = vpop.f32.mrf.mxu0
      %v4511 = vadd.f32 %v4412, %v4510
      %4512 = vmatmul.bf16.gmra.mxu0 %v3056
      %v4513 = vpop.f32.mrf.mxu0
      %v4514 = vadd.f32 %v4415, %v4513
      %v4515 = vpop.f32.mrf.mxu0
      %v4516 = vadd.f32 %v4417, %v4515
      %4517 = vmatmul.bf16.gmra.mxu0 %v3057
      %v4518 = vpop.f32.mrf.mxu0
      %v4519 = vadd.f32 %v4420, %v4518
      %v4520 = vpop.f32.mrf.mxu0
      %v4521 = vadd.f32 %v4422, %v4520
      %4522 = vmatmul.bf16.gmra.mxu0 %v3058
      %v4523 = vpop.f32.mrf.mxu0
      %v4524 = vadd.f32 %v4425, %v4523
      %v4525 = vpop.f32.mrf.mxu0
      %v4526 = vadd.f32 %v4427, %v4525
      %4527 = vmatmul.bf16.gmra.mxu0 %v3059
      %v4528 = vpop.f32.mrf.mxu0
      %v4529 = vadd.f32 %v4430, %v4528
      %v4530 = vpop.f32.mrf.mxu0
      %v4531 = vadd.f32 %v4432, %v4530
      %4532 = vmatmul.bf16.gmra.mxu0 %v3060
      %v4533 = vpop.f32.mrf.mxu0
      %v4534 = vadd.f32 %v4435, %v4533
      %v4535 = vpop.f32.mrf.mxu0
      %v4536 = vadd.f32 %v4437, %v4535
      %4537 = vmatmul.bf16.gmra.mxu0 %v3061
      %v4538 = vpop.f32.mrf.mxu0
      %v4539 = vadd.f32 %v4440, %v4538
      %v4540 = vpop.f32.mrf.mxu0
      %v4541 = vadd.f32 %v4442, %v4540
      %4542 = vmatmul.bf16.gmra.mxu0 %v3062
      %v4543 = vpop.f32.mrf.mxu0
      %v4544 = vadd.f32 %v4445, %v4543
      %v4545 = vpop.f32.mrf.mxu0
      %v4546 = vadd.f32 %v4447, %v4545
      %4547 = vdwg.mxu0
      %v4548 = vld [vmem:[%s2] sm:$0x1]
      %v4550 = vperm.slane %v4548, 0
      %v4552 = vmul.f32 %v4459, %v4550
      %v4553 = vmul.f32 %v4461, %v4550
      %v4554 = vmul.f32 %v4464, %v4550
      %v4555 = vmul.f32 %v4466, %v4550
      %v4556 = vmul.f32 %v4469, %v4550
      %v4557 = vmul.f32 %v4471, %v4550
      %v4558 = vmul.f32 %v4474, %v4550
      %v4559 = vmul.f32 %v4476, %v4550
      %v4560 = vmul.f32 %v4479, %v4550
      %v4561 = vmul.f32 %v4481, %v4550
      %v4562 = vmul.f32 %v4484, %v4550
      %v4563 = vmul.f32 %v4486, %v4550
      %v4564 = vmul.f32 %v4489, %v4550
      %v4565 = vmul.f32 %v4491, %v4550
      %v4566 = vmul.f32 %v4494, %v4550
      %v4567 = vmul.f32 %v4496, %v4550
      %v4568 = vmul.f32 %v4499, %v4550
      %v4569 = vmul.f32 %v4501, %v4550
      %v4570 = vmul.f32 %v4504, %v4550
      %v4571 = vmul.f32 %v4506, %v4550
      %v4572 = vmul.f32 %v4509, %v4550
      %v4573 = vmul.f32 %v4511, %v4550
      %v4574 = vmul.f32 %v4514, %v4550
      %v4575 = vmul.f32 %v4516, %v4550
      %v4576 = vmul.f32 %v4519, %v4550
      %v4577 = vmul.f32 %v4521, %v4550
      %v4578 = vmul.f32 %v4524, %v4550
      %v4579 = vmul.f32 %v4526, %v4550
      %v4580 = vmul.f32 %v4529, %v4550
      %v4581 = vmul.f32 %v4531, %v4550
      %v4582 = vmul.f32 %v4534, %v4550
      %v4583 = vmul.f32 %v4536, %v4550
      %v4584 = vmul.f32 %v4539, %v4550
      %v4585 = vmul.f32 %v4541, %v4550
      %v4586 = vmul.f32 %v4544, %v4550
      %v4587 = vmul.f32 %v4546, %v4550
      %v4588 = vld [vmem:[%s3] sm:$0x1]
      %v4590 = vperm.slane %v4588, 0
      %v4592 = vadd.f32 %v4552, %v4590
      %v4593 = vadd.f32 %v4553, %v4590
      %v4594 = vadd.f32 %v4554, %v4590
      %v4595 = vadd.f32 %v4555, %v4590
      %v4596 = vadd.f32 %v4556, %v4590
      %v4597 = vadd.f32 %v4557, %v4590
      %v4598 = vadd.f32 %v4558, %v4590
      %v4599 = vadd.f32 %v4559, %v4590
      %v4600 = vadd.f32 %v4560, %v4590
      %v4601 = vadd.f32 %v4561, %v4590
      %v4602 = vadd.f32 %v4562, %v4590
      %v4603 = vadd.f32 %v4563, %v4590
      %v4604 = vadd.f32 %v4564, %v4590
      %v4605 = vadd.f32 %v4565, %v4590
      %v4606 = vadd.f32 %v4566, %v4590
      %v4607 = vadd.f32 %v4567, %v4590
      %v4608 = vadd.f32 %v4568, %v4590
      %v4609 = vadd.f32 %v4569, %v4590
      %v4610 = vadd.f32 %v4570, %v4590
      %v4611 = vadd.f32 %v4571, %v4590
      %v4612 = vadd.f32 %v4572, %v4590
      %v4613 = vadd.f32 %v4573, %v4590
      %v4614 = vadd.f32 %v4574, %v4590
      %v4615 = vadd.f32 %v4575, %v4590
      %v4616 = vadd.f32 %v4576, %v4590
      %v4617 = vadd.f32 %v4577, %v4590
      %v4618 = vadd.f32 %v4578, %v4590
      %v4619 = vadd.f32 %v4579, %v4590
      %v4620 = vadd.f32 %v4580, %v4590
      %v4621 = vadd.f32 %v4581, %v4590
      %v4622 = vadd.f32 %v4582, %v4590
      %v4623 = vadd.f32 %v4583, %v4590
      %v4624 = vadd.f32 %v4584, %v4590
      %v4625 = vadd.f32 %v4585, %v4590
      %v4626 = vadd.f32 %v4586, %v4590
      %v4627 = vadd.f32 %v4587, %v4590
      %v4628 = vmax.f32 %v4592, 0.0
      %v4629 = vmax.f32 %v4593, 0.0
      %v4630 = vmax.f32 %v4594, 0.0
      %v4631 = vmax.f32 %v4595, 0.0
      %v4632 = vmax.f32 %v4596, 0.0
      %v4633 = vmax.f32 %v4597, 0.0
      %v4634 = vmax.f32 %v4598, 0.0
      %v4635 = vmax.f32 %v4599, 0.0
      %v4636 = vmax.f32 %v4600, 0.0
      %v4637 = vmax.f32 %v4601, 0.0
      %v4638 = vmax.f32 %v4602, 0.0
      %v4639 = vmax.f32 %v4603, 0.0
      %v4640 = vmax.f32 %v4604, 0.0
      %v4641 = vmax.f32 %v4605, 0.0
      %v4642 = vmax.f32 %v4606, 0.0
      %v4643 = vmax.f32 %v4607, 0.0
      %v4644 = vmax.f32 %v4608, 0.0
      %v4645 = vmax.f32 %v4609, 0.0
      %v4646 = vmax.f32 %v4610, 0.0
      %v4647 = vmax.f32 %v4611, 0.0
      %v4648 = vmax.f32 %v4612, 0.0
      %v4649 = vmax.f32 %v4613, 0.0
      %v4650 = vmax.f32 %v4614, 0.0
      %v4651 = vmax.f32 %v4615, 0.0
      %v4652 = vmax.f32 %v4616, 0.0
      %v4653 = vmax.f32 %v4617, 0.0
      %v4654 = vmax.f32 %v4618, 0.0
      %v4655 = vmax.f32 %v4619, 0.0
      %v4656 = vmax.f32 %v4620, 0.0
      %v4657 = vmax.f32 %v4621, 0.0
      %v4658 = vmax.f32 %v4622, 0.0
      %v4659 = vmax.f32 %v4623, 0.0
      %v4660 = vmax.f32 %v4624, 0.0
      %v4661 = vmax.f32 %v4625, 0.0
      %v4662 = vmax.f32 %v4626, 0.0
      %v4663 = vmax.f32 %v4627, 0.0
      %v4664 = vpack.c.bf16 %v4628, %v4628
      %v4665 = vpack.c.bf16 %v4629, %v4629
      %v4666 = vpack.c.bf16 %v4630, %v4630
      %v4667 = vpack.c.bf16 %v4631, %v4631
      %v4668 = vpack.c.bf16 %v4632, %v4632
      %v4669 = vpack.c.bf16 %v4633, %v4633
      %v4670 = vpack.c.bf16 %v4634, %v4634
      %v4671 = vpack.c.bf16 %v4635, %v4635
      %v4672 = vpack.c.bf16 %v4636, %v4636
      %v4673 = vpack.c.bf16 %v4637, %v4637
      %v4674 = vpack.c.bf16 %v4638, %v4638
      %v4675 = vpack.c.bf16 %v4639, %v4639
      %v4676 = vpack.c.bf16 %v4640, %v4640
      %v4677 = vpack.c.bf16 %v4641, %v4641
      %v4678 = vpack.c.bf16 %v4642, %v4642
      %v4679 = vpack.c.bf16 %v4643, %v4643
      %v4680 = vpack.c.bf16 %v4644, %v4644
      %v4681 = vpack.c.bf16 %v4645, %v4645
      %v4682 = vpack.c.bf16 %v4646, %v4646
      %v4683 = vpack.c.bf16 %v4647, %v4647
      %v4684 = vpack.c.bf16 %v4648, %v4648
      %v4685 = vpack.c.bf16 %v4649, %v4649
      %v4686 = vpack.c.bf16 %v4650, %v4650
      %v4687 = vpack.c.bf16 %v4651, %v4651
      %v4688 = vpack.c.bf16 %v4652, %v4652
      %v4689 = vpack.c.bf16 %v4653, %v4653
      %v4690 = vpack.c.bf16 %v4654, %v4654
      %v4691 = vpack.c.bf16 %v4655, %v4655
      %v4692 = vpack.c.bf16 %v4656, %v4656
      %v4693 = vpack.c.bf16 %v4657, %v4657
      %v4694 = vpack.c.bf16 %v4658, %v4658
      %v4695 = vpack.c.bf16 %v4659, %v4659
      %v4696 = vpack.c.bf16 %v4660, %v4660
      %v4697 = vpack.c.bf16 %v4661, %v4661
      %v4698 = vpack.c.bf16 %v4662, %v4662
      %v4699 = vpack.c.bf16 %v4663, %v4663
      %4700 = vst [vmem:[#allocation2 + $0x8] sm:$0xf] %v4664
      %4701 = vst [vmem:[#allocation2 + $0xc] sm:$0xf] %v4665
      %4702 = vst [vmem:[#allocation2 + $0x20] sm:$0xf] %v4666
      %4703 = vst [vmem:[#allocation2 + $0x24] sm:$0xf] %v4667
      %4704 = vst [vmem:[#allocation2 + $0x38] sm:$0xf] %v4668
      %4705 = vst [vmem:[#allocation2 + $0x3c] sm:$0xf] %v4669
      %4706 = vst [vmem:[#allocation2 + $0x50] sm:$0xf] %v4670
      %4707 = vst [vmem:[#allocation2 + $0x54] sm:$0xf] %v4671
      %4708 = vst [vmem:[#allocation2 + $0x68] sm:$0xf] %v4672
      %4709 = vst [vmem:[#allocation2 + $0x6c] sm:$0xf] %v4673
      %4710 = vst [vmem:[#allocation2 + $0x80] sm:$0xf] %v4674
      %4711 = vst [vmem:[#allocation2 + $0x84] sm:$0xf] %v4675
      %4712 = vst [vmem:[#allocation2 + $0x98] sm:$0xf] %v4676
      %4713 = vst [vmem:[#allocation2 + $0x9c] sm:$0xf] %v4677
      %4714 = vst [vmem:[#allocation2 + $0xb0] sm:$0xf] %v4678
      %4715 = vst [vmem:[#allocation2 + $0xb4] sm:$0xf] %v4679
      %4716 = vst [vmem:[#allocation2 + $0xc8] sm:$0xf] %v4680
      %4717 = vst [vmem:[#allocation2 + $0xcc] sm:$0xf] %v4681
      %4718 = vst [vmem:[#allocation2 + $0xe0] sm:$0xf] %v4682
      %4719 = vst [vmem:[#allocation2 + $0xe4] sm:$0xf] %v4683
      %4720 = vst [vmem:[#allocation2 + $0xf8] sm:$0xf] %v4684
      %4721 = vst [vmem:[#allocation2 + $0xfc] sm:$0xf] %v4685
      %4722 = vst [vmem:[#allocation2 + $0x110] sm:$0xf] %v4686
      %4723 = vst [vmem:[#allocation2 + $0x114] sm:$0xf] %v4687
      %4724 = vst [vmem:[#allocation2 + $0x128] sm:$0xf] %v4688
      %4725 = vst [vmem:[#allocation2 + $0x12c] sm:$0xf] %v4689
      %4726 = vst [vmem:[#allocation2 + $0x140] sm:$0xf] %v4690
      %4727 = vst [vmem:[#allocation2 + $0x144] sm:$0xf] %v4691
      %4728 = vst [vmem:[#allocation2 + $0x158] sm:$0xf] %v4692
      %4729 = vst [vmem:[#allocation2 + $0x15c] sm:$0xf] %v4693
      %4730 = vst [vmem:[#allocation2 + $0x170] sm:$0xf] %v4694
      %4731 = vst [vmem:[#allocation2 + $0x174] sm:$0xf] %v4695
      %4732 = vst [vmem:[#allocation2 + $0x188] sm:$0xf] %v4696
      %4733 = vst [vmem:[#allocation2 + $0x18c] sm:$0xf] %v4697
      %4734 = vst [vmem:[#allocation2 + $0x1a0] sm:$0xf] %v4698
      %4735 = vst [vmem:[#allocation2 + $0x1a4] sm:$0xf] %v4699
      %4736 = vst [vmem:[#allocation2] sm:$0xf] 0
      %4737 = vst [vmem:[#allocation2 + $0x4] sm:$0xf] 0
      %4738 = vst [vmem:[#allocation2 + $0x18] sm:$0xf] 0
      %4739 = vst [vmem:[#allocation2 + $0x1c] sm:$0xf] 0
      %4740 = vst [vmem:[#allocation2 + $0x30] sm:$0xf] 0
      %4741 = vst [vmem:[#allocation2 + $0x34] sm:$0xf] 0
      %4742 = vst [vmem:[#allocation2 + $0x48] sm:$0xf] 0
      %4743 = vst [vmem:[#allocation2 + $0x4c] sm:$0xf] 0
      %4744 = vst [vmem:[#allocation2 + $0x60] sm:$0xf] 0
      %4745 = vst [vmem:[#allocation2 + $0x64] sm:$0xf] 0
      %4746 = vst [vmem:[#allocation2 + $0x78] sm:$0xf] 0
      %4747 = vst [vmem:[#allocation2 + $0x7c] sm:$0xf] 0
      %4748 = vst [vmem:[#allocation2 + $0x90] sm:$0xf] 0
      %4749 = vst [vmem:[#allocation2 + $0x94] sm:$0xf] 0
      %4750 = vst [vmem:[#allocation2 + $0xa8] sm:$0xf] 0
      %4751 = vst [vmem:[#allocation2 + $0xac] sm:$0xf] 0
      %4752 = vst [vmem:[#allocation2 + $0xc0] sm:$0xf] 0
      %4753 = vst [vmem:[#allocation2 + $0xc4] sm:$0xf] 0
      %4754 = vst [vmem:[#allocation2 + $0xd8] sm:$0xf] 0
      %4755 = vst [vmem:[#allocation2 + $0xdc] sm:$0xf] 0
      %4756 = vst [vmem:[#allocation2 + $0xf0] sm:$0xf] 0
      %4757 = vst [vmem:[#allocation2 + $0xf4] sm:$0xf] 0
      %4758 = vst [vmem:[#allocation2 + $0x108] sm:$0xf] 0
      %4759 = vst [vmem:[#allocation2 + $0x10c] sm:$0xf] 0
      %4760 = vst [vmem:[#allocation2 + $0x120] sm:$0xf] 0
      %4761 = vst [vmem:[#allocation2 + $0x124] sm:$0xf] 0
      %4762 = vst [vmem:[#allocation2 + $0x138] sm:$0xf] 0
      %4763 = vst [vmem:[#allocation2 + $0x13c] sm:$0xf] 0
      %4764 = vst [vmem:[#allocation2 + $0x150] sm:$0xf] 0
      %4765 = vst [vmem:[#allocation2 + $0x154] sm:$0xf] 0
      %4766 = vst [vmem:[#allocation2 + $0x168] sm:$0xf] 0
      %4767 = vst [vmem:[#allocation2 + $0x16c] sm:$0xf] 0
      %4768 = vst [vmem:[#allocation2 + $0x180] sm:$0xf] 0
      %4769 = vst [vmem:[#allocation2 + $0x184] sm:$0xf] 0
      %4770 = vst [vmem:[#allocation2 + $0x198] sm:$0xf] 0
      %4771 = vst [vmem:[#allocation2 + $0x19c] sm:$0xf] 0
      %4772 = vst [vmem:[#allocation2 + $0x10] sm:$0xf] 0
      %4773 = vst [vmem:[#allocation2 + $0x14] sm:$0xf] 0
      %4774 = vst [vmem:[#allocation2 + $0x28] sm:$0xf] 0
      %4775 = vst [vmem:[#allocation2 + $0x2c] sm:$0xf] 0
      %4776 = vst [vmem:[#allocation2 + $0x40] sm:$0xf] 0
      %4777 = vst [vmem:[#allocation2 + $0x44] sm:$0xf] 0
      %4778 = vst [vmem:[#allocation2 + $0x58] sm:$0xf] 0
      %4779 = vst [vmem:[#allocation2 + $0x5c] sm:$0xf] 0
      %4780 = vst [vmem:[#allocation2 + $0x70] sm:$0xf] 0
      %4781 = vst [vmem:[#allocation2 + $0x74] sm:$0xf] 0
      %4782 = vst [vmem:[#allocation2 + $0x88] sm:$0xf] 0
      %4783 = vst [vmem:[#allocation2 + $0x8c] sm:$0xf] 0
      %4784 = vst [vmem:[#allocation2 + $0xa0] sm:$0xf] 0
      %4785 = vst [vmem:[#allocation2 + $0xa4] sm:$0xf] 0
      %4786 = vst [vmem:[#allocation2 + $0xb8] sm:$0xf] 0
      %4787 = vst [vmem:[#allocation2 + $0xbc] sm:$0xf] 0
      %4788 = vst [vmem:[#allocation2 + $0xd0] sm:$0xf] 0
      %4789 = vst [vmem:[#allocation2 + $0xd4] sm:$0xf] 0
      %4790 = vst [vmem:[#allocation2 + $0xe8] sm:$0xf] 0
      %4791 = vst [vmem:[#allocation2 + $0xec] sm:$0xf] 0
      %4792 = vst [vmem:[#allocation2 + $0x100] sm:$0xf] 0
      %4793 = vst [vmem:[#allocation2 + $0x104] sm:$0xf] 0
      %4794 = vst [vmem:[#allocation2 + $0x118] sm:$0xf] 0
      %4795 = vst [vmem:[#allocation2 + $0x11c] sm:$0xf] 0
      %4796 = vst [vmem:[#allocation2 + $0x130] sm:$0xf] 0
      %4797 = vst [vmem:[#allocation2 + $0x134] sm:$0xf] 0
      %4798 = vst [vmem:[#allocation2 + $0x148] sm:$0xf] 0
      %4799 = vst [vmem:[#allocation2 + $0x14c] sm:$0xf] 0
      %4800 = vst [vmem:[#allocation2 + $0x160] sm:$0xf] 0
      %4801 = vst [vmem:[#allocation2 + $0x164] sm:$0xf] 0
      %4802 = vst [vmem:[#allocation2 + $0x178] sm:$0xf] 0
      %4803 = vst [vmem:[#allocation2 + $0x17c] sm:$0xf] 0
      %4804 = vst [vmem:[#allocation2 + $0x190] sm:$0xf] 0
      %4805 = vst [vmem:[#allocation2 + $0x194] sm:$0xf] 0
      %4806 = vst [vmem:[#allocation2 + $0x1a8] sm:$0xf] 0
      %4807 = vst [vmem:[#allocation2 + $0x1ac] sm:$0xf] 0
      %p4808 = scmp.eq.s32.totalorder %s23, 0
      // Predicated region
      $region49: #{basic_block_forward.1} parent=47 // pred_check
        %p4809 = pneg %p4808
      $region50: #{basic_block_forward.1} parent=47 // pred_check_branch
        %4811 = sbr.rel (%p4809) target = $region52
      $region51: #{basic_block_forward.1} parent=47 // pred_region
        %4812 = vst [vmem:[#allocation2 + $0x8] sm:$0xf] 0
        %4813 = vst [vmem:[#allocation2 + $0xc] sm:$0xf] 0
        %s4814 = scalar_lea.vmem [#allocation2], 408
        %4815 = vst [vmem:[%s4814 + $0x8] sm:$0xf] 0
        %4816 = vst [vmem:[%s4814 + $0xc] sm:$0xf] 0
      $region52: #{basic_block_forward.1} parent=47 // pred_fallthru
        _
      %v4817 = vld [vmem:[#allocation2 + $0x4] sm:$0x8]
      %v4818 = vld [vmem:[#allocation2 + $0x8] sm:$0xf]
      %v4819 = vld [vmem:[#allocation2 + $0xc] sm:$0xf]
      %v4820 = vld [vmem:[#allocation2 + $0x1c] sm:$0x8]
      %v4821 = vld [vmem:[#allocation2 + $0x20] sm:$0xf]
      %v4822 = vld [vmem:[#allocation2 + $0x24] sm:$0xf]
      %v4823 = vld [vmem:[#allocation2 + $0x34] sm:$0x8]
      %v4824 = vld [vmem:[#allocation2 + $0x38] sm:$0xf]
      %v4825 = vld [vmem:[#allocation2 + $0x3c] sm:$0xf]
      %v4826 = vld [vmem:[#allocation2 + $0x4c] sm:$0x8]
      %v4827 = vld [vmem:[#allocation2 + $0x50] sm:$0xf]
      %v4828 = vld [vmem:[#allocation2 + $0x54] sm:$0xf]
      %v4829 = vld [vmem:[#allocation2 + $0x64] sm:$0x8]
      %v4830 = vld [vmem:[#allocation2 + $0x68] sm:$0xf]
      %v4831 = vld [vmem:[#allocation2 + $0x6c] sm:$0xf]
      %v4832 = vld [vmem:[#allocation2 + $0x7c] sm:$0x8]
      %v4833 = vld [vmem:[#allocation2 + $0x80] sm:$0xf]
      %v4834 = vld [vmem:[#allocation2 + $0x84] sm:$0xf]
      %v4835 = vld [vmem:[#allocation2 + $0x94] sm:$0x8]
      %v4836 = vld [vmem:[#allocation2 + $0x98] sm:$0xf]
      %v4837 = vld [vmem:[#allocation2 + $0x9c] sm:$0xf]
      %v4838 = vld [vmem:[#allocation2 + $0xac] sm:$0x8]
      %v4839 = vld [vmem:[#allocation2 + $0xb0] sm:$0xf]
      %v4840 = vld [vmem:[#allocation2 + $0xb4] sm:$0xf]
      %v4841 = vld [vmem:[#allocation2 + $0xc4] sm:$0x8]
      %v4842 = vld [vmem:[#allocation2 + $0xc8] sm:$0xf]
      %v4843 = vld [vmem:[#allocation2 + $0xcc] sm:$0xf]
      %v4844 = vld [vmem:[#allocation2 + $0xdc] sm:$0x8]
      %v4845 = vld [vmem:[#allocation2 + $0xe0] sm:$0xf]
      %v4846 = vld [vmem:[#allocation2 + $0xe4] sm:$0xf]
      %v4847 = vld [vmem:[#allocation2 + $0xf4] sm:$0x8]
      %v4848 = vld [vmem:[#allocation2 + $0xf8] sm:$0xf]
      %v4849 = vld [vmem:[#allocation2 + $0xfc] sm:$0xf]
      %v4850 = vld [vmem:[#allocation2 + $0x10c] sm:$0x8]
      %v4851 = vld [vmem:[#allocation2 + $0x110] sm:$0xf]
      %v4852 = vld [vmem:[#allocation2 + $0x114] sm:$0xf]
      %v4853 = vld [vmem:[#allocation2 + $0x124] sm:$0x8]
      %v4854 = vld [vmem:[#allocation2 + $0x128] sm:$0xf]
      %v4855 = vld [vmem:[#allocation2 + $0x12c] sm:$0xf]
      %v4856 = vld [vmem:[#allocation2 + $0x13c] sm:$0x8]
      %v4857 = vld [vmem:[#allocation2 + $0x140] sm:$0xf]
      %v4858 = vld [vmem:[#allocation2 + $0x144] sm:$0xf]
      %v4859 = vld [vmem:[#allocation2 + $0x154] sm:$0x8]
      %v4860 = vld [vmem:[#allocation2 + $0x158] sm:$0xf]
      %v4861 = vld [vmem:[#allocation2 + $0x15c] sm:$0xf]
      %v4862 = vld [vmem:[#allocation2 + $0x16c] sm:$0x8]
      %v4863 = vld [vmem:[#allocation2 + $0x170] sm:$0xf]
      %v4864 = vld [vmem:[#allocation2 + $0x174] sm:$0xf]
      %vm4865 = vsmask.f32 256
      %vm4866 = vsmask.f32 4368
      %vm4867 = vmor %vm4865, %vm4866
      %v4869 = vshrl.u32 %v4817, 16
      %v4871 = vrot.slane %v4869, 7
      %v4872 = vrot.slane %v4871, 4
      %v4874 = vshrl.u32 %v4818, 16
      %v4876 = vrot.slane %v4874, 7
      %v4877 = vshll.u32 %v4818, 16
      %v4879 = vor.u32 %v4876, %v4877
      %v4880 = vsel %vm4867, %v4872, %v4879
      %v4881 = vrot.slane %v4876, 4
      %v4883 = vshrl.u32 %v4819, 16
      %v4885 = vrot.slane %v4883, 7
      %v4886 = vshll.u32 %v4819, 16
      %v4888 = vor.u32 %v4885, %v4886
      %v4889 = vsel %vm4867, %v4881, %v4888
      %v4891 = vshrl.u32 %v4820, 16
      %v4893 = vrot.slane %v4891, 7
      %v4894 = vrot.slane %v4893, 4
      %v4896 = vshrl.u32 %v4821, 16
      %v4898 = vrot.slane %v4896, 7
      %v4899 = vshll.u32 %v4821, 16
      %v4901 = vor.u32 %v4898, %v4899
      %v4902 = vsel %vm4867, %v4894, %v4901
      %v4903 = vrot.slane %v4898, 4
      %v4905 = vshrl.u32 %v4822, 16
      %v4907 = vrot.slane %v4905, 7
      %v4908 = vshll.u32 %v4822, 16
      %v4910 = vor.u32 %v4907, %v4908
      %v4911 = vsel %vm4867, %v4903, %v4910
      %v4913 = vshrl.u32 %v4823, 16
      %v4915 = vrot.slane %v4913, 7
      %v4916 = vrot.slane %v4915, 4
      %v4918 = vshrl.u32 %v4824, 16
      %v4920 = vrot.slane %v4918, 7
      %v4921 = vshll.u32 %v4824, 16
      %v4923 = vor.u32 %v4920, %v4921
      %v4924 = vsel %vm4867, %v4916, %v4923
      %v4925 = vrot.slane %v4920, 4
      %v4927 = vshrl.u32 %v4825, 16
      %v4929 = vrot.slane %v4927, 7
      %v4930 = vshll.u32 %v4825, 16
      %v4932 = vor.u32 %v4929, %v4930
      %v4933 = vsel %vm4867, %v4925, %v4932
      %v4935 = vshrl.u32 %v4826, 16
      %v4937 = vrot.slane %v4935, 7
      %v4938 = vrot.slane %v4937, 4
      %v4940 = vshrl.u32 %v4827, 16
      %v4942 = vrot.slane %v4940, 7
      %v4943 = vshll.u32 %v4827, 16
      %v4945 = vor.u32 %v4942, %v4943
      %v4946 = vsel %vm4867, %v4938, %v4945
      %v4947 = vrot.slane %v4942, 4
      %v4949 = vshrl.u32 %v4828, 16
      %v4951 = vrot.slane %v4949, 7
      %v4952 = vshll.u32 %v4828, 16
      %v4954 = vor.u32 %v4951, %v4952
      %v4955 = vsel %vm4867, %v4947, %v4954
      %v4957 = vshrl.u32 %v4829, 16
      %v4959 = vrot.slane %v4957, 7
      %v4960 = vrot.slane %v4959, 4
      %v4962 = vshrl.u32 %v4830, 16
      %v4964 = vrot.slane %v4962, 7
      %v4965 = vshll.u32 %v4830, 16
      %v4967 = vor.u32 %v4964, %v4965
      %v4968 = vsel %vm4867, %v4960, %v4967
      %v4969 = vrot.slane %v4964, 4
      %v4971 = vshrl.u32 %v4831, 16
      %v4973 = vrot.slane %v4971, 7
      %v4974 = vshll.u32 %v4831, 16
      %v4976 = vor.u32 %v4973, %v4974
      %v4977 = vsel %vm4867, %v4969, %v4976
      %v4979 = vshrl.u32 %v4832, 16
      %v4981 = vrot.slane %v4979, 7
      %v4982 = vrot.slane %v4981, 4
      %v4984 = vshrl.u32 %v4833, 16
      %v4986 = vrot.slane %v4984, 7
      %v4987 = vshll.u32 %v4833, 16
      %v4989 = vor.u32 %v4986, %v4987
      %v4990 = vsel %vm4867, %v4982, %v4989
      %v4991 = vrot.slane %v4986, 4
      %v4993 = vshrl.u32 %v4834, 16
      %v4995 = vrot.slane %v4993, 7
      %v4996 = vshll.u32 %v4834, 16
      %v4998 = vor.u32 %v4995, %v4996
      %v4999 = vsel %vm4867, %v4991, %v4998
      %v5001 = vshrl.u32 %v4835, 16
      %v5003 = vrot.slane %v5001, 7
      %v5004 = vrot.slane %v5003, 4
      %v5006 = vshrl.u32 %v4836, 16
      %v5008 = vrot.slane %v5006, 7
      %v5009 = vshll.u32 %v4836, 16
      %v5011 = vor.u32 %v5008, %v5009
      %v5012 = vsel %vm4867, %v5004, %v5011
      %v5013 = vrot.slane %v5008, 4
      %v5015 = vshrl.u32 %v4837, 16
      %v5017 = vrot.slane %v5015, 7
      %v5018 = vshll.u32 %v4837, 16
      %v5020 = vor.u32 %v5017, %v5018
      %v5021 = vsel %vm4867, %v5013, %v5020
      %v5023 = vshrl.u32 %v4838, 16
      %v5025 = vrot.slane %v5023, 7
      %v5026 = vrot.slane %v5025, 4
      %v5028 = vshrl.u32 %v4839, 16
      %v5030 = vrot.slane %v5028, 7
      %v5031 = vshll.u32 %v4839, 16
      %v5033 = vor.u32 %v5030, %v5031
      %v5034 = vsel %vm4867, %v5026, %v5033
      %v5035 = vrot.slane %v5030, 4
      %v5037 = vshrl.u32 %v4840, 16
      %v5039 = vrot.slane %v5037, 7
      %v5040 = vshll.u32 %v4840, 16
      %v5042 = vor.u32 %v5039, %v5040
      %v5043 = vsel %vm4867, %v5035, %v5042
      %v5045 = vshrl.u32 %v4841, 16
      %v5047 = vrot.slane %v5045, 7
      %v5048 = vrot.slane %v5047, 4
      %v5050 = vshrl.u32 %v4842, 16
      %v5052 = vrot.slane %v5050, 7
      %v5053 = vshll.u32 %v4842, 16
      %v5055 = vor.u32 %v5052, %v5053
      %v5056 = vsel %vm4867, %v5048, %v5055
      %v5057 = vrot.slane %v5052, 4
      %v5059 = vshrl.u32 %v4843, 16
      %v5061 = vrot.slane %v5059, 7
      %v5062 = vshll.u32 %v4843, 16
      %v5064 = vor.u32 %v5061, %v5062
      %v5065 = vsel %vm4867, %v5057, %v5064
      %v5067 = vshrl.u32 %v4844, 16
      %v5069 = vrot.slane %v5067, 7
      %v5070 = vrot.slane %v5069, 4
      %v5072 = vshrl.u32 %v4845, 16
      %v5074 = vrot.slane %v5072, 7
      %v5075 = vshll.u32 %v4845, 16
      %v5077 = vor.u32 %v5074, %v5075
      %v5078 = vsel %vm4867, %v5070, %v5077
      %v5079 = vrot.slane %v5074, 4
      %v5081 = vshrl.u32 %v4846, 16
      %v5083 = vrot.slane %v5081, 7
      %v5084 = vshll.u32 %v4846, 16
      %v5086 = vor.u32 %v5083, %v5084
      %v5087 = vsel %vm4867, %v5079, %v5086
      %v5089 = vshrl.u32 %v4847, 16
      %v5091 = vrot.slane %v5089, 7
      %v5092 = vrot.slane %v5091, 4
      %v5094 = vshrl.u32 %v4848, 16
      %v5096 = vrot.slane %v5094, 7
      %v5097 = vshll.u32 %v4848, 16
      %v5099 = vor.u32 %v5096, %v5097
      %v5100 = vsel %vm4867, %v5092, %v5099
      %v5101 = vrot.slane %v5096, 4
      %v5103 = vshrl.u32 %v4849, 16
      %v5105 = vrot.slane %v5103, 7
      %v5106 = vshll.u32 %v4849, 16
      %v5108 = vor.u32 %v5105, %v5106
      %v5109 = vsel %vm4867, %v5101, %v5108
      %v5111 = vshrl.u32 %v4850, 16
      %v5113 = vrot.slane %v5111, 7
      %v5114 = vrot.slane %v5113, 4
      %v5116 = vshrl.u32 %v4851, 16
      %v5118 = vrot.slane %v5116, 7
      %v5119 = vshll.u32 %v4851, 16
      %v5121 = vor.u32 %v5118, %v5119
      %v5122 = vsel %vm4867, %v5114, %v5121
      %v5123 = vrot.slane %v5118, 4
      %v5125 = vshrl.u32 %v4852, 16
      %v5127 = vrot.slane %v5125, 7
      %v5128 = vshll.u32 %v4852, 16
      %v5130 = vor.u32 %v5127, %v5128
      %v5131 = vsel %vm4867, %v5123, %v5130
      %v5133 = vshrl.u32 %v4853, 16
      %v5135 = vrot.slane %v5133, 7
      %v5136 = vrot.slane %v5135, 4
      %v5138 = vshrl.u32 %v4854, 16
      %v5140 = vrot.slane %v5138, 7
      %v5141 = vshll.u32 %v4854, 16
      %v5143 = vor.u32 %v5140, %v5141
      %v5144 = vsel %vm4867, %v5136, %v5143
      %v5145 = vrot.slane %v5140, 4
      %v5147 = vshrl.u32 %v4855, 16
      %v5149 = vrot.slane %v5147, 7
      %v5150 = vshll.u32 %v4855, 16
      %v5152 = vor.u32 %v5149, %v5150
      %v5153 = vsel %vm4867, %v5145, %v5152
      %v5155 = vshrl.u32 %v4856, 16
      %v5157 = vrot.slane %v5155, 7
      %v5158 = vrot.slane %v5157, 4
      %v5160 = vshrl.u32 %v4857, 16
      %v5162 = vrot.slane %v5160, 7
      %v5163 = vshll.u32 %v4857, 16
      %v5165 = vor.u32 %v5162, %v5163
      %v5166 = vsel %vm4867, %v5158, %v5165
      %v5167 = vrot.slane %v5162, 4
      %v5169 = vshrl.u32 %v4858, 16
      %v5171 = vrot.slane %v5169, 7
      %v5172 = vshll.u32 %v4858, 16
      %v5174 = vor.u32 %v5171, %v5172
      %v5175 = vsel %vm4867, %v5167, %v5174
      %v5177 = vshrl.u32 %v4859, 16
      %v5179 = vrot.slane %v5177, 7
      %v5180 = vrot.slane %v5179, 4
      %v5182 = vshrl.u32 %v4860, 16
      %v5184 = vrot.slane %v5182, 7
      %v5185 = vshll.u32 %v4860, 16
      %v5187 = vor.u32 %v5184, %v5185
      %v5188 = vsel %vm4867, %v5180, %v5187
      %v5189 = vrot.slane %v5184, 4
      %v5191 = vshrl.u32 %v4861, 16
      %v5193 = vrot.slane %v5191, 7
      %v5194 = vshll.u32 %v4861, 16
      %v5196 = vor.u32 %v5193, %v5194
      %v5197 = vsel %vm4867, %v5189, %v5196
      %v5199 = vshrl.u32 %v4862, 16
      %v5201 = vrot.slane %v5199, 7
      %v5202 = vrot.slane %v5201, 4
      %v5204 = vshrl.u32 %v4863, 16
      %v5206 = vrot.slane %v5204, 7
      %v5207 = vshll.u32 %v4863, 16
      %v5209 = vor.u32 %v5206, %v5207
      %v5210 = vsel %vm4867, %v5202, %v5209
      %v5211 = vrot.slane %v5206, 4
      %v5213 = vshrl.u32 %v4864, 16
      %v5215 = vrot.slane %v5213, 7
      %v5216 = vshll.u32 %v4864, 16
      %v5218 = vor.u32 %v5215, %v5216
      %v5219 = vsel %vm4867, %v5211, %v5218
      %v5220 = vld [vmem:[#allocation2 + $0x10] sm:$0x1]
      %v5221 = vld [vmem:[#allocation2 + $0x28] sm:$0x1]
      %v5222 = vld [vmem:[#allocation2 + $0x40] sm:$0x1]
      %v5223 = vld [vmem:[#allocation2 + $0x58] sm:$0x1]
      %v5224 = vld [vmem:[#allocation2 + $0x70] sm:$0x1]
      %v5225 = vld [vmem:[#allocation2 + $0x88] sm:$0x1]
      %v5226 = vld [vmem:[#allocation2 + $0xa0] sm:$0x1]
      %v5227 = vld [vmem:[#allocation2 + $0xb8] sm:$0x1]
      %v5228 = vld [vmem:[#allocation2 + $0xd0] sm:$0x1]
      %v5229 = vld [vmem:[#allocation2 + $0xe8] sm:$0x1]
      %v5230 = vld [vmem:[#allocation2 + $0x100] sm:$0x1]
      %v5231 = vld [vmem:[#allocation2 + $0x118] sm:$0x1]
      %v5232 = vld [vmem:[#allocation2 + $0x130] sm:$0x1]
      %v5233 = vld [vmem:[#allocation2 + $0x148] sm:$0x1]
      %v5234 = vld [vmem:[#allocation2 + $0x160] sm:$0x1]
      %v5235 = vld [vmem:[#allocation2 + $0x178] sm:$0x1]
      %v5236 = vrot.slane %v4874, 4
      %v5237 = vrot.slane %v4877, 5
      %v5238 = vor.u32 %v5236, %v5237
      %v5239 = vrot.slane %v5238, 4
      %v5240 = vrot.slane %v4886, 5
      %v5241 = vsel %vm375, %v5239, %v5240
      %v5242 = vrot.slane %v4883, 4
      %v5243 = vor.u32 %v5242, %v5240
      %v5244 = vrot.slane %v5243, 4
      %v5246 = vshll.u32 %v5220, 16
      %v5248 = vrot.slane %v5246, 5
      %v5249 = vsel %vm375, %v5244, %v5248
      %v5250 = vrot.slane %v4896, 4
      %v5251 = vrot.slane %v4899, 5
      %v5252 = vor.u32 %v5250, %v5251
      %v5253 = vrot.slane %v5252, 4
      %v5254 = vrot.slane %v4908, 5
      %v5255 = vsel %vm375, %v5253, %v5254
      %v5256 = vrot.slane %v4905, 4
      %v5257 = vor.u32 %v5256, %v5254
      %v5258 = vrot.slane %v5257, 4
      %v5260 = vshll.u32 %v5221, 16
      %v5262 = vrot.slane %v5260, 5
      %v5263 = vsel %vm375, %v5258, %v5262
      %v5264 = vrot.slane %v4918, 4
      %v5265 = vrot.slane %v4921, 5
      %v5266 = vor.u32 %v5264, %v5265
      %v5267 = vrot.slane %v5266, 4
      %v5268 = vrot.slane %v4930, 5
      %v5269 = vsel %vm375, %v5267, %v5268
      %v5270 = vrot.slane %v4927, 4
      %v5271 = vor.u32 %v5270, %v5268
      %v5272 = vrot.slane %v5271, 4
      %v5274 = vshll.u32 %v5222, 16
      %v5276 = vrot.slane %v5274, 5
      %v5277 = vsel %vm375, %v5272, %v5276
      %v5278 = vrot.slane %v4940, 4
      %v5279 = vrot.slane %v4943, 5
      %v5280 = vor.u32 %v5278, %v5279
      %v5281 = vrot.slane %v5280, 4
      %v5282 = vrot.slane %v4952, 5
      %v5283 = vsel %vm375, %v5281, %v5282
      %v5284 = vrot.slane %v4949, 4
      %v5285 = vor.u32 %v5284, %v5282
      %v5286 = vrot.slane %v5285, 4
      %v5288 = vshll.u32 %v5223, 16
      %v5290 = vrot.slane %v5288, 5
      %v5291 = vsel %vm375, %v5286, %v5290
      %v5292 = vrot.slane %v4962, 4
      %v5293 = vrot.slane %v4965, 5
      %v5294 = vor.u32 %v5292, %v5293
      %v5295 = vrot.slane %v5294, 4
      %v5296 = vrot.slane %v4974, 5
      %v5297 = vsel %vm375, %v5295, %v5296
      %v5298 = vrot.slane %v4971, 4
      %v5299 = vor.u32 %v5298, %v5296
      %v5300 = vrot.slane %v5299, 4
      %v5302 = vshll.u32 %v5224, 16
      %v5304 = vrot.slane %v5302, 5
      %v5305 = vsel %vm375, %v5300, %v5304
      %v5306 = vrot.slane %v4984, 4
      %v5307 = vrot.slane %v4987, 5
      %v5308 = vor.u32 %v5306, %v5307
      %v5309 = vrot.slane %v5308, 4
      %v5310 = vrot.slane %v4996, 5
      %v5311 = vsel %vm375, %v5309, %v5310
      %v5312 = vrot.slane %v4993, 4
      %v5313 = vor.u32 %v5312, %v5310
      %v5314 = vrot.slane %v5313, 4
      %v5316 = vshll.u32 %v5225, 16
      %v5318 = vrot.slane %v5316, 5
      %v5319 = vsel %vm375, %v5314, %v5318
      %v5320 = vrot.slane %v5006, 4
      %v5321 = vrot.slane %v5009, 5
      %v5322 = vor.u32 %v5320, %v5321
      %v5323 = vrot.slane %v5322, 4
      %v5324 = vrot.slane %v5018, 5
      %v5325 = vsel %vm375, %v5323, %v5324
      %v5326 = vrot.slane %v5015, 4
      %v5327 = vor.u32 %v5326, %v5324
      %v5328 = vrot.slane %v5327, 4
      %v5330 = vshll.u32 %v5226, 16
      %v5332 = vrot.slane %v5330, 5
      %v5333 = vsel %vm375, %v5328, %v5332
      %v5334 = vrot.slane %v5028, 4
      %v5335 = vrot.slane %v5031, 5
      %v5336 = vor.u32 %v5334, %v5335
      %v5337 = vrot.slane %v5336, 4
      %v5338 = vrot.slane %v5040, 5
      %v5339 = vsel %vm375, %v5337, %v5338
      %v5340 = vrot.slane %v5037, 4
      %v5341 = vor.u32 %v5340, %v5338
      %v5342 = vrot.slane %v5341, 4
      %v5344 = vshll.u32 %v5227, 16
      %v5346 = vrot.slane %v5344, 5
      %v5347 = vsel %vm375, %v5342, %v5346
      %v5348 = vrot.slane %v5050, 4
      %v5349 = vrot.slane %v5053, 5
      %v5350 = vor.u32 %v5348, %v5349
      %v5351 = vrot.slane %v5350, 4
      %v5352 = vrot.slane %v5062, 5
      %v5353 = vsel %vm375, %v5351, %v5352
      %v5354 = vrot.slane %v5059, 4
      %v5355 = vor.u32 %v5354, %v5352
      %v5356 = vrot.slane %v5355, 4
      %v5358 = vshll.u32 %v5228, 16
      %v5360 = vrot.slane %v5358, 5
      %v5361 = vsel %vm375, %v5356, %v5360
      %v5362 = vrot.slane %v5072, 4
      %v5363 = vrot.slane %v5075, 5
      %v5364 = vor.u32 %v5362, %v5363
      %v5365 = vrot.slane %v5364, 4
      %v5366 = vrot.slane %v5084, 5
      %v5367 = vsel %vm375, %v5365, %v5366
      %v5368 = vrot.slane %v5081, 4
      %v5369 = vor.u32 %v5368, %v5366
      %v5370 = vrot.slane %v5369, 4
      %v5372 = vshll.u32 %v5229, 16
      %v5374 = vrot.slane %v5372, 5
      %v5375 = vsel %vm375, %v5370, %v5374
      %v5376 = vrot.slane %v5094, 4
      %v5377 = vrot.slane %v5097, 5
      %v5378 = vor.u32 %v5376, %v5377
      %v5379 = vrot.slane %v5378, 4
      %v5380 = vrot.slane %v5106, 5
      %v5381 = vsel %vm375, %v5379, %v5380
      %v5382 = vrot.slane %v5103, 4
      %v5383 = vor.u32 %v5382, %v5380
      %v5384 = vrot.slane %v5383, 4
      %v5386 = vshll.u32 %v5230, 16
      %v5388 = vrot.slane %v5386, 5
      %v5389 = vsel %vm375, %v5384, %v5388
      %v5390 = vrot.slane %v5116, 4
      %v5391 = vrot.slane %v5119, 5
      %v5392 = vor.u32 %v5390, %v5391
      %v5393 = vrot.slane %v5392, 4
      %v5394 = vrot.slane %v5128, 5
      %v5395 = vsel %vm375, %v5393, %v5394
      %v5396 = vrot.slane %v5125, 4
      %v5397 = vor.u32 %v5396, %v5394
      %v5398 = vrot.slane %v5397, 4
      %v5400 = vshll.u32 %v5231, 16
      %v5402 = vrot.slane %v5400, 5
      %v5403 = vsel %vm375, %v5398, %v5402
      %v5404 = vrot.slane %v5138, 4
      %v5405 = vrot.slane %v5141, 5
      %v5406 = vor.u32 %v5404, %v5405
      %v5407 = vrot.slane %v5406, 4
      %v5408 = vrot.slane %v5150, 5
      %v5409 = vsel %vm375, %v5407, %v5408
      %v5410 = vrot.slane %v5147, 4
      %v5411 = vor.u32 %v5410, %v5408
      %v5412 = vrot.slane %v5411, 4
      %v5414 = vshll.u32 %v5232, 16
      %v5416 = vrot.slane %v5414, 5
      %v5417 = vsel %vm375, %v5412, %v5416
      %v5418 = vrot.slane %v5160, 4
      %v5419 = vrot.slane %v5163, 5
      %v5420 = vor.u32 %v5418, %v5419
      %v5421 = vrot.slane %v5420, 4
      %v5422 = vrot.slane %v5172, 5
      %v5423 = vsel %vm375, %v5421, %v5422
      %v5424 = vrot.slane %v5169, 4
      %v5425 = vor.u32 %v5424, %v5422
      %v5426 = vrot.slane %v5425, 4
      %v5428 = vshll.u32 %v5233, 16
      %v5430 = vrot.slane %v5428, 5
      %v5431 = vsel %vm375, %v5426, %v5430
      %v5432 = vrot.slane %v5182, 4
      %v5433 = vrot.slane %v5185, 5
      %v5434 = vor.u32 %v5432, %v5433
      %v5435 = vrot.slane %v5434, 4
      %v5436 = vrot.slane %v5194, 5
      %v5437 = vsel %vm375, %v5435, %v5436
      %v5438 = vrot.slane %v5191, 4
      %v5439 = vor.u32 %v5438, %v5436
      %v5440 = vrot.slane %v5439, 4
      %v5442 = vshll.u32 %v5234, 16
      %v5444 = vrot.slane %v5442, 5
      %v5445 = vsel %vm375, %v5440, %v5444
      %v5446 = vrot.slane %v5204, 4
      %v5447 = vrot.slane %v5207, 5
      %v5448 = vor.u32 %v5446, %v5447
      %v5449 = vrot.slane %v5448, 4
      %v5450 = vrot.slane %v5216, 5
      %v5451 = vsel %vm375, %v5449, %v5450
      %v5452 = vrot.slane %v5213, 4
      %v5453 = vor.u32 %v5452, %v5450
      %v5454 = vrot.slane %v5453, 4
      %v5456 = vshll.u32 %v5235, 16
      %v5458 = vrot.slane %v5456, 5
      %v5459 = vsel %vm375, %v5454, %v5458
      %s5460 = scalar_lea.vmem [#allocation2], 24
      %v5461 = vld [vmem:[%s5460 + $0x4] sm:$0x8]
      %v5462 = vld [vmem:[%s5460 + $0x8] sm:$0xf]
      %v5463 = vld [vmem:[%s5460 + $0xc] sm:$0xf]
      %v5464 = vld [vmem:[%s5460 + $0x1c] sm:$0x8]
      %v5465 = vld [vmem:[%s5460 + $0x20] sm:$0xf]
      %v5466 = vld [vmem:[%s5460 + $0x24] sm:$0xf]
      %v5467 = vld [vmem:[%s5460 + $0x34] sm:$0x8]
      %v5468 = vld [vmem:[%s5460 + $0x38] sm:$0xf]
      %v5469 = vld [vmem:[%s5460 + $0x3c] sm:$0xf]
      %v5470 = vld [vmem:[%s5460 + $0x4c] sm:$0x8]
      %v5471 = vld [vmem:[%s5460 + $0x50] sm:$0xf]
      %v5472 = vld [vmem:[%s5460 + $0x54] sm:$0xf]
      %v5473 = vld [vmem:[%s5460 + $0x64] sm:$0x8]
      %v5474 = vld [vmem:[%s5460 + $0x68] sm:$0xf]
      %v5475 = vld [vmem:[%s5460 + $0x6c] sm:$0xf]
      %v5476 = vld [vmem:[%s5460 + $0x7c] sm:$0x8]
      %v5477 = vld [vmem:[%s5460 + $0x80] sm:$0xf]
      %v5478 = vld [vmem:[%s5460 + $0x84] sm:$0xf]
      %v5479 = vld [vmem:[%s5460 + $0x94] sm:$0x8]
      %v5480 = vld [vmem:[%s5460 + $0x98] sm:$0xf]
      %v5481 = vld [vmem:[%s5460 + $0x9c] sm:$0xf]
      %v5482 = vld [vmem:[%s5460 + $0xac] sm:$0x8]
      %v5483 = vld [vmem:[%s5460 + $0xb0] sm:$0xf]
      %v5484 = vld [vmem:[%s5460 + $0xb4] sm:$0xf]
      %v5485 = vld [vmem:[%s5460 + $0xc4] sm:$0x8]
      %v5486 = vld [vmem:[%s5460 + $0xc8] sm:$0xf]
      %v5487 = vld [vmem:[%s5460 + $0xcc] sm:$0xf]
      %v5488 = vld [vmem:[%s5460 + $0xdc] sm:$0x8]
      %v5489 = vld [vmem:[%s5460 + $0xe0] sm:$0xf]
      %v5490 = vld [vmem:[%s5460 + $0xe4] sm:$0xf]
      %v5491 = vld [vmem:[%s5460 + $0xf4] sm:$0x8]
      %v5492 = vld [vmem:[%s5460 + $0xf8] sm:$0xf]
      %v5493 = vld [vmem:[%s5460 + $0xfc] sm:$0xf]
      %v5494 = vld [vmem:[%s5460 + $0x10c] sm:$0x8]
      %v5495 = vld [vmem:[%s5460 + $0x110] sm:$0xf]
      %v5496 = vld [vmem:[%s5460 + $0x114] sm:$0xf]
      %v5497 = vld [vmem:[%s5460 + $0x124] sm:$0x8]
      %v5498 = vld [vmem:[%s5460 + $0x128] sm:$0xf]
      %v5499 = vld [vmem:[%s5460 + $0x12c] sm:$0xf]
      %v5500 = vld [vmem:[%s5460 + $0x13c] sm:$0x8]
      %v5501 = vld [vmem:[%s5460 + $0x140] sm:$0xf]
      %v5502 = vld [vmem:[%s5460 + $0x144] sm:$0xf]
      %v5503 = vld [vmem:[%s5460 + $0x154] sm:$0x8]
      %v5504 = vld [vmem:[%s5460 + $0x158] sm:$0xf]
      %v5505 = vld [vmem:[%s5460 + $0x15c] sm:$0xf]
      %v5506 = vld [vmem:[%s5460 + $0x16c] sm:$0x8]
      %v5507 = vld [vmem:[%s5460 + $0x170] sm:$0xf]
      %v5508 = vld [vmem:[%s5460 + $0x174] sm:$0xf]
      %v5510 = vshrl.u32 %v5461, 16
      %v5512 = vrot.slane %v5510, 7
      %v5513 = vrot.slane %v5512, 4
      %v5515 = vshrl.u32 %v5462, 16
      %v5517 = vrot.slane %v5515, 7
      %v5518 = vshll.u32 %v5462, 16
      %v5520 = vor.u32 %v5517, %v5518
      %v5521 = vsel %vm4867, %v5513, %v5520
      %v5522 = vrot.slane %v5517, 4
      %v5524 = vshrl.u32 %v5463, 16
      %v5526 = vrot.slane %v5524, 7
      %v5527 = vshll.u32 %v5463, 16
      %v5529 = vor.u32 %v5526, %v5527
      %v5530 = vsel %vm4867, %v5522, %v5529
      %v5532 = vshrl.u32 %v5464, 16
      %v5534 = vrot.slane %v5532, 7
      %v5535 = vrot.slane %v5534, 4
      %v5537 = vshrl.u32 %v5465, 16
      %v5539 = vrot.slane %v5537, 7
      %v5540 = vshll.u32 %v5465, 16
      %v5542 = vor.u32 %v5539, %v5540
      %v5543 = vsel %vm4867, %v5535, %v5542
      %v5544 = vrot.slane %v5539, 4
      %v5546 = vshrl.u32 %v5466, 16
      %v5548 = vrot.slane %v5546, 7
      %v5549 = vshll.u32 %v5466, 16
      %v5551 = vor.u32 %v5548, %v5549
      %v5552 = vsel %vm4867, %v5544, %v5551
      %v5554 = vshrl.u32 %v5467, 16
      %v5556 = vrot.slane %v5554, 7
      %v5557 = vrot.slane %v5556, 4
      %v5559 = vshrl.u32 %v5468, 16
      %v5561 = vrot.slane %v5559, 7
      %v5562 = vshll.u32 %v5468, 16
      %v5564 = vor.u32 %v5561, %v5562
      %v5565 = vsel %vm4867, %v5557, %v5564
      %v5566 = vrot.slane %v5561, 4
      %v5568 = vshrl.u32 %v5469, 16
      %v5570 = vrot.slane %v5568, 7
      %v5571 = vshll.u32 %v5469, 16
      %v5573 = vor.u32 %v5570, %v5571
      %v5574 = vsel %vm4867, %v5566, %v5573
      %v5576 = vshrl.u32 %v5470, 16
      %v5578 = vrot.slane %v5576, 7
      %v5579 = vrot.slane %v5578, 4
      %v5581 = vshrl.u32 %v5471, 16
      %v5583 = vrot.slane %v5581, 7
      %v5584 = vshll.u32 %v5471, 16
      %v5586 = vor.u32 %v5583, %v5584
      %v5587 = vsel %vm4867, %v5579, %v5586
      %v5588 = vrot.slane %v5583, 4
      %v5590 = vshrl.u32 %v5472, 16
      %v5592 = vrot.slane %v5590, 7
      %v5593 = vshll.u32 %v5472, 16
      %v5595 = vor.u32 %v5592, %v5593
      %v5596 = vsel %vm4867, %v5588, %v5595
      %v5598 = vshrl.u32 %v5473, 16
      %v5600 = vrot.slane %v5598, 7
      %v5601 = vrot.slane %v5600, 4
      %v5603 = vshrl.u32 %v5474, 16
      %v5605 = vrot.slane %v5603, 7
      %v5606 = vshll.u32 %v5474, 16
      %v5608 = vor.u32 %v5605, %v5606
      %v5609 = vsel %vm4867, %v5601, %v5608
      %v5610 = vrot.slane %v5605, 4
      %v5612 = vshrl.u32 %v5475, 16
      %v5614 = vrot.slane %v5612, 7
      %v5615 = vshll.u32 %v5475, 16
      %v5617 = vor.u32 %v5614, %v5615
      %v5618 = vsel %vm4867, %v5610, %v5617
      %v5620 = vshrl.u32 %v5476, 16
      %v5622 = vrot.slane %v5620, 7
      %v5623 = vrot.slane %v5622, 4
      %v5625 = vshrl.u32 %v5477, 16
      %v5627 = vrot.slane %v5625, 7
      %v5628 = vshll.u32 %v5477, 16
      %v5630 = vor.u32 %v5627, %v5628
      %v5631 = vsel %vm4867, %v5623, %v5630
      %v5632 = vrot.slane %v5627, 4
      %v5634 = vshrl.u32 %v5478, 16
      %v5636 = vrot.slane %v5634, 7
      %v5637 = vshll.u32 %v5478, 16
      %v5639 = vor.u32 %v5636, %v5637
      %v5640 = vsel %vm4867, %v5632, %v5639
      %v5642 = vshrl.u32 %v5479, 16
      %v5644 = vrot.slane %v5642, 7
      %v5645 = vrot.slane %v5644, 4
      %v5647 = vshrl.u32 %v5480, 16
      %v5649 = vrot.slane %v5647, 7
      %v5650 = vshll.u32 %v5480, 16
      %v5652 = vor.u32 %v5649, %v5650
      %v5653 = vsel %vm4867, %v5645, %v5652
      %v5654 = vrot.slane %v5649, 4
      %v5656 = vshrl.u32 %v5481, 16
      %v5658 = vrot.slane %v5656, 7
      %v5659 = vshll.u32 %v5481, 16
      %v5661 = vor.u32 %v5658, %v5659
      %v5662 = vsel %vm4867, %v5654, %v5661
      %v5664 = vshrl.u32 %v5482, 16
      %v5666 = vrot.slane %v5664, 7
      %v5667 = vrot.slane %v5666, 4
      %v5669 = vshrl.u32 %v5483, 16
      %v5671 = vrot.slane %v5669, 7
      %v5672 = vshll.u32 %v5483, 16
      %v5674 = vor.u32 %v5671, %v5672
      %v5675 = vsel %vm4867, %v5667, %v5674
      %v5676 = vrot.slane %v5671, 4
      %v5678 = vshrl.u32 %v5484, 16
      %v5680 = vrot.slane %v5678, 7
      %v5681 = vshll.u32 %v5484, 16
      %v5683 = vor.u32 %v5680, %v5681
      %v5684 = vsel %vm4867, %v5676, %v5683
      %v5686 = vshrl.u32 %v5485, 16
      %v5688 = vrot.slane %v5686, 7
      %v5689 = vrot.slane %v5688, 4
      %v5691 = vshrl.u32 %v5486, 16
      %v5693 = vrot.slane %v5691, 7
      %v5694 = vshll.u32 %v5486, 16
      %v5696 = vor.u32 %v5693, %v5694
      %v5697 = vsel %vm4867, %v5689, %v5696
      %v5698 = vrot.slane %v5693, 4
      %v5700 = vshrl.u32 %v5487, 16
      %v5702 = vrot.slane %v5700, 7
      %v5703 = vshll.u32 %v5487, 16
      %v5705 = vor.u32 %v5702, %v5703
      %v5706 = vsel %vm4867, %v5698, %v5705
      %v5708 = vshrl.u32 %v5488, 16
      %v5710 = vrot.slane %v5708, 7
      %v5711 = vrot.slane %v5710, 4
      %v5713 = vshrl.u32 %v5489, 16
      %v5715 = vrot.slane %v5713, 7
      %v5716 = vshll.u32 %v5489, 16
      %v5718 = vor.u32 %v5715, %v5716
      %v5719 = vsel %vm4867, %v5711, %v5718
      %v5720 = vrot.slane %v5715, 4
      %v5722 = vshrl.u32 %v5490, 16
      %v5724 = vrot.slane %v5722, 7
      %v5725 = vshll.u32 %v5490, 16
      %v5727 = vor.u32 %v5724, %v5725
      %v5728 = vsel %vm4867, %v5720, %v5727
      %v5730 = vshrl.u32 %v5491, 16
      %v5732 = vrot.slane %v5730, 7
      %v5733 = vrot.slane %v5732, 4
      %v5735 = vshrl.u32 %v5492, 16
      %v5737 = vrot.slane %v5735, 7
      %v5738 = vshll.u32 %v5492, 16
      %v5740 = vor.u32 %v5737, %v5738
      %v5741 = vsel %vm4867, %v5733, %v5740
      %v5742 = vrot.slane %v5737, 4
      %v5744 = vshrl.u32 %v5493, 16
      %v5746 = vrot.slane %v5744, 7
      %v5747 = vshll.u32 %v5493, 16
      %v5749 = vor.u32 %v5746, %v5747
      %v5750 = vsel %vm4867, %v5742, %v5749
      %v5752 = vshrl.u32 %v5494, 16
      %v5754 = vrot.slane %v5752, 7
      %v5755 = vrot.slane %v5754, 4
      %v5757 = vshrl.u32 %v5495, 16
      %v5759 = vrot.slane %v5757, 7
      %v5760 = vshll.u32 %v5495, 16
      %v5762 = vor.u32 %v5759, %v5760
      %v5763 = vsel %vm4867, %v5755, %v5762
      %v5764 = vrot.slane %v5759, 4
      %v5766 = vshrl.u32 %v5496, 16
      %v5768 = vrot.slane %v5766, 7
      %v5769 = vshll.u32 %v5496, 16
      %v5771 = vor.u32 %v5768, %v5769
      %v5772 = vsel %vm4867, %v5764, %v5771
      %v5774 = vshrl.u32 %v5497, 16
      %v5776 = vrot.slane %v5774, 7
      %v5777 = vrot.slane %v5776, 4
      %v5779 = vshrl.u32 %v5498, 16
      %v5781 = vrot.slane %v5779, 7
      %v5782 = vshll.u32 %v5498, 16
      %v5784 = vor.u32 %v5781, %v5782
      %v5785 = vsel %vm4867, %v5777, %v5784
      %v5786 = vrot.slane %v5781, 4
      %v5788 = vshrl.u32 %v5499, 16
      %v5790 = vrot.slane %v5788, 7
      %v5791 = vshll.u32 %v5499, 16
      %v5793 = vor.u32 %v5790, %v5791
      %v5794 = vsel %vm4867, %v5786, %v5793
      %v5796 = vshrl.u32 %v5500, 16
      %v5798 = vrot.slane %v5796, 7
      %v5799 = vrot.slane %v5798, 4
      %v5801 = vshrl.u32 %v5501, 16
      %v5803 = vrot.slane %v5801, 7
      %v5804 = vshll.u32 %v5501, 16
      %v5806 = vor.u32 %v5803, %v5804
      %v5807 = vsel %vm4867, %v5799, %v5806
      %v5808 = vrot.slane %v5803, 4
      %v5810 = vshrl.u32 %v5502, 16
      %v5812 = vrot.slane %v5810, 7
      %v5813 = vshll.u32 %v5502, 16
      %v5815 = vor.u32 %v5812, %v5813
      %v5816 = vsel %vm4867, %v5808, %v5815
      %v5818 = vshrl.u32 %v5503, 16
      %v5820 = vrot.slane %v5818, 7
      %v5821 = vrot.slane %v5820, 4
      %v5823 = vshrl.u32 %v5504, 16
      %v5825 = vrot.slane %v5823, 7
      %v5826 = vshll.u32 %v5504, 16
      %v5828 = vor.u32 %v5825, %v5826
      %v5829 = vsel %vm4867, %v5821, %v5828
      %v5830 = vrot.slane %v5825, 4
      %v5832 = vshrl.u32 %v5505, 16
      %v5834 = vrot.slane %v5832, 7
      %v5835 = vshll.u32 %v5505, 16
      %v5837 = vor.u32 %v5834, %v5835
      %v5838 = vsel %vm4867, %v5830, %v5837
      %v5840 = vshrl.u32 %v5506, 16
      %v5842 = vrot.slane %v5840, 7
      %v5843 = vrot.slane %v5842, 4
      %v5845 = vshrl.u32 %v5507, 16
      %v5847 = vrot.slane %v5845, 7
      %v5848 = vshll.u32 %v5507, 16
      %v5850 = vor.u32 %v5847, %v5848
      %v5851 = vsel %vm4867, %v5843, %v5850
      %v5852 = vrot.slane %v5847, 4
      %v5854 = vshrl.u32 %v5508, 16
      %v5856 = vrot.slane %v5854, 7
      %v5857 = vshll.u32 %v5508, 16
      %v5859 = vor.u32 %v5856, %v5857
      %v5860 = vsel %vm4867, %v5852, %v5859
      %v5861 = vld [vmem:[%s5460 + $0x10] sm:$0x1]
      %v5862 = vld [vmem:[%s5460 + $0x28] sm:$0x1]
      %v5863 = vld [vmem:[%s5460 + $0x40] sm:$0x1]
      %v5864 = vld [vmem:[%s5460 + $0x58] sm:$0x1]
      %v5865 = vld [vmem:[%s5460 + $0x70] sm:$0x1]
      %v5866 = vld [vmem:[%s5460 + $0x88] sm:$0x1]
      %v5867 = vld [vmem:[%s5460 + $0xa0] sm:$0x1]
      %v5868 = vld [vmem:[%s5460 + $0xb8] sm:$0x1]
      %v5869 = vld [vmem:[%s5460 + $0xd0] sm:$0x1]
      %v5870 = vld [vmem:[%s5460 + $0xe8] sm:$0x1]
      %v5871 = vld [vmem:[%s5460 + $0x100] sm:$0x1]
      %v5872 = vld [vmem:[%s5460 + $0x118] sm:$0x1]
      %v5873 = vld [vmem:[%s5460 + $0x130] sm:$0x1]
      %v5874 = vld [vmem:[%s5460 + $0x148] sm:$0x1]
      %v5875 = vld [vmem:[%s5460 + $0x160] sm:$0x1]
      %v5876 = vld [vmem:[%s5460 + $0x178] sm:$0x1]
      %v5877 = vrot.slane %v5515, 4
      %v5878 = vrot.slane %v5518, 5
      %v5879 = vor.u32 %v5877, %v5878
      %v5880 = vrot.slane %v5879, 4
      %v5881 = vrot.slane %v5527, 5
      %v5882 = vsel %vm375, %v5880, %v5881
      %v5883 = vrot.slane %v5524, 4
      %v5884 = vor.u32 %v5883, %v5881
      %v5885 = vrot.slane %v5884, 4
      %v5887 = vshll.u32 %v5861, 16
      %v5889 = vrot.slane %v5887, 5
      %v5890 = vsel %vm375, %v5885, %v5889
      %v5891 = vrot.slane %v5537, 4
      %v5892 = vrot.slane %v5540, 5
      %v5893 = vor.u32 %v5891, %v5892
      %v5894 = vrot.slane %v5893, 4
      %v5895 = vrot.slane %v5549, 5
      %v5896 = vsel %vm375, %v5894, %v5895
      %v5897 = vrot.slane %v5546, 4
      %v5898 = vor.u32 %v5897, %v5895
      %v5899 = vrot.slane %v5898, 4
      %v5901 = vshll.u32 %v5862, 16
      %v5903 = vrot.slane %v5901, 5
      %v5904 = vsel %vm375, %v5899, %v5903
      %v5905 = vrot.slane %v5559, 4
      %v5906 = vrot.slane %v5562, 5
      %v5907 = vor.u32 %v5905, %v5906
      %v5908 = vrot.slane %v5907, 4
      %v5909 = vrot.slane %v5571, 5
      %v5910 = vsel %vm375, %v5908, %v5909
      %v5911 = vrot.slane %v5568, 4
      %v5912 = vor.u32 %v5911, %v5909
      %v5913 = vrot.slane %v5912, 4
      %v5915 = vshll.u32 %v5863, 16
      %v5917 = vrot.slane %v5915, 5
      %v5918 = vsel %vm375, %v5913, %v5917
      %v5919 = vrot.slane %v5581, 4
      %v5920 = vrot.slane %v5584, 5
      %v5921 = vor.u32 %v5919, %v5920
      %v5922 = vrot.slane %v5921, 4
      %v5923 = vrot.slane %v5593, 5
      %v5924 = vsel %vm375, %v5922, %v5923
      %v5925 = vrot.slane %v5590, 4
      %v5926 = vor.u32 %v5925, %v5923
      %v5927 = vrot.slane %v5926, 4
      %v5929 = vshll.u32 %v5864, 16
      %v5931 = vrot.slane %v5929, 5
      %v5932 = vsel %vm375, %v5927, %v5931
      %v5933 = vrot.slane %v5603, 4
      %v5934 = vrot.slane %v5606, 5
      %v5935 = vor.u32 %v5933, %v5934
      %v5936 = vrot.slane %v5935, 4
      %v5937 = vrot.slane %v5615, 5
      %v5938 = vsel %vm375, %v5936, %v5937
      %v5939 = vrot.slane %v5612, 4
      %v5940 = vor.u32 %v5939, %v5937
      %v5941 = vrot.slane %v5940, 4
      %v5943 = vshll.u32 %v5865, 16
      %v5945 = vrot.slane %v5943, 5
      %v5946 = vsel %vm375, %v5941, %v5945
      %v5947 = vrot.slane %v5625, 4
      %v5948 = vrot.slane %v5628, 5
      %v5949 = vor.u32 %v5947, %v5948
      %v5950 = vrot.slane %v5949, 4
      %v5951 = vrot.slane %v5637, 5
      %v5952 = vsel %vm375, %v5950, %v5951
      %v5953 = vrot.slane %v5634, 4
      %v5954 = vor.u32 %v5953, %v5951
      %v5955 = vrot.slane %v5954, 4
      %v5957 = vshll.u32 %v5866, 16
      %v5959 = vrot.slane %v5957, 5
      %v5960 = vsel %vm375, %v5955, %v5959
      %v5961 = vrot.slane %v5647, 4
      %v5962 = vrot.slane %v5650, 5
      %v5963 = vor.u32 %v5961, %v5962
      %v5964 = vrot.slane %v5963, 4
      %v5965 = vrot.slane %v5659, 5
      %v5966 = vsel %vm375, %v5964, %v5965
      %v5967 = vrot.slane %v5656, 4
      %v5968 = vor.u32 %v5967, %v5965
      %v5969 = vrot.slane %v5968, 4
      %v5971 = vshll.u32 %v5867, 16
      %v5973 = vrot.slane %v5971, 5
      %v5974 = vsel %vm375, %v5969, %v5973
      %v5975 = vrot.slane %v5669, 4
      %v5976 = vrot.slane %v5672, 5
      %v5977 = vor.u32 %v5975, %v5976
      %v5978 = vrot.slane %v5977, 4
      %v5979 = vrot.slane %v5681, 5
      %v5980 = vsel %vm375, %v5978, %v5979
      %v5981 = vrot.slane %v5678, 4
      %v5982 = vor.u32 %v5981, %v5979
      %v5983 = vrot.slane %v5982, 4
      %v5985 = vshll.u32 %v5868, 16
      %v5987 = vrot.slane %v5985, 5
      %v5988 = vsel %vm375, %v5983, %v5987
      %v5989 = vrot.slane %v5691, 4
      %v5990 = vrot.slane %v5694, 5
      %v5991 = vor.u32 %v5989, %v5990
      %v5992 = vrot.slane %v5991, 4
      %v5993 = vrot.slane %v5703, 5
      %v5994 = vsel %vm375, %v5992, %v5993
      %v5995 = vrot.slane %v5700, 4
      %v5996 = vor.u32 %v5995, %v5993
      %v5997 = vrot.slane %v5996, 4
      %v5999 = vshll.u32 %v5869, 16
      %v6001 = vrot.slane %v5999, 5
      %v6002 = vsel %vm375, %v5997, %v6001
      %v6003 = vrot.slane %v5713, 4
      %v6004 = vrot.slane %v5716, 5
      %v6005 = vor.u32 %v6003, %v6004
      %v6006 = vrot.slane %v6005, 4
      %v6007 = vrot.slane %v5725, 5
      %v6008 = vsel %vm375, %v6006, %v6007
      %v6009 = vrot.slane %v5722, 4
      %v6010 = vor.u32 %v6009, %v6007
      %v6011 = vrot.slane %v6010, 4
      %v6013 = vshll.u32 %v5870, 16
      %v6015 = vrot.slane %v6013, 5
      %v6016 = vsel %vm375, %v6011, %v6015
      %v6017 = vrot.slane %v5735, 4
      %v6018 = vrot.slane %v5738, 5
      %v6019 = vor.u32 %v6017, %v6018
      %v6020 = vrot.slane %v6019, 4
      %v6021 = vrot.slane %v5747, 5
      %v6022 = vsel %vm375, %v6020, %v6021
      %v6023 = vrot.slane %v5744, 4
      %v6024 = vor.u32 %v6023, %v6021
      %v6025 = vrot.slane %v6024, 4
      %v6027 = vshll.u32 %v5871, 16
      %v6029 = vrot.slane %v6027, 5
      %v6030 = vsel %vm375, %v6025, %v6029
      %v6031 = vrot.slane %v5757, 4
      %v6032 = vrot.slane %v5760, 5
      %v6033 = vor.u32 %v6031, %v6032
      %v6034 = vrot.slane %v6033, 4
      %v6035 = vrot.slane %v5769, 5
      %v6036 = vsel %vm375, %v6034, %v6035
      %v6037 = vrot.slane %v5766, 4
      %v6038 = vor.u32 %v6037, %v6035
      %v6039 = vrot.slane %v6038, 4
      %v6041 = vshll.u32 %v5872, 16
      %v6043 = vrot.slane %v6041, 5
      %v6044 = vsel %vm375, %v6039, %v6043
      %v6045 = vrot.slane %v5779, 4
      %v6046 = vrot.slane %v5782, 5
      %v6047 = vor.u32 %v6045, %v6046
      %v6048 = vrot.slane %v6047, 4
      %v6049 = vrot.slane %v5791, 5
      %v6050 = vsel %vm375, %v6048, %v6049
      %v6051 = vrot.slane %v5788, 4
      %v6052 = vor.u32 %v6051, %v6049
      %v6053 = vrot.slane %v6052, 4
      %v6055 = vshll.u32 %v5873, 16
      %v6057 = vrot.slane %v6055, 5
      %v6058 = vsel %vm375, %v6053, %v6057
      %v6059 = vrot.slane %v5801, 4
      %v6060 = vrot.slane %v5804, 5
      %v6061 = vor.u32 %v6059, %v6060
      %v6062 = vrot.slane %v6061, 4
      %v6063 = vrot.slane %v5813, 5
      %v6064 = vsel %vm375, %v6062, %v6063
      %v6065 = vrot.slane %v5810, 4
      %v6066 = vor.u32 %v6065, %v6063
      %v6067 = vrot.slane %v6066, 4
      %v6069 = vshll.u32 %v5874, 16
      %v6071 = vrot.slane %v6069, 5
      %v6072 = vsel %vm375, %v6067, %v6071
      %v6073 = vrot.slane %v5823, 4
      %v6074 = vrot.slane %v5826, 5
      %v6075 = vor.u32 %v6073, %v6074
      %v6076 = vrot.slane %v6075, 4
      %v6077 = vrot.slane %v5835, 5
      %v6078 = vsel %vm375, %v6076, %v6077
      %v6079 = vrot.slane %v5832, 4
      %v6080 = vor.u32 %v6079, %v6077
      %v6081 = vrot.slane %v6080, 4
      %v6083 = vshll.u32 %v5875, 16
      %v6085 = vrot.slane %v6083, 5
      %v6086 = vsel %vm375, %v6081, %v6085
      %v6087 = vrot.slane %v5845, 4
      %v6088 = vrot.slane %v5848, 5
      %v6089 = vor.u32 %v6087, %v6088
      %v6090 = vrot.slane %v6089, 4
      %v6091 = vrot.slane %v5857, 5
      %v6092 = vsel %vm375, %v6090, %v6091
      %v6093 = vrot.slane %v5854, 4
      %v6094 = vor.u32 %v6093, %v6091
      %v6095 = vrot.slane %v6094, 4
      %v6097 = vshll.u32 %v5876, 16
      %v6099 = vrot.slane %v6097, 5
      %v6100 = vsel %vm375, %v6095, %v6099
      %s6101 = scalar_lea.vmem [#allocation2], 48
      %v6102 = vld [vmem:[%s6101 + $0x4] sm:$0x8]
      %v6103 = vld [vmem:[%s6101 + $0x8] sm:$0xf]
      %v6104 = vld [vmem:[%s6101 + $0xc] sm:$0xf]
      %v6105 = vld [vmem:[%s6101 + $0x1c] sm:$0x8]
      %v6106 = vld [vmem:[%s6101 + $0x20] sm:$0xf]
      %v6107 = vld [vmem:[%s6101 + $0x24] sm:$0xf]
      %v6108 = vld [vmem:[%s6101 + $0x34] sm:$0x8]
      %v6109 = vld [vmem:[%s6101 + $0x38] sm:$0xf]
      %v6110 = vld [vmem:[%s6101 + $0x3c] sm:$0xf]
      %v6111 = vld [vmem:[%s6101 + $0x4c] sm:$0x8]
      %v6112 = vld [vmem:[%s6101 + $0x50] sm:$0xf]
      %v6113 = vld [vmem:[%s6101 + $0x54] sm:$0xf]
      %v6114 = vld [vmem:[%s6101 + $0x64] sm:$0x8]
      %v6115 = vld [vmem:[%s6101 + $0x68] sm:$0xf]
      %v6116 = vld [vmem:[%s6101 + $0x6c] sm:$0xf]
      %v6117 = vld [vmem:[%s6101 + $0x7c] sm:$0x8]
      %v6118 = vld [vmem:[%s6101 + $0x80] sm:$0xf]
      %v6119 = vld [vmem:[%s6101 + $0x84] sm:$0xf]
      %v6120 = vld [vmem:[%s6101 + $0x94] sm:$0x8]
      %v6121 = vld [vmem:[%s6101 + $0x98] sm:$0xf]
      %v6122 = vld [vmem:[%s6101 + $0x9c] sm:$0xf]
      %v6123 = vld [vmem:[%s6101 + $0xac] sm:$0x8]
      %v6124 = vld [vmem:[%s6101 + $0xb0] sm:$0xf]
      %v6125 = vld [vmem:[%s6101 + $0xb4] sm:$0xf]
      %v6126 = vld [vmem:[%s6101 + $0xc4] sm:$0x8]
      %v6127 = vld [vmem:[%s6101 + $0xc8] sm:$0xf]
      %v6128 = vld [vmem:[%s6101 + $0xcc] sm:$0xf]
      %v6129 = vld [vmem:[%s6101 + $0xdc] sm:$0x8]
      %v6130 = vld [vmem:[%s6101 + $0xe0] sm:$0xf]
      %v6131 = vld [vmem:[%s6101 + $0xe4] sm:$0xf]
      %v6132 = vld [vmem:[%s6101 + $0xf4] sm:$0x8]
      %v6133 = vld [vmem:[%s6101 + $0xf8] sm:$0xf]
      %v6134 = vld [vmem:[%s6101 + $0xfc] sm:$0xf]
      %v6135 = vld [vmem:[%s6101 + $0x10c] sm:$0x8]
      %v6136 = vld [vmem:[%s6101 + $0x110] sm:$0xf]
      %v6137 = vld [vmem:[%s6101 + $0x114] sm:$0xf]
      %v6138 = vld [vmem:[%s6101 + $0x124] sm:$0x8]
      %v6139 = vld [vmem:[%s6101 + $0x128] sm:$0xf]
      %v6140 = vld [vmem:[%s6101 + $0x12c] sm:$0xf]
      %v6141 = vld [vmem:[%s6101 + $0x13c] sm:$0x8]
      %v6142 = vld [vmem:[%s6101 + $0x140] sm:$0xf]
      %v6143 = vld [vmem:[%s6101 + $0x144] sm:$0xf]
      %v6144 = vld [vmem:[%s6101 + $0x154] sm:$0x8]
      %v6145 = vld [vmem:[%s6101 + $0x158] sm:$0xf]
      %v6146 = vld [vmem:[%s6101 + $0x15c] sm:$0xf]
      %v6147 = vld [vmem:[%s6101 + $0x16c] sm:$0x8]
      %v6148 = vld [vmem:[%s6101 + $0x170] sm:$0xf]
      %v6149 = vld [vmem:[%s6101 + $0x174] sm:$0xf]
      %v6151 = vshrl.u32 %v6102, 16
      %v6153 = vrot.slane %v6151, 7
      %v6154 = vrot.slane %v6153, 4
      %v6156 = vshrl.u32 %v6103, 16
      %v6158 = vrot.slane %v6156, 7
      %v6159 = vshll.u32 %v6103, 16
      %v6161 = vor.u32 %v6158, %v6159
      %v6162 = vsel %vm4867, %v6154, %v6161
      %v6163 = vrot.slane %v6158, 4
      %v6165 = vshrl.u32 %v6104, 16
      %v6167 = vrot.slane %v6165, 7
      %v6168 = vshll.u32 %v6104, 16
      %v6170 = vor.u32 %v6167, %v6168
      %v6171 = vsel %vm4867, %v6163, %v6170
      %v6173 = vshrl.u32 %v6105, 16
      %v6175 = vrot.slane %v6173, 7
      %v6176 = vrot.slane %v6175, 4
      %v6178 = vshrl.u32 %v6106, 16
      %v6180 = vrot.slane %v6178, 7
      %v6181 = vshll.u32 %v6106, 16
      %v6183 = vor.u32 %v6180, %v6181
      %v6184 = vsel %vm4867, %v6176, %v6183
      %v6185 = vrot.slane %v6180, 4
      %v6187 = vshrl.u32 %v6107, 16
      %v6189 = vrot.slane %v6187, 7
      %v6190 = vshll.u32 %v6107, 16
      %v6192 = vor.u32 %v6189, %v6190
      %v6193 = vsel %vm4867, %v6185, %v6192
      %v6195 = vshrl.u32 %v6108, 16
      %v6197 = vrot.slane %v6195, 7
      %v6198 = vrot.slane %v6197, 4
      %v6200 = vshrl.u32 %v6109, 16
      %v6202 = vrot.slane %v6200, 7
      %v6203 = vshll.u32 %v6109, 16
      %v6205 = vor.u32 %v6202, %v6203
      %v6206 = vsel %vm4867, %v6198, %v6205
      %v6207 = vrot.slane %v6202, 4
      %v6209 = vshrl.u32 %v6110, 16
      %v6211 = vrot.slane %v6209, 7
      %v6212 = vshll.u32 %v6110, 16
      %v6214 = vor.u32 %v6211, %v6212
      %v6215 = vsel %vm4867, %v6207, %v6214
      %v6217 = vshrl.u32 %v6111, 16
      %v6219 = vrot.slane %v6217, 7
      %v6220 = vrot.slane %v6219, 4
      %v6222 = vshrl.u32 %v6112, 16
      %v6224 = vrot.slane %v6222, 7
      %v6225 = vshll.u32 %v6112, 16
      %v6227 = vor.u32 %v6224, %v6225
      %v6228 = vsel %vm4867, %v6220, %v6227
      %v6229 = vrot.slane %v6224, 4
      %v6231 = vshrl.u32 %v6113, 16
      %v6233 = vrot.slane %v6231, 7
      %v6234 = vshll.u32 %v6113, 16
      %v6236 = vor.u32 %v6233, %v6234
      %v6237 = vsel %vm4867, %v6229, %v6236
      %v6239 = vshrl.u32 %v6114, 16
      %v6241 = vrot.slane %v6239, 7
      %v6242 = vrot.slane %v6241, 4
      %v6244 = vshrl.u32 %v6115, 16
      %v6246 = vrot.slane %v6244, 7
      %v6247 = vshll.u32 %v6115, 16
      %v6249 = vor.u32 %v6246, %v6247
      %v6250 = vsel %vm4867, %v6242, %v6249
      %v6251 = vrot.slane %v6246, 4
      %v6253 = vshrl.u32 %v6116, 16
      %v6255 = vrot.slane %v6253, 7
      %v6256 = vshll.u32 %v6116, 16
      %v6258 = vor.u32 %v6255, %v6256
      %v6259 = vsel %vm4867, %v6251, %v6258
      %v6261 = vshrl.u32 %v6117, 16
      %v6263 = vrot.slane %v6261, 7
      %v6264 = vrot.slane %v6263, 4
      %v6266 = vshrl.u32 %v6118, 16
      %v6268 = vrot.slane %v6266, 7
      %v6269 = vshll.u32 %v6118, 16
      %v6271 = vor.u32 %v6268, %v6269
      %v6272 = vsel %vm4867, %v6264, %v6271
      %v6273 = vrot.slane %v6268, 4
      %v6275 = vshrl.u32 %v6119, 16
      %v6277 = vrot.slane %v6275, 7
      %v6278 = vshll.u32 %v6119, 16
      %v6280 = vor.u32 %v6277, %v6278
      %v6281 = vsel %vm4867, %v6273, %v6280
      %v6283 = vshrl.u32 %v6120, 16
      %v6285 = vrot.slane %v6283, 7
      %v6286 = vrot.slane %v6285, 4
      %v6288 = vshrl.u32 %v6121, 16
      %v6290 = vrot.slane %v6288, 7
      %v6291 = vshll.u32 %v6121, 16
      %v6293 = vor.u32 %v6290, %v6291
      %v6294 = vsel %vm4867, %v6286, %v6293
      %v6295 = vrot.slane %v6290, 4
      %v6297 = vshrl.u32 %v6122, 16
      %v6299 = vrot.slane %v6297, 7
      %v6300 = vshll.u32 %v6122, 16
      %v6302 = vor.u32 %v6299, %v6300
      %v6303 = vsel %vm4867, %v6295, %v6302
      %v6305 = vshrl.u32 %v6123, 16
      %v6307 = vrot.slane %v6305, 7
      %v6308 = vrot.slane %v6307, 4
      %v6310 = vshrl.u32 %v6124, 16
      %v6312 = vrot.slane %v6310, 7
      %v6313 = vshll.u32 %v6124, 16
      %v6315 = vor.u32 %v6312, %v6313
      %v6316 = vsel %vm4867, %v6308, %v6315
      %v6317 = vrot.slane %v6312, 4
      %v6319 = vshrl.u32 %v6125, 16
      %v6321 = vrot.slane %v6319, 7
      %v6322 = vshll.u32 %v6125, 16
      %v6324 = vor.u32 %v6321, %v6322
      %v6325 = vsel %vm4867, %v6317, %v6324
      %v6327 = vshrl.u32 %v6126, 16
      %v6329 = vrot.slane %v6327, 7
      %v6330 = vrot.slane %v6329, 4
      %v6332 = vshrl.u32 %v6127, 16
      %v6334 = vrot.slane %v6332, 7
      %v6335 = vshll.u32 %v6127, 16
      %v6337 = vor.u32 %v6334, %v6335
      %v6338 = vsel %vm4867, %v6330, %v6337
      %v6339 = vrot.slane %v6334, 4
      %v6341 = vshrl.u32 %v6128, 16
      %v6343 = vrot.slane %v6341, 7
      %v6344 = vshll.u32 %v6128, 16
      %v6346 = vor.u32 %v6343, %v6344
      %v6347 = vsel %vm4867, %v6339, %v6346
      %v6349 = vshrl.u32 %v6129, 16
      %v6351 = vrot.slane %v6349, 7
      %v6352 = vrot.slane %v6351, 4
      %v6354 = vshrl.u32 %v6130, 16
      %v6356 = vrot.slane %v6354, 7
      %v6357 = vshll.u32 %v6130, 16
      %v6359 = vor.u32 %v6356, %v6357
      %v6360 = vsel %vm4867, %v6352, %v6359
      %v6361 = vrot.slane %v6356, 4
      %v6363 = vshrl.u32 %v6131, 16
      %v6365 = vrot.slane %v6363, 7
      %v6366 = vshll.u32 %v6131, 16
      %v6368 = vor.u32 %v6365, %v6366
      %v6369 = vsel %vm4867, %v6361, %v6368
      %v6371 = vshrl.u32 %v6132, 16
      %v6373 = vrot.slane %v6371, 7
      %v6374 = vrot.slane %v6373, 4
      %v6376 = vshrl.u32 %v6133, 16
      %v6378 = vrot.slane %v6376, 7
      %v6379 = vshll.u32 %v6133, 16
      %v6381 = vor.u32 %v6378, %v6379
      %v6382 = vsel %vm4867, %v6374, %v6381
      %v6383 = vrot.slane %v6378, 4
      %v6385 = vshrl.u32 %v6134, 16
      %v6387 = vrot.slane %v6385, 7
      %v6388 = vshll.u32 %v6134, 16
      %v6390 = vor.u32 %v6387, %v6388
      %v6391 = vsel %vm4867, %v6383, %v6390
      %v6393 = vshrl.u32 %v6135, 16
      %v6395 = vrot.slane %v6393, 7
      %v6396 = vrot.slane %v6395, 4
      %v6398 = vshrl.u32 %v6136, 16
      %v6400 = vrot.slane %v6398, 7
      %v6401 = vshll.u32 %v6136, 16
      %v6403 = vor.u32 %v6400, %v6401
      %v6404 = vsel %vm4867, %v6396, %v6403
      %v6405 = vrot.slane %v6400, 4
      %v6407 = vshrl.u32 %v6137, 16
      %v6409 = vrot.slane %v6407, 7
      %v6410 = vshll.u32 %v6137, 16
      %v6412 = vor.u32 %v6409, %v6410
      %v6413 = vsel %vm4867, %v6405, %v6412
      %v6415 = vshrl.u32 %v6138, 16
      %v6417 = vrot.slane %v6415, 7
      %v6418 = vrot.slane %v6417, 4
      %v6420 = vshrl.u32 %v6139, 16
      %v6422 = vrot.slane %v6420, 7
      %v6423 = vshll.u32 %v6139, 16
      %v6425 = vor.u32 %v6422, %v6423
      %v6426 = vsel %vm4867, %v6418, %v6425
      %v6427 = vrot.slane %v6422, 4
      %v6429 = vshrl.u32 %v6140, 16
      %v6431 = vrot.slane %v6429, 7
      %v6432 = vshll.u32 %v6140, 16
      %v6434 = vor.u32 %v6431, %v6432
      %v6435 = vsel %vm4867, %v6427, %v6434
      %v6437 = vshrl.u32 %v6141, 16
      %v6439 = vrot.slane %v6437, 7
      %v6440 = vrot.slane %v6439, 4
      %v6442 = vshrl.u32 %v6142, 16
      %v6444 = vrot.slane %v6442, 7
      %v6445 = vshll.u32 %v6142, 16
      %v6447 = vor.u32 %v6444, %v6445
      %v6448 = vsel %vm4867, %v6440, %v6447
      %v6449 = vrot.slane %v6444, 4
      %v6451 = vshrl.u32 %v6143, 16
      %v6453 = vrot.slane %v6451, 7
      %v6454 = vshll.u32 %v6143, 16
      %v6456 = vor.u32 %v6453, %v6454
      %v6457 = vsel %vm4867, %v6449, %v6456
      %v6459 = vshrl.u32 %v6144, 16
      %v6461 = vrot.slane %v6459, 7
      %v6462 = vrot.slane %v6461, 4
      %v6464 = vshrl.u32 %v6145, 16
      %v6466 = vrot.slane %v6464, 7
      %v6467 = vshll.u32 %v6145, 16
      %v6469 = vor.u32 %v6466, %v6467
      %v6470 = vsel %vm4867, %v6462, %v6469
      %v6471 = vrot.slane %v6466, 4
      %v6473 = vshrl.u32 %v6146, 16
      %v6475 = vrot.slane %v6473, 7
      %v6476 = vshll.u32 %v6146, 16
      %v6478 = vor.u32 %v6475, %v6476
      %v6479 = vsel %vm4867, %v6471, %v6478
      %v6481 = vshrl.u32 %v6147, 16
      %v6483 = vrot.slane %v6481, 7
      %v6484 = vrot.slane %v6483, 4
      %v6486 = vshrl.u32 %v6148, 16
      %v6488 = vrot.slane %v6486, 7
      %v6489 = vshll.u32 %v6148, 16
      %v6491 = vor.u32 %v6488, %v6489
      %v6492 = vsel %vm4867, %v6484, %v6491
      %v6493 = vrot.slane %v6488, 4
      %v6495 = vshrl.u32 %v6149, 16
      %v6497 = vrot.slane %v6495, 7
      %v6498 = vshll.u32 %v6149, 16
      %v6500 = vor.u32 %v6497, %v6498
      %v6501 = vsel %vm4867, %v6493, %v6500
      %v6502 = vld [vmem:[%s6101 + $0x10] sm:$0x1]
      %v6503 = vld [vmem:[%s6101 + $0x28] sm:$0x1]
      %v6504 = vld [vmem:[%s6101 + $0x40] sm:$0x1]
      %v6505 = vld [vmem:[%s6101 + $0x58] sm:$0x1]
      %v6506 = vld [vmem:[%s6101 + $0x70] sm:$0x1]
      %v6507 = vld [vmem:[%s6101 + $0x88] sm:$0x1]
      %v6508 = vld [vmem:[%s6101 + $0xa0] sm:$0x1]
      %v6509 = vld [vmem:[%s6101 + $0xb8] sm:$0x1]
      %v6510 = vld [vmem:[%s6101 + $0xd0] sm:$0x1]
      %v6511 = vld [vmem:[%s6101 + $0xe8] sm:$0x1]
      %v6512 = vld [vmem:[%s6101 + $0x100] sm:$0x1]
      %v6513 = vld [vmem:[%s6101 + $0x118] sm:$0x1]
      %v6514 = vld [vmem:[%s6101 + $0x130] sm:$0x1]
      %v6515 = vld [vmem:[%s6101 + $0x148] sm:$0x1]
      %v6516 = vld [vmem:[%s6101 + $0x160] sm:$0x1]
      %v6517 = vld [vmem:[%s6101 + $0x178] sm:$0x1]
      %v6518 = vrot.slane %v6156, 4
      %v6519 = vrot.slane %v6159, 5
      %v6520 = vor.u32 %v6518, %v6519
      %v6521 = vrot.slane %v6520, 4
      %v6522 = vrot.slane %v6168, 5
      %v6523 = vsel %vm375, %v6521, %v6522
      %v6524 = vrot.slane %v6165, 4
      %v6525 = vor.u32 %v6524, %v6522
      %v6526 = vrot.slane %v6525, 4
      %v6528 = vshll.u32 %v6502, 16
      %v6530 = vrot.slane %v6528, 5
      %v6531 = vsel %vm375, %v6526, %v6530
      %v6532 = vrot.slane %v6178, 4
      %v6533 = vrot.slane %v6181, 5
      %v6534 = vor.u32 %v6532, %v6533
      %v6535 = vrot.slane %v6534, 4
      %v6536 = vrot.slane %v6190, 5
      %v6537 = vsel %vm375, %v6535, %v6536
      %v6538 = vrot.slane %v6187, 4
      %v6539 = vor.u32 %v6538, %v6536
      %v6540 = vrot.slane %v6539, 4
      %v6542 = vshll.u32 %v6503, 16
      %v6544 = vrot.slane %v6542, 5
      %v6545 = vsel %vm375, %v6540, %v6544
      %v6546 = vrot.slane %v6200, 4
      %v6547 = vrot.slane %v6203, 5
      %v6548 = vor.u32 %v6546, %v6547
      %v6549 = vrot.slane %v6548, 4
      %v6550 = vrot.slane %v6212, 5
      %v6551 = vsel %vm375, %v6549, %v6550
      %v6552 = vrot.slane %v6209, 4
      %v6553 = vor.u32 %v6552, %v6550
      %v6554 = vrot.slane %v6553, 4
      %v6556 = vshll.u32 %v6504, 16
      %v6558 = vrot.slane %v6556, 5
      %v6559 = vsel %vm375, %v6554, %v6558
      %v6560 = vrot.slane %v6222, 4
      %v6561 = vrot.slane %v6225, 5
      %v6562 = vor.u32 %v6560, %v6561
      %v6563 = vrot.slane %v6562, 4
      %v6564 = vrot.slane %v6234, 5
      %v6565 = vsel %vm375, %v6563, %v6564
      %v6566 = vrot.slane %v6231, 4
      %v6567 = vor.u32 %v6566, %v6564
      %v6568 = vrot.slane %v6567, 4
      %v6570 = vshll.u32 %v6505, 16
      %v6572 = vrot.slane %v6570, 5
      %v6573 = vsel %vm375, %v6568, %v6572
      %v6574 = vrot.slane %v6244, 4
      %v6575 = vrot.slane %v6247, 5
      %v6576 = vor.u32 %v6574, %v6575
      %v6577 = vrot.slane %v6576, 4
      %v6578 = vrot.slane %v6256, 5
      %v6579 = vsel %vm375, %v6577, %v6578
      %v6580 = vrot.slane %v6253, 4
      %v6581 = vor.u32 %v6580, %v6578
      %v6582 = vrot.slane %v6581, 4
      %v6584 = vshll.u32 %v6506, 16
      %v6586 = vrot.slane %v6584, 5
      %v6587 = vsel %vm375, %v6582, %v6586
      %v6588 = vrot.slane %v6266, 4
      %v6589 = vrot.slane %v6269, 5
      %v6590 = vor.u32 %v6588, %v6589
      %v6591 = vrot.slane %v6590, 4
      %v6592 = vrot.slane %v6278, 5
      %v6593 = vsel %vm375, %v6591, %v6592
      %v6594 = vrot.slane %v6275, 4
      %v6595 = vor.u32 %v6594, %v6592
      %v6596 = vrot.slane %v6595, 4
      %v6598 = vshll.u32 %v6507, 16
      %v6600 = vrot.slane %v6598, 5
      %v6601 = vsel %vm375, %v6596, %v6600
      %v6602 = vrot.slane %v6288, 4
      %v6603 = vrot.slane %v6291, 5
      %v6604 = vor.u32 %v6602, %v6603
      %v6605 = vrot.slane %v6604, 4
      %v6606 = vrot.slane %v6300, 5
      %v6607 = vsel %vm375, %v6605, %v6606
      %v6608 = vrot.slane %v6297, 4
      %v6609 = vor.u32 %v6608, %v6606
      %v6610 = vrot.slane %v6609, 4
      %v6612 = vshll.u32 %v6508, 16
      %v6614 = vrot.slane %v6612, 5
      %v6615 = vsel %vm375, %v6610, %v6614
      %v6616 = vrot.slane %v6310, 4
      %v6617 = vrot.slane %v6313, 5
      %v6618 = vor.u32 %v6616, %v6617
      %v6619 = vrot.slane %v6618, 4
      %v6620 = vrot.slane %v6322, 5
      %v6621 = vsel %vm375, %v6619, %v6620
      %v6622 = vrot.slane %v6319, 4
      %v6623 = vor.u32 %v6622, %v6620
      %v6624 = vrot.slane %v6623, 4
      %v6626 = vshll.u32 %v6509, 16
      %v6628 = vrot.slane %v6626, 5
      %v6629 = vsel %vm375, %v6624, %v6628
      %v6630 = vrot.slane %v6332, 4
      %v6631 = vrot.slane %v6335, 5
      %v6632 = vor.u32 %v6630, %v6631
      %v6633 = vrot.slane %v6632, 4
      %v6634 = vrot.slane %v6344, 5
      %v6635 = vsel %vm375, %v6633, %v6634
      %v6636 = vrot.slane %v6341, 4
      %v6637 = vor.u32 %v6636, %v6634
      %v6638 = vrot.slane %v6637, 4
      %v6640 = vshll.u32 %v6510, 16
      %v6642 = vrot.slane %v6640, 5
      %v6643 = vsel %vm375, %v6638, %v6642
      %v6644 = vrot.slane %v6354, 4
      %v6645 = vrot.slane %v6357, 5
      %v6646 = vor.u32 %v6644, %v6645
      %v6647 = vrot.slane %v6646, 4
      %v6648 = vrot.slane %v6366, 5
      %v6649 = vsel %vm375, %v6647, %v6648
      %v6650 = vrot.slane %v6363, 4
      %v6651 = vor.u32 %v6650, %v6648
      %v6652 = vrot.slane %v6651, 4
      %v6654 = vshll.u32 %v6511, 16
      %v6656 = vrot.slane %v6654, 5
      %v6657 = vsel %vm375, %v6652, %v6656
      %v6658 = vrot.slane %v6376, 4
      %v6659 = vrot.slane %v6379, 5
      %v6660 = vor.u32 %v6658, %v6659
      %v6661 = vrot.slane %v6660, 4
      %v6662 = vrot.slane %v6388, 5
      %v6663 = vsel %vm375, %v6661, %v6662
      %v6664 = vrot.slane %v6385, 4
      %v6665 = vor.u32 %v6664, %v6662
      %v6666 = vrot.slane %v6665, 4
      %v6668 = vshll.u32 %v6512, 16
      %v6670 = vrot.slane %v6668, 5
      %v6671 = vsel %vm375, %v6666, %v6670
      %v6672 = vrot.slane %v6398, 4
      %v6673 = vrot.slane %v6401, 5
      %v6674 = vor.u32 %v6672, %v6673
      %v6675 = vrot.slane %v6674, 4
      %v6676 = vrot.slane %v6410, 5
      %v6677 = vsel %vm375, %v6675, %v6676
      %v6678 = vrot.slane %v6407, 4
      %v6679 = vor.u32 %v6678, %v6676
      %v6680 = vrot.slane %v6679, 4
      %v6682 = vshll.u32 %v6513, 16
      %v6684 = vrot.slane %v6682, 5
      %v6685 = vsel %vm375, %v6680, %v6684
      %v6686 = vrot.slane %v6420, 4
      %v6687 = vrot.slane %v6423, 5
      %v6688 = vor.u32 %v6686, %v6687
      %v6689 = vrot.slane %v6688, 4
      %v6690 = vrot.slane %v6432, 5
      %v6691 = vsel %vm375, %v6689, %v6690
      %v6692 = vrot.slane %v6429, 4
      %v6693 = vor.u32 %v6692, %v6690
      %v6694 = vrot.slane %v6693, 4
      %v6696 = vshll.u32 %v6514, 16
      %v6698 = vrot.slane %v6696, 5
      %v6699 = vsel %vm375, %v6694, %v6698
      %v6700 = vrot.slane %v6442, 4
      %v6701 = vrot.slane %v6445, 5
      %v6702 = vor.u32 %v6700, %v6701
      %v6703 = vrot.slane %v6702, 4
      %v6704 = vrot.slane %v6454, 5
      %v6705 = vsel %vm375, %v6703, %v6704
      %v6706 = vrot.slane %v6451, 4
      %v6707 = vor.u32 %v6706, %v6704
      %v6708 = vrot.slane %v6707, 4
      %v6710 = vshll.u32 %v6515, 16
      %v6712 = vrot.slane %v6710, 5
      %v6713 = vsel %vm375, %v6708, %v6712
      %v6714 = vrot.slane %v6464, 4
      %v6715 = vrot.slane %v6467, 5
      %v6716 = vor.u32 %v6714, %v6715
      %v6717 = vrot.slane %v6716, 4
      %v6718 = vrot.slane %v6476, 5
      %v6719 = vsel %vm375, %v6717, %v6718
      %v6720 = vrot.slane %v6473, 4
      %v6721 = vor.u32 %v6720, %v6718
      %v6722 = vrot.slane %v6721, 4
      %v6724 = vshll.u32 %v6516, 16
      %v6726 = vrot.slane %v6724, 5
      %v6727 = vsel %vm375, %v6722, %v6726
      %v6728 = vrot.slane %v6486, 4
      %v6729 = vrot.slane %v6489, 5
      %v6730 = vor.u32 %v6728, %v6729
      %v6731 = vrot.slane %v6730, 4
      %v6732 = vrot.slane %v6498, 5
      %v6733 = vsel %vm375, %v6731, %v6732
      %v6734 = vrot.slane %v6495, 4
      %v6735 = vor.u32 %v6734, %v6732
      %v6736 = vrot.slane %v6735, 4
      %v6738 = vshll.u32 %v6517, 16
      %v6740 = vrot.slane %v6738, 5
      %v6741 = vsel %vm375, %v6736, %v6740
      %v6742 = vunpack.c.l.b16 %v4880
      %v6743 = vunpack.c.l.b16 %v4889
      %v6744 = vunpack.c.l.b16 %v4902
      %v6745 = vunpack.c.l.b16 %v4911
      %v6746 = vunpack.c.l.b16 %v4924
      %v6747 = vunpack.c.l.b16 %v4933
      %v6748 = vunpack.c.l.b16 %v4946
      %v6749 = vunpack.c.l.b16 %v4955
      %v6750 = vunpack.c.l.b16 %v4968
      %v6751 = vunpack.c.l.b16 %v4977
      %v6752 = vunpack.c.l.b16 %v4990
      %v6753 = vunpack.c.l.b16 %v4999
      %v6754 = vunpack.c.l.b16 %v5012
      %v6755 = vunpack.c.l.b16 %v5021
      %v6756 = vunpack.c.l.b16 %v5034
      %v6757 = vunpack.c.l.b16 %v5043
      %v6758 = vunpack.c.l.b16 %v5056
      %v6759 = vunpack.c.l.b16 %v5065
      %v6760 = vunpack.c.l.b16 %v5078
      %v6761 = vunpack.c.l.b16 %v5087
      %v6762 = vunpack.c.l.b16 %v5100
      %v6763 = vunpack.c.l.b16 %v5109
      %v6764 = vunpack.c.l.b16 %v5122
      %v6765 = vunpack.c.l.b16 %v5131
      %v6766 = vunpack.c.l.b16 %v5144
      %v6767 = vunpack.c.l.b16 %v5153
      %v6768 = vunpack.c.l.b16 %v5166
      %v6769 = vunpack.c.l.b16 %v5175
      %v6770 = vunpack.c.l.b16 %v5188
      %v6771 = vunpack.c.l.b16 %v5197
      %v6772 = vunpack.c.l.b16 %v5210
      %v6773 = vunpack.c.l.b16 %v5219
      %v6774 = vpack.c.b16 %v6743, %v6742
      %v6775 = vpack.c.b16 %v6745, %v6744
      %v6776 = vpack.c.b16 %v6747, %v6746
      %v6777 = vpack.c.b16 %v6749, %v6748
      %v6778 = vpack.c.b16 %v6751, %v6750
      %v6779 = vpack.c.b16 %v6753, %v6752
      %v6780 = vpack.c.b16 %v6755, %v6754
      %v6781 = vpack.c.b16 %v6757, %v6756
      %v6782 = vpack.c.b16 %v6759, %v6758
      %v6783 = vpack.c.b16 %v6761, %v6760
      %v6784 = vpack.c.b16 %v6763, %v6762
      %v6785 = vpack.c.b16 %v6765, %v6764
      %v6786 = vpack.c.b16 %v6767, %v6766
      %v6787 = vpack.c.b16 %v6769, %v6768
      %v6788 = vpack.c.b16 %v6771, %v6770
      %v6789 = vpack.c.b16 %v6773, %v6772
      %v6838 = vunpack.c.l.b16 %v4818
      %v6839 = vunpack.c.l.b16 %v4819
      %v6840 = vunpack.c.l.b16 %v4821
      %v6841 = vunpack.c.l.b16 %v4822
      %v6842 = vunpack.c.l.b16 %v4824
      %v6843 = vunpack.c.l.b16 %v4825
      %v6844 = vunpack.c.l.b16 %v4827
      %v6845 = vunpack.c.l.b16 %v4828
      %v6846 = vunpack.c.l.b16 %v4830
      %v6847 = vunpack.c.l.b16 %v4831
      %v6848 = vunpack.c.l.b16 %v4833
      %v6849 = vunpack.c.l.b16 %v4834
      %v6850 = vunpack.c.l.b16 %v4836
      %v6851 = vunpack.c.l.b16 %v4837
      %v6852 = vunpack.c.l.b16 %v4839
      %v6853 = vunpack.c.l.b16 %v4840
      %v6854 = vunpack.c.l.b16 %v4842
      %v6855 = vunpack.c.l.b16 %v4843
      %v6856 = vunpack.c.l.b16 %v4845
      %v6857 = vunpack.c.l.b16 %v4846
      %v6858 = vunpack.c.l.b16 %v4848
      %v6859 = vunpack.c.l.b16 %v4849
      %v6860 = vunpack.c.l.b16 %v4851
      %v6861 = vunpack.c.l.b16 %v4852
      %v6862 = vunpack.c.l.b16 %v4854
      %v6863 = vunpack.c.l.b16 %v4855
      %v6864 = vunpack.c.l.b16 %v4857
      %v6865 = vunpack.c.l.b16 %v4858
      %v6866 = vunpack.c.l.b16 %v4860
      %v6867 = vunpack.c.l.b16 %v4861
      %v6868 = vunpack.c.l.b16 %v4863
      %v6869 = vunpack.c.l.b16 %v4864
      %v6870 = vpack.c.b16 %v6839, %v6838
      %v6871 = vpack.c.b16 %v6841, %v6840
      %v6872 = vpack.c.b16 %v6843, %v6842
      %v6873 = vpack.c.b16 %v6845, %v6844
      %v6874 = vpack.c.b16 %v6847, %v6846
      %v6875 = vpack.c.b16 %v6849, %v6848
      %v6876 = vpack.c.b16 %v6851, %v6850
      %v6877 = vpack.c.b16 %v6853, %v6852
      %v6878 = vpack.c.b16 %v6855, %v6854
      %v6879 = vpack.c.b16 %v6857, %v6856
      %v6880 = vpack.c.b16 %v6859, %v6858
      %v6881 = vpack.c.b16 %v6861, %v6860
      %v6882 = vpack.c.b16 %v6863, %v6862
      %v6883 = vpack.c.b16 %v6865, %v6864
      %v6884 = vpack.c.b16 %v6867, %v6866
      %v6885 = vpack.c.b16 %v6869, %v6868
      %v6902 = vunpack.c.l.b16 %v5241
      %v6903 = vunpack.c.l.b16 %v5249
      %v6904 = vunpack.c.l.b16 %v5255
      %v6905 = vunpack.c.l.b16 %v5263
      %v6906 = vunpack.c.l.b16 %v5269
      %v6907 = vunpack.c.l.b16 %v5277
      %v6908 = vunpack.c.l.b16 %v5283
      %v6909 = vunpack.c.l.b16 %v5291
      %v6910 = vunpack.c.l.b16 %v5297
      %v6911 = vunpack.c.l.b16 %v5305
      %v6912 = vunpack.c.l.b16 %v5311
      %v6913 = vunpack.c.l.b16 %v5319
      %v6914 = vunpack.c.l.b16 %v5325
      %v6915 = vunpack.c.l.b16 %v5333
      %v6916 = vunpack.c.l.b16 %v5339
      %v6917 = vunpack.c.l.b16 %v5347
      %v6918 = vunpack.c.l.b16 %v5353
      %v6919 = vunpack.c.l.b16 %v5361
      %v6920 = vunpack.c.l.b16 %v5367
      %v6921 = vunpack.c.l.b16 %v5375
      %v6922 = vunpack.c.l.b16 %v5381
      %v6923 = vunpack.c.l.b16 %v5389
      %v6924 = vunpack.c.l.b16 %v5395
      %v6925 = vunpack.c.l.b16 %v5403
      %v6926 = vunpack.c.l.b16 %v5409
      %v6927 = vunpack.c.l.b16 %v5417
      %v6928 = vunpack.c.l.b16 %v5423
      %v6929 = vunpack.c.l.b16 %v5431
      %v6930 = vunpack.c.l.b16 %v5437
      %v6931 = vunpack.c.l.b16 %v5445
      %v6932 = vunpack.c.l.b16 %v5451
      %v6933 = vunpack.c.l.b16 %v5459
      %v6934 = vpack.c.b16 %v6903, %v6902
      %v6935 = vpack.c.b16 %v6905, %v6904
      %v6936 = vpack.c.b16 %v6907, %v6906
      %v6937 = vpack.c.b16 %v6909, %v6908
      %v6938 = vpack.c.b16 %v6911, %v6910
      %v6939 = vpack.c.b16 %v6913, %v6912
      %v6940 = vpack.c.b16 %v6915, %v6914
      %v6941 = vpack.c.b16 %v6917, %v6916
      %v6942 = vpack.c.b16 %v6919, %v6918
      %v6943 = vpack.c.b16 %v6921, %v6920
      %v6944 = vpack.c.b16 %v6923, %v6922
      %v6945 = vpack.c.b16 %v6925, %v6924
      %v6946 = vpack.c.b16 %v6927, %v6926
      %v6947 = vpack.c.b16 %v6929, %v6928
      %v6948 = vpack.c.b16 %v6931, %v6930
      %v6949 = vpack.c.b16 %v6933, %v6932
      %v6966 = vunpack.c.l.b16 %v5521
      %v6967 = vunpack.c.l.b16 %v5530
      %v6968 = vunpack.c.l.b16 %v5543
      %v6969 = vunpack.c.l.b16 %v5552
      %v6970 = vunpack.c.l.b16 %v5565
      %v6971 = vunpack.c.l.b16 %v5574
      %v6972 = vunpack.c.l.b16 %v5587
      %v6973 = vunpack.c.l.b16 %v5596
      %v6974 = vunpack.c.l.b16 %v5609
      %v6975 = vunpack.c.l.b16 %v5618
      %v6976 = vunpack.c.l.b16 %v5631
      %v6977 = vunpack.c.l.b16 %v5640
      %v6978 = vunpack.c.l.b16 %v5653
      %v6979 = vunpack.c.l.b16 %v5662
      %v6980 = vunpack.c.l.b16 %v5675
      %v6981 = vunpack.c.l.b16 %v5684
      %v6982 = vunpack.c.l.b16 %v5697
      %v6983 = vunpack.c.l.b16 %v5706
      %v6984 = vunpack.c.l.b16 %v5719
      %v6985 = vunpack.c.l.b16 %v5728
      %v6986 = vunpack.c.l.b16 %v5741
      %v6987 = vunpack.c.l.b16 %v5750
      %v6988 = vunpack.c.l.b16 %v5763
      %v6989 = vunpack.c.l.b16 %v5772
      %v6990 = vunpack.c.l.b16 %v5785
      %v6991 = vunpack.c.l.b16 %v5794
      %v6992 = vunpack.c.l.b16 %v5807
      %v6993 = vunpack.c.l.b16 %v5816
      %v6994 = vunpack.c.l.b16 %v5829
      %v6995 = vunpack.c.l.b16 %v5838
      %v6996 = vunpack.c.l.b16 %v5851
      %v6997 = vunpack.c.l.b16 %v5860
      %v6998 = vpack.c.b16 %v6967, %v6966
      %v6999 = vpack.c.b16 %v6969, %v6968
      %v7000 = vpack.c.b16 %v6971, %v6970
      %v7001 = vpack.c.b16 %v6973, %v6972
      %v7002 = vpack.c.b16 %v6975, %v6974
      %v7003 = vpack.c.b16 %v6977, %v6976
      %v7004 = vpack.c.b16 %v6979, %v6978
      %v7005 = vpack.c.b16 %v6981, %v6980
      %v7006 = vpack.c.b16 %v6983, %v6982
      %v7007 = vpack.c.b16 %v6985, %v6984
      %v7008 = vpack.c.b16 %v6987, %v6986
      %v7009 = vpack.c.b16 %v6989, %v6988
      %v7010 = vpack.c.b16 %v6991, %v6990
      %v7011 = vpack.c.b16 %v6993, %v6992
      %v7012 = vpack.c.b16 %v6995, %v6994
      %v7013 = vpack.c.b16 %v6997, %v6996
      %v7062 = vunpack.c.l.b16 %v5462
      %v7063 = vunpack.c.l.b16 %v5463
      %v7064 = vunpack.c.l.b16 %v5465
      %v7065 = vunpack.c.l.b16 %v5466
      %v7066 = vunpack.c.l.b16 %v5468
      %v7067 = vunpack.c.l.b16 %v5469
      %v7068 = vunpack.c.l.b16 %v5471
      %v7069 = vunpack.c.l.b16 %v5472
      %v7070 = vunpack.c.l.b16 %v5474
      %v7071 = vunpack.c.l.b16 %v5475
      %v7072 = vunpack.c.l.b16 %v5477
      %v7073 = vunpack.c.l.b16 %v5478
      %v7074 = vunpack.c.l.b16 %v5480
      %v7075 = vunpack.c.l.b16 %v5481
      %v7076 = vunpack.c.l.b16 %v5483
      %v7077 = vunpack.c.l.b16 %v5484
      %v7078 = vunpack.c.l.b16 %v5486
      %v7079 = vunpack.c.l.b16 %v5487
      %v7080 = vunpack.c.l.b16 %v5489
      %v7081 = vunpack.c.l.b16 %v5490
      %v7082 = vunpack.c.l.b16 %v5492
      %v7083 = vunpack.c.l.b16 %v5493
      %v7084 = vunpack.c.l.b16 %v5495
      %v7085 = vunpack.c.l.b16 %v5496
      %v7086 = vunpack.c.l.b16 %v5498
      %v7087 = vunpack.c.l.b16 %v5499
      %v7088 = vunpack.c.l.b16 %v5501
      %v7089 = vunpack.c.l.b16 %v5502
      %v7090 = vunpack.c.l.b16 %v5504
      %v7091 = vunpack.c.l.b16 %v5505
      %v7092 = vunpack.c.l.b16 %v5507
      %v7093 = vunpack.c.l.b16 %v5508
      %v7094 = vpack.c.b16 %v7063, %v7062
      %v7095 = vpack.c.b16 %v7065, %v7064
      %v7096 = vpack.c.b16 %v7067, %v7066
      %v7097 = vpack.c.b16 %v7069, %v7068
      %v7098 = vpack.c.b16 %v7071, %v7070
      %v7099 = vpack.c.b16 %v7073, %v7072
      %v7100 = vpack.c.b16 %v7075, %v7074
      %v7101 = vpack.c.b16 %v7077, %v7076
      %v7102 = vpack.c.b16 %v7079, %v7078
      %v7103 = vpack.c.b16 %v7081, %v7080
      %v7104 = vpack.c.b16 %v7083, %v7082
      %v7105 = vpack.c.b16 %v7085, %v7084
      %v7106 = vpack.c.b16 %v7087, %v7086
      %v7107 = vpack.c.b16 %v7089, %v7088
      %v7108 = vpack.c.b16 %v7091, %v7090
      %v7109 = vpack.c.b16 %v7093, %v7092
      %v7126 = vunpack.c.l.b16 %v5882
      %v7127 = vunpack.c.l.b16 %v5890
      %v7128 = vunpack.c.l.b16 %v5896
      %v7129 = vunpack.c.l.b16 %v5904
      %v7130 = vunpack.c.l.b16 %v5910
      %v7131 = vunpack.c.l.b16 %v5918
      %v7132 = vunpack.c.l.b16 %v5924
      %v7133 = vunpack.c.l.b16 %v5932
      %v7134 = vunpack.c.l.b16 %v5938
      %v7135 = vunpack.c.l.b16 %v5946
      %v7136 = vunpack.c.l.b16 %v5952
      %v7137 = vunpack.c.l.b16 %v5960
      %v7138 = vunpack.c.l.b16 %v5966
      %v7139 = vunpack.c.l.b16 %v5974
      %v7140 = vunpack.c.l.b16 %v5980
      %v7141 = vunpack.c.l.b16 %v5988
      %v7142 = vunpack.c.l.b16 %v5994
      %v7143 = vunpack.c.l.b16 %v6002
      %v7144 = vunpack.c.l.b16 %v6008
      %v7145 = vunpack.c.l.b16 %v6016
      %v7146 = vunpack.c.l.b16 %v6022
      %v7147 = vunpack.c.l.b16 %v6030
      %v7148 = vunpack.c.l.b16 %v6036
      %v7149 = vunpack.c.l.b16 %v6044
      %v7150 = vunpack.c.l.b16 %v6050
      %v7151 = vunpack.c.l.b16 %v6058
      %v7152 = vunpack.c.l.b16 %v6064
      %v7153 = vunpack.c.l.b16 %v6072
      %v7154 = vunpack.c.l.b16 %v6078
      %v7155 = vunpack.c.l.b16 %v6086
      %v7156 = vunpack.c.l.b16 %v6092
      %v7157 = vunpack.c.l.b16 %v6100
      %v7158 = vpack.c.b16 %v7127, %v7126
      %v7159 = vpack.c.b16 %v7129, %v7128
      %v7160 = vpack.c.b16 %v7131, %v7130
      %v7161 = vpack.c.b16 %v7133, %v7132
      %v7162 = vpack.c.b16 %v7135, %v7134
      %v7163 = vpack.c.b16 %v7137, %v7136
      %v7164 = vpack.c.b16 %v7139, %v7138
      %v7165 = vpack.c.b16 %v7141, %v7140
      %v7166 = vpack.c.b16 %v7143, %v7142
      %v7167 = vpack.c.b16 %v7145, %v7144
      %v7168 = vpack.c.b16 %v7147, %v7146
      %v7169 = vpack.c.b16 %v7149, %v7148
      %v7170 = vpack.c.b16 %v7151, %v7150
      %v7171 = vpack.c.b16 %v7153, %v7152
      %v7172 = vpack.c.b16 %v7155, %v7154
      %v7173 = vpack.c.b16 %v7157, %v7156
      %v7190 = vunpack.c.l.b16 %v6162
      %v7191 = vunpack.c.l.b16 %v6171
      %v7192 = vunpack.c.l.b16 %v6184
      %v7193 = vunpack.c.l.b16 %v6193
      %v7194 = vunpack.c.l.b16 %v6206
      %v7195 = vunpack.c.l.b16 %v6215
      %v7196 = vunpack.c.l.b16 %v6228
      %v7197 = vunpack.c.l.b16 %v6237
      %v7198 = vunpack.c.l.b16 %v6250
      %v7199 = vunpack.c.l.b16 %v6259
      %v7200 = vunpack.c.l.b16 %v6272
      %v7201 = vunpack.c.l.b16 %v6281
      %v7202 = vunpack.c.l.b16 %v6294
      %v7203 = vunpack.c.l.b16 %v6303
      %v7204 = vunpack.c.l.b16 %v6316
      %v7205 = vunpack.c.l.b16 %v6325
      %v7206 = vunpack.c.l.b16 %v6338
      %v7207 = vunpack.c.l.b16 %v6347
      %v7208 = vunpack.c.l.b16 %v6360
      %v7209 = vunpack.c.l.b16 %v6369
      %v7210 = vunpack.c.l.b16 %v6382
      %v7211 = vunpack.c.l.b16 %v6391
      %v7212 = vunpack.c.l.b16 %v6404
      %v7213 = vunpack.c.l.b16 %v6413
      %v7214 = vunpack.c.l.b16 %v6426
      %v7215 = vunpack.c.l.b16 %v6435
      %v7216 = vunpack.c.l.b16 %v6448
      %v7217 = vunpack.c.l.b16 %v6457
      %v7218 = vunpack.c.l.b16 %v6470
      %v7219 = vunpack.c.l.b16 %v6479
      %v7220 = vunpack.c.l.b16 %v6492
      %v7221 = vunpack.c.l.b16 %v6501
      %v7222 = vpack.c.b16 %v7191, %v7190
      %v7223 = vpack.c.b16 %v7193, %v7192
      %v7224 = vpack.c.b16 %v7195, %v7194
      %v7225 = vpack.c.b16 %v7197, %v7196
      %v7226 = vpack.c.b16 %v7199, %v7198
      %v7227 = vpack.c.b16 %v7201, %v7200
      %v7228 = vpack.c.b16 %v7203, %v7202
      %v7229 = vpack.c.b16 %v7205, %v7204
      %v7230 = vpack.c.b16 %v7207, %v7206
      %v7231 = vpack.c.b16 %v7209, %v7208
      %v7232 = vpack.c.b16 %v7211, %v7210
      %v7233 = vpack.c.b16 %v7213, %v7212
      %v7234 = vpack.c.b16 %v7215, %v7214
      %v7235 = vpack.c.b16 %v7217, %v7216
      %v7236 = vpack.c.b16 %v7219, %v7218
      %v7237 = vpack.c.b16 %v7221, %v7220
      %v7286 = vunpack.c.l.b16 %v6103
      %v7287 = vunpack.c.l.b16 %v6104
      %v7288 = vunpack.c.l.b16 %v6106
      %v7289 = vunpack.c.l.b16 %v6107
      %v7290 = vunpack.c.l.b16 %v6109
      %v7291 = vunpack.c.l.b16 %v6110
      %v7292 = vunpack.c.l.b16 %v6112
      %v7293 = vunpack.c.l.b16 %v6113
      %v7294 = vunpack.c.l.b16 %v6115
      %v7295 = vunpack.c.l.b16 %v6116
      %v7296 = vunpack.c.l.b16 %v6118
      %v7297 = vunpack.c.l.b16 %v6119
      %v7298 = vunpack.c.l.b16 %v6121
      %v7299 = vunpack.c.l.b16 %v6122
      %v7300 = vunpack.c.l.b16 %v6124
      %v7301 = vunpack.c.l.b16 %v6125
      %v7302 = vunpack.c.l.b16 %v6127
      %v7303 = vunpack.c.l.b16 %v6128
      %v7304 = vunpack.c.l.b16 %v6130
      %v7305 = vunpack.c.l.b16 %v6131
      %v7306 = vunpack.c.l.b16 %v6133
      %v7307 = vunpack.c.l.b16 %v6134
      %v7308 = vunpack.c.l.b16 %v6136
      %v7309 = vunpack.c.l.b16 %v6137
      %v7310 = vunpack.c.l.b16 %v6139
      %v7311 = vunpack.c.l.b16 %v6140
      %v7312 = vunpack.c.l.b16 %v6142
      %v7313 = vunpack.c.l.b16 %v6143
      %v7314 = vunpack.c.l.b16 %v6145
      %v7315 = vunpack.c.l.b16 %v6146
      %v7316 = vunpack.c.l.b16 %v6148
      %v7317 = vunpack.c.l.b16 %v6149
      %v7318 = vpack.c.b16 %v7287, %v7286
      %v7319 = vpack.c.b16 %v7289, %v7288
      %v7320 = vpack.c.b16 %v7291, %v7290
      %v7321 = vpack.c.b16 %v7293, %v7292
      %v7322 = vpack.c.b16 %v7295, %v7294
      %v7323 = vpack.c.b16 %v7297, %v7296
      %v7324 = vpack.c.b16 %v7299, %v7298
      %v7325 = vpack.c.b16 %v7301, %v7300
      %v7326 = vpack.c.b16 %v7303, %v7302
      %v7327 = vpack.c.b16 %v7305, %v7304
      %v7328 = vpack.c.b16 %v7307, %v7306
      %v7329 = vpack.c.b16 %v7309, %v7308
      %v7330 = vpack.c.b16 %v7311, %v7310
      %v7331 = vpack.c.b16 %v7313, %v7312
      %v7332 = vpack.c.b16 %v7315, %v7314
      %v7333 = vpack.c.b16 %v7317, %v7316
      %v7350 = vunpack.c.l.b16 %v6523
      %v7351 = vunpack.c.l.b16 %v6531
      %v7352 = vunpack.c.l.b16 %v6537
      %v7353 = vunpack.c.l.b16 %v6545
      %v7354 = vunpack.c.l.b16 %v6551
      %v7355 = vunpack.c.l.b16 %v6559
      %v7356 = vunpack.c.l.b16 %v6565
      %v7357 = vunpack.c.l.b16 %v6573
      %v7358 = vunpack.c.l.b16 %v6579
      %v7359 = vunpack.c.l.b16 %v6587
      %v7360 = vunpack.c.l.b16 %v6593
      %v7361 = vunpack.c.l.b16 %v6601
      %v7362 = vunpack.c.l.b16 %v6607
      %v7363 = vunpack.c.l.b16 %v6615
      %v7364 = vunpack.c.l.b16 %v6621
      %v7365 = vunpack.c.l.b16 %v6629
      %v7366 = vunpack.c.l.b16 %v6635
      %v7367 = vunpack.c.l.b16 %v6643
      %v7368 = vunpack.c.l.b16 %v6649
      %v7369 = vunpack.c.l.b16 %v6657
      %v7370 = vunpack.c.l.b16 %v6663
      %v7371 = vunpack.c.l.b16 %v6671
      %v7372 = vunpack.c.l.b16 %v6677
      %v7373 = vunpack.c.l.b16 %v6685
      %v7374 = vunpack.c.l.b16 %v6691
      %v7375 = vunpack.c.l.b16 %v6699
      %v7376 = vunpack.c.l.b16 %v6705
      %v7377 = vunpack.c.l.b16 %v6713
      %v7378 = vunpack.c.l.b16 %v6719
      %v7379 = vunpack.c.l.b16 %v6727
      %v7380 = vunpack.c.l.b16 %v6733
      %v7381 = vunpack.c.l.b16 %v6741
      %v7382 = vpack.c.b16 %v7351, %v7350
      %v7383 = vpack.c.b16 %v7353, %v7352
      %v7384 = vpack.c.b16 %v7355, %v7354
      %v7385 = vpack.c.b16 %v7357, %v7356
      %v7386 = vpack.c.b16 %v7359, %v7358
      %v7387 = vpack.c.b16 %v7361, %v7360
      %v7388 = vpack.c.b16 %v7363, %v7362
      %v7389 = vpack.c.b16 %v7365, %v7364
      %v7390 = vpack.c.b16 %v7367, %v7366
      %v7391 = vpack.c.b16 %v7369, %v7368
      %v7392 = vpack.c.b16 %v7371, %v7370
      %v7393 = vpack.c.b16 %v7373, %v7372
      %v7394 = vpack.c.b16 %v7375, %v7374
      %v7395 = vpack.c.b16 %v7377, %v7376
      %v7396 = vpack.c.b16 %v7379, %v7378
      %v7397 = vpack.c.b16 %v7381, %v7380
      %v7414 = vld [vmem:[%s4] sm:$0xf]
      %v7415 = vld [vmem:[%s4 + $0x4] sm:$0xf]
      %v7416 = vld [vmem:[%s4 + $0x8] sm:$0xf]
      %v7417 = vld [vmem:[%s4 + $0xc] sm:$0xf]
      %v7418 = vld [vmem:[%s4 + $0x10] sm:$0xf]
      %v7419 = vld [vmem:[%s4 + $0x14] sm:$0xf]
      %v7420 = vld [vmem:[%s4 + $0x18] sm:$0xf]
      %v7421 = vld [vmem:[%s4 + $0x1c] sm:$0xf]
      %v7422 = vld [vmem:[%s4 + $0x20] sm:$0xf]
      %v7423 = vld [vmem:[%s4 + $0x24] sm:$0xf]
      %v7424 = vld [vmem:[%s4 + $0x28] sm:$0xf]
      %v7425 = vld [vmem:[%s4 + $0x2c] sm:$0xf]
      %v7426 = vld [vmem:[%s4 + $0x30] sm:$0xf]
      %v7427 = vld [vmem:[%s4 + $0x34] sm:$0xf]
      %v7428 = vld [vmem:[%s4 + $0x38] sm:$0xf]
      %v7429 = vld [vmem:[%s4 + $0x3c] sm:$0xf]
      %v7430 = vld [vmem:[%s4 + $0x40] sm:$0xf]
      %v7431 = vld [vmem:[%s4 + $0x44] sm:$0xf]
      %v7432 = vld [vmem:[%s4 + $0x48] sm:$0xf]
      %v7433 = vld [vmem:[%s4 + $0x4c] sm:$0xf]
      %v7434 = vld [vmem:[%s4 + $0x50] sm:$0xf]
      %v7435 = vld [vmem:[%s4 + $0x54] sm:$0xf]
      %v7436 = vld [vmem:[%s4 + $0x58] sm:$0xf]
      %v7437 = vld [vmem:[%s4 + $0x5c] sm:$0xf]
      %v7438 = vld [vmem:[%s4 + $0x60] sm:$0xf]
      %v7439 = vld [vmem:[%s4 + $0x64] sm:$0xf]
      %v7440 = vld [vmem:[%s4 + $0x68] sm:$0xf]
      %v7441 = vld [vmem:[%s4 + $0x6c] sm:$0xf]
      %v7442 = vld [vmem:[%s4 + $0x70] sm:$0xf]
      %v7443 = vld [vmem:[%s4 + $0x74] sm:$0xf]
      %v7444 = vld [vmem:[%s4 + $0x78] sm:$0xf]
      %v7445 = vld [vmem:[%s4 + $0x7c] sm:$0xf]
      %v7446 = vld [vmem:[%s4 + $0x80] sm:$0xf]
      %v7447 = vld [vmem:[%s4 + $0x84] sm:$0xf]
      %v7448 = vld [vmem:[%s4 + $0x88] sm:$0xf]
      %v7449 = vld [vmem:[%s4 + $0x8c] sm:$0xf]
      %v7450 = vld [vmem:[%s4 + $0x90] sm:$0xf]
      %v7451 = vld [vmem:[%s4 + $0x94] sm:$0xf]
      %v7452 = vld [vmem:[%s4 + $0x98] sm:$0xf]
      %v7453 = vld [vmem:[%s4 + $0x9c] sm:$0xf]
      %v7454 = vld [vmem:[%s4 + $0xa0] sm:$0xf]
      %v7455 = vld [vmem:[%s4 + $0xa4] sm:$0xf]
      %v7456 = vld [vmem:[%s4 + $0xa8] sm:$0xf]
      %v7457 = vld [vmem:[%s4 + $0xac] sm:$0xf]
      %v7458 = vld [vmem:[%s4 + $0xb0] sm:$0xf]
      %v7459 = vld [vmem:[%s4 + $0xb4] sm:$0xf]
      %v7460 = vld [vmem:[%s4 + $0xb8] sm:$0xf]
      %v7461 = vld [vmem:[%s4 + $0xbc] sm:$0xf]
      %v7462 = vld [vmem:[%s4 + $0xc0] sm:$0xf]
      %v7463 = vld [vmem:[%s4 + $0xc4] sm:$0xf]
      %v7464 = vld [vmem:[%s4 + $0xc8] sm:$0xf]
      %v7465 = vld [vmem:[%s4 + $0xcc] sm:$0xf]
      %v7466 = vld [vmem:[%s4 + $0xd0] sm:$0xf]
      %v7467 = vld [vmem:[%s4 + $0xd4] sm:$0xf]
      %v7468 = vld [vmem:[%s4 + $0xd8] sm:$0xf]
      %v7469 = vld [vmem:[%s4 + $0xdc] sm:$0xf]
      %v7470 = vld [vmem:[%s4 + $0xe0] sm:$0xf]
      %v7471 = vld [vmem:[%s4 + $0xe4] sm:$0xf]
      %v7472 = vld [vmem:[%s4 + $0xe8] sm:$0xf]
      %v7473 = vld [vmem:[%s4 + $0xec] sm:$0xf]
      %v7474 = vld [vmem:[%s4 + $0xf0] sm:$0xf]
      %v7475 = vld [vmem:[%s4 + $0xf4] sm:$0xf]
      %v7476 = vld [vmem:[%s4 + $0xf8] sm:$0xf]
      %v7477 = vld [vmem:[%s4 + $0xfc] sm:$0xf]
      %v7478 = vld [vmem:[%s4 + $0x100] sm:$0xf]
      %v7479 = vld [vmem:[%s4 + $0x104] sm:$0xf]
      %v7480 = vld [vmem:[%s4 + $0x108] sm:$0xf]
      %v7481 = vld [vmem:[%s4 + $0x10c] sm:$0xf]
      %v7482 = vld [vmem:[%s4 + $0x110] sm:$0xf]
      %v7483 = vld [vmem:[%s4 + $0x114] sm:$0xf]
      %v7484 = vld [vmem:[%s4 + $0x118] sm:$0xf]
      %v7485 = vld [vmem:[%s4 + $0x11c] sm:$0xf]
      %v7486 = vld [vmem:[%s4 + $0x120] sm:$0xf]
      %v7487 = vld [vmem:[%s4 + $0x124] sm:$0xf]
      %v7488 = vld [vmem:[%s4 + $0x128] sm:$0xf]
      %v7489 = vld [vmem:[%s4 + $0x12c] sm:$0xf]
      %v7490 = vld [vmem:[%s4 + $0x130] sm:$0xf]
      %v7491 = vld [vmem:[%s4 + $0x134] sm:$0xf]
      %v7492 = vld [vmem:[%s4 + $0x138] sm:$0xf]
      %v7493 = vld [vmem:[%s4 + $0x13c] sm:$0xf]
      %v7494 = vld [vmem:[%s4 + $0x140] sm:$0xf]
      %v7495 = vld [vmem:[%s4 + $0x144] sm:$0xf]
      %v7496 = vld [vmem:[%s4 + $0x148] sm:$0xf]
      %v7497 = vld [vmem:[%s4 + $0x14c] sm:$0xf]
      %v7498 = vld [vmem:[%s4 + $0x150] sm:$0xf]
      %v7499 = vld [vmem:[%s4 + $0x154] sm:$0xf]
      %v7500 = vld [vmem:[%s4 + $0x158] sm:$0xf]
      %v7501 = vld [vmem:[%s4 + $0x15c] sm:$0xf]
      %v7502 = vld [vmem:[%s4 + $0x160] sm:$0xf]
      %v7503 = vld [vmem:[%s4 + $0x164] sm:$0xf]
      %v7504 = vld [vmem:[%s4 + $0x168] sm:$0xf]
      %v7505 = vld [vmem:[%s4 + $0x16c] sm:$0xf]
      %v7506 = vld [vmem:[%s4 + $0x170] sm:$0xf]
      %v7507 = vld [vmem:[%s4 + $0x174] sm:$0xf]
      %v7508 = vld [vmem:[%s4 + $0x178] sm:$0xf]
      %v7509 = vld [vmem:[%s4 + $0x17c] sm:$0xf]
      %v7510 = vld [vmem:[%s4 + $0x180] sm:$0xf]
      %v7511 = vld [vmem:[%s4 + $0x184] sm:$0xf]
      %v7512 = vld [vmem:[%s4 + $0x188] sm:$0xf]
      %v7513 = vld [vmem:[%s4 + $0x18c] sm:$0xf]
      %v7514 = vld [vmem:[%s4 + $0x190] sm:$0xf]
      %v7515 = vld [vmem:[%s4 + $0x194] sm:$0xf]
      %v7516 = vld [vmem:[%s4 + $0x198] sm:$0xf]
      %v7517 = vld [vmem:[%s4 + $0x19c] sm:$0xf]
      %v7518 = vld [vmem:[%s4 + $0x1a0] sm:$0xf]
      %v7519 = vld [vmem:[%s4 + $0x1a4] sm:$0xf]
      %v7520 = vld [vmem:[%s4 + $0x1a8] sm:$0xf]
      %v7521 = vld [vmem:[%s4 + $0x1ac] sm:$0xf]
      %v7522 = vld [vmem:[%s4 + $0x1b0] sm:$0xf]
      %v7523 = vld [vmem:[%s4 + $0x1b4] sm:$0xf]
      %v7524 = vld [vmem:[%s4 + $0x1b8] sm:$0xf]
      %v7525 = vld [vmem:[%s4 + $0x1bc] sm:$0xf]
      %v7526 = vld [vmem:[%s4 + $0x1c0] sm:$0xf]
      %v7527 = vld [vmem:[%s4 + $0x1c4] sm:$0xf]
      %v7528 = vld [vmem:[%s4 + $0x1c8] sm:$0xf]
      %v7529 = vld [vmem:[%s4 + $0x1cc] sm:$0xf]
      %v7530 = vld [vmem:[%s4 + $0x1d0] sm:$0xf]
      %v7531 = vld [vmem:[%s4 + $0x1d4] sm:$0xf]
      %v7532 = vld [vmem:[%s4 + $0x1d8] sm:$0xf]
      %v7533 = vld [vmem:[%s4 + $0x1dc] sm:$0xf]
      %v7534 = vld [vmem:[%s4 + $0x1e0] sm:$0xf]
      %v7535 = vld [vmem:[%s4 + $0x1e4] sm:$0xf]
      %v7536 = vld [vmem:[%s4 + $0x1e8] sm:$0xf]
      %v7537 = vld [vmem:[%s4 + $0x1ec] sm:$0xf]
      %v7538 = vld [vmem:[%s4 + $0x1f0] sm:$0xf]
      %v7539 = vld [vmem:[%s4 + $0x1f4] sm:$0xf]
      %v7540 = vld [vmem:[%s4 + $0x1f8] sm:$0xf]
      %v7541 = vld [vmem:[%s4 + $0x1fc] sm:$0xf]
      %v7542 = vld [vmem:[%s4 + $0x200] sm:$0xf]
      %v7543 = vld [vmem:[%s4 + $0x204] sm:$0xf]
      %v7544 = vld [vmem:[%s4 + $0x208] sm:$0xf]
      %v7545 = vld [vmem:[%s4 + $0x20c] sm:$0xf]
      %v7546 = vld [vmem:[%s4 + $0x210] sm:$0xf]
      %v7547 = vld [vmem:[%s4 + $0x214] sm:$0xf]
      %v7548 = vld [vmem:[%s4 + $0x218] sm:$0xf]
      %v7549 = vld [vmem:[%s4 + $0x21c] sm:$0xf]
      %v7550 = vld [vmem:[%s4 + $0x220] sm:$0xf]
      %v7551 = vld [vmem:[%s4 + $0x224] sm:$0xf]
      %v7552 = vld [vmem:[%s4 + $0x228] sm:$0xf]
      %v7553 = vld [vmem:[%s4 + $0x22c] sm:$0xf]
      %v7554 = vld [vmem:[%s4 + $0x230] sm:$0xf]
      %v7555 = vld [vmem:[%s4 + $0x234] sm:$0xf]
      %v7556 = vld [vmem:[%s4 + $0x238] sm:$0xf]
      %v7557 = vld [vmem:[%s4 + $0x23c] sm:$0xf]
      %v7702 = vunpack.c.l.b16 %v7414
      %v7703 = vunpack.c.l.b16 %v7415
      %v7704 = vunpack.c.l.b16 %v7416
      %v7705 = vunpack.c.l.b16 %v7417
      %v7706 = vunpack.c.l.b16 %v7418
      %v7707 = vunpack.c.l.b16 %v7419
      %v7708 = vunpack.c.l.b16 %v7420
      %v7709 = vunpack.c.l.b16 %v7421
      %v7710 = vunpack.c.l.b16 %v7422
      %v7711 = vunpack.c.l.b16 %v7423
      %v7712 = vunpack.c.l.b16 %v7424
      %v7713 = vunpack.c.l.b16 %v7425
      %v7714 = vunpack.c.l.b16 %v7426
      %v7715 = vunpack.c.l.b16 %v7427
      %v7716 = vunpack.c.l.b16 %v7428
      %v7717 = vunpack.c.l.b16 %v7429
      %v7718 = vunpack.c.l.b16 %v7430
      %v7719 = vunpack.c.l.b16 %v7431
      %v7720 = vunpack.c.l.b16 %v7432
      %v7721 = vunpack.c.l.b16 %v7433
      %v7722 = vunpack.c.l.b16 %v7434
      %v7723 = vunpack.c.l.b16 %v7435
      %v7724 = vunpack.c.l.b16 %v7436
      %v7725 = vunpack.c.l.b16 %v7437
      %v7726 = vunpack.c.l.b16 %v7438
      %v7727 = vunpack.c.l.b16 %v7439
      %v7728 = vunpack.c.l.b16 %v7440
      %v7729 = vunpack.c.l.b16 %v7441
      %v7730 = vunpack.c.l.b16 %v7442
      %v7731 = vunpack.c.l.b16 %v7443
      %v7732 = vunpack.c.l.b16 %v7444
      %v7733 = vunpack.c.l.b16 %v7445
      %v7734 = vunpack.c.l.b16 %v7446
      %v7735 = vunpack.c.l.b16 %v7447
      %v7736 = vunpack.c.l.b16 %v7448
      %v7737 = vunpack.c.l.b16 %v7449
      %v7738 = vunpack.c.l.b16 %v7450
      %v7739 = vunpack.c.l.b16 %v7451
      %v7740 = vunpack.c.l.b16 %v7452
      %v7741 = vunpack.c.l.b16 %v7453
      %v7742 = vunpack.c.l.b16 %v7454
      %v7743 = vunpack.c.l.b16 %v7455
      %v7744 = vunpack.c.l.b16 %v7456
      %v7745 = vunpack.c.l.b16 %v7457
      %v7746 = vunpack.c.l.b16 %v7458
      %v7747 = vunpack.c.l.b16 %v7459
      %v7748 = vunpack.c.l.b16 %v7460
      %v7749 = vunpack.c.l.b16 %v7461
      %v7750 = vunpack.c.l.b16 %v7462
      %v7751 = vunpack.c.l.b16 %v7463
      %v7752 = vunpack.c.l.b16 %v7464
      %v7753 = vunpack.c.l.b16 %v7465
      %v7754 = vunpack.c.l.b16 %v7466
      %v7755 = vunpack.c.l.b16 %v7467
      %v7756 = vunpack.c.l.b16 %v7468
      %v7757 = vunpack.c.l.b16 %v7469
      %v7758 = vunpack.c.l.b16 %v7470
      %v7759 = vunpack.c.l.b16 %v7471
      %v7760 = vunpack.c.l.b16 %v7472
      %v7761 = vunpack.c.l.b16 %v7473
      %v7762 = vunpack.c.l.b16 %v7474
      %v7763 = vunpack.c.l.b16 %v7475
      %v7764 = vunpack.c.l.b16 %v7476
      %v7765 = vunpack.c.l.b16 %v7477
      %v7766 = vunpack.c.l.b16 %v7478
      %v7767 = vunpack.c.l.b16 %v7479
      %v7768 = vunpack.c.l.b16 %v7480
      %v7769 = vunpack.c.l.b16 %v7481
      %v7770 = vunpack.c.l.b16 %v7482
      %v7771 = vunpack.c.l.b16 %v7483
      %v7772 = vunpack.c.l.b16 %v7484
      %v7773 = vunpack.c.l.b16 %v7485
      %v7774 = vunpack.c.l.b16 %v7486
      %v7775 = vunpack.c.l.b16 %v7487
      %v7776 = vunpack.c.l.b16 %v7488
      %v7777 = vunpack.c.l.b16 %v7489
      %v7778 = vunpack.c.l.b16 %v7490
      %v7779 = vunpack.c.l.b16 %v7491
      %v7780 = vunpack.c.l.b16 %v7492
      %v7781 = vunpack.c.l.b16 %v7493
      %v7782 = vunpack.c.l.b16 %v7494
      %v7783 = vunpack.c.l.b16 %v7495
      %v7784 = vunpack.c.l.b16 %v7496
      %v7785 = vunpack.c.l.b16 %v7497
      %v7786 = vunpack.c.l.b16 %v7498
      %v7787 = vunpack.c.l.b16 %v7499
      %v7788 = vunpack.c.l.b16 %v7500
      %v7789 = vunpack.c.l.b16 %v7501
      %v7790 = vunpack.c.l.b16 %v7502
      %v7791 = vunpack.c.l.b16 %v7503
      %v7792 = vunpack.c.l.b16 %v7504
      %v7793 = vunpack.c.l.b16 %v7505
      %v7794 = vunpack.c.l.b16 %v7506
      %v7795 = vunpack.c.l.b16 %v7507
      %v7796 = vunpack.c.l.b16 %v7508
      %v7797 = vunpack.c.l.b16 %v7509
      %v7798 = vunpack.c.l.b16 %v7510
      %v7799 = vunpack.c.l.b16 %v7511
      %v7800 = vunpack.c.l.b16 %v7512
      %v7801 = vunpack.c.l.b16 %v7513
      %v7802 = vunpack.c.l.b16 %v7514
      %v7803 = vunpack.c.l.b16 %v7515
      %v7804 = vunpack.c.l.b16 %v7516
      %v7805 = vunpack.c.l.b16 %v7517
      %v7806 = vunpack.c.l.b16 %v7518
      %v7807 = vunpack.c.l.b16 %v7519
      %v7808 = vunpack.c.l.b16 %v7520
      %v7809 = vunpack.c.l.b16 %v7521
      %v7810 = vunpack.c.l.b16 %v7522
      %v7811 = vunpack.c.l.b16 %v7523
      %v7812 = vunpack.c.l.b16 %v7524
      %v7813 = vunpack.c.l.b16 %v7525
      %v7814 = vunpack.c.l.b16 %v7526
      %v7815 = vunpack.c.l.b16 %v7527
      %v7816 = vunpack.c.l.b16 %v7528
      %v7817 = vunpack.c.l.b16 %v7529
      %v7818 = vunpack.c.l.b16 %v7530
      %v7819 = vunpack.c.l.b16 %v7531
      %v7820 = vunpack.c.l.b16 %v7532
      %v7821 = vunpack.c.l.b16 %v7533
      %v7822 = vunpack.c.l.b16 %v7534
      %v7823 = vunpack.c.l.b16 %v7535
      %v7824 = vunpack.c.l.b16 %v7536
      %v7825 = vunpack.c.l.b16 %v7537
      %v7826 = vunpack.c.l.b16 %v7538
      %v7827 = vunpack.c.l.b16 %v7539
      %v7828 = vunpack.c.l.b16 %v7540
      %v7829 = vunpack.c.l.b16 %v7541
      %v7830 = vunpack.c.l.b16 %v7542
      %v7831 = vunpack.c.l.b16 %v7543
      %v7832 = vunpack.c.l.b16 %v7544
      %v7833 = vunpack.c.l.b16 %v7545
      %v7834 = vunpack.c.l.b16 %v7546
      %v7835 = vunpack.c.l.b16 %v7547
      %v7836 = vunpack.c.l.b16 %v7548
      %v7837 = vunpack.c.l.b16 %v7549
      %v7838 = vunpack.c.l.b16 %v7550
      %v7839 = vunpack.c.l.b16 %v7551
      %v7840 = vunpack.c.l.b16 %v7552
      %v7841 = vunpack.c.l.b16 %v7553
      %v7842 = vunpack.c.l.b16 %v7554
      %v7843 = vunpack.c.l.b16 %v7555
      %v7844 = vunpack.c.l.b16 %v7556
      %v7845 = vunpack.c.l.b16 %v7557
      %v7846 = vpack.c.b16 %v7703, %v7702
      %v7847 = vpack.c.b16 %v7705, %v7704
      %v7848 = vpack.c.b16 %v7707, %v7706
      %v7849 = vpack.c.b16 %v7709, %v7708
      %v7850 = vpack.c.b16 %v7711, %v7710
      %v7851 = vpack.c.b16 %v7713, %v7712
      %v7852 = vpack.c.b16 %v7715, %v7714
      %v7853 = vpack.c.b16 %v7717, %v7716
      %v7854 = vpack.c.b16 %v7719, %v7718
      %v7855 = vpack.c.b16 %v7721, %v7720
      %v7856 = vpack.c.b16 %v7723, %v7722
      %v7857 = vpack.c.b16 %v7725, %v7724
      %v7858 = vpack.c.b16 %v7727, %v7726
      %v7859 = vpack.c.b16 %v7729, %v7728
      %v7860 = vpack.c.b16 %v7731, %v7730
      %v7861 = vpack.c.b16 %v7733, %v7732
      %v7862 = vpack.c.b16 %v7735, %v7734
      %v7863 = vpack.c.b16 %v7737, %v7736
      %v7864 = vpack.c.b16 %v7739, %v7738
      %v7865 = vpack.c.b16 %v7741, %v7740
      %v7866 = vpack.c.b16 %v7743, %v7742
      %v7867 = vpack.c.b16 %v7745, %v7744
      %v7868 = vpack.c.b16 %v7747, %v7746
      %v7869 = vpack.c.b16 %v7749, %v7748
      %v7870 = vpack.c.b16 %v7751, %v7750
      %v7871 = vpack.c.b16 %v7753, %v7752
      %v7872 = vpack.c.b16 %v7755, %v7754
      %v7873 = vpack.c.b16 %v7757, %v7756
      %v7874 = vpack.c.b16 %v7759, %v7758
      %v7875 = vpack.c.b16 %v7761, %v7760
      %v7876 = vpack.c.b16 %v7763, %v7762
      %v7877 = vpack.c.b16 %v7765, %v7764
      %v7878 = vpack.c.b16 %v7767, %v7766
      %v7879 = vpack.c.b16 %v7769, %v7768
      %v7880 = vpack.c.b16 %v7771, %v7770
      %v7881 = vpack.c.b16 %v7773, %v7772
      %v7882 = vpack.c.b16 %v7775, %v7774
      %v7883 = vpack.c.b16 %v7777, %v7776
      %v7884 = vpack.c.b16 %v7779, %v7778
      %v7885 = vpack.c.b16 %v7781, %v7780
      %v7886 = vpack.c.b16 %v7783, %v7782
      %v7887 = vpack.c.b16 %v7785, %v7784
      %v7888 = vpack.c.b16 %v7787, %v7786
      %v7889 = vpack.c.b16 %v7789, %v7788
      %v7890 = vpack.c.b16 %v7791, %v7790
      %v7891 = vpack.c.b16 %v7793, %v7792
      %v7892 = vpack.c.b16 %v7795, %v7794
      %v7893 = vpack.c.b16 %v7797, %v7796
      %v7894 = vpack.c.b16 %v7799, %v7798
      %v7895 = vpack.c.b16 %v7801, %v7800
      %v7896 = vpack.c.b16 %v7803, %v7802
      %v7897 = vpack.c.b16 %v7805, %v7804
      %v7898 = vpack.c.b16 %v7807, %v7806
      %v7899 = vpack.c.b16 %v7809, %v7808
      %v7900 = vpack.c.b16 %v7811, %v7810
      %v7901 = vpack.c.b16 %v7813, %v7812
      %v7902 = vpack.c.b16 %v7815, %v7814
      %v7903 = vpack.c.b16 %v7817, %v7816
      %v7904 = vpack.c.b16 %v7819, %v7818
      %v7905 = vpack.c.b16 %v7821, %v7820
      %v7906 = vpack.c.b16 %v7823, %v7822
      %v7907 = vpack.c.b16 %v7825, %v7824
      %v7908 = vpack.c.b16 %v7827, %v7826
      %v7909 = vpack.c.b16 %v7829, %v7828
      %v7910 = vpack.c.b16 %v7831, %v7830
      %v7911 = vpack.c.b16 %v7833, %v7832
      %v7912 = vpack.c.b16 %v7835, %v7834
      %v7913 = vpack.c.b16 %v7837, %v7836
      %v7914 = vpack.c.b16 %v7839, %v7838
      %v7915 = vpack.c.b16 %v7841, %v7840
      %v7916 = vpack.c.b16 %v7843, %v7842
      %v7917 = vpack.c.b16 %v7845, %v7844
      %7990 = vmatpush.bf16.msra.mxu0 %v7853
      %7991 = vmatpush.bf16.msra.mxu0 %v7852
      %7992 = vmatpush.bf16.msra.mxu0 %v7851
      %7993 = vmatpush.bf16.msra.mxu0 %v7850
      %7994 = vmatpush.bf16.msra.mxu0 %v7849
      %7995 = vmatpush.bf16.msra.mxu0 %v7848
      %7996 = vmatpush.bf16.msra.mxu0 %v7847
      %7997 = vmatpush.bf16.msra.mxu0 %v7846
      %7998 = vmatmul.bf16.gmra.mxu0 %v6774
      %v7999 = vpop.f32.mrf.mxu0
      %v8000 = vadd.f32 0.0, %v7999
      %v8001 = vpop.f32.mrf.mxu0
      %v8002 = vadd.f32 0.0, %v8001
      %8003 = vmatmul.bf16.gmra.mxu0 %v6775
      %v8004 = vpop.f32.mrf.mxu0
      %v8005 = vadd.f32 0.0, %v8004
      %v8006 = vpop.f32.mrf.mxu0
      %v8007 = vadd.f32 0.0, %v8006
      %8008 = vmatmul.bf16.gmra.mxu0 %v6776
      %v8009 = vpop.f32.mrf.mxu0
      %v8010 = vadd.f32 0.0, %v8009
      %v8011 = vpop.f32.mrf.mxu0
      %v8012 = vadd.f32 0.0, %v8011
      %8013 = vmatmul.bf16.gmra.mxu0 %v6777
      %v8014 = vpop.f32.mrf.mxu0
      %v8015 = vadd.f32 0.0, %v8014
      %v8016 = vpop.f32.mrf.mxu0
      %v8017 = vadd.f32 0.0, %v8016
      %8018 = vmatmul.bf16.gmra.mxu0 %v6778
      %v8019 = vpop.f32.mrf.mxu0
      %v8020 = vadd.f32 0.0, %v8019
      %v8021 = vpop.f32.mrf.mxu0
      %v8022 = vadd.f32 0.0, %v8021
      %8023 = vmatmul.bf16.gmra.mxu0 %v6779
      %v8024 = vpop.f32.mrf.mxu0
      %v8025 = vadd.f32 0.0, %v8024
      %v8026 = vpop.f32.mrf.mxu0
      %v8027 = vadd.f32 0.0, %v8026
      %8028 = vmatmul.bf16.gmra.mxu0 %v6780
      %v8029 = vpop.f32.mrf.mxu0
      %v8030 = vadd.f32 0.0, %v8029
      %v8031 = vpop.f32.mrf.mxu0
      %v8032 = vadd.f32 0.0, %v8031
      %8033 = vmatmul.bf16.gmra.mxu0 %v6781
      %v8034 = vpop.f32.mrf.mxu0
      %v8035 = vadd.f32 0.0, %v8034
      %v8036 = vpop.f32.mrf.mxu0
      %v8037 = vadd.f32 0.0, %v8036
      %8038 = vmatmul.bf16.gmra.mxu0 %v6782
      %v8039 = vpop.f32.mrf.mxu0
      %v8040 = vadd.f32 0.0, %v8039
      %v8041 = vpop.f32.mrf.mxu0
      %v8042 = vadd.f32 0.0, %v8041
      %8043 = vmatmul.bf16.gmra.mxu0 %v6783
      %v8044 = vpop.f32.mrf.mxu0
      %v8045 = vadd.f32 0.0, %v8044
      %v8046 = vpop.f32.mrf.mxu0
      %v8047 = vadd.f32 0.0, %v8046
      %8048 = vmatmul.bf16.gmra.mxu0 %v6784
      %v8049 = vpop.f32.mrf.mxu0
      %v8050 = vadd.f32 0.0, %v8049
      %v8051 = vpop.f32.mrf.mxu0
      %v8052 = vadd.f32 0.0, %v8051
      %8053 = vmatmul.bf16.gmra.mxu0 %v6785
      %v8054 = vpop.f32.mrf.mxu0
      %v8055 = vadd.f32 0.0, %v8054
      %v8056 = vpop.f32.mrf.mxu0
      %v8057 = vadd.f32 0.0, %v8056
      %8058 = vmatmul.bf16.gmra.mxu0 %v6786
      %v8059 = vpop.f32.mrf.mxu0
      %v8060 = vadd.f32 0.0, %v8059
      %v8061 = vpop.f32.mrf.mxu0
      %v8062 = vadd.f32 0.0, %v8061
      %8063 = vmatmul.bf16.gmra.mxu0 %v6787
      %v8064 = vpop.f32.mrf.mxu0
      %v8065 = vadd.f32 0.0, %v8064
      %v8066 = vpop.f32.mrf.mxu0
      %v8067 = vadd.f32 0.0, %v8066
      %8068 = vmatmul.bf16.gmra.mxu0 %v6788
      %v8069 = vpop.f32.mrf.mxu0
      %v8070 = vadd.f32 0.0, %v8069
      %v8071 = vpop.f32.mrf.mxu0
      %v8072 = vadd.f32 0.0, %v8071
      %8073 = vmatmul.bf16.gmra.mxu0 %v6789
      %v8074 = vpop.f32.mrf.mxu0
      %v8075 = vadd.f32 0.0, %v8074
      %v8076 = vpop.f32.mrf.mxu0
      %v8077 = vadd.f32 0.0, %v8076
      %8078 = vdwg.mxu0
      %8079 = vmatpush.bf16.msra.mxu0 %v7861
      %8080 = vmatpush.bf16.msra.mxu0 %v7860
      %8081 = vmatpush.bf16.msra.mxu0 %v7859
      %8082 = vmatpush.bf16.msra.mxu0 %v7858
      %8083 = vmatpush.bf16.msra.mxu0 %v7857
      %8084 = vmatpush.bf16.msra.mxu0 %v7856
      %8085 = vmatpush.bf16.msra.mxu0 %v7855
      %8086 = vmatpush.bf16.msra.mxu0 %v7854
      %8087 = vmatmul.bf16.gmra.mxu0 %v6870
      %v8088 = vpop.f32.mrf.mxu0
      %v8089 = vadd.f32 %v8000, %v8088
      %v8090 = vpop.f32.mrf.mxu0
      %v8091 = vadd.f32 %v8002, %v8090
      %8092 = vmatmul.bf16.gmra.mxu0 %v6871
      %v8093 = vpop.f32.mrf.mxu0
      %v8094 = vadd.f32 %v8005, %v8093
      %v8095 = vpop.f32.mrf.mxu0
      %v8096 = vadd.f32 %v8007, %v8095
      %8097 = vmatmul.bf16.gmra.mxu0 %v6872
      %v8098 = vpop.f32.mrf.mxu0
      %v8099 = vadd.f32 %v8010, %v8098
      %v8100 = vpop.f32.mrf.mxu0
      %v8101 = vadd.f32 %v8012, %v8100
      %8102 = vmatmul.bf16.gmra.mxu0 %v6873
      %v8103 = vpop.f32.mrf.mxu0
      %v8104 = vadd.f32 %v8015, %v8103
      %v8105 = vpop.f32.mrf.mxu0
      %v8106 = vadd.f32 %v8017, %v8105
      %8107 = vmatmul.bf16.gmra.mxu0 %v6874
      %v8108 = vpop.f32.mrf.mxu0
      %v8109 = vadd.f32 %v8020, %v8108
      %v8110 = vpop.f32.mrf.mxu0
      %v8111 = vadd.f32 %v8022, %v8110
      %8112 = vmatmul.bf16.gmra.mxu0 %v6875
      %v8113 = vpop.f32.mrf.mxu0
      %v8114 = vadd.f32 %v8025, %v8113
      %v8115 = vpop.f32.mrf.mxu0
      %v8116 = vadd.f32 %v8027, %v8115
      %8117 = vmatmul.bf16.gmra.mxu0 %v6876
      %v8118 = vpop.f32.mrf.mxu0
      %v8119 = vadd.f32 %v8030, %v8118
      %v8120 = vpop.f32.mrf.mxu0
      %v8121 = vadd.f32 %v8032, %v8120
      %8122 = vmatmul.bf16.gmra.mxu0 %v6877
      %v8123 = vpop.f32.mrf.mxu0
      %v8124 = vadd.f32 %v8035, %v8123
      %v8125 = vpop.f32.mrf.mxu0
      %v8126 = vadd.f32 %v8037, %v8125
      %8127 = vmatmul.bf16.gmra.mxu0 %v6878
      %v8128 = vpop.f32.mrf.mxu0
      %v8129 = vadd.f32 %v8040, %v8128
      %v8130 = vpop.f32.mrf.mxu0
      %v8131 = vadd.f32 %v8042, %v8130
      %8132 = vmatmul.bf16.gmra.mxu0 %v6879
      %v8133 = vpop.f32.mrf.mxu0
      %v8134 = vadd.f32 %v8045, %v8133
      %v8135 = vpop.f32.mrf.mxu0
      %v8136 = vadd.f32 %v8047, %v8135
      %8137 = vmatmul.bf16.gmra.mxu0 %v6880
      %v8138 = vpop.f32.mrf.mxu0
      %v8139 = vadd.f32 %v8050, %v8138
      %v8140 = vpop.f32.mrf.mxu0
      %v8141 = vadd.f32 %v8052, %v8140
      %8142 = vmatmul.bf16.gmra.mxu0 %v6881
      %v8143 = vpop.f32.mrf.mxu0
      %v8144 = vadd.f32 %v8055, %v8143
      %v8145 = vpop.f32.mrf.mxu0
      %v8146 = vadd.f32 %v8057, %v8145
      %8147 = vmatmul.bf16.gmra.mxu0 %v6882
      %v8148 = vpop.f32.mrf.mxu0
      %v8149 = vadd.f32 %v8060, %v8148
      %v8150 = vpop.f32.mrf.mxu0
      %v8151 = vadd.f32 %v8062, %v8150
      %8152 = vmatmul.bf16.gmra.mxu0 %v6883
      %v8153 = vpop.f32.mrf.mxu0
      %v8154 = vadd.f32 %v8065, %v8153
      %v8155 = vpop.f32.mrf.mxu0
      %v8156 = vadd.f32 %v8067, %v8155
      %8157 = vmatmul.bf16.gmra.mxu0 %v6884
      %v8158 = vpop.f32.mrf.mxu0
      %v8159 = vadd.f32 %v8070, %v8158
      %v8160 = vpop.f32.mrf.mxu0
      %v8161 = vadd.f32 %v8072, %v8160
      %8162 = vmatmul.bf16.gmra.mxu0 %v6885
      %v8163 = vpop.f32.mrf.mxu0
      %v8164 = vadd.f32 %v8075, %v8163
      %v8165 = vpop.f32.mrf.mxu0
      %v8166 = vadd.f32 %v8077, %v8165
      %8167 = vdwg.mxu0
      %8168 = vmatpush.bf16.msra.mxu0 %v7869
      %8169 = vmatpush.bf16.msra.mxu0 %v7868
      %8170 = vmatpush.bf16.msra.mxu0 %v7867
      %8171 = vmatpush.bf16.msra.mxu0 %v7866
      %8172 = vmatpush.bf16.msra.mxu0 %v7865
      %8173 = vmatpush.bf16.msra.mxu0 %v7864
      %8174 = vmatpush.bf16.msra.mxu0 %v7863
      %8175 = vmatpush.bf16.msra.mxu0 %v7862
      %8176 = vmatmul.bf16.gmra.mxu0 %v6934
      %v8177 = vpop.f32.mrf.mxu0
      %v8178 = vadd.f32 %v8089, %v8177
      %v8179 = vpop.f32.mrf.mxu0
      %v8180 = vadd.f32 %v8091, %v8179
      %8181 = vmatmul.bf16.gmra.mxu0 %v6935
      %v8182 = vpop.f32.mrf.mxu0
      %v8183 = vadd.f32 %v8094, %v8182
      %v8184 = vpop.f32.mrf.mxu0
      %v8185 = vadd.f32 %v8096, %v8184
      %8186 = vmatmul.bf16.gmra.mxu0 %v6936
      %v8187 = vpop.f32.mrf.mxu0
      %v8188 = vadd.f32 %v8099, %v8187
      %v8189 = vpop.f32.mrf.mxu0
      %v8190 = vadd.f32 %v8101, %v8189
      %8191 = vmatmul.bf16.gmra.mxu0 %v6937
      %v8192 = vpop.f32.mrf.mxu0
      %v8193 = vadd.f32 %v8104, %v8192
      %v8194 = vpop.f32.mrf.mxu0
      %v8195 = vadd.f32 %v8106, %v8194
      %8196 = vmatmul.bf16.gmra.mxu0 %v6938
      %v8197 = vpop.f32.mrf.mxu0
      %v8198 = vadd.f32 %v8109, %v8197
      %v8199 = vpop.f32.mrf.mxu0
      %v8200 = vadd.f32 %v8111, %v8199
      %8201 = vmatmul.bf16.gmra.mxu0 %v6939
      %v8202 = vpop.f32.mrf.mxu0
      %v8203 = vadd.f32 %v8114, %v8202
      %v8204 = vpop.f32.mrf.mxu0
      %v8205 = vadd.f32 %v8116, %v8204
      %8206 = vmatmul.bf16.gmra.mxu0 %v6940
      %v8207 = vpop.f32.mrf.mxu0
      %v8208 = vadd.f32 %v8119, %v8207
      %v8209 = vpop.f32.mrf.mxu0
      %v8210 = vadd.f32 %v8121, %v8209
      %8211 = vmatmul.bf16.gmra.mxu0 %v6941
      %v8212 = vpop.f32.mrf.mxu0
      %v8213 = vadd.f32 %v8124, %v8212
      %v8214 = vpop.f32.mrf.mxu0
      %v8215 = vadd.f32 %v8126, %v8214
      %8216 = vmatmul.bf16.gmra.mxu0 %v6942
      %v8217 = vpop.f32.mrf.mxu0
      %v8218 = vadd.f32 %v8129, %v8217
      %v8219 = vpop.f32.mrf.mxu0
      %v8220 = vadd.f32 %v8131, %v8219
      %8221 = vmatmul.bf16.gmra.mxu0 %v6943
      %v8222 = vpop.f32.mrf.mxu0
      %v8223 = vadd.f32 %v8134, %v8222
      %v8224 = vpop.f32.mrf.mxu0
      %v8225 = vadd.f32 %v8136, %v8224
      %8226 = vmatmul.bf16.gmra.mxu0 %v6944
      %v8227 = vpop.f32.mrf.mxu0
      %v8228 = vadd.f32 %v8139, %v8227
      %v8229 = vpop.f32.mrf.mxu0
      %v8230 = vadd.f32 %v8141, %v8229
      %8231 = vmatmul.bf16.gmra.mxu0 %v6945
      %v8232 = vpop.f32.mrf.mxu0
      %v8233 = vadd.f32 %v8144, %v8232
      %v8234 = vpop.f32.mrf.mxu0
      %v8235 = vadd.f32 %v8146, %v8234
      %8236 = vmatmul.bf16.gmra.mxu0 %v6946
      %v8237 = vpop.f32.mrf.mxu0
      %v8238 = vadd.f32 %v8149, %v8237
      %v8239 = vpop.f32.mrf.mxu0
      %v8240 = vadd.f32 %v8151, %v8239
      %8241 = vmatmul.bf16.gmra.mxu0 %v6947
      %v8242 = vpop.f32.mrf.mxu0
      %v8243 = vadd.f32 %v8154, %v8242
      %v8244 = vpop.f32.mrf.mxu0
      %v8245 = vadd.f32 %v8156, %v8244
      %8246 = vmatmul.bf16.gmra.mxu0 %v6948
      %v8247 = vpop.f32.mrf.mxu0
      %v8248 = vadd.f32 %v8159, %v8247
      %v8249 = vpop.f32.mrf.mxu0
      %v8250 = vadd.f32 %v8161, %v8249
      %8251 = vmatmul.bf16.gmra.mxu0 %v6949
      %v8252 = vpop.f32.mrf.mxu0
      %v8253 = vadd.f32 %v8164, %v8252
      %v8254 = vpop.f32.mrf.mxu0
      %v8255 = vadd.f32 %v8166, %v8254
      %8256 = vdwg.mxu0
      %8257 = vmatpush.bf16.msra.mxu0 %v7877
      %8258 = vmatpush.bf16.msra.mxu0 %v7876
      %8259 = vmatpush.bf16.msra.mxu0 %v7875
      %8260 = vmatpush.bf16.msra.mxu0 %v7874
      %8261 = vmatpush.bf16.msra.mxu0 %v7873
      %8262 = vmatpush.bf16.msra.mxu0 %v7872
      %8263 = vmatpush.bf16.msra.mxu0 %v7871
      %8264 = vmatpush.bf16.msra.mxu0 %v7870
      %8265 = vmatmul.bf16.gmra.mxu0 %v6998
      %v8266 = vpop.f32.mrf.mxu0
      %v8267 = vadd.f32 %v8178, %v8266
      %v8268 = vpop.f32.mrf.mxu0
      %v8269 = vadd.f32 %v8180, %v8268
      %8270 = vmatmul.bf16.gmra.mxu0 %v6999
      %v8271 = vpop.f32.mrf.mxu0
      %v8272 = vadd.f32 %v8183, %v8271
      %v8273 = vpop.f32.mrf.mxu0
      %v8274 = vadd.f32 %v8185, %v8273
      %8275 = vmatmul.bf16.gmra.mxu0 %v7000
      %v8276 = vpop.f32.mrf.mxu0
      %v8277 = vadd.f32 %v8188, %v8276
      %v8278 = vpop.f32.mrf.mxu0
      %v8279 = vadd.f32 %v8190, %v8278
      %8280 = vmatmul.bf16.gmra.mxu0 %v7001
      %v8281 = vpop.f32.mrf.mxu0
      %v8282 = vadd.f32 %v8193, %v8281
      %v8283 = vpop.f32.mrf.mxu0
      %v8284 = vadd.f32 %v8195, %v8283
      %8285 = vmatmul.bf16.gmra.mxu0 %v7002
      %v8286 = vpop.f32.mrf.mxu0
      %v8287 = vadd.f32 %v8198, %v8286
      %v8288 = vpop.f32.mrf.mxu0
      %v8289 = vadd.f32 %v8200, %v8288
      %8290 = vmatmul.bf16.gmra.mxu0 %v7003
      %v8291 = vpop.f32.mrf.mxu0
      %v8292 = vadd.f32 %v8203, %v8291
      %v8293 = vpop.f32.mrf.mxu0
      %v8294 = vadd.f32 %v8205, %v8293
      %8295 = vmatmul.bf16.gmra.mxu0 %v7004
      %v8296 = vpop.f32.mrf.mxu0
      %v8297 = vadd.f32 %v8208, %v8296
      %v8298 = vpop.f32.mrf.mxu0
      %v8299 = vadd.f32 %v8210, %v8298
      %8300 = vmatmul.bf16.gmra.mxu0 %v7005
      %v8301 = vpop.f32.mrf.mxu0
      %v8302 = vadd.f32 %v8213, %v8301
      %v8303 = vpop.f32.mrf.mxu0
      %v8304 = vadd.f32 %v8215, %v8303
      %8305 = vmatmul.bf16.gmra.mxu0 %v7006
      %v8306 = vpop.f32.mrf.mxu0
      %v8307 = vadd.f32 %v8218, %v8306
      %v8308 = vpop.f32.mrf.mxu0
      %v8309 = vadd.f32 %v8220, %v8308
      %8310 = vmatmul.bf16.gmra.mxu0 %v7007
      %v8311 = vpop.f32.mrf.mxu0
      %v8312 = vadd.f32 %v8223, %v8311
      %v8313 = vpop.f32.mrf.mxu0
      %v8314 = vadd.f32 %v8225, %v8313
      %8315 = vmatmul.bf16.gmra.mxu0 %v7008
      %v8316 = vpop.f32.mrf.mxu0
      %v8317 = vadd.f32 %v8228, %v8316
      %v8318 = vpop.f32.mrf.mxu0
      %v8319 = vadd.f32 %v8230, %v8318
      %8320 = vmatmul.bf16.gmra.mxu0 %v7009
      %v8321 = vpop.f32.mrf.mxu0
      %v8322 = vadd.f32 %v8233, %v8321
      %v8323 = vpop.f32.mrf.mxu0
      %v8324 = vadd.f32 %v8235, %v8323
      %8325 = vmatmul.bf16.gmra.mxu0 %v7010
      %v8326 = vpop.f32.mrf.mxu0
      %v8327 = vadd.f32 %v8238, %v8326
      %v8328 = vpop.f32.mrf.mxu0
      %v8329 = vadd.f32 %v8240, %v8328
      %8330 = vmatmul.bf16.gmra.mxu0 %v7011
      %v8331 = vpop.f32.mrf.mxu0
      %v8332 = vadd.f32 %v8243, %v8331
      %v8333 = vpop.f32.mrf.mxu0
      %v8334 = vadd.f32 %v8245, %v8333
      %8335 = vmatmul.bf16.gmra.mxu0 %v7012
      %v8336 = vpop.f32.mrf.mxu0
      %v8337 = vadd.f32 %v8248, %v8336
      %v8338 = vpop.f32.mrf.mxu0
      %v8339 = vadd.f32 %v8250, %v8338
      %8340 = vmatmul.bf16.gmra.mxu0 %v7013
      %v8341 = vpop.f32.mrf.mxu0
      %v8342 = vadd.f32 %v8253, %v8341
      %v8343 = vpop.f32.mrf.mxu0
      %v8344 = vadd.f32 %v8255, %v8343
      %8345 = vdwg.mxu0
      %8346 = vmatpush.bf16.msra.mxu0 %v7885
      %8347 = vmatpush.bf16.msra.mxu0 %v7884
      %8348 = vmatpush.bf16.msra.mxu0 %v7883
      %8349 = vmatpush.bf16.msra.mxu0 %v7882
      %8350 = vmatpush.bf16.msra.mxu0 %v7881
      %8351 = vmatpush.bf16.msra.mxu0 %v7880
      %8352 = vmatpush.bf16.msra.mxu0 %v7879
      %8353 = vmatpush.bf16.msra.mxu0 %v7878
      %8354 = vmatmul.bf16.gmra.mxu0 %v7094
      %v8355 = vpop.f32.mrf.mxu0
      %v8356 = vadd.f32 %v8267, %v8355
      %v8357 = vpop.f32.mrf.mxu0
      %v8358 = vadd.f32 %v8269, %v8357
      %8359 = vmatmul.bf16.gmra.mxu0 %v7095
      %v8360 = vpop.f32.mrf.mxu0
      %v8361 = vadd.f32 %v8272, %v8360
      %v8362 = vpop.f32.mrf.mxu0
      %v8363 = vadd.f32 %v8274, %v8362
      %8364 = vmatmul.bf16.gmra.mxu0 %v7096
      %v8365 = vpop.f32.mrf.mxu0
      %v8366 = vadd.f32 %v8277, %v8365
      %v8367 = vpop.f32.mrf.mxu0
      %v8368 = vadd.f32 %v8279, %v8367
      %8369 = vmatmul.bf16.gmra.mxu0 %v7097
      %v8370 = vpop.f32.mrf.mxu0
      %v8371 = vadd.f32 %v8282, %v8370
      %v8372 = vpop.f32.mrf.mxu0
      %v8373 = vadd.f32 %v8284, %v8372
      %8374 = vmatmul.bf16.gmra.mxu0 %v7098
      %v8375 = vpop.f32.mrf.mxu0
      %v8376 = vadd.f32 %v8287, %v8375
      %v8377 = vpop.f32.mrf.mxu0
      %v8378 = vadd.f32 %v8289, %v8377
      %8379 = vmatmul.bf16.gmra.mxu0 %v7099
      %v8380 = vpop.f32.mrf.mxu0
      %v8381 = vadd.f32 %v8292, %v8380
      %v8382 = vpop.f32.mrf.mxu0
      %v8383 = vadd.f32 %v8294, %v8382
      %8384 = vmatmul.bf16.gmra.mxu0 %v7100
      %v8385 = vpop.f32.mrf.mxu0
      %v8386 = vadd.f32 %v8297, %v8385
      %v8387 = vpop.f32.mrf.mxu0
      %v8388 = vadd.f32 %v8299, %v8387
      %8389 = vmatmul.bf16.gmra.mxu0 %v7101
      %v8390 = vpop.f32.mrf.mxu0
      %v8391 = vadd.f32 %v8302, %v8390
      %v8392 = vpop.f32.mrf.mxu0
      %v8393 = vadd.f32 %v8304, %v8392
      %8394 = vmatmul.bf16.gmra.mxu0 %v7102
      %v8395 = vpop.f32.mrf.mxu0
      %v8396 = vadd.f32 %v8307, %v8395
      %v8397 = vpop.f32.mrf.mxu0
      %v8398 = vadd.f32 %v8309, %v8397
      %8399 = vmatmul.bf16.gmra.mxu0 %v7103
      %v8400 = vpop.f32.mrf.mxu0
      %v8401 = vadd.f32 %v8312, %v8400
      %v8402 = vpop.f32.mrf.mxu0
      %v8403 = vadd.f32 %v8314, %v8402
      %8404 = vmatmul.bf16.gmra.mxu0 %v7104
      %v8405 = vpop.f32.mrf.mxu0
      %v8406 = vadd.f32 %v8317, %v8405
      %v8407 = vpop.f32.mrf.mxu0
      %v8408 = vadd.f32 %v8319, %v8407
      %8409 = vmatmul.bf16.gmra.mxu0 %v7105
      %v8410 = vpop.f32.mrf.mxu0
      %v8411 = vadd.f32 %v8322, %v8410
      %v8412 = vpop.f32.mrf.mxu0
      %v8413 = vadd.f32 %v8324, %v8412
      %8414 = vmatmul.bf16.gmra.mxu0 %v7106
      %v8415 = vpop.f32.mrf.mxu0
      %v8416 = vadd.f32 %v8327, %v8415
      %v8417 = vpop.f32.mrf.mxu0
      %v8418 = vadd.f32 %v8329, %v8417
      %8419 = vmatmul.bf16.gmra.mxu0 %v7107
      %v8420 = vpop.f32.mrf.mxu0
      %v8421 = vadd.f32 %v8332, %v8420
      %v8422 = vpop.f32.mrf.mxu0
      %v8423 = vadd.f32 %v8334, %v8422
      %8424 = vmatmul.bf16.gmra.mxu0 %v7108
      %v8425 = vpop.f32.mrf.mxu0
      %v8426 = vadd.f32 %v8337, %v8425
      %v8427 = vpop.f32.mrf.mxu0
      %v8428 = vadd.f32 %v8339, %v8427
      %8429 = vmatmul.bf16.gmra.mxu0 %v7109
      %v8430 = vpop.f32.mrf.mxu0
      %v8431 = vadd.f32 %v8342, %v8430
      %v8432 = vpop.f32.mrf.mxu0
      %v8433 = vadd.f32 %v8344, %v8432
      %8434 = vdwg.mxu0
      %8435 = vmatpush.bf16.msra.mxu0 %v7893
      %8436 = vmatpush.bf16.msra.mxu0 %v7892
      %8437 = vmatpush.bf16.msra.mxu0 %v7891
      %8438 = vmatpush.bf16.msra.mxu0 %v7890
      %8439 = vmatpush.bf16.msra.mxu0 %v7889
      %8440 = vmatpush.bf16.msra.mxu0 %v7888
      %8441 = vmatpush.bf16.msra.mxu0 %v7887
      %8442 = vmatpush.bf16.msra.mxu0 %v7886
      %8443 = vmatmul.bf16.gmra.mxu0 %v7158
      %v8444 = vpop.f32.mrf.mxu0
      %v8445 = vadd.f32 %v8356, %v8444
      %v8446 = vpop.f32.mrf.mxu0
      %v8447 = vadd.f32 %v8358, %v8446
      %8448 = vmatmul.bf16.gmra.mxu0 %v7159
      %v8449 = vpop.f32.mrf.mxu0
      %v8450 = vadd.f32 %v8361, %v8449
      %v8451 = vpop.f32.mrf.mxu0
      %v8452 = vadd.f32 %v8363, %v8451
      %8453 = vmatmul.bf16.gmra.mxu0 %v7160
      %v8454 = vpop.f32.mrf.mxu0
      %v8455 = vadd.f32 %v8366, %v8454
      %v8456 = vpop.f32.mrf.mxu0
      %v8457 = vadd.f32 %v8368, %v8456
      %8458 = vmatmul.bf16.gmra.mxu0 %v7161
      %v8459 = vpop.f32.mrf.mxu0
      %v8460 = vadd.f32 %v8371, %v8459
      %v8461 = vpop.f32.mrf.mxu0
      %v8462 = vadd.f32 %v8373, %v8461
      %8463 = vmatmul.bf16.gmra.mxu0 %v7162
      %v8464 = vpop.f32.mrf.mxu0
      %v8465 = vadd.f32 %v8376, %v8464
      %v8466 = vpop.f32.mrf.mxu0
      %v8467 = vadd.f32 %v8378, %v8466
      %8468 = vmatmul.bf16.gmra.mxu0 %v7163
      %v8469 = vpop.f32.mrf.mxu0
      %v8470 = vadd.f32 %v8381, %v8469
      %v8471 = vpop.f32.mrf.mxu0
      %v8472 = vadd.f32 %v8383, %v8471
      %8473 = vmatmul.bf16.gmra.mxu0 %v7164
      %v8474 = vpop.f32.mrf.mxu0
      %v8475 = vadd.f32 %v8386, %v8474
      %v8476 = vpop.f32.mrf.mxu0
      %v8477 = vadd.f32 %v8388, %v8476
      %8478 = vmatmul.bf16.gmra.mxu0 %v7165
      %v8479 = vpop.f32.mrf.mxu0
      %v8480 = vadd.f32 %v8391, %v8479
      %v8481 = vpop.f32.mrf.mxu0
      %v8482 = vadd.f32 %v8393, %v8481
      %8483 = vmatmul.bf16.gmra.mxu0 %v7166
      %v8484 = vpop.f32.mrf.mxu0
      %v8485 = vadd.f32 %v8396, %v8484
      %v8486 = vpop.f32.mrf.mxu0
      %v8487 = vadd.f32 %v8398, %v8486
      %8488 = vmatmul.bf16.gmra.mxu0 %v7167
      %v8489 = vpop.f32.mrf.mxu0
      %v8490 = vadd.f32 %v8401, %v8489
      %v8491 = vpop.f32.mrf.mxu0
      %v8492 = vadd.f32 %v8403, %v8491
      %8493 = vmatmul.bf16.gmra.mxu0 %v7168
      %v8494 = vpop.f32.mrf.mxu0
      %v8495 = vadd.f32 %v8406, %v8494
      %v8496 = vpop.f32.mrf.mxu0
      %v8497 = vadd.f32 %v8408, %v8496
      %8498 = vmatmul.bf16.gmra.mxu0 %v7169
      %v8499 = vpop.f32.mrf.mxu0
      %v8500 = vadd.f32 %v8411, %v8499
      %v8501 = vpop.f32.mrf.mxu0
      %v8502 = vadd.f32 %v8413, %v8501
      %8503 = vmatmul.bf16.gmra.mxu0 %v7170
      %v8504 = vpop.f32.mrf.mxu0
      %v8505 = vadd.f32 %v8416, %v8504
      %v8506 = vpop.f32.mrf.mxu0
      %v8507 = vadd.f32 %v8418, %v8506
      %8508 = vmatmul.bf16.gmra.mxu0 %v7171
      %v8509 = vpop.f32.mrf.mxu0
      %v8510 = vadd.f32 %v8421, %v8509
      %v8511 = vpop.f32.mrf.mxu0
      %v8512 = vadd.f32 %v8423, %v8511
      %8513 = vmatmul.bf16.gmra.mxu0 %v7172
      %v8514 = vpop.f32.mrf.mxu0
      %v8515 = vadd.f32 %v8426, %v8514
      %v8516 = vpop.f32.mrf.mxu0
      %v8517 = vadd.f32 %v8428, %v8516
      %8518 = vmatmul.bf16.gmra.mxu0 %v7173
      %v8519 = vpop.f32.mrf.mxu0
      %v8520 = vadd.f32 %v8431, %v8519
      %v8521 = vpop.f32.mrf.mxu0
      %v8522 = vadd.f32 %v8433, %v8521
      %8523 = vdwg.mxu0
      %8524 = vmatpush.bf16.msra.mxu0 %v7901
      %8525 = vmatpush.bf16.msra.mxu0 %v7900
      %8526 = vmatpush.bf16.msra.mxu0 %v7899
      %8527 = vmatpush.bf16.msra.mxu0 %v7898
      %8528 = vmatpush.bf16.msra.mxu0 %v7897
      %8529 = vmatpush.bf16.msra.mxu0 %v7896
      %8530 = vmatpush.bf16.msra.mxu0 %v7895
      %8531 = vmatpush.bf16.msra.mxu0 %v7894
      %8532 = vmatmul.bf16.gmra.mxu0 %v7222
      %v8533 = vpop.f32.mrf.mxu0
      %v8534 = vadd.f32 %v8445, %v8533
      %v8535 = vpop.f32.mrf.mxu0
      %v8536 = vadd.f32 %v8447, %v8535
      %8537 = vmatmul.bf16.gmra.mxu0 %v7223
      %v8538 = vpop.f32.mrf.mxu0
      %v8539 = vadd.f32 %v8450, %v8538
      %v8540 = vpop.f32.mrf.mxu0
      %v8541 = vadd.f32 %v8452, %v8540
      %8542 = vmatmul.bf16.gmra.mxu0 %v7224
      %v8543 = vpop.f32.mrf.mxu0
      %v8544 = vadd.f32 %v8455, %v8543
      %v8545 = vpop.f32.mrf.mxu0
      %v8546 = vadd.f32 %v8457, %v8545
      %8547 = vmatmul.bf16.gmra.mxu0 %v7225
      %v8548 = vpop.f32.mrf.mxu0
      %v8549 = vadd.f32 %v8460, %v8548
      %v8550 = vpop.f32.mrf.mxu0
      %v8551 = vadd.f32 %v8462, %v8550
      %8552 = vmatmul.bf16.gmra.mxu0 %v7226
      %v8553 = vpop.f32.mrf.mxu0
      %v8554 = vadd.f32 %v8465, %v8553
      %v8555 = vpop.f32.mrf.mxu0
      %v8556 = vadd.f32 %v8467, %v8555
      %8557 = vmatmul.bf16.gmra.mxu0 %v7227
      %v8558 = vpop.f32.mrf.mxu0
      %v8559 = vadd.f32 %v8470, %v8558
      %v8560 = vpop.f32.mrf.mxu0
      %v8561 = vadd.f32 %v8472, %v8560
      %8562 = vmatmul.bf16.gmra.mxu0 %v7228
      %v8563 = vpop.f32.mrf.mxu0
      %v8564 = vadd.f32 %v8475, %v8563
      %v8565 = vpop.f32.mrf.mxu0
      %v8566 = vadd.f32 %v8477, %v8565
      %8567 = vmatmul.bf16.gmra.mxu0 %v7229
      %v8568 = vpop.f32.mrf.mxu0
      %v8569 = vadd.f32 %v8480, %v8568
      %v8570 = vpop.f32.mrf.mxu0
      %v8571 = vadd.f32 %v8482, %v8570
      %8572 = vmatmul.bf16.gmra.mxu0 %v7230
      %v8573 = vpop.f32.mrf.mxu0
      %v8574 = vadd.f32 %v8485, %v8573
      %v8575 = vpop.f32.mrf.mxu0
      %v8576 = vadd.f32 %v8487, %v8575
      %8577 = vmatmul.bf16.gmra.mxu0 %v7231
      %v8578 = vpop.f32.mrf.mxu0
      %v8579 = vadd.f32 %v8490, %v8578
      %v8580 = vpop.f32.mrf.mxu0
      %v8581 = vadd.f32 %v8492, %v8580
      %8582 = vmatmul.bf16.gmra.mxu0 %v7232
      %v8583 = vpop.f32.mrf.mxu0
      %v8584 = vadd.f32 %v8495, %v8583
      %v8585 = vpop.f32.mrf.mxu0
      %v8586 = vadd.f32 %v8497, %v8585
      %8587 = vmatmul.bf16.gmra.mxu0 %v7233
      %v8588 = vpop.f32.mrf.mxu0
      %v8589 = vadd.f32 %v8500, %v8588
      %v8590 = vpop.f32.mrf.mxu0
      %v8591 = vadd.f32 %v8502, %v8590
      %8592 = vmatmul.bf16.gmra.mxu0 %v7234
      %v8593 = vpop.f32.mrf.mxu0
      %v8594 = vadd.f32 %v8505, %v8593
      %v8595 = vpop.f32.mrf.mxu0
      %v8596 = vadd.f32 %v8507, %v8595
      %8597 = vmatmul.bf16.gmra.mxu0 %v7235
      %v8598 = vpop.f32.mrf.mxu0
      %v8599 = vadd.f32 %v8510, %v8598
      %v8600 = vpop.f32.mrf.mxu0
      %v8601 = vadd.f32 %v8512, %v8600
      %8602 = vmatmul.bf16.gmra.mxu0 %v7236
      %v8603 = vpop.f32.mrf.mxu0
      %v8604 = vadd.f32 %v8515, %v8603
      %v8605 = vpop.f32.mrf.mxu0
      %v8606 = vadd.f32 %v8517, %v8605
      %8607 = vmatmul.bf16.gmra.mxu0 %v7237
      %v8608 = vpop.f32.mrf.mxu0
      %v8609 = vadd.f32 %v8520, %v8608
      %v8610 = vpop.f32.mrf.mxu0
      %v8611 = vadd.f32 %v8522, %v8610
      %8612 = vdwg.mxu0
      %8613 = vmatpush.bf16.msra.mxu0 %v7909
      %8614 = vmatpush.bf16.msra.mxu0 %v7908
      %8615 = vmatpush.bf16.msra.mxu0 %v7907
      %8616 = vmatpush.bf16.msra.mxu0 %v7906
      %8617 = vmatpush.bf16.msra.mxu0 %v7905
      %8618 = vmatpush.bf16.msra.mxu0 %v7904
      %8619 = vmatpush.bf16.msra.mxu0 %v7903
      %8620 = vmatpush.bf16.msra.mxu0 %v7902
      %8621 = vmatmul.bf16.gmra.mxu0 %v7318
      %v8622 = vpop.f32.mrf.mxu0
      %v8623 = vadd.f32 %v8534, %v8622
      %v8624 = vpop.f32.mrf.mxu0
      %v8625 = vadd.f32 %v8536, %v8624
      %8626 = vmatmul.bf16.gmra.mxu0 %v7319
      %v8627 = vpop.f32.mrf.mxu0
      %v8628 = vadd.f32 %v8539, %v8627
      %v8629 = vpop.f32.mrf.mxu0
      %v8630 = vadd.f32 %v8541, %v8629
      %8631 = vmatmul.bf16.gmra.mxu0 %v7320
      %v8632 = vpop.f32.mrf.mxu0
      %v8633 = vadd.f32 %v8544, %v8632
      %v8634 = vpop.f32.mrf.mxu0
      %v8635 = vadd.f32 %v8546, %v8634
      %8636 = vmatmul.bf16.gmra.mxu0 %v7321
      %v8637 = vpop.f32.mrf.mxu0
      %v8638 = vadd.f32 %v8549, %v8637
      %v8639 = vpop.f32.mrf.mxu0
      %v8640 = vadd.f32 %v8551, %v8639
      %8641 = vmatmul.bf16.gmra.mxu0 %v7322
      %v8642 = vpop.f32.mrf.mxu0
      %v8643 = vadd.f32 %v8554, %v8642
      %v8644 = vpop.f32.mrf.mxu0
      %v8645 = vadd.f32 %v8556, %v8644
      %8646 = vmatmul.bf16.gmra.mxu0 %v7323
      %v8647 = vpop.f32.mrf.mxu0
      %v8648 = vadd.f32 %v8559, %v8647
      %v8649 = vpop.f32.mrf.mxu0
      %v8650 = vadd.f32 %v8561, %v8649
      %8651 = vmatmul.bf16.gmra.mxu0 %v7324
      %v8652 = vpop.f32.mrf.mxu0
      %v8653 = vadd.f32 %v8564, %v8652
      %v8654 = vpop.f32.mrf.mxu0
      %v8655 = vadd.f32 %v8566, %v8654
      %8656 = vmatmul.bf16.gmra.mxu0 %v7325
      %v8657 = vpop.f32.mrf.mxu0
      %v8658 = vadd.f32 %v8569, %v8657
      %v8659 = vpop.f32.mrf.mxu0
      %v8660 = vadd.f32 %v8571, %v8659
      %8661 = vmatmul.bf16.gmra.mxu0 %v7326
      %v8662 = vpop.f32.mrf.mxu0
      %v8663 = vadd.f32 %v8574, %v8662
      %v8664 = vpop.f32.mrf.mxu0
      %v8665 = vadd.f32 %v8576, %v8664
      %8666 = vmatmul.bf16.gmra.mxu0 %v7327
      %v8667 = vpop.f32.mrf.mxu0
      %v8668 = vadd.f32 %v8579, %v8667
      %v8669 = vpop.f32.mrf.mxu0
      %v8670 = vadd.f32 %v8581, %v8669
      %8671 = vmatmul.bf16.gmra.mxu0 %v7328
      %v8672 = vpop.f32.mrf.mxu0
      %v8673 = vadd.f32 %v8584, %v8672
      %v8674 = vpop.f32.mrf.mxu0
      %v8675 = vadd.f32 %v8586, %v8674
      %8676 = vmatmul.bf16.gmra.mxu0 %v7329
      %v8677 = vpop.f32.mrf.mxu0
      %v8678 = vadd.f32 %v8589, %v8677
      %v8679 = vpop.f32.mrf.mxu0
      %v8680 = vadd.f32 %v8591, %v8679
      %8681 = vmatmul.bf16.gmra.mxu0 %v7330
      %v8682 = vpop.f32.mrf.mxu0
      %v8683 = vadd.f32 %v8594, %v8682
      %v8684 = vpop.f32.mrf.mxu0
      %v8685 = vadd.f32 %v8596, %v8684
      %8686 = vmatmul.bf16.gmra.mxu0 %v7331
      %v8687 = vpop.f32.mrf.mxu0
      %v8688 = vadd.f32 %v8599, %v8687
      %v8689 = vpop.f32.mrf.mxu0
      %v8690 = vadd.f32 %v8601, %v8689
      %8691 = vmatmul.bf16.gmra.mxu0 %v7332
      %v8692 = vpop.f32.mrf.mxu0
      %v8693 = vadd.f32 %v8604, %v8692
      %v8694 = vpop.f32.mrf.mxu0
      %v8695 = vadd.f32 %v8606, %v8694
      %8696 = vmatmul.bf16.gmra.mxu0 %v7333
      %v8697 = vpop.f32.mrf.mxu0
      %v8698 = vadd.f32 %v8609, %v8697
      %v8699 = vpop.f32.mrf.mxu0
      %v8700 = vadd.f32 %v8611, %v8699
      %8701 = vdwg.mxu0
      %8702 = vmatpush.bf16.msra.mxu0 %v7917
      %8703 = vmatpush.bf16.msra.mxu0 %v7916
      %8704 = vmatpush.bf16.msra.mxu0 %v7915
      %8705 = vmatpush.bf16.msra.mxu0 %v7914
      %8706 = vmatpush.bf16.msra.mxu0 %v7913
      %8707 = vmatpush.bf16.msra.mxu0 %v7912
      %8708 = vmatpush.bf16.msra.mxu0 %v7911
      %8709 = vmatpush.bf16.msra.mxu0 %v7910
      %8710 = vmatmul.bf16.gmra.mxu0 %v7382
      %v8711 = vpop.f32.mrf.mxu0
      %v8712 = vadd.f32 %v8623, %v8711
      %v8713 = vpop.f32.mrf.mxu0
      %v8714 = vadd.f32 %v8625, %v8713
      %8715 = vmatmul.bf16.gmra.mxu0 %v7383
      %v8716 = vpop.f32.mrf.mxu0
      %v8717 = vadd.f32 %v8628, %v8716
      %v8718 = vpop.f32.mrf.mxu0
      %v8719 = vadd.f32 %v8630, %v8718
      %8720 = vmatmul.bf16.gmra.mxu0 %v7384
      %v8721 = vpop.f32.mrf.mxu0
      %v8722 = vadd.f32 %v8633, %v8721
      %v8723 = vpop.f32.mrf.mxu0
      %v8724 = vadd.f32 %v8635, %v8723
      %8725 = vmatmul.bf16.gmra.mxu0 %v7385
      %v8726 = vpop.f32.mrf.mxu0
      %v8727 = vadd.f32 %v8638, %v8726
      %v8728 = vpop.f32.mrf.mxu0
      %v8729 = vadd.f32 %v8640, %v8728
      %8730 = vmatmul.bf16.gmra.mxu0 %v7386
      %v8731 = vpop.f32.mrf.mxu0
      %v8732 = vadd.f32 %v8643, %v8731
      %v8733 = vpop.f32.mrf.mxu0
      %v8734 = vadd.f32 %v8645, %v8733
      %8735 = vmatmul.bf16.gmra.mxu0 %v7387
      %v8736 = vpop.f32.mrf.mxu0
      %v8737 = vadd.f32 %v8648, %v8736
      %v8738 = vpop.f32.mrf.mxu0
      %v8739 = vadd.f32 %v8650, %v8738
      %8740 = vmatmul.bf16.gmra.mxu0 %v7388
      %v8741 = vpop.f32.mrf.mxu0
      %v8742 = vadd.f32 %v8653, %v8741
      %v8743 = vpop.f32.mrf.mxu0
      %v8744 = vadd.f32 %v8655, %v8743
      %8745 = vmatmul.bf16.gmra.mxu0 %v7389
      %v8746 = vpop.f32.mrf.mxu0
      %v8747 = vadd.f32 %v8658, %v8746
      %v8748 = vpop.f32.mrf.mxu0
      %v8749 = vadd.f32 %v8660, %v8748
      %8750 = vmatmul.bf16.gmra.mxu0 %v7390
      %v8751 = vpop.f32.mrf.mxu0
      %v8752 = vadd.f32 %v8663, %v8751
      %v8753 = vpop.f32.mrf.mxu0
      %v8754 = vadd.f32 %v8665, %v8753
      %8755 = vmatmul.bf16.gmra.mxu0 %v7391
      %v8756 = vpop.f32.mrf.mxu0
      %v8757 = vadd.f32 %v8668, %v8756
      %v8758 = vpop.f32.mrf.mxu0
      %v8759 = vadd.f32 %v8670, %v8758
      %8760 = vmatmul.bf16.gmra.mxu0 %v7392
      %v8761 = vpop.f32.mrf.mxu0
      %v8762 = vadd.f32 %v8673, %v8761
      %v8763 = vpop.f32.mrf.mxu0
      %v8764 = vadd.f32 %v8675, %v8763
      %8765 = vmatmul.bf16.gmra.mxu0 %v7393
      %v8766 = vpop.f32.mrf.mxu0
      %v8767 = vadd.f32 %v8678, %v8766
      %v8768 = vpop.f32.mrf.mxu0
      %v8769 = vadd.f32 %v8680, %v8768
      %8770 = vmatmul.bf16.gmra.mxu0 %v7394
      %v8771 = vpop.f32.mrf.mxu0
      %v8772 = vadd.f32 %v8683, %v8771
      %v8773 = vpop.f32.mrf.mxu0
      %v8774 = vadd.f32 %v8685, %v8773
      %8775 = vmatmul.bf16.gmra.mxu0 %v7395
      %v8776 = vpop.f32.mrf.mxu0
      %v8777 = vadd.f32 %v8688, %v8776
      %v8778 = vpop.f32.mrf.mxu0
      %v8779 = vadd.f32 %v8690, %v8778
      %8780 = vmatmul.bf16.gmra.mxu0 %v7396
      %v8781 = vpop.f32.mrf.mxu0
      %v8782 = vadd.f32 %v8693, %v8781
      %v8783 = vpop.f32.mrf.mxu0
      %v8784 = vadd.f32 %v8695, %v8783
      %8785 = vmatmul.bf16.gmra.mxu0 %v7397
      %v8786 = vpop.f32.mrf.mxu0
      %v8787 = vadd.f32 %v8698, %v8786
      %v8788 = vpop.f32.mrf.mxu0
      %v8789 = vadd.f32 %v8700, %v8788
      %8790 = vdwg.mxu0
      %v8791 = vld [vmem:[%s5] sm:$0x1]
      %v8793 = vperm.slane %v8791, 0
      %v8795 = vmul.f32 %v8712, %v8793
      %v8796 = vmul.f32 %v8714, %v8793
      %v8797 = vmul.f32 %v8717, %v8793
      %v8798 = vmul.f32 %v8719, %v8793
      %v8799 = vmul.f32 %v8722, %v8793
      %v8800 = vmul.f32 %v8724, %v8793
      %v8801 = vmul.f32 %v8727, %v8793
      %v8802 = vmul.f32 %v8729, %v8793
      %v8803 = vmul.f32 %v8732, %v8793
      %v8804 = vmul.f32 %v8734, %v8793
      %v8805 = vmul.f32 %v8737, %v8793
      %v8806 = vmul.f32 %v8739, %v8793
      %v8807 = vmul.f32 %v8742, %v8793
      %v8808 = vmul.f32 %v8744, %v8793
      %v8809 = vmul.f32 %v8747, %v8793
      %v8810 = vmul.f32 %v8749, %v8793
      %v8811 = vmul.f32 %v8752, %v8793
      %v8812 = vmul.f32 %v8754, %v8793
      %v8813 = vmul.f32 %v8757, %v8793
      %v8814 = vmul.f32 %v8759, %v8793
      %v8815 = vmul.f32 %v8762, %v8793
      %v8816 = vmul.f32 %v8764, %v8793
      %v8817 = vmul.f32 %v8767, %v8793
      %v8818 = vmul.f32 %v8769, %v8793
      %v8819 = vmul.f32 %v8772, %v8793
      %v8820 = vmul.f32 %v8774, %v8793
      %v8821 = vmul.f32 %v8777, %v8793
      %v8822 = vmul.f32 %v8779, %v8793
      %v8823 = vmul.f32 %v8782, %v8793
      %v8824 = vmul.f32 %v8784, %v8793
      %v8825 = vmul.f32 %v8787, %v8793
      %v8826 = vmul.f32 %v8789, %v8793
      %v8827 = vld [vmem:[%s6] sm:$0x1]
      %v8829 = vperm.slane %v8827, 0
      %v8831 = vadd.f32 %v8795, %v8829
      %v8832 = vadd.f32 %v8796, %v8829
      %v8833 = vadd.f32 %v8797, %v8829
      %v8834 = vadd.f32 %v8798, %v8829
      %v8835 = vadd.f32 %v8799, %v8829
      %v8836 = vadd.f32 %v8800, %v8829
      %v8837 = vadd.f32 %v8801, %v8829
      %v8838 = vadd.f32 %v8802, %v8829
      %v8839 = vadd.f32 %v8803, %v8829
      %v8840 = vadd.f32 %v8804, %v8829
      %v8841 = vadd.f32 %v8805, %v8829
      %v8842 = vadd.f32 %v8806, %v8829
      %v8843 = vadd.f32 %v8807, %v8829
      %v8844 = vadd.f32 %v8808, %v8829
      %v8845 = vadd.f32 %v8809, %v8829
      %v8846 = vadd.f32 %v8810, %v8829
      %v8847 = vadd.f32 %v8811, %v8829
      %v8848 = vadd.f32 %v8812, %v8829
      %v8849 = vadd.f32 %v8813, %v8829
      %v8850 = vadd.f32 %v8814, %v8829
      %v8851 = vadd.f32 %v8815, %v8829
      %v8852 = vadd.f32 %v8816, %v8829
      %v8853 = vadd.f32 %v8817, %v8829
      %v8854 = vadd.f32 %v8818, %v8829
      %v8855 = vadd.f32 %v8819, %v8829
      %v8856 = vadd.f32 %v8820, %v8829
      %v8857 = vadd.f32 %v8821, %v8829
      %v8858 = vadd.f32 %v8822, %v8829
      %v8859 = vadd.f32 %v8823, %v8829
      %v8860 = vadd.f32 %v8824, %v8829
      %v8861 = vadd.f32 %v8825, %v8829
      %v8862 = vadd.f32 %v8826, %v8829
      %v8863 = vld [vmem:[%s1694] sm:$0xf]
      %v8864 = vld [vmem:[%s1694 + $0x4] sm:$0xf]
      %v8865 = vld [vmem:[%s1694 + $0x8] sm:$0x1]
      %v8866 = vld [vmem:[%s1694 + $0xc] sm:$0xf]
      %v8867 = vld [vmem:[%s1694 + $0x10] sm:$0xf]
      %v8868 = vld [vmem:[%s1694 + $0x14] sm:$0x1]
      %v8869 = vld [vmem:[%s1694 + $0x18] sm:$0xf]
      %v8870 = vld [vmem:[%s1694 + $0x1c] sm:$0xf]
      %v8871 = vld [vmem:[%s1694 + $0x20] sm:$0x1]
      %v8872 = vld [vmem:[%s1694 + $0x24] sm:$0xf]
      %v8873 = vld [vmem:[%s1694 + $0x28] sm:$0xf]
      %v8874 = vld [vmem:[%s1694 + $0x2c] sm:$0x1]
      %v8875 = vld [vmem:[%s1694 + $0x30] sm:$0xf]
      %v8876 = vld [vmem:[%s1694 + $0x34] sm:$0xf]
      %v8877 = vld [vmem:[%s1694 + $0x38] sm:$0x1]
      %v8878 = vld [vmem:[%s1694 + $0x3c] sm:$0xf]
      %v8879 = vld [vmem:[%s1694 + $0x40] sm:$0xf]
      %v8880 = vld [vmem:[%s1694 + $0x44] sm:$0x1]
      %v8881 = vld [vmem:[%s1694 + $0x48] sm:$0xf]
      %v8882 = vld [vmem:[%s1694 + $0x4c] sm:$0xf]
      %v8883 = vld [vmem:[%s1694 + $0x50] sm:$0x1]
      %v8884 = vld [vmem:[%s1694 + $0x54] sm:$0xf]
      %v8885 = vld [vmem:[%s1694 + $0x58] sm:$0xf]
      %v8886 = vld [vmem:[%s1694 + $0x5c] sm:$0x1]
      %v8887 = vld [vmem:[%s1694 + $0x60] sm:$0xf]
      %v8888 = vld [vmem:[%s1694 + $0x64] sm:$0xf]
      %v8889 = vld [vmem:[%s1694 + $0x68] sm:$0x1]
      %v8890 = vld [vmem:[%s1694 + $0x6c] sm:$0xf]
      %v8891 = vld [vmem:[%s1694 + $0x70] sm:$0xf]
      %v8892 = vld [vmem:[%s1694 + $0x74] sm:$0x1]
      %v8893 = vld [vmem:[%s1694 + $0x78] sm:$0xf]
      %v8894 = vld [vmem:[%s1694 + $0x7c] sm:$0xf]
      %v8895 = vld [vmem:[%s1694 + $0x80] sm:$0x1]
      %v8896 = vld [vmem:[%s1694 + $0x84] sm:$0xf]
      %v8897 = vld [vmem:[%s1694 + $0x88] sm:$0xf]
      %v8898 = vld [vmem:[%s1694 + $0x8c] sm:$0x1]
      %v8899 = vld [vmem:[%s1694 + $0x90] sm:$0xf]
      %v8900 = vld [vmem:[%s1694 + $0x94] sm:$0xf]
      %v8901 = vld [vmem:[%s1694 + $0x98] sm:$0x1]
      %v8902 = vld [vmem:[%s1694 + $0x9c] sm:$0xf]
      %v8903 = vld [vmem:[%s1694 + $0xa0] sm:$0xf]
      %v8904 = vld [vmem:[%s1694 + $0xa4] sm:$0x1]
      %v8905 = vld [vmem:[%s1694 + $0xa8] sm:$0xf]
      %v8906 = vld [vmem:[%s1694 + $0xac] sm:$0xf]
      %v8907 = vld [vmem:[%s1694 + $0xb0] sm:$0x1]
      %v8908 = vld [vmem:[%s1694 + $0xb4] sm:$0xf]
      %v8909 = vld [vmem:[%s1694 + $0xb8] sm:$0xf]
      %v8910 = vld [vmem:[%s1694 + $0xbc] sm:$0x1]
      %v8911 = vunpack.c.l.bf16 %v8863
      %v8912 = vunpack.c.l.bf16 %v8864
      %v8913 = vunpack.c.l.bf16 %v8865
      %v8914 = vunpack.c.l.bf16 %v8866
      %v8915 = vunpack.c.l.bf16 %v8867
      %v8916 = vunpack.c.l.bf16 %v8868
      %v8917 = vunpack.c.l.bf16 %v8869
      %v8918 = vunpack.c.l.bf16 %v8870
      %v8919 = vunpack.c.l.bf16 %v8871
      %v8920 = vunpack.c.l.bf16 %v8872
      %v8921 = vunpack.c.l.bf16 %v8873
      %v8922 = vunpack.c.l.bf16 %v8874
      %v8923 = vunpack.c.l.bf16 %v8875
      %v8924 = vunpack.c.l.bf16 %v8876
      %v8925 = vunpack.c.l.bf16 %v8877
      %v8926 = vunpack.c.l.bf16 %v8878
      %v8927 = vunpack.c.l.bf16 %v8879
      %v8928 = vunpack.c.l.bf16 %v8880
      %v8929 = vunpack.c.l.bf16 %v8881
      %v8930 = vunpack.c.l.bf16 %v8882
      %v8931 = vunpack.c.l.bf16 %v8883
      %v8932 = vunpack.c.l.bf16 %v8884
      %v8933 = vunpack.c.l.bf16 %v8885
      %v8934 = vunpack.c.l.bf16 %v8886
      %v8935 = vunpack.c.l.bf16 %v8887
      %v8936 = vunpack.c.l.bf16 %v8888
      %v8937 = vunpack.c.l.bf16 %v8889
      %v8938 = vunpack.c.l.bf16 %v8890
      %v8939 = vunpack.c.l.bf16 %v8891
      %v8940 = vunpack.c.l.bf16 %v8892
      %v8941 = vunpack.c.l.bf16 %v8893
      %v8942 = vunpack.c.l.bf16 %v8894
      %v8943 = vunpack.c.l.bf16 %v8895
      %v8944 = vunpack.c.l.bf16 %v8896
      %v8945 = vunpack.c.l.bf16 %v8897
      %v8946 = vunpack.c.l.bf16 %v8898
      %v8947 = vunpack.c.l.bf16 %v8899
      %v8948 = vunpack.c.l.bf16 %v8900
      %v8949 = vunpack.c.l.bf16 %v8901
      %v8950 = vunpack.c.l.bf16 %v8902
      %v8951 = vunpack.c.l.bf16 %v8903
      %v8952 = vunpack.c.l.bf16 %v8904
      %v8953 = vunpack.c.l.bf16 %v8905
      %v8954 = vunpack.c.l.bf16 %v8906
      %v8955 = vunpack.c.l.bf16 %v8907
      %v8956 = vunpack.c.l.bf16 %v8908
      %v8957 = vunpack.c.l.bf16 %v8909
      %v8958 = vunpack.c.l.bf16 %v8910
      %vm9007 = vcmask 1046528
      %v9008 = vrot.slane %v8911, 1
      %v9009 = vrot.slane %v8912, 1
      %v9010 = vsel %vm9007, %v9008, %v9009
      %v9011 = vrot.slane %v8913, 1
      %v9012 = vsel %vm9007, %v9009, %v9011
      %v9013 = vrot.slane %v8914, 1
      %v9014 = vrot.slane %v8915, 1
      %v9015 = vsel %vm9007, %v9013, %v9014
      %v9016 = vrot.slane %v8916, 1
      %v9017 = vsel %vm9007, %v9014, %v9016
      %v9018 = vrot.slane %v8917, 1
      %v9019 = vrot.slane %v8918, 1
      %v9020 = vsel %vm9007, %v9018, %v9019
      %v9021 = vrot.slane %v8919, 1
      %v9022 = vsel %vm9007, %v9019, %v9021
      %v9023 = vrot.slane %v8920, 1
      %v9024 = vrot.slane %v8921, 1
      %v9025 = vsel %vm9007, %v9023, %v9024
      %v9026 = vrot.slane %v8922, 1
      %v9027 = vsel %vm9007, %v9024, %v9026
      %v9028 = vrot.slane %v8923, 1
      %v9029 = vrot.slane %v8924, 1
      %v9030 = vsel %vm9007, %v9028, %v9029
      %v9031 = vrot.slane %v8925, 1
      %v9032 = vsel %vm9007, %v9029, %v9031
      %v9033 = vrot.slane %v8926, 1
      %v9034 = vrot.slane %v8927, 1
      %v9035 = vsel %vm9007, %v9033, %v9034
      %v9036 = vrot.slane %v8928, 1
      %v9037 = vsel %vm9007, %v9034, %v9036
      %v9038 = vrot.slane %v8929, 1
      %v9039 = vrot.slane %v8930, 1
      %v9040 = vsel %vm9007, %v9038, %v9039
      %v9041 = vrot.slane %v8931, 1
      %v9042 = vsel %vm9007, %v9039, %v9041
      %v9043 = vrot.slane %v8932, 1
      %v9044 = vrot.slane %v8933, 1
      %v9045 = vsel %vm9007, %v9043, %v9044
      %v9046 = vrot.slane %v8934, 1
      %v9047 = vsel %vm9007, %v9044, %v9046
      %v9048 = vrot.slane %v8935, 1
      %v9049 = vrot.slane %v8936, 1
      %v9050 = vsel %vm9007, %v9048, %v9049
      %v9051 = vrot.slane %v8937, 1
      %v9052 = vsel %vm9007, %v9049, %v9051
      %v9053 = vrot.slane %v8938, 1
      %v9054 = vrot.slane %v8939, 1
      %v9055 = vsel %vm9007, %v9053, %v9054
      %v9056 = vrot.slane %v8940, 1
      %v9057 = vsel %vm9007, %v9054, %v9056
      %v9058 = vrot.slane %v8941, 1
      %v9059 = vrot.slane %v8942, 1
      %v9060 = vsel %vm9007, %v9058, %v9059
      %v9061 = vrot.slane %v8943, 1
      %v9062 = vsel %vm9007, %v9059, %v9061
      %v9063 = vrot.slane %v8944, 1
      %v9064 = vrot.slane %v8945, 1
      %v9065 = vsel %vm9007, %v9063, %v9064
      %v9066 = vrot.slane %v8946, 1
      %v9067 = vsel %vm9007, %v9064, %v9066
      %v9068 = vrot.slane %v8947, 1
      %v9069 = vrot.slane %v8948, 1
      %v9070 = vsel %vm9007, %v9068, %v9069
      %v9071 = vrot.slane %v8949, 1
      %v9072 = vsel %vm9007, %v9069, %v9071
      %v9073 = vrot.slane %v8950, 1
      %v9074 = vrot.slane %v8951, 1
      %v9075 = vsel %vm9007, %v9073, %v9074
      %v9076 = vrot.slane %v8952, 1
      %v9077 = vsel %vm9007, %v9074, %v9076
      %v9078 = vrot.slane %v8953, 1
      %v9079 = vrot.slane %v8954, 1
      %v9080 = vsel %vm9007, %v9078, %v9079
      %v9081 = vrot.slane %v8955, 1
      %v9082 = vsel %vm9007, %v9079, %v9081
      %v9083 = vrot.slane %v8956, 1
      %v9084 = vrot.slane %v8957, 1
      %v9085 = vsel %vm9007, %v9083, %v9084
      %v9086 = vrot.slane %v8958, 1
      %v9087 = vsel %vm9007, %v9084, %v9086
      %v9120 = vadd.f32 %v8831, %v9010
      %v9121 = vadd.f32 %v8832, %v9012
      %v9122 = vadd.f32 %v8833, %v9015
      %v9123 = vadd.f32 %v8834, %v9017
      %v9124 = vadd.f32 %v8835, %v9020
      %v9125 = vadd.f32 %v8836, %v9022
      %v9126 = vadd.f32 %v8837, %v9025
      %v9127 = vadd.f32 %v8838, %v9027
      %v9128 = vadd.f32 %v8839, %v9030
      %v9129 = vadd.f32 %v8840, %v9032
      %v9130 = vadd.f32 %v8841, %v9035
      %v9131 = vadd.f32 %v8842, %v9037
      %v9132 = vadd.f32 %v8843, %v9040
      %v9133 = vadd.f32 %v8844, %v9042
      %v9134 = vadd.f32 %v8845, %v9045
      %v9135 = vadd.f32 %v8846, %v9047
      %v9136 = vadd.f32 %v8847, %v9050
      %v9137 = vadd.f32 %v8848, %v9052
      %v9138 = vadd.f32 %v8849, %v9055
      %v9139 = vadd.f32 %v8850, %v9057
      %v9140 = vadd.f32 %v8851, %v9060
      %v9141 = vadd.f32 %v8852, %v9062
      %v9142 = vadd.f32 %v8853, %v9065
      %v9143 = vadd.f32 %v8854, %v9067
      %v9144 = vadd.f32 %v8855, %v9070
      %v9145 = vadd.f32 %v8856, %v9072
      %v9146 = vadd.f32 %v8857, %v9075
      %v9147 = vadd.f32 %v8858, %v9077
      %v9148 = vadd.f32 %v8859, %v9080
      %v9149 = vadd.f32 %v8860, %v9082
      %v9150 = vadd.f32 %v8861, %v9085
      %v9151 = vadd.f32 %v8862, %v9087
      %v9152 = vmax.f32 %v9120, 0.0
      %v9153 = vmax.f32 %v9121, 0.0
      %v9154 = vmax.f32 %v9122, 0.0
      %v9155 = vmax.f32 %v9123, 0.0
      %v9156 = vmax.f32 %v9124, 0.0
      %v9157 = vmax.f32 %v9125, 0.0
      %v9158 = vmax.f32 %v9126, 0.0
      %v9159 = vmax.f32 %v9127, 0.0
      %v9160 = vmax.f32 %v9128, 0.0
      %v9161 = vmax.f32 %v9129, 0.0
      %v9162 = vmax.f32 %v9130, 0.0
      %v9163 = vmax.f32 %v9131, 0.0
      %v9164 = vmax.f32 %v9132, 0.0
      %v9165 = vmax.f32 %v9133, 0.0
      %v9166 = vmax.f32 %v9134, 0.0
      %v9167 = vmax.f32 %v9135, 0.0
      %v9168 = vmax.f32 %v9136, 0.0
      %v9169 = vmax.f32 %v9137, 0.0
      %v9170 = vmax.f32 %v9138, 0.0
      %v9171 = vmax.f32 %v9139, 0.0
      %v9172 = vmax.f32 %v9140, 0.0
      %v9173 = vmax.f32 %v9141, 0.0
      %v9174 = vmax.f32 %v9142, 0.0
      %v9175 = vmax.f32 %v9143, 0.0
      %v9176 = vmax.f32 %v9144, 0.0
      %v9177 = vmax.f32 %v9145, 0.0
      %v9178 = vmax.f32 %v9146, 0.0
      %v9179 = vmax.f32 %v9147, 0.0
      %v9180 = vmax.f32 %v9148, 0.0
      %v9181 = vmax.f32 %v9149, 0.0
      %v9182 = vmax.f32 %v9150, 0.0
      %v9183 = vmax.f32 %v9151, 0.0
      %v9184 = vpack.c.bf16 %v9152, %v9152
      %v9185 = vpack.c.bf16 %v9153, %v9153
      %v9186 = vpack.c.bf16 %v9154, %v9154
      %v9187 = vpack.c.bf16 %v9155, %v9155
      %v9188 = vpack.c.bf16 %v9156, %v9156
      %v9189 = vpack.c.bf16 %v9157, %v9157
      %v9190 = vpack.c.bf16 %v9158, %v9158
      %v9191 = vpack.c.bf16 %v9159, %v9159
      %v9192 = vpack.c.bf16 %v9160, %v9160
      %v9193 = vpack.c.bf16 %v9161, %v9161
      %v9194 = vpack.c.bf16 %v9162, %v9162
      %v9195 = vpack.c.bf16 %v9163, %v9163
      %v9196 = vpack.c.bf16 %v9164, %v9164
      %v9197 = vpack.c.bf16 %v9165, %v9165
      %v9198 = vpack.c.bf16 %v9166, %v9166
      %v9199 = vpack.c.bf16 %v9167, %v9167
      %v9200 = vpack.c.bf16 %v9168, %v9168
      %v9201 = vpack.c.bf16 %v9169, %v9169
      %v9202 = vpack.c.bf16 %v9170, %v9170
      %v9203 = vpack.c.bf16 %v9171, %v9171
      %v9204 = vpack.c.bf16 %v9172, %v9172
      %v9205 = vpack.c.bf16 %v9173, %v9173
      %v9206 = vpack.c.bf16 %v9174, %v9174
      %v9207 = vpack.c.bf16 %v9175, %v9175
      %v9208 = vpack.c.bf16 %v9176, %v9176
      %v9209 = vpack.c.bf16 %v9177, %v9177
      %v9210 = vpack.c.bf16 %v9178, %v9178
      %v9211 = vpack.c.bf16 %v9179, %v9179
      %v9212 = vpack.c.bf16 %v9180, %v9180
      %v9213 = vpack.c.bf16 %v9181, %v9181
      %v9214 = vpack.c.bf16 %v9182, %v9182
      %v9215 = vpack.c.bf16 %v9183, %v9183
      %9216 = vst [vmem:[%s316] sm:$0xf] %v9184
      %9217 = vst [vmem:[%s316 + $0x4] sm:$0xf] %v9185
      %9218 = vst [vmem:[%s316 + $0x8] sm:$0xf] %v9186
      %9219 = vst [vmem:[%s316 + $0xc] sm:$0xf] %v9187
      %9220 = vst [vmem:[%s316 + $0x10] sm:$0xf] %v9188
      %9221 = vst [vmem:[%s316 + $0x14] sm:$0xf] %v9189
      %9222 = vst [vmem:[%s316 + $0x18] sm:$0xf] %v9190
      %9223 = vst [vmem:[%s316 + $0x1c] sm:$0xf] %v9191
      %9224 = vst [vmem:[%s316 + $0x20] sm:$0xf] %v9192
      %9225 = vst [vmem:[%s316 + $0x24] sm:$0xf] %v9193
      %9226 = vst [vmem:[%s316 + $0x28] sm:$0xf] %v9194
      %9227 = vst [vmem:[%s316 + $0x2c] sm:$0xf] %v9195
      %9228 = vst [vmem:[%s316 + $0x30] sm:$0xf] %v9196
      %9229 = vst [vmem:[%s316 + $0x34] sm:$0xf] %v9197
      %9230 = vst [vmem:[%s316 + $0x38] sm:$0xf] %v9198
      %9231 = vst [vmem:[%s316 + $0x3c] sm:$0xf] %v9199
      %9232 = vst [vmem:[%s316 + $0x40] sm:$0xf] %v9200
      %9233 = vst [vmem:[%s316 + $0x44] sm:$0xf] %v9201
      %9234 = vst [vmem:[%s316 + $0x48] sm:$0xf] %v9202
      %9235 = vst [vmem:[%s316 + $0x4c] sm:$0xf] %v9203
      %9236 = vst [vmem:[%s316 + $0x50] sm:$0xf] %v9204
      %9237 = vst [vmem:[%s316 + $0x54] sm:$0xf] %v9205
      %9238 = vst [vmem:[%s316 + $0x58] sm:$0xf] %v9206
      %9239 = vst [vmem:[%s316 + $0x5c] sm:$0xf] %v9207
      %9240 = vst [vmem:[%s316 + $0x60] sm:$0xf] %v9208
      %9241 = vst [vmem:[%s316 + $0x64] sm:$0xf] %v9209
      %9242 = vst [vmem:[%s316 + $0x68] sm:$0xf] %v9210
      %9243 = vst [vmem:[%s316 + $0x6c] sm:$0xf] %v9211
      %9244 = vst [vmem:[%s316 + $0x70] sm:$0xf] %v9212
      %9245 = vst [vmem:[%s316 + $0x74] sm:$0xf] %v9213
      %9246 = vst [vmem:[%s316 + $0x78] sm:$0xf] %v9214
      %9247 = vst [vmem:[%s316 + $0x7c] sm:$0xf] %v9215
      %s9248 = smul.u32 16, %s23
      %p9249 = scmp.lt.s32.totalorder %s22, 1
      %s9250 = scalar_select %p9249, %s22, 1
      %p9251 = scmp.lt.s32.totalorder %s9248, 15
      %s9252 = scalar_select %p9251, %s9248, 15
      %s9253 = smul.addr %s9252, 2
      %s9254 = smul.addr %s9250, 32
      %s9255 = sadd.s32 %s9253, %s9254
      %s9256 = smul.addr %s9255, 4
      %s9257 = scalar_lea.vmem %s7, %s9256
      // Predicated region
      $region53: #{basic_block_forward.1} parent=47 // pred_check
        %p9258 = pneg %p204
      $region54: #{basic_block_forward.1} parent=47 // pred_check_branch
        %9260 = sbr.rel (%p9258) target = $region56
      $region55: #{basic_block_forward.1} parent=47 // pred_region
        %s9261 = smul.u32 16, %s23
      $region56: #{basic_block_forward.1} parent=47 // pred_fallthru
        _
    $region48: #{basic_block_forward.1} parent=5 // pred_fallthru
      _
    %p9262 = scmp.le.s32.totalorder 2, %s13
    // Predicated region
    $region57: #{basic_block_forward.1} parent=5 // pred_check
      %p9263 = pneg %p9262
    $region58: #{basic_block_forward.1} parent=5 // pred_check_branch
      %9265 = sbr.rel (%p9263) target = $region60
    $region59: #{basic_block_forward.1} parent=5 // pred_region
      %s9266 = ssub.s32 %s13, 2
      // Predicated region
      $region61: #{basic_block_forward.1} parent=59 // pred_check
        %p9267 = pneg %p210
      $region62: #{basic_block_forward.1} parent=59 // pred_check_branch
        %9269 = sbr.rel (%p9267) target = $region64
      $region63: #{basic_block_forward.1} parent=59 // pred_region
        %s9270 = smul.u32 16, %s25
        %p9271 = scmp.lt.s32.totalorder %s24, 1
        %s9272 = scalar_select %p9271, %s24, 1
        %p9273 = scmp.lt.s32.totalorder %s9270, 15
        %s9274 = scalar_select %p9273, %s9270, 15
        %s9275 = smul.addr %s9274, 2
        %s9276 = smul.addr %s9272, 32
        %s9277 = sadd.s32 %s9275, %s9276
        %s9278 = smul.addr %s9277, 4
        %s9279 = scalar_lea.vmem %s7, %s9278
      $region64: #{basic_block_forward.1} parent=59 // pred_fallthru
        _
    $region60: #{basic_block_forward.1} parent=5 // pred_fallthru
      _
  $region6: #{basic_block_forward.1} parent=0 // loop_footer
    %s17 = sadd.s32 1, %s13
  $region7: #{basic_block_forward.1} parent=0 // loop_footer_branch
    %12 = sbr.rel target = $region3
  $region8: #{basic_block_forward.1} parent=0 // loop_exit
    _

</llo_original>
